<compile_context>
chip_gen: v7x
topology: tpu7x:2x2x1
jax: 0.10.0
libtpu: 0.0.40
codegen_flags: <defaults>
</compile_context>

<pallas_src>
import numpy as np
import jax
import jax.numpy as jnp
from jax.experimental import pallas as pl
from jax.experimental.pallas import tpu as pltpu

D_MODEL = 256
D_MSG = 64                 # d_message == TersoffAttention channels
D_HID = 4 * D_MODEL
FUSED = 2 * D_MSG          # 128-lane fused edge feature: [ xij (64) | rnorm (pad 64) ]
TRIPLET_TILE = 128         # T-axis tile (grid axis)

_DN_TA = (((0,), (0,)), ((), ()))   # dot_general dims: contract leading dims ("trans_a")


def tersoff_block_kernel(
    x_ref, y_ref, r_ref, sg_ref, dg_ref, st_ref, dt_ref,
    place_ref, attn_ref,
    wsrc_ref, bsrc_ref, wdst_ref, bdst_ref, wedge_ref, bedge_ref,
    w1_ref, b1_ref, w2_ref, b2_ref,
    out_ref,
    feat_ref, m_ref, l_ref, acc_ref,
):
    f32 = jnp.float32
    step = pl.program_id(0)
    n_steps = pl.num_programs(0)

    # ---------------- phase A (step 0): edge features + softmax state init ------
    @pl.when(step == 0)
    def _init():
        x = x_ref[...]                                   # [N, d_model]
        y = y_ref[...]                                   # [E, d_model]
        # projections; weight columns pre-padded to 128 (cols 64..127 are zero)
        xj = jnp.dot(x, wsrc_ref[...], preferred_element_type=f32) + bsrc_ref[...]
        xi = jnp.dot(x, wdst_ref[...], preferred_element_type=f32) + bdst_ref[...]
        ye = jnp.dot(y, wedge_ref[...], preferred_element_type=f32) + bedge_ref[...]
        sg = sg_ref[...].astype(f32)                     # [E, N] one-hot (stored bf16)
        dg = dg_ref[...].astype(f32)
        # g.apply_edges(u_add_v('xj','xi','xij')); xij += project_edge(y)
        xij = (jnp.dot(sg, xj, preferred_element_type=f32)
               + jnp.dot(dg, xi, preferred_element_type=f32) + ye)       # [E, 128]
        # rnorm = -r/|r| (rsqrt(0) -> inf, same behaviour as the reference),
        # placed into lanes 64..66 of the fused buffer via a tiny placement matmul.
        r = r_ref[...]                                                   # [E, 8]
        rn = (-r) * jax.lax.rsqrt(jnp.sum(r * r, axis=-1, keepdims=True))
        feat_ref[...] = xij + jnp.dot(rn, place_ref[...],
                                      preferred_element_type=f32)        # [E, 128]
        m_ref[...] = jnp.full(m_ref.shape, -1e30, f32)   # running score shift
        l_ref[...] = jnp.zeros(l_ref.shape, f32)         # softmax denominators
        acc_ref[...] = jnp.zeros(acc_ref.shape, f32)     # weighted message accumulator

    # ---------------- phase B (every step): one tile of triplets -----------------
    st = st_ref[...].astype(f32)            # [TT, E] one-hot src edge (bf16 in HBM)
    dt = dt_ref[...].astype(f32)            # [TT, E] one-hot dst edge
    feat = feat_ref[...]                    # [E, 128] fused [xij | rnorm]

    # fused lane-dense gathers: one 128-wide matmul per side
    x_src = jnp.dot(st, feat, preferred_element_type=f32)      # [TT, 128]
    x_dst = jnp.dot(dt, feat, preferred_element_type=f32)      # [TT, 128]

    # cos_jik = u_dot_v('rnorm','rnorm') : only the rnorm lanes (>= 64) contribute
    lanes = jax.lax.broadcasted_iota(jnp.int32, (1, FUSED), 1)
    cosv = jnp.sum(jnp.where(lanes >= D_MSG, x_src * x_dst, 0.0),
                   axis=-1, keepdims=True)                      # [TT, 1]
    cosv = jnp.clip(cosv, -1.0, 1.0)
    sinv = jnp.sqrt(jnp.maximum(1.0 - cosv * cosv, 0.0))

    # ChebyshevExpansion: T_n(cos) = cos(n*theta), lane-dense via log-depth
    # cos/sin angle doubling (no serial 62-step chain, no 64-way concat).
    cheb_c = jnp.concatenate([jnp.ones_like(cosv), cosv], axis=-1)   # [TT, 2]
    cheb_s = jnp.concatenate([jnp.zeros_like(sinv), sinv], axis=-1)
    ck = cosv * cosv - sinv * sinv          # cos(2*theta)
    sk = 2.0 * cosv * sinv                  # sin(2*theta)
    width = 2
    while width < FUSED:
        c2 = ck * cheb_c - sk * cheb_s
        s2 = sk * cheb_c + ck * cheb_s
        cheb_c = jnp.concatenate([cheb_c, c2], axis=-1)
        cheb_s = jnp.concatenate([cheb_s, s2], axis=-1)
        ck, sk = ck * ck - sk * sk, 2.0 * ck * sk
        width *= 2
    # lanes >= 64 of cheb_c hold T_64..T_127 (bounded), masked by attn below.

    # e_jik = SiLU(z + xij[src] + xij[dst]) ; score = sum(e_jik * attn)
    pre = cheb_c + x_src + x_dst
    act = pre * jax.nn.sigmoid(pre)                               # [TT, 128]
    s_col = jnp.sum(act * attn_ref[...], axis=-1, keepdims=True)  # [TT, 1]

    # edge_softmax over triplets grouped by destination edge -- online, with a
    # per-tile scalar shift (softmax is shift-invariant; segment sums are MXU
    # matmuls against the resident Dt tile -> no [T,E] temporaries).
    g_shift = jnp.max(s_col, axis=0, keepdims=True)               # [1, 1]
    u = jnp.exp(jnp.minimum(s_col - g_shift, 60.0))               # [TT, 1], <= 1
    bl = jax.lax.dot_general(dt, u, _DN_TA, preferred_element_type=f32)          # [E,1]
    bacc = jax.lax.dot_general(dt, u * x_src, _DN_TA, preferred_element_type=f32)  # [E,128]

    m_old = m_ref[...]
    m_new = jnp.maximum(m_old, g_shift)
    alpha = jnp.exp(m_old - m_new)          # rescale old state
    beta = jnp.exp(g_shift - m_new)         # rescale this tile
    m_ref[...] = m_new
    l_ref[...] = alpha * l_ref[...] + beta * bl
    acc_ref[...] = alpha * acc_ref[...] + beta * bacc

    # ---------------- phase C (last step): normalize, aggregate, feedforward -----
    @pl.when(step == n_steps - 1)
    def _finalize():
        l = l_ref[...]
        inv_l = jnp.where(l > 0.0, 1.0 / l, 0.0)        # edges with no triplets -> 0
        ft_edge = acc_ref[...] * inv_l                   # [E, 128]
        dg = dg_ref[...].astype(f32)
        # sum edge messages onto destination atoms (trans_a contraction, no DgT copy)
        h = jax.lax.dot_general(dg, ft_edge, _DN_TA, preferred_element_type=f32)  # [N,128]
        # FeedForward: Linear -> SiLU -> Linear  (w1 rows 64..127 are zero, so the
        # rnorm lanes of the fused accumulator never reach the output)
        hid = jnp.dot(h, w1_ref[...], preferred_element_type=f32) + b1_ref[...]
        hid = hid * jax.nn.sigmoid(hid)
        out_ref[...] = jnp.dot(hid, w2_ref[...], preferred_element_type=f32) + b2_ref[...]


def tersoff_block(x, y, r, src, dst, t_src, t_dst, params, *, triplet_tile=TRIPLET_TILE):
    """Wrapper: builds bf16 incidence matrices + padded params (glue) and calls the kernel."""
    f32, bf16 = jnp.float32, jnp.bfloat16
    N, d_model = x.shape
    E = y.shape[0]
    T = int(t_src.shape[0])
    d_hid = params["w1_T"].shape[-1]
    assert params["attn"].shape[-1] == D_MSG and FUSED == 2 * D_MSG

    TT = triplet_tile
    T_pad = max(TT, ((T + TT - 1) // TT) * TT)
    nT = T_pad // TT

    # incidence matrices (bf16, exact 0/1); single orientation each, no transposed copies
    Sg = jax.nn.one_hot(src, N, dtype=bf16)                    # [E, N]
    Dg = jax.nn.one_hot(dst, N, dtype=bf16)                    # [E, N]
    St = jnp.pad(jax.nn.one_hot(t_src, E, dtype=bf16), ((0, T_pad - T), (0, 0)))  # [T_pad, E]
    Dt = jnp.pad(jax.nn.one_hot(t_dst, E, dtype=bf16), ((0, T_pad - T), (0, 0)))  # [T_pad, E]

    # bond vectors: 8 lanes per edge (not 128); placement matrix puts rnorm at lanes 64..66
    r8 = jnp.zeros((E, 8), f32).at[:, : r.shape[-1]].set(r)
    place = jnp.zeros((8, FUSED), f32).at[jnp.arange(3), D_MSG + jnp.arange(3)].set(1.0)

    # parameters padded to 128 lanes so the kernel stays lane-dense with zero slicing
    def pad_cols(w, b):
        wp = jnp.zeros((w.shape[0], FUSED), f32).at[:, :D_MSG].set(w)
        bp = jnp.zeros((1, FUSED), f32).at[:, :D_MSG].set(b)
        return wp, bp

    w_src, b_src = pad_cols(params["w_src_T"], params["b_src"])
    w_dst, b_dst = pad_cols(params["w_dst_T"], params["b_dst"])
    w_edge, b_edge = pad_cols(params["w_edge_T"], params["b_edge"])
    attn128 = jnp.zeros((1, FUSED), f32).at[:, :D_MSG].set(params["attn"])
    w1p = jnp.zeros((FUSED, d_hid), f32).at[:D_MSG, :].set(params["w1_T"])
    b1 = params["b1"]
    w2 = params["w2_T"]
    b2 = params["b2"]

    inputs = (x, y, r8, Sg, Dg, St, Dt, place, attn128,
              w_src, b_src, w_dst, b_dst, w_edge, b_edge, w1p, b1, w2, b2)

    def full_spec(a):
        zero = (0,) * a.ndim
        return pl.BlockSpec(a.shape, lambda t, _z=zero: _z)

    tile_spec = pl.BlockSpec((TT, E), lambda t: (t, 0))
    in_specs = []
    for i, a in enumerate(inputs):
        in_specs.append(tile_spec if i in (5, 6) else full_spec(a))

    grid_spec = pltpu.PrefetchScalarGridSpec(
        num_scalar_prefetch=0,
        grid=(nT,),
        in_specs=in_specs,
        out_specs=pl.BlockSpec((N, d_model), lambda t: (0, 0)),
        scratch_shapes=[
            pltpu.VMEM((E, FUSED), jnp.float32),   # fused [xij | rnorm] edge features
            pltpu.VMEM((1, 1), jnp.float32),       # running softmax shift
            pltpu.VMEM((E, 1), jnp.float32),       # softmax denominators per edge
            pltpu.VMEM((E, FUSED), jnp.float32),   # weighted message accumulator
        ],
    )

    flops = int(2 * (3 * N * d_model * FUSED + 2 * E * N * FUSED
                     + 2 * T_pad * E * FUSED + T_pad * E * (FUSED + 1)
                     + E * N * FUSED + N * FUSED * d_hid + N * d_hid * d_model))
    transcendentals = int(T_pad * (2 * FUSED + 4) + N * d_hid + 2 * E)
    bytes_accessed = int(sum(a.size * a.dtype.itemsize for a in inputs) + N * d_model * 4)

    out = pl.pallas_call(
        tersoff_block_kernel,
        out_shape=jax.ShapeDtypeStruct((N, d_model), jnp.float32),
        grid_spec=grid_spec,
        compiler_params=pltpu.CompilerParams(
            dimension_semantics=("arbitrary",),      # T axis carries accumulator state
            vmem_limit_bytes=32 * 1024 * 1024,
        ),
        cost_estimate=pl.CostEstimate(flops=flops, transcendentals=transcendentals,
                                      bytes_accessed=bytes_accessed),
    )(*inputs)
    return out


def tersoff_block_ref(x, y, r, src, dst, t_src, t_dst, params):
    """Plain-JAX reference (gather/segment version) for validation."""
    C = params["attn"].shape[-1]
    E = y.shape[0]
    N = x.shape[0]
    xj = x @ params["w_src_T"] + params["b_src"]
    xi = x @ params["w_dst_T"] + params["b_dst"]
    ye = y @ params["w_edge_T"] + params["b_edge"]
    xij = xj[src] + xi[dst] + ye
    rnorm = -r / jnp.linalg.norm(r, axis=1, keepdims=True)
    cos = jnp.clip(jnp.sum(rnorm[t_src] * rnorm[t_dst], axis=-1, keepdims=True), -1.0, 1.0)
    n = jnp.arange(C, dtype=jnp.float32)[None, :]
    z = jnp.cos(n * jnp.arccos(cos))
    e_jik = jax.nn.silu(z + xij[t_src] + xij[t_dst])
    score = jnp.sum(e_jik * params["attn"], axis=-1)
    gmax = jax.ops.segment_max(score, t_dst, num_segments=E)
    exp_s = jnp.exp(score - gmax[t_dst])
    gsum = jax.ops.segment_sum(exp_s, t_dst, num_segments=E)
    a = exp_s / gsum[t_dst]
    ft = jax.ops.segment_sum(a[:, None] * xij[t_src], t_dst, num_segments=E)
    h = jax.ops.segment_sum(ft, dst, num_segments=N)
    hid = jax.nn.silu(h @ params["w1_T"] + params["b1"])
    return hid @ params["w2_T"] + params["b2"]


def make_params(key):
    def lin(k, fan_in, fan_out):
        kw, kb = jax.random.split(k)
        w = jax.random.normal(kw, (fan_in, fan_out), jnp.float32) / np.sqrt(fan_in)
        b = 0.01 * jax.random.normal(kb, (1, fan_out), jnp.float32)
        return w, b

    k = jax.random.split(key, 6)
    w_src_T, b_src = lin(k[0], D_MODEL, D_MSG)
    w_dst_T, b_dst = lin(k[1], D_MODEL, D_MSG)
    w_edge_T, b_edge = lin(k[2], D_MODEL, D_MSG)
    w1_T, b1 = lin(k[3], D_MSG, D_HID)
    w2_T, b2 = lin(k[4], D_HID, D_MODEL)
    attn = jax.random.normal(k[5], (1, D_MSG), jnp.float32) / np.sqrt(D_MSG)
    return dict(
        w_src_T=w_src_T, b_src=b_src,
        w_dst_T=w_dst_T, b_dst=b_dst,
        w_edge_T=w_edge_T, b_edge=b_edge,
        attn=attn, w1_T=w1_T, b1=b1, w2_T=w2_T, b2=b2,
    )


if __name__ == "__main__":
    # --- small deterministic synthetic graph (2 triplet tiles -> real pipeline) ---
    N = 16  # atoms
    src_list, dst_list = [], []
    for i in range(N):
        for d in (1, 2, N - 1, N - 2):          # 4 neighbours per atom
            src_list.append((i + d) % N)        # edge j -> i
            dst_list.append(i)
    src = np.array(src_list, np.int32)
    dst = np.array(dst_list, np.int32)
    E = src.shape[0]                            # 64 edges

    # line graph (triplets): edge (u->v) connects to edge (v->w), w != u
    t_src_list, t_dst_list = [], []
    for e1 in range(E):
        for e2 in range(E):
            if dst[e1] == src[e2] and src[e1] != dst[e2]:
                t_src_list.append(e1)
                t_dst_list.append(e2)
    t_src = np.array(t_src_list, np.int32)
    t_dst = np.array(t_dst_list, np.int32)      # 192 triplets -> T_pad=256, grid=(2,)

    key = jax.random.PRNGKey(0)
    kx, ky, kr, kp = jax.random.split(key, 4)
    x = jax.random.normal(kx, (N, D_MODEL), jnp.float32)   # node features
    y = jax.random.normal(ky, (E, D_MODEL), jnp.float32)   # edge features
    r = jax.random.normal(kr, (E, 3), jnp.float32)         # bond vectors
    params = make_params(kp)

    src_j = jnp.asarray(src)
    dst_j = jnp.asarray(dst)
    t_src_j = jnp.asarray(t_src)
    t_dst_j = jnp.asarray(t_dst)

    out = jax.block_until_ready(
        tersoff_block(x, y, r, src_j, dst_j, t_src_j, t_dst_j, params)
    )
    ref = jax.block_until_ready(
        tersoff_block_ref(x, y, r, src_j, dst_j, t_src_j, t_dst_j, params)
    )

    assert out.shape == (N, D_MODEL)
    max_err = float(jnp.max(jnp.abs(out - ref)))
    assert np.isfinite(max_err) and max_err < 1e-2, f"mismatch: {max_err}"
    print("KERNEL_OK")
</pallas_src>

<mosaic_0001>
module attributes {stable_mosaic.version = 11 : i64} {
  func.func @tersoff_block_kernel(%arg0: i32, %arg1: memref<16x256xf32, #tpu.memory_space<vmem>>, %arg2: memref<64x256xf32, #tpu.memory_space<vmem>>, %arg3: memref<64x8xf32, #tpu.memory_space<vmem>>, %arg4: memref<64x16xbf16, #tpu.memory_space<vmem>>, %arg5: memref<64x16xbf16, #tpu.memory_space<vmem>>, %arg6: memref<128x64xbf16, #tpu.memory_space<vmem>>, %arg7: memref<128x64xbf16, #tpu.memory_space<vmem>>, %arg8: memref<8x128xf32, #tpu.memory_space<vmem>>, %arg9: memref<1x128xf32, #tpu.memory_space<vmem>>, %arg10: memref<256x128xf32, #tpu.memory_space<vmem>>, %arg11: memref<1x128xf32, #tpu.memory_space<vmem>>, %arg12: memref<256x128xf32, #tpu.memory_space<vmem>>, %arg13: memref<1x128xf32, #tpu.memory_space<vmem>>, %arg14: memref<256x128xf32, #tpu.memory_space<vmem>>, %arg15: memref<1x128xf32, #tpu.memory_space<vmem>>, %arg16: memref<128x1024xf32, #tpu.memory_space<vmem>>, %arg17: memref<1x1024xf32, #tpu.memory_space<vmem>>, %arg18: memref<1024x256xf32, #tpu.memory_space<vmem>>, %arg19: memref<1x256xf32, #tpu.memory_space<vmem>>, %arg20: memref<16x256xf32, #tpu.memory_space<vmem>>, %arg21: memref<64x128xf32, #tpu.memory_space<vmem>>, %arg22: memref<1x1xf32, #tpu.memory_space<vmem>>, %arg23: memref<64x1xf32, #tpu.memory_space<vmem>>, %arg24: memref<64x128xf32, #tpu.memory_space<vmem>>) attributes {dimension_semantics = [#tpu.dimension_semantics<arbitrary>], iteration_bounds = array<i64: 2>, scalar_prefetch = 0 : i64, scratch_operands = 4 : i64, tpu.core_type = #tpu.core_type<tc>, window_params = [{pipeline_mode = #tpu.pipeline_mode<synchronous>, transform_indices = @transform_0, window_bounds = array<i64: 16, 256>}, {pipeline_mode = #tpu.pipeline_mode<synchronous>, transform_indices = @transform_1, window_bounds = array<i64: 64, 256>}, {pipeline_mode = #tpu.pipeline_mode<synchronous>, transform_indices = @transform_2, window_bounds = array<i64: 64, 8>}, {pipeline_mode = #tpu.pipeline_mode<synchronous>, transform_indices = @transform_3, window_bounds = array<i64: 64, 16>}, {pipeline_mode = #tpu.pipeline_mode<synchronous>, transform_indices = @transform_4, window_bounds = array<i64: 64, 16>}, {transform_indices = @transform_5, window_bounds = array<i64: 128, 64>}, {transform_indices = @transform_6, window_bounds = array<i64: 128, 64>}, {pipeline_mode = #tpu.pipeline_mode<synchronous>, transform_indices = @transform_7, window_bounds = array<i64: 8, 128>}, {pipeline_mode = #tpu.pipeline_mode<synchronous>, transform_indices = @transform_8, window_bounds = array<i64: 1, 128>}, {pipeline_mode = #tpu.pipeline_mode<synchronous>, transform_indices = @transform_9, window_bounds = array<i64: 256, 128>}, {pipeline_mode = #tpu.pipeline_mode<synchronous>, transform_indices = @transform_10, window_bounds = array<i64: 1, 128>}, {pipeline_mode = #tpu.pipeline_mode<synchronous>, transform_indices = @transform_11, window_bounds = array<i64: 256, 128>}, {pipeline_mode = #tpu.pipeline_mode<synchronous>, transform_indices = @transform_12, window_bounds = array<i64: 1, 128>}, {pipeline_mode = #tpu.pipeline_mode<synchronous>, transform_indices = @transform_13, window_bounds = array<i64: 256, 128>}, {pipeline_mode = #tpu.pipeline_mode<synchronous>, transform_indices = @transform_14, window_bounds = array<i64: 1, 128>}, {pipeline_mode = #tpu.pipeline_mode<synchronous>, transform_indices = @transform_15, window_bounds = array<i64: 128, 1024>}, {pipeline_mode = #tpu.pipeline_mode<synchronous>, transform_indices = @transform_16, window_bounds = array<i64: 1, 1024>}, {pipeline_mode = #tpu.pipeline_mode<synchronous>, transform_indices = @transform_17, window_bounds = array<i64: 1024, 256>}, {pipeline_mode = #tpu.pipeline_mode<synchronous>, transform_indices = @transform_18, window_bounds = array<i64: 1, 256>}, {pipeline_mode = #tpu.pipeline_mode<synchronous>, transform_indices = @transform_19, window_bounds = array<i64: 16, 256>}]} {
    %c0_i32 = arith.constant 0 : i32
    %0 = arith.cmpi eq, %arg0, %c0_i32 : i32
    %1 = arith.extui %0 : i1 to i32
    %c0_i32_0 = arith.constant 0 : i32
    %2 = arith.cmpi ne, %1, %c0_i32_0 : i32
    scf.if %2 {
      %c0_42 = arith.constant 0 : index
      %c0_43 = arith.constant 0 : index
      %184 = vector.load %arg1[%c0_42, %c0_43] : memref<16x256xf32, #tpu.memory_space<vmem>>, vector<16x256xf32>
      %c0_44 = arith.constant 0 : index
      %c0_45 = arith.constant 0 : index
      %185 = vector.load %arg2[%c0_44, %c0_45] : memref<64x256xf32, #tpu.memory_space<vmem>>, vector<64x256xf32>
      %c0_46 = arith.constant 0 : index
      %c0_47 = arith.constant 0 : index
      %186 = vector.load %arg10[%c0_46, %c0_47] : memref<256x128xf32, #tpu.memory_space<vmem>>, vector<256x128xf32>
      %cst_48 = arith.constant dense<0.000000e+00> : vector<16x128xf32>
      %187 = tpu.matmul %184, %186, %cst_48 {dimension_numbers = #tpu.dot_dimension_numbers<[1], [0], [0], [1], [0, 0, 1, 1], [], []>} : vector<16x256xf32>, vector<256x128xf32>, vector<16x128xf32> -> vector<16x128xf32>
      %c0_49 = arith.constant 0 : index
      %c0_50 = arith.constant 0 : index
      %188 = vector.load %arg11[%c0_49, %c0_50] : memref<1x128xf32, #tpu.memory_space<vmem>>, vector<1x128xf32>
      %189 = vector.broadcast %188 : vector<1x128xf32> to vector<16x128xf32>
      %190 = arith.addf %187, %189 : vector<16x128xf32>
      %c0_51 = arith.constant 0 : index
      %c0_52 = arith.constant 0 : index
      %191 = vector.load %arg12[%c0_51, %c0_52] : memref<256x128xf32, #tpu.memory_space<vmem>>, vector<256x128xf32>
      %cst_53 = arith.constant dense<0.000000e+00> : vector<16x128xf32>
      %192 = tpu.matmul %184, %191, %cst_53 {dimension_numbers = #tpu.dot_dimension_numbers<[1], [0], [0], [1], [0, 0, 1, 1], [], []>} : vector<16x256xf32>, vector<256x128xf32>, vector<16x128xf32> -> vector<16x128xf32>
      %c0_54 = arith.constant 0 : index
      %c0_55 = arith.constant 0 : index
      %193 = vector.load %arg13[%c0_54, %c0_55] : memref<1x128xf32, #tpu.memory_space<vmem>>, vector<1x128xf32>
      %194 = vector.broadcast %193 : vector<1x128xf32> to vector<16x128xf32>
      %195 = arith.addf %192, %194 : vector<16x128xf32>
      %c0_56 = arith.constant 0 : index
      %c0_57 = arith.constant 0 : index
      %196 = vector.load %arg14[%c0_56, %c0_57] : memref<256x128xf32, #tpu.memory_space<vmem>>, vector<256x128xf32>
      %cst_58 = arith.constant dense<0.000000e+00> : vector<64x128xf32>
      %197 = tpu.matmul %185, %196, %cst_58 {dimension_numbers = #tpu.dot_dimension_numbers<[1], [0], [0], [1], [0, 0, 1, 1], [], []>} : vector<64x256xf32>, vector<256x128xf32>, vector<64x128xf32> -> vector<64x128xf32>
      %c0_59 = arith.constant 0 : index
      %c0_60 = arith.constant 0 : index
      %198 = vector.load %arg15[%c0_59, %c0_60] : memref<1x128xf32, #tpu.memory_space<vmem>>, vector<1x128xf32>
      %199 = vector.broadcast %198 : vector<1x128xf32> to vector<64x128xf32>
      %200 = arith.addf %197, %199 : vector<64x128xf32>
      %c0_61 = arith.constant 0 : index
      %c0_62 = arith.constant 0 : index
      %201 = vector.load %arg4[%c0_61, %c0_62] : memref<64x16xbf16, #tpu.memory_space<vmem>>, vector<64x16xbf16>
      %202 = arith.extf %201 : vector<64x16xbf16> to vector<64x16xf32>
      %c0_63 = arith.constant 0 : index
      %c0_64 = arith.constant 0 : index
      %203 = vector.load %arg5[%c0_63, %c0_64] : memref<64x16xbf16, #tpu.memory_space<vmem>>, vector<64x16xbf16>
      %204 = arith.extf %203 : vector<64x16xbf16> to vector<64x16xf32>
      %cst_65 = arith.constant dense<0.000000e+00> : vector<64x128xf32>
      %205 = tpu.matmul %202, %190, %cst_65 {dimension_numbers = #tpu.dot_dimension_numbers<[1], [0], [0], [1], [0, 0, 1, 1], [], []>} : vector<64x16xf32>, vector<16x128xf32>, vector<64x128xf32> -> vector<64x128xf32>
      %cst_66 = arith.constant dense<0.000000e+00> : vector<64x128xf32>
      %206 = tpu.matmul %204, %195, %cst_66 {dimension_numbers = #tpu.dot_dimension_numbers<[1], [0], [0], [1], [0, 0, 1, 1], [], []>} : vector<64x16xf32>, vector<16x128xf32>, vector<64x128xf32> -> vector<64x128xf32>
      %207 = arith.addf %205, %206 : vector<64x128xf32>
      %208 = arith.addf %207, %200 : vector<64x128xf32>
      %c0_67 = arith.constant 0 : index
      %c0_68 = arith.constant 0 : index
      %209 = vector.load %arg3[%c0_67, %c0_68] : memref<64x8xf32, #tpu.memory_space<vmem>>, vector<64x8xf32>
      %cst_69 = arith.constant 0.000000e+00 : f32
      %210 = vector.broadcast %cst_69 : f32 to vector<64x8xf32>
      %211 = arith.subf %210, %209 : vector<64x8xf32>
      %212 = arith.mulf %209, %209 : vector<64x8xf32>
      %cst_70 = arith.constant dense<0.000000e+00> : vector<64xf32>
      %213 = vector.multi_reduction <add>, %212, %cst_70 [1] : vector<64x8xf32> to vector<64xf32>
      %214 = vector.shape_cast %213 : vector<64xf32> to vector<64x1xf32>
      %215 = math.rsqrt %214 : vector<64x1xf32>
      %216 = vector.broadcast %215 : vector<64x1xf32> to vector<64x8xf32>
      %217 = arith.mulf %211, %216 : vector<64x8xf32>
      %c0_71 = arith.constant 0 : index
      %c0_72 = arith.constant 0 : index
      %218 = vector.load %arg8[%c0_71, %c0_72] : memref<8x128xf32, #tpu.memory_space<vmem>>, vector<8x128xf32>
      %cst_73 = arith.constant dense<0.000000e+00> : vector<64x128xf32>
      %219 = tpu.matmul %217, %218, %cst_73 {dimension_numbers = #tpu.dot_dimension_numbers<[1], [0], [0], [1], [0, 0, 1, 1], [], []>} : vector<64x8xf32>, vector<8x128xf32>, vector<64x128xf32> -> vector<64x128xf32>
      %220 = arith.addf %208, %219 : vector<64x128xf32>
      %c0_74 = arith.constant 0 : index
      %c0_75 = arith.constant 0 : index
      %221 = vector.load %arg21[%c0_74, %c0_75] : memref<64x128xf32, #tpu.memory_space<vmem>>, vector<64x128xf32>
      tpu.vector_store %arg21[%c0_74, %c0_75], %220 {strides = array<i32>} : memref<64x128xf32, #tpu.memory_space<vmem>>, vector<64x128xf32>,
      %cst_76 = arith.constant -1.000000e+30 : f32
      %222 = vector.broadcast %cst_76 : f32 to vector<1x1xf32>
      %c0_77 = arith.constant 0 : index
      %c0_78 = arith.constant 0 : index
      %223 = vector.load %arg22[%c0_77, %c0_78] : memref<1x1xf32, #tpu.memory_space<vmem>>, vector<1x1xf32>
      tpu.vector_store %arg22[%c0_77, %c0_78], %222 {strides = array<i32>} : memref<1x1xf32, #tpu.memory_space<vmem>>, vector<1x1xf32>,
      %cst_79 = arith.constant 0.000000e+00 : f32
      %224 = vector.broadcast %cst_79 : f32 to vector<64x1xf32>
      %c0_80 = arith.constant 0 : index
      %c0_81 = arith.constant 0 : index
      %225 = vector.load %arg23[%c0_80, %c0_81] : memref<64x1xf32, #tpu.memory_space<vmem>>, vector<64x1xf32>
      tpu.vector_store %arg23[%c0_80, %c0_81], %224 {strides = array<i32>} : memref<64x1xf32, #tpu.memory_space<vmem>>, vector<64x1xf32>,
      %cst_82 = arith.constant 0.000000e+00 : f32
      %226 = vector.broadcast %cst_82 : f32 to vector<64x128xf32>
      %c0_83 = arith.constant 0 : index
      %c0_84 = arith.constant 0 : index
      %227 = vector.load %arg24[%c0_83, %c0_84] : memref<64x128xf32, #tpu.memory_space<vmem>>, vector<64x128xf32>
      tpu.vector_store %arg24[%c0_83, %c0_84], %226 {strides = array<i32>} : memref<64x128xf32, #tpu.memory_space<vmem>>, vector<64x128xf32>,
    } else {
    }
    %c0 = arith.constant 0 : index
    %c0_1 = arith.constant 0 : index
    %3 = vector.load %arg6[%c0, %c0_1] : memref<128x64xbf16, #tpu.memory_space<vmem>>, vector<128x64xbf16>
    %4 = arith.extf %3 : vector<128x64xbf16> to vector<128x64xf32>
    %c0_2 = arith.constant 0 : index
    %c0_3 = arith.constant 0 : index
    %5 = vector.load %arg7[%c0_2, %c0_3] : memref<128x64xbf16, #tpu.memory_space<vmem>>, vector<128x64xbf16>
    %6 = arith.extf %5 : vector<128x64xbf16> to vector<128x64xf32>
    %c0_4 = arith.constant 0 : index
    %c0_5 = arith.constant 0 : index
    %7 = vector.load %arg21[%c0_4, %c0_5] : memref<64x128xf32, #tpu.memory_space<vmem>>, vector<64x128xf32>
    %cst = arith.constant dense<0.000000e+00> : vector<128x128xf32>
    %8 = tpu.matmul %4, %7, %cst {dimension_numbers = #tpu.dot_dimension_numbers<[1], [0], [0], [1], [0, 0, 1, 1], [], []>} : vector<128x64xf32>, vector<64x128xf32>, vector<128x128xf32> -> vector<128x128xf32>
    %cst_6 = arith.constant dense<0.000000e+00> : vector<128x128xf32>
    %9 = tpu.matmul %6, %7, %cst_6 {dimension_numbers = #tpu.dot_dimension_numbers<[1], [0], [0], [1], [0, 0, 1, 1], [], []>} : vector<128x64xf32>, vector<64x128xf32>, vector<128x128xf32> -> vector<128x128xf32>
    %10 = tpu.iota {dimensions = array<i32: 1>} : vector<1x128xi32>
    %c64_i32 = arith.constant 64 : i32
    %11 = vector.broadcast %c64_i32 : i32 to vector<1x128xi32>
    %12 = arith.cmpi sge, %10, %11 : vector<1x128xi32>
    %13 = arith.mulf %8, %9 : vector<128x128xf32>
    %cst_7 = arith.constant 0.000000e+00 : f32
    %14 = vector.shape_cast %12 : vector<1x128xi1> to vector<1x128xi1>
    %15 = vector.broadcast %14 : vector<1x128xi1> to vector<128x128xi1>
    %16 = vector.broadcast %cst_7 : f32 to vector<128x128xf32>
    %17 = arith.select %15, %13, %16 : vector<128x128xi1>, vector<128x128xf32>
    %cst_8 = arith.constant dense<0.000000e+00> : vector<128xf32>
    %18 = vector.multi_reduction <add>, %17, %cst_8 [1] : vector<128x128xf32> to vector<128xf32>
    %19 = vector.shape_cast %18 : vector<128xf32> to vector<128x1xf32>
    %cst_9 = arith.constant -1.000000e+00 : f32
    %cst_10 = arith.constant 1.000000e+00 : f32
    %20 = vector.broadcast %cst_9 : f32 to vector<128x1xf32>
    %21 = arith.maximumf %20, %19 : vector<128x1xf32>
    %22 = vector.broadcast %cst_10 : f32 to vector<128x1xf32>
    %23 = arith.minimumf %22, %21 : vector<128x1xf32>
    %24 = arith.mulf %23, %23 : vector<128x1xf32>
    %cst_11 = arith.constant 1.000000e+00 : f32
    %25 = vector.broadcast %cst_11 : f32 to vector<128x1xf32>
    %26 = arith.subf %25, %24 : vector<128x1xf32>
    %cst_12 = arith.constant 0.000000e+00 : f32
    %27 = vector.broadcast %cst_12 : f32 to vector<128x1xf32>
    %28 = arith.maximumf %26, %27 : vector<128x1xf32>
    %29 = math.sqrt %28 : vector<128x1xf32>
    %cst_13 = arith.constant 1.000000e+00 : f32
    %30 = vector.broadcast %cst_13 : f32 to vector<128x1xf32>
    %31 = tpu.concatenate %30, %23 in 1 : vector<128x1xf32>, vector<128x1xf32> -> vector<128x2xf32>
    %cst_14 = arith.constant 0.000000e+00 : f32
    %32 = vector.broadcast %cst_14 : f32 to vector<128x1xf32>
    %33 = tpu.concatenate %32, %29 in 1 : vector<128x1xf32>, vector<128x1xf32> -> vector<128x2xf32>
    %34 = arith.mulf %23, %23 : vector<128x1xf32>
    %35 = arith.mulf %29, %29 : vector<128x1xf32>
    %36 = arith.subf %34, %35 : vector<128x1xf32>
    %cst_15 = arith.constant 2.000000e+00 : f32
    %37 = vector.broadcast %cst_15 : f32 to vector<128x1xf32>
    %38 = arith.mulf %37, %23 : vector<128x1xf32>
    %39 = arith.mulf %38, %29 : vector<128x1xf32>
    %40 = vector.broadcast %36 : vector<128x1xf32> to vector<128x2xf32>
    %41 = arith.mulf %40, %31 : vector<128x2xf32>
    %42 = vector.broadcast %39 : vector<128x1xf32> to vector<128x2xf32>
    %43 = arith.mulf %42, %33 : vector<128x2xf32>
    %44 = arith.subf %41, %43 : vector<128x2xf32>
    %45 = vector.broadcast %39 : vector<128x1xf32> to vector<128x2xf32>
    %46 = arith.mulf %45, %31 : vector<128x2xf32>
    %47 = vector.broadcast %36 : vector<128x1xf32> to vector<128x2xf32>
    %48 = arith.mulf %47, %33 : vector<128x2xf32>
    %49 = arith.addf %46, %48 : vector<128x2xf32>
    %50 = tpu.concatenate %31, %44 in 1 : vector<128x2xf32>, vector<128x2xf32> -> vector<128x4xf32>
    %51 = tpu.concatenate %33, %49 in 1 : vector<128x2xf32>, vector<128x2xf32> -> vector<128x4xf32>
    %52 = arith.mulf %36, %36 : vector<128x1xf32>
    %53 = arith.mulf %39, %39 : vector<128x1xf32>
    %54 = arith.subf %52, %53 : vector<128x1xf32>
    %cst_16 = arith.constant 2.000000e+00 : f32
    %55 = vector.broadcast %cst_16 : f32 to vector<128x1xf32>
    %56 = arith.mulf %55, %36 : vector<128x1xf32>
    %57 = arith.mulf %56, %39 : vector<128x1xf32>
    %58 = vector.broadcast %54 : vector<128x1xf32> to vector<128x4xf32>
    %59 = arith.mulf %58, %50 : vector<128x4xf32>
    %60 = vector.broadcast %57 : vector<128x1xf32> to vector<128x4xf32>
    %61 = arith.mulf %60, %51 : vector<128x4xf32>
    %62 = arith.subf %59, %61 : vector<128x4xf32>
    %63 = vector.broadcast %57 : vector<128x1xf32> to vector<128x4xf32>
    %64 = arith.mulf %63, %50 : vector<128x4xf32>
    %65 = vector.broadcast %54 : vector<128x1xf32> to vector<128x4xf32>
    %66 = arith.mulf %65, %51 : vector<128x4xf32>
    %67 = arith.addf %64, %66 : vector<128x4xf32>
    %68 = tpu.concatenate %50, %62 in 1 : vector<128x4xf32>, vector<128x4xf32> -> vector<128x8xf32>
    %69 = tpu.concatenate %51, %67 in 1 : vector<128x4xf32>, vector<128x4xf32> -> vector<128x8xf32>
    %70 = arith.mulf %54, %54 : vector<128x1xf32>
    %71 = arith.mulf %57, %57 : vector<128x1xf32>
    %72 = arith.subf %70, %71 : vector<128x1xf32>
    %cst_17 = arith.constant 2.000000e+00 : f32
    %73 = vector.broadcast %cst_17 : f32 to vector<128x1xf32>
    %74 = arith.mulf %73, %54 : vector<128x1xf32>
    %75 = arith.mulf %74, %57 : vector<128x1xf32>
    %76 = vector.broadcast %72 : vector<128x1xf32> to vector<128x8xf32>
    %77 = arith.mulf %76, %68 : vector<128x8xf32>
    %78 = vector.broadcast %75 : vector<128x1xf32> to vector<128x8xf32>
    %79 = arith.mulf %78, %69 : vector<128x8xf32>
    %80 = arith.subf %77, %79 : vector<128x8xf32>
    %81 = vector.broadcast %75 : vector<128x1xf32> to vector<128x8xf32>
    %82 = arith.mulf %81, %68 : vector<128x8xf32>
    %83 = vector.broadcast %72 : vector<128x1xf32> to vector<128x8xf32>
    %84 = arith.mulf %83, %69 : vector<128x8xf32>
    %85 = arith.addf %82, %84 : vector<128x8xf32>
    %86 = tpu.concatenate %68, %80 in 1 : vector<128x8xf32>, vector<128x8xf32> -> vector<128x16xf32>
    %87 = tpu.concatenate %69, %85 in 1 : vector<128x8xf32>, vector<128x8xf32> -> vector<128x16xf32>
    %88 = arith.mulf %72, %72 : vector<128x1xf32>
    %89 = arith.mulf %75, %75 : vector<128x1xf32>
    %90 = arith.subf %88, %89 : vector<128x1xf32>
    %cst_18 = arith.constant 2.000000e+00 : f32
    %91 = vector.broadcast %cst_18 : f32 to vector<128x1xf32>
    %92 = arith.mulf %91, %72 : vector<128x1xf32>
    %93 = arith.mulf %92, %75 : vector<128x1xf32>
    %94 = vector.broadcast %90 : vector<128x1xf32> to vector<128x16xf32>
    %95 = arith.mulf %94, %86 : vector<128x16xf32>
    %96 = vector.broadcast %93 : vector<128x1xf32> to vector<128x16xf32>
    %97 = arith.mulf %96, %87 : vector<128x16xf32>
    %98 = arith.subf %95, %97 : vector<128x16xf32>
    %99 = vector.broadcast %93 : vector<128x1xf32> to vector<128x16xf32>
    %100 = arith.mulf %99, %86 : vector<128x16xf32>
    %101 = vector.broadcast %90 : vector<128x1xf32> to vector<128x16xf32>
    %102 = arith.mulf %101, %87 : vector<128x16xf32>
    %103 = arith.addf %100, %102 : vector<128x16xf32>
    %104 = tpu.concatenate %86, %98 in 1 : vector<128x16xf32>, vector<128x16xf32> -> vector<128x32xf32>
    %105 = tpu.concatenate %87, %103 in 1 : vector<128x16xf32>, vector<128x16xf32> -> vector<128x32xf32>
    %106 = arith.mulf %90, %90 : vector<128x1xf32>
    %107 = arith.mulf %93, %93 : vector<128x1xf32>
    %108 = arith.subf %106, %107 : vector<128x1xf32>
    %cst_19 = arith.constant 2.000000e+00 : f32
    %109 = vector.broadcast %cst_19 : f32 to vector<128x1xf32>
    %110 = arith.mulf %109, %90 : vector<128x1xf32>
    %111 = arith.mulf %110, %93 : vector<128x1xf32>
    %112 = vector.broadcast %108 : vector<128x1xf32> to vector<128x32xf32>
    %113 = arith.mulf %112, %104 : vector<128x32xf32>
    %114 = vector.broadcast %111 : vector<128x1xf32> to vector<128x32xf32>
    %115 = arith.mulf %114, %105 : vector<128x32xf32>
    %116 = arith.subf %113, %115 : vector<128x32xf32>
    %117 = vector.broadcast %111 : vector<128x1xf32> to vector<128x32xf32>
    %118 = arith.mulf %117, %104 : vector<128x32xf32>
    %119 = vector.broadcast %108 : vector<128x1xf32> to vector<128x32xf32>
    %120 = arith.mulf %119, %105 : vector<128x32xf32>
    %121 = arith.addf %118, %120 : vector<128x32xf32>
    %122 = tpu.concatenate %104, %116 in 1 : vector<128x32xf32>, vector<128x32xf32> -> vector<128x64xf32>
    %123 = tpu.concatenate %105, %121 in 1 : vector<128x32xf32>, vector<128x32xf32> -> vector<128x64xf32>
    %124 = arith.mulf %108, %108 : vector<128x1xf32>
    %125 = arith.mulf %111, %111 : vector<128x1xf32>
    %126 = arith.subf %124, %125 : vector<128x1xf32>
    %cst_20 = arith.constant 2.000000e+00 : f32
    %127 = vector.broadcast %cst_20 : f32 to vector<128x1xf32>
    %128 = arith.mulf %127, %108 : vector<128x1xf32>
    %129 = arith.mulf %128, %111 : vector<128x1xf32>
    %130 = vector.broadcast %126 : vector<128x1xf32> to vector<128x64xf32>
    %131 = arith.mulf %130, %122 : vector<128x64xf32>
    %132 = vector.broadcast %129 : vector<128x1xf32> to vector<128x64xf32>
    %133 = arith.mulf %132, %123 : vector<128x64xf32>
    %134 = arith.subf %131, %133 : vector<128x64xf32>
    %135 = tpu.concatenate %122, %134 in 1 : vector<128x64xf32>, vector<128x64xf32> -> vector<128x128xf32>
    %136 = arith.addf %135, %8 : vector<128x128xf32>
    %137 = arith.addf %136, %9 : vector<128x128xf32>
    %138 = arith.negf %137 : vector<128x128xf32>
    %139 = math.exp %138 : vector<128x128xf32>
    %cst_21 = arith.constant 1.000000e+00 : f32
    %140 = vector.broadcast %cst_21 : f32 to vector<128x128xf32>
    %141 = arith.addf %140, %139 : vector<128x128xf32>
    %142 = arith.divf %140, %141 : vector<128x128xf32>
    %143 = arith.mulf %137, %142 : vector<128x128xf32>
    %c0_22 = arith.constant 0 : index
    %c0_23 = arith.constant 0 : index
    %144 = vector.load %arg9[%c0_22, %c0_23] : memref<1x128xf32, #tpu.memory_space<vmem>>, vector<1x128xf32>
    %145 = vector.broadcast %144 : vector<1x128xf32> to vector<128x128xf32>
    %146 = arith.mulf %143, %145 : vector<128x128xf32>
    %cst_24 = arith.constant dense<0.000000e+00> : vector<128xf32>
    %147 = vector.multi_reduction <add>, %146, %cst_24 [1] : vector<128x128xf32> to vector<128xf32>
    %148 = vector.shape_cast %147 : vector<128xf32> to vector<128x1xf32>
    %cst_25 = arith.constant dense<0xFF800000> : vector<1xf32>
    %149 = vector.multi_reduction <maximumf>, %148, %cst_25 [0] : vector<128x1xf32> to vector<1xf32>
    %150 = vector.shape_cast %149 : vector<1xf32> to vector<1x1xf32>
    %151 = vector.broadcast %150 : vector<1x1xf32> to vector<128x1xf32>
    %152 = arith.subf %148, %151 : vector<128x1xf32>
    %cst_26 = arith.constant 6.000000e+01 : f32
    %153 = vector.broadcast %cst_26 : f32 to vector<128x1xf32>
    %154 = arith.minimumf %152, %153 : vector<128x1xf32>
    %155 = math.exp %154 : vector<128x1xf32>
    %cst_27 = arith.constant dense<0.000000e+00> : vector<64x1xf32>
    %156 = tpu.matmul %6, %155, %cst_27 {dimension_numbers = #tpu.dot_dimension_numbers<[0], [0], [1], [1], [0, 1, 1, 1], [], []>} : vector<128x64xf32>, vector<128x1xf32>, vector<64x1xf32> -> vector<64x1xf32>
    %157 = vector.broadcast %155 : vector<128x1xf32> to vector<128x128xf32>
    %158 = arith.mulf %157, %8 : vector<128x128xf32>
    %cst_28 = arith.constant dense<0.000000e+00> : vector<64x128xf32>
    %159 = tpu.matmul %6, %158, %cst_28 {dimension_numbers = #tpu.dot_dimension_numbers<[0], [0], [1], [1], [0, 1, 1, 1], [], []>} : vector<128x64xf32>, vector<128x128xf32>, vector<64x128xf32> -> vector<64x128xf32>
    %c0_29 = arith.constant 0 : index
    %c0_30 = arith.constant 0 : index
    %160 = vector.load %arg22[%c0_29, %c0_30] : memref<1x1xf32, #tpu.memory_space<vmem>>, vector<1x1xf32>
    %161 = arith.maximumf %160, %150 : vector<1x1xf32>
    %162 = arith.subf %160, %161 : vector<1x1xf32>
    %163 = math.exp %162 : vector<1x1xf32>
    %164 = arith.subf %150, %161 : vector<1x1xf32>
    %165 = math.exp %164 : vector<1x1xf32>
    %c0_31 = arith.constant 0 : index
    %c0_32 = arith.constant 0 : index
    %166 = vector.load %arg22[%c0_31, %c0_32] : memref<1x1xf32, #tpu.memory_space<vmem>>, vector<1x1xf32>
    tpu.vector_store %arg22[%c0_31, %c0_32], %161 {strides = array<i32>} : memref<1x1xf32, #tpu.memory_space<vmem>>, vector<1x1xf32>,
    %c0_33 = arith.constant 0 : index
    %c0_34 = arith.constant 0 : index
    %167 = vector.load %arg23[%c0_33, %c0_34] : memref<64x1xf32, #tpu.memory_space<vmem>>, vector<64x1xf32>
    %168 = vector.broadcast %163 : vector<1x1xf32> to vector<64x1xf32>
    %169 = arith.mulf %168, %167 : vector<64x1xf32>
    %170 = vector.broadcast %165 : vector<1x1xf32> to vector<64x1xf32>
    %171 = arith.mulf %170, %156 : vector<64x1xf32>
    %172 = arith.addf %169, %171 : vector<64x1xf32>
    %c0_35 = arith.constant 0 : index
    %c0_36 = arith.constant 0 : index
    %173 = vector.load %arg23[%c0_35, %c0_36] : memref<64x1xf32, #tpu.memory_space<vmem>>, vector<64x1xf32>
    tpu.vector_store %arg23[%c0_35, %c0_36], %172 {strides = array<i32>} : memref<64x1xf32, #tpu.memory_space<vmem>>, vector<64x1xf32>,
    %c0_37 = arith.constant 0 : index
    %c0_38 = arith.constant 0 : index
    %174 = vector.load %arg24[%c0_37, %c0_38] : memref<64x128xf32, #tpu.memory_space<vmem>>, vector<64x128xf32>
    %175 = vector.broadcast %163 : vector<1x1xf32> to vector<64x128xf32>
    %176 = arith.mulf %175, %174 : vector<64x128xf32>
    %177 = vector.broadcast %165 : vector<1x1xf32> to vector<64x128xf32>
    %178 = arith.mulf %177, %159 : vector<64x128xf32>
    %179 = arith.addf %176, %178 : vector<64x128xf32>
    %c0_39 = arith.constant 0 : index
    %c0_40 = arith.constant 0 : index
    %180 = vector.load %arg24[%c0_39, %c0_40] : memref<64x128xf32, #tpu.memory_space<vmem>>, vector<64x128xf32>
    tpu.vector_store %arg24[%c0_39, %c0_40], %179 {strides = array<i32>} : memref<64x128xf32, #tpu.memory_space<vmem>>, vector<64x128xf32>,
    %c1_i32 = arith.constant 1 : i32
    %181 = arith.cmpi eq, %arg0, %c1_i32 : i32
    %182 = arith.extui %181 : i1 to i32
    %c0_i32_41 = arith.constant 0 : i32
    %183 = arith.cmpi ne, %182, %c0_i32_41 : i32
    scf.if %183 {
      %c0_42 = arith.constant 0 : index
      %c0_43 = arith.constant 0 : index
      %184 = vector.load %arg23[%c0_42, %c0_43] : memref<64x1xf32, #tpu.memory_space<vmem>>, vector<64x1xf32>
      %cst_44 = arith.constant 0.000000e+00 : f32
      %185 = vector.broadcast %cst_44 : f32 to vector<64x1xf32>
      %186 = arith.cmpf ogt, %184, %185 : vector<64x1xf32>
      %cst_45 = arith.constant 1.000000e+00 : f32
      %187 = vector.broadcast %cst_45 : f32 to vector<64x1xf32>
      %188 = arith.divf %187, %184 : vector<64x1xf32>
      %cst_46 = arith.constant 0.000000e+00 : f32
      %189 = vector.broadcast %cst_46 : f32 to vector<64x1xf32>
      %190 = arith.select %186, %188, %189 : vector<64x1xi1>, vector<64x1xf32>
      %c0_47 = arith.constant 0 : index
      %c0_48 = arith.constant 0 : index
      %191 = vector.load %arg24[%c0_47, %c0_48] : memref<64x128xf32, #tpu.memory_space<vmem>>, vector<64x128xf32>
      %192 = vector.broadcast %190 : vector<64x1xf32> to vector<64x128xf32>
      %193 = arith.mulf %191, %192 : vector<64x128xf32>
      %c0_49 = arith.constant 0 : index
      %c0_50 = arith.constant 0 : index
      %194 = vector.load %arg5[%c0_49, %c0_50] : memref<64x16xbf16, #tpu.memory_space<vmem>>, vector<64x16xbf16>
      %195 = arith.extf %194 : vector<64x16xbf16> to vector<64x16xf32>
      %cst_51 = arith.constant dense<0.000000e+00> : vector<16x128xf32>
      %196 = tpu.matmul %195, %193, %cst_51 {dimension_numbers = #tpu.dot_dimension_numbers<[0], [0], [1], [1], [0, 1, 1, 1], [], []>} : vector<64x16xf32>, vector<64x128xf32>, vector<16x128xf32> -> vector<16x128xf32>
      %c0_52 = arith.constant 0 : index
      %c0_53 = arith.constant 0 : index
      %197 = vector.load %arg16[%c0_52, %c0_53] : memref<128x1024xf32, #tpu.memory_space<vmem>>, vector<128x1024xf32>
      %cst_54 = arith.constant dense<0.000000e+00> : vector<16x1024xf32>
      %198 = tpu.matmul %196, %197, %cst_54 {dimension_numbers = #tpu.dot_dimension_numbers<[1], [0], [0], [1], [0, 0, 1, 1], [], []>} : vector<16x128xf32>, vector<128x1024xf32>, vector<16x1024xf32> -> vector<16x1024xf32>
      %c0_55 = arith.constant 0 : index
      %c0_56 = arith.constant 0 : index
      %199 = vector.load %arg17[%c0_55, %c0_56] : memref<1x1024xf32, #tpu.memory_space<vmem>>, vector<1x1024xf32>
      %200 = vector.broadcast %199 : vector<1x1024xf32> to vector<16x1024xf32>
      %201 = arith.addf %198, %200 : vector<16x1024xf32>
      %202 = arith.negf %201 : vector<16x1024xf32>
      %203 = math.exp %202 : vector<16x1024xf32>
      %cst_57 = arith.constant 1.000000e+00 : f32
      %204 = vector.broadcast %cst_57 : f32 to vector<16x1024xf32>
      %205 = arith.addf %204, %203 : vector<16x1024xf32>
      %206 = arith.divf %204, %205 : vector<16x1024xf32>
      %207 = arith.mulf %201, %206 : vector<16x1024xf32>
      %c0_58 = arith.constant 0 : index
      %c0_59 = arith.constant 0 : index
      %208 = vector.load %arg18[%c0_58, %c0_59] : memref<1024x256xf32, #tpu.memory_space<vmem>>, vector<1024x256xf32>
      %cst_60 = arith.constant dense<0.000000e+00> : vector<16x256xf32>
      %209 = tpu.matmul %207, %208, %cst_60 {dimension_numbers = #tpu.dot_dimension_numbers<[1], [0], [0], [1], [0, 0, 1, 1], [], []>} : vector<16x1024xf32>, vector<1024x256xf32>, vector<16x256xf32> -> vector<16x256xf32>
      %c0_61 = arith.constant 0 : index
      %c0_62 = arith.constant 0 : index
      %210 = vector.load %arg19[%c0_61, %c0_62] : memref<1x256xf32, #tpu.memory_space<vmem>>, vector<1x256xf32>
      %211 = vector.broadcast %210 : vector<1x256xf32> to vector<16x256xf32>
      %212 = arith.addf %209, %211 : vector<16x256xf32>
      %c0_63 = arith.constant 0 : index
      %c0_64 = arith.constant 0 : index
      %213 = vector.load %arg20[%c0_63, %c0_64] : memref<16x256xf32, #tpu.memory_space<vmem>>, vector<16x256xf32>
      tpu.vector_store %arg20[%c0_63, %c0_64], %212 {strides = array<i32>} : memref<16x256xf32, #tpu.memory_space<vmem>>, vector<16x256xf32>,
    } else {
    }
    return
  }
  func.func @transform_0(%arg0: i32) -> (i32, i32) {
    %c0_i32 = arith.constant 0 : i32
    %c0_i32_0 = arith.constant 0 : i32
    %c0_i32_1 = arith.constant 0 : i32
    return %c0_i32, %c0_i32_0 : i32, i32
  }
  func.func @transform_1(%arg0: i32) -> (i32, i32) {
    %c0_i32 = arith.constant 0 : i32
    %c0_i32_0 = arith.constant 0 : i32
    %c0_i32_1 = arith.constant 0 : i32
    return %c0_i32, %c0_i32_0 : i32, i32
  }
  func.func @transform_2(%arg0: i32) -> (i32, i32) {
    %c0_i32 = arith.constant 0 : i32
    %c0_i32_0 = arith.constant 0 : i32
    %c0_i32_1 = arith.constant 0 : i32
    return %c0_i32, %c0_i32_0 : i32, i32
  }
  func.func @transform_3(%arg0: i32) -> (i32, i32) {
    %c0_i32 = arith.constant 0 : i32
    %c0_i32_0 = arith.constant 0 : i32
    %c0_i32_1 = arith.constant 0 : i32
    return %c0_i32, %c0_i32_0 : i32, i32
  }
  func.func @transform_4(%arg0: i32) -> (i32, i32) {
    %c0_i32 = arith.constant 0 : i32
    %c0_i32_0 = arith.constant 0 : i32
    %c0_i32_1 = arith.constant 0 : i32
    return %c0_i32, %c0_i32_0 : i32, i32
  }
  func.func @transform_5(%arg0: i32) -> (i32, i32) {
    %c0_i32 = arith.constant 0 : i32
    %c0_i32_0 = arith.constant 0 : i32
    return %arg0, %c0_i32 : i32, i32
  }
  func.func @transform_6(%arg0: i32) -> (i32, i32) {
    %c0_i32 = arith.constant 0 : i32
    %c0_i32_0 = arith.constant 0 : i32
    return %arg0, %c0_i32 : i32, i32
  }
  func.func @transform_7(%arg0: i32) -> (i32, i32) {
    %c0_i32 = arith.constant 0 : i32
    %c0_i32_0 = arith.constant 0 : i32
    %c0_i32_1 = arith.constant 0 : i32
    return %c0_i32, %c0_i32_0 : i32, i32
  }
  func.func @transform_8(%arg0: i32) -> (i32, i32) {
    %c0_i32 = arith.constant 0 : i32
    %c0_i32_0 = arith.constant 0 : i32
    %c0_i32_1 = arith.constant 0 : i32
    return %c0_i32, %c0_i32_0 : i32, i32
  }
  func.func @transform_9(%arg0: i32) -> (i32, i32) {
    %c0_i32 = arith.constant 0 : i32
    %c0_i32_0 = arith.constant 0 : i32
    %c0_i32_1 = arith.constant 0 : i32
    return %c0_i32, %c0_i32_0 : i32, i32
  }
  func.func @transform_10(%arg0: i32) -> (i32, i32) {
    %c0_i32 = arith.constant 0 : i32
    %c0_i32_0 = arith.constant 0 : i32
    %c0_i32_1 = arith.constant 0 : i32
    return %c0_i32, %c0_i32_0 : i32, i32
  }
  func.func @transform_11(%arg0: i32) -> (i32, i32) {
    %c0_i32 = arith.constant 0 : i32
    %c0_i32_0 = arith.constant 0 : i32
    %c0_i32_1 = arith.constant 0 : i32
    return %c0_i32, %c0_i32_0 : i32, i32
  }
  func.func @transform_12(%arg0: i32) -> (i32, i32) {
    %c0_i32 = arith.constant 0 : i32
    %c0_i32_0 = arith.constant 0 : i32
    %c0_i32_1 = arith.constant 0 : i32
    return %c0_i32, %c0_i32_0 : i32, i32
  }
  func.func @transform_13(%arg0: i32) -> (i32, i32) {
    %c0_i32 = arith.constant 0 : i32
    %c0_i32_0 = arith.constant 0 : i32
    %c0_i32_1 = arith.constant 0 : i32
    return %c0_i32, %c0_i32_0 : i32, i32
  }
  func.func @transform_14(%arg0: i32) -> (i32, i32) {
    %c0_i32 = arith.constant 0 : i32
    %c0_i32_0 = arith.constant 0 : i32
    %c0_i32_1 = arith.constant 0 : i32
    return %c0_i32, %c0_i32_0 : i32, i32
  }
  func.func @transform_15(%arg0: i32) -> (i32, i32) {
    %c0_i32 = arith.constant 0 : i32
    %c0_i32_0 = arith.constant 0 : i32
    %c0_i32_1 = arith.constant 0 : i32
    return %c0_i32, %c0_i32_0 : i32, i32
  }
  func.func @transform_16(%arg0: i32) -> (i32, i32) {
    %c0_i32 = arith.constant 0 : i32
    %c0_i32_0 = arith.constant 0 : i32
    %c0_i32_1 = arith.constant 0 : i32
    return %c0_i32, %c0_i32_0 : i32, i32
  }
  func.func @transform_17(%arg0: i32) -> (i32, i32) {
    %c0_i32 = arith.constant 0 : i32
    %c0_i32_0 = arith.constant 0 : i32
    %c0_i32_1 = arith.constant 0 : i32
    return %c0_i32, %c0_i32_0 : i32, i32
  }
  func.func @transform_18(%arg0: i32) -> (i32, i32) {
    %c0_i32 = arith.constant 0 : i32
    %c0_i32_0 = arith.constant 0 : i32
    %c0_i32_1 = arith.constant 0 : i32
    return %c0_i32, %c0_i32_0 : i32, i32
  }
  func.func @transform_19(%arg0: i32) -> (i32, i32) {
    %c0_i32 = arith.constant 0 : i32
    %c0_i32_0 = arith.constant 0 : i32
    %c0_i32_1 = arith.constant 0 : i32
    return %c0_i32, %c0_i32_0 : i32, i32
  }
}

</mosaic_0001>

<llo_original>
// kernel: tpu_custom_call.1
$region0: #{tpu_custom_call.1}
  #allocation0 [shape = 'u32[]', space=smem, size = 0x4, offset = 0x4, fixed_abs, tag = 'smem constant byte address 0x4 - core index']
  #allocation1 [shape = 'u32[144,128]{1,0:T(1,128)}', space=vmem, size = 0x12000, scoped, tag = 'internal scratch']
  #allocation2 [shape = 'f32[64,128]{1,0:T(8,128)}', space=vmem, size = 0x8000, scoped, tag = 'scratch operand']
  #allocation3 [shape = 'f32[1,1]{1,0:T(1,128)}', space=vmem, size = 0x200, scoped, tag = 'scratch operand']
  #allocation4 [shape = 'f32[64,1]{1,0:T(8,128)}', space=vmem, size = 0x8000, scoped, tag = 'scratch operand']
  #allocation5 [shape = 'f32[64,128]{1,0:T(8,128)}', space=vmem, size = 0x8000, scoped, tag = 'scratch operand']
  %s0 = inlined_call_operand.hbm [shape: f32[16,256], index: 0, kind: input, shape index: {}]
  %s1 = inlined_call_operand.hbm [shape: f32[64,256], index: 1, kind: input, shape index: {}]
  %s2 = inlined_call_operand.vmem [shape: f32[64,8], index: 2, kind: input, shape index: {}]
  %s3 = inlined_call_operand.vmem [shape: bf16[64,16], index: 3, kind: input, shape index: {}]
  %s4 = inlined_call_operand.vmem [shape: bf16[64,16], index: 4, kind: input, shape index: {}]
  %s5 = inlined_call_operand.vmem [shape: bf16[256,64], index: 5, kind: input, shape index: {}]
  %s6 = inlined_call_operand.vmem [shape: bf16[256,64], index: 6, kind: input, shape index: {}]
  %s7 = inlined_call_operand.vmem [shape: f32[8,128], index: 7, kind: input, shape index: {}]
  %s8 = inlined_call_operand.vmem [shape: f32[1,128], index: 8, kind: input, shape index: {}]
  %s9 = inlined_call_operand.vmem [shape: f32[256,128], index: 9, kind: input, shape index: {}]
  %s10 = inlined_call_operand.vmem [shape: f32[1,128], index: 10, kind: input, shape index: {}]
  %s11 = inlined_call_operand.vmem [shape: f32[256,128], index: 11, kind: input, shape index: {}]
  %s12 = inlined_call_operand.vmem [shape: f32[1,128], index: 12, kind: input, shape index: {}]
  %s13 = inlined_call_operand.hbm [shape: f32[256,128], index: 13, kind: input, shape index: {}]
  %s14 = inlined_call_operand.vmem [shape: f32[1,128], index: 14, kind: input, shape index: {}]
  %s15 = inlined_call_operand.hbm [shape: f32[128,1024], index: 15, kind: input, shape index: {}]
  %s16 = inlined_call_operand.vmem [shape: f32[1,1024], index: 16, kind: input, shape index: {}]
  %s17 = inlined_call_operand.hbm [shape: f32[1024,256], index: 17, kind: input, shape index: {}]
  %s18 = inlined_call_operand.vmem [shape: f32[1,256], index: 18, kind: input, shape index: {}]
  %s19 = inlined_call_operand.hbm [shape: f32[16,256], index: 19, kind: output, shape index: {}]
  %s20 = sld [smem:[#allocation0]]
  $region137: #{tpu_custom_call.1} parent=0
    _
  %s22 = ssub.s32 1, %s20
  %s23 = scalar_select 0, %s22, %s20
  $region1: #{tpu_custom_call.1} parent=0
    #allocation6 [shape = 'u8[16384]{0}', space=vmem, size = 0x4000, scoped, tag = 'input window, operand 0, single buffered']
    #allocation7 [shape = 's32[2]{0}', space=sflag, size = 0x8, scoped, tag = 'scoped memory for tpu_custom_call.1']
    #allocation8 [shape = 's32[2]{0}', space=sflag, size = 0x8, scoped, tag = 'scoped memory for tpu_custom_call.1']
    #allocation9 [shape = 'u8[65536]{0}', space=vmem, size = 0x10000, scoped, tag = 'input window, operand 1, single buffered']
    #allocation10 [shape = 's32[1]{0}', space=sflag, size = 0x4, scoped, tag = 'scoped memory for tpu_custom_call.1']
    #allocation11 [shape = 'u8[131072]{0}', space=vmem, size = 0x20000, scoped, tag = 'input window, operand 13, single buffered']
    #allocation12 [shape = 'u8[524288]{0}', space=vmem, size = 0x80000, scoped, tag = 'input window, operand 15, single buffered']
    #allocation13 [shape = 's32[1]{0}', space=sflag, size = 0x4, scoped, tag = 'scoped memory for tpu_custom_call.1']
    #allocation14 [shape = 'u8[1048576]{0}', space=vmem, size = 0x100000, scoped, tag = 'input window, operand 17, single buffered']
    #allocation15 [shape = 'u8[16384]{0}', space=vmem, size = 0x4000, scoped, tag = 'output window, operand 0, single buffered']
    %24 = vsyncpa [#allocation7], 0
    %25 = vsyncpa [#allocation10], 0
    %26 = vsyncpa [#allocation13], 0
    %27 = vsyncpa [#allocation8], 0
    loop: start=0, step=1, limit=4
    $region2: #{tpu_custom_call.1} parent=1 // loop_pre_header
      _
    $region3: #{tpu_custom_call.1} parent=1 // loop_header
      %s29 = sphi 0, %s33
      %p30 = scmp.ge.s32.totalorder %s29, 4
      %s37 = sphi 0, %s37
      %s39 = sphi 0, %s37
      %s40 = sphi 0, %s39
      %s54 = sphi 0, %s40
      %s58 = sphi 0, %s58
      %s60 = sphi 0, %s58
      %s61 = sphi 0, %s60
      %s75 = sphi 0, %s61
      %s79 = sphi 0, %s79
      %s81 = sphi 0, %s79
      %s82 = sphi 0, %s81
      %s96 = sphi 0, %s82
      %s100 = sphi 0, %s100
      %s102 = sphi 0, %s100
      %s103 = sphi 0, %s102
      %s117 = sphi 0, %s103
      %s121 = sphi 0, %s121
      %s123 = sphi 0, %s121
      %s124 = sphi 0, %s123
      %s138 = sphi 0, %s124
      %s144 = sphi 0, %s146
      %s147 = sphi 0, %s144
      %s148 = sphi 0, %s147
      %s164 = sphi 0, %s148
      %s170 = sphi 0, %s172
      %s173 = sphi 0, %s170
      %s174 = sphi 0, %s173
      %s190 = sphi 0, %s174
      %s194 = sphi 0, %s194
      %s196 = sphi 0, %s194
      %s197 = sphi 0, %s196
      %s211 = sphi 0, %s197
      %s215 = sphi 0, %s215
      %s217 = sphi 0, %s215
      %s218 = sphi 0, %s217
      %s232 = sphi 0, %s218
      %s236 = sphi 0, %s236
      %s238 = sphi 0, %s236
      %s239 = sphi 0, %s238
      %s253 = sphi 0, %s239
      %s257 = sphi 0, %s257
      %s259 = sphi 0, %s257
      %s260 = sphi 0, %s259
      %s274 = sphi 0, %s260
      %s278 = sphi 0, %s278
      %s280 = sphi 0, %s278
      %s281 = sphi 0, %s280
      %s295 = sphi 0, %s281
      %s299 = sphi 0, %s299
      %s301 = sphi 0, %s299
      %s302 = sphi 0, %s301
      %s316 = sphi 0, %s302
      %s320 = sphi 0, %s320
      %s322 = sphi 0, %s320
      %s323 = sphi 0, %s322
      %s337 = sphi 0, %s323
      %s341 = sphi 0, %s341
      %s343 = sphi 0, %s341
      %s344 = sphi 0, %s343
      %s358 = sphi 0, %s344
      %s362 = sphi 0, %s362
      %s364 = sphi 0, %s362
      %s365 = sphi 0, %s364
      %s379 = sphi 0, %s365
      %s383 = sphi 0, %s383
      %s385 = sphi 0, %s383
      %s386 = sphi 0, %s385
      %s400 = sphi 0, %s386
      %s404 = sphi 0, %s404
      %s406 = sphi 0, %s404
      %s407 = sphi 0, %s406
      %s421 = sphi 0, %s407
      %s425 = sphi 0, %s425
      %s427 = sphi 0, %s425
      %s428 = sphi 0, %s427
      %s442 = sphi 0, %s428
      %s446 = sphi 0, %s446
      %s448 = sphi 0, %s446
      %s449 = sphi 0, %s448
      %s463 = sphi 0, %s449
    $region4: #{tpu_custom_call.1} parent=1 // loop_header_branch
      %32 = sbr.rel (%p30) target = $region8
    $region5: #{tpu_custom_call.1} parent=1 // loop_body
      %s34 = ssub.s32 %s29, 1
      %s35 = ssub.s32 %s29, 2
      %s36 = sadd.s32 %s29, 1
      %s38 = sadd.s32 %s37, 1
      %p41 = scmp.eq.s32.totalorder %s29, 1
      %p42 = scmp.ne.s32.totalorder %s37, %s39
      %p43 = scmp.eq.s32.totalorder %s29, 0
      %p44 = por %p42, %p43
      %p45 = scmp.ne.s32.totalorder %s37, %s39
      %p46 = scmp.eq.s32.totalorder %s34, 1
      %p47 = por %p45, %p46
      %p48 = scmp.ne.s32.totalorder %s39, %s40
      %p49 = scmp.eq.s32.totalorder %s34, 0
      %p50 = por %p48, %p49
      %p51 = scmp.ne.s32.totalorder %s39, %s40
      %p52 = scmp.eq.s32.totalorder %s35, 1
      %p53 = por %p51, %p52
      %p55 = scmp.ne.s32.totalorder %s40, %s54
      %p56 = scmp.eq.s32.totalorder %s35, 0
      %p57 = por %p55, %p56
      %s59 = sadd.s32 %s58, 1
      %p62 = scmp.eq.s32.totalorder %s29, 1
      %p63 = scmp.ne.s32.totalorder %s58, %s60
      %p64 = scmp.eq.s32.totalorder %s29, 0
      %p65 = por %p63, %p64
      %p66 = scmp.ne.s32.totalorder %s58, %s60
      %p67 = scmp.eq.s32.totalorder %s34, 1
      %p68 = por %p66, %p67
      %p69 = scmp.ne.s32.totalorder %s60, %s61
      %p70 = scmp.eq.s32.totalorder %s34, 0
      %p71 = por %p69, %p70
      %p72 = scmp.ne.s32.totalorder %s60, %s61
      %p73 = scmp.eq.s32.totalorder %s35, 1
      %p74 = por %p72, %p73
      %p76 = scmp.ne.s32.totalorder %s61, %s75
      %p77 = scmp.eq.s32.totalorder %s35, 0
      %p78 = por %p76, %p77
      %s80 = sadd.s32 %s79, 1
      %p83 = scmp.eq.s32.totalorder %s29, 1
      %p84 = scmp.ne.s32.totalorder %s79, %s81
      %p85 = scmp.eq.s32.totalorder %s29, 0
      %p86 = por %p84, %p85
      %p87 = scmp.ne.s32.totalorder %s79, %s81
      %p88 = scmp.eq.s32.totalorder %s34, 1
      %p89 = por %p87, %p88
      %p90 = scmp.ne.s32.totalorder %s81, %s82
      %p91 = scmp.eq.s32.totalorder %s34, 0
      %p92 = por %p90, %p91
      %p93 = scmp.ne.s32.totalorder %s81, %s82
      %p94 = scmp.eq.s32.totalorder %s35, 1
      %p95 = por %p93, %p94
      %p97 = scmp.ne.s32.totalorder %s82, %s96
      %p98 = scmp.eq.s32.totalorder %s35, 0
      %p99 = por %p97, %p98
      %s101 = sadd.s32 %s100, 1
      %p104 = scmp.eq.s32.totalorder %s29, 1
      %p105 = scmp.ne.s32.totalorder %s100, %s102
      %p106 = scmp.eq.s32.totalorder %s29, 0
      %p107 = por %p105, %p106
      %p108 = scmp.ne.s32.totalorder %s100, %s102
      %p109 = scmp.eq.s32.totalorder %s34, 1
      %p110 = por %p108, %p109
      %p111 = scmp.ne.s32.totalorder %s102, %s103
      %p112 = scmp.eq.s32.totalorder %s34, 0
      %p113 = por %p111, %p112
      %p114 = scmp.ne.s32.totalorder %s102, %s103
      %p115 = scmp.eq.s32.totalorder %s35, 1
      %p116 = por %p114, %p115
      %p118 = scmp.ne.s32.totalorder %s103, %s117
      %p119 = scmp.eq.s32.totalorder %s35, 0
      %p120 = por %p118, %p119
      %s122 = sadd.s32 %s121, 1
      %p125 = scmp.eq.s32.totalorder %s29, 1
      %p126 = scmp.ne.s32.totalorder %s121, %s123
      %p127 = scmp.eq.s32.totalorder %s29, 0
      %p128 = por %p126, %p127
      %p129 = scmp.ne.s32.totalorder %s121, %s123
      %p130 = scmp.eq.s32.totalorder %s34, 1
      %p131 = por %p129, %p130
      %p132 = scmp.ne.s32.totalorder %s123, %s124
      %p133 = scmp.eq.s32.totalorder %s34, 0
      %p134 = por %p132, %p133
      %p135 = scmp.ne.s32.totalorder %s123, %s124
      %p136 = scmp.eq.s32.totalorder %s35, 1
      %p137 = por %p135, %p136
      %p139 = scmp.ne.s32.totalorder %s124, %s138
      %p140 = scmp.eq.s32.totalorder %s35, 0
      %p141 = por %p139, %p140
      %s142 = ssub.s32 %s29, %s36
      %p143 = scmp.eq.s32.totalorder %s142, 0
      %s145 = sadd.s32 %s144, 1
      %s146 = scalar_select %p143, %s144, %s145
      %p149 = pneg %p143
      %p150 = scmp.eq.s32.totalorder %s29, 1
      %p151 = por %p149, %p150
      %p152 = scmp.ne.s32.totalorder %s144, %s147
      %p153 = scmp.eq.s32.totalorder %s29, 0
      %p154 = por %p152, %p153
      %p155 = scmp.ne.s32.totalorder %s144, %s147
      %p156 = scmp.eq.s32.totalorder %s34, 1
      %p157 = por %p155, %p156
      %p158 = scmp.ne.s32.totalorder %s147, %s148
      %p159 = scmp.eq.s32.totalorder %s34, 0
      %p160 = por %p158, %p159
      %p161 = scmp.ne.s32.totalorder %s147, %s148
      %p162 = scmp.eq.s32.totalorder %s35, 1
      %p163 = por %p161, %p162
      %p165 = scmp.ne.s32.totalorder %s148, %s164
      %p166 = scmp.eq.s32.totalorder %s35, 0
      %p167 = por %p165, %p166
      %s168 = ssub.s32 %s29, %s36
      %p169 = scmp.eq.s32.totalorder %s168, 0
      %s171 = sadd.s32 %s170, 1
      %s172 = scalar_select %p169, %s170, %s171
      %p175 = pneg %p169
      %p176 = scmp.eq.s32.totalorder %s29, 1
      %p177 = por %p175, %p176
      %p178 = scmp.ne.s32.totalorder %s170, %s173
      %p179 = scmp.eq.s32.totalorder %s29, 0
      %p180 = por %p178, %p179
      %p181 = scmp.ne.s32.totalorder %s170, %s173
      %p182 = scmp.eq.s32.totalorder %s34, 1
      %p183 = por %p181, %p182
      %p184 = scmp.ne.s32.totalorder %s173, %s174
      %p185 = scmp.eq.s32.totalorder %s34, 0
      %p186 = por %p184, %p185
      %p187 = scmp.ne.s32.totalorder %s173, %s174
      %p188 = scmp.eq.s32.totalorder %s35, 1
      %p189 = por %p187, %p188
      %p191 = scmp.ne.s32.totalorder %s174, %s190
      %p192 = scmp.eq.s32.totalorder %s35, 0
      %p193 = por %p191, %p192
      %s195 = sadd.s32 %s194, 1
      %p198 = scmp.eq.s32.totalorder %s29, 1
      %p199 = scmp.ne.s32.totalorder %s194, %s196
      %p200 = scmp.eq.s32.totalorder %s29, 0
      %p201 = por %p199, %p200
      %p202 = scmp.ne.s32.totalorder %s194, %s196
      %p203 = scmp.eq.s32.totalorder %s34, 1
      %p204 = por %p202, %p203
      %p205 = scmp.ne.s32.totalorder %s196, %s197
      %p206 = scmp.eq.s32.totalorder %s34, 0
      %p207 = por %p205, %p206
      %p208 = scmp.ne.s32.totalorder %s196, %s197
      %p209 = scmp.eq.s32.totalorder %s35, 1
      %p210 = por %p208, %p209
      %p212 = scmp.ne.s32.totalorder %s197, %s211
      %p213 = scmp.eq.s32.totalorder %s35, 0
      %p214 = por %p212, %p213
      %s216 = sadd.s32 %s215, 1
      %p219 = scmp.eq.s32.totalorder %s29, 1
      %p220 = scmp.ne.s32.totalorder %s215, %s217
      %p221 = scmp.eq.s32.totalorder %s29, 0
      %p222 = por %p220, %p221
      %p223 = scmp.ne.s32.totalorder %s215, %s217
      %p224 = scmp.eq.s32.totalorder %s34, 1
      %p225 = por %p223, %p224
      %p226 = scmp.ne.s32.totalorder %s217, %s218
      %p227 = scmp.eq.s32.totalorder %s34, 0
      %p228 = por %p226, %p227
      %p229 = scmp.ne.s32.totalorder %s217, %s218
      %p230 = scmp.eq.s32.totalorder %s35, 1
      %p231 = por %p229, %p230
      %p233 = scmp.ne.s32.totalorder %s218, %s232
      %p234 = scmp.eq.s32.totalorder %s35, 0
      %p235 = por %p233, %p234
      %s237 = sadd.s32 %s236, 1
      %p240 = scmp.eq.s32.totalorder %s29, 1
      %p241 = scmp.ne.s32.totalorder %s236, %s238
      %p242 = scmp.eq.s32.totalorder %s29, 0
      %p243 = por %p241, %p242
      %p244 = scmp.ne.s32.totalorder %s236, %s238
      %p245 = scmp.eq.s32.totalorder %s34, 1
      %p246 = por %p244, %p245
      %p247 = scmp.ne.s32.totalorder %s238, %s239
      %p248 = scmp.eq.s32.totalorder %s34, 0
      %p249 = por %p247, %p248
      %p250 = scmp.ne.s32.totalorder %s238, %s239
      %p251 = scmp.eq.s32.totalorder %s35, 1
      %p252 = por %p250, %p251
      %p254 = scmp.ne.s32.totalorder %s239, %s253
      %p255 = scmp.eq.s32.totalorder %s35, 0
      %p256 = por %p254, %p255
      %s258 = sadd.s32 %s257, 1
      %p261 = scmp.eq.s32.totalorder %s29, 1
      %p262 = scmp.ne.s32.totalorder %s257, %s259
      %p263 = scmp.eq.s32.totalorder %s29, 0
      %p264 = por %p262, %p263
      %p265 = scmp.ne.s32.totalorder %s257, %s259
      %p266 = scmp.eq.s32.totalorder %s34, 1
      %p267 = por %p265, %p266
      %p268 = scmp.ne.s32.totalorder %s259, %s260
      %p269 = scmp.eq.s32.totalorder %s34, 0
      %p270 = por %p268, %p269
      %p271 = scmp.ne.s32.totalorder %s259, %s260
      %p272 = scmp.eq.s32.totalorder %s35, 1
      %p273 = por %p271, %p272
      %p275 = scmp.ne.s32.totalorder %s260, %s274
      %p276 = scmp.eq.s32.totalorder %s35, 0
      %p277 = por %p275, %p276
      %s279 = sadd.s32 %s278, 1
      %p282 = scmp.eq.s32.totalorder %s29, 1
      %p283 = scmp.ne.s32.totalorder %s278, %s280
      %p284 = scmp.eq.s32.totalorder %s29, 0
      %p285 = por %p283, %p284
      %p286 = scmp.ne.s32.totalorder %s278, %s280
      %p287 = scmp.eq.s32.totalorder %s34, 1
      %p288 = por %p286, %p287
      %p289 = scmp.ne.s32.totalorder %s280, %s281
      %p290 = scmp.eq.s32.totalorder %s34, 0
      %p291 = por %p289, %p290
      %p292 = scmp.ne.s32.totalorder %s280, %s281
      %p293 = scmp.eq.s32.totalorder %s35, 1
      %p294 = por %p292, %p293
      %p296 = scmp.ne.s32.totalorder %s281, %s295
      %p297 = scmp.eq.s32.totalorder %s35, 0
      %p298 = por %p296, %p297
      %s300 = sadd.s32 %s299, 1
      %p303 = scmp.eq.s32.totalorder %s29, 1
      %p304 = scmp.ne.s32.totalorder %s299, %s301
      %p305 = scmp.eq.s32.totalorder %s29, 0
      %p306 = por %p304, %p305
      %p307 = scmp.ne.s32.totalorder %s299, %s301
      %p308 = scmp.eq.s32.totalorder %s34, 1
      %p309 = por %p307, %p308
      %p310 = scmp.ne.s32.totalorder %s301, %s302
      %p311 = scmp.eq.s32.totalorder %s34, 0
      %p312 = por %p310, %p311
      %p313 = scmp.ne.s32.totalorder %s301, %s302
      %p314 = scmp.eq.s32.totalorder %s35, 1
      %p315 = por %p313, %p314
      %p317 = scmp.ne.s32.totalorder %s302, %s316
      %p318 = scmp.eq.s32.totalorder %s35, 0
      %p319 = por %p317, %p318
      %s321 = sadd.s32 %s320, 1
      %p324 = scmp.eq.s32.totalorder %s29, 1
      %p325 = scmp.ne.s32.totalorder %s320, %s322
      %p326 = scmp.eq.s32.totalorder %s29, 0
      %p327 = por %p325, %p326
      %p328 = scmp.ne.s32.totalorder %s320, %s322
      %p329 = scmp.eq.s32.totalorder %s34, 1
      %p330 = por %p328, %p329
      %p331 = scmp.ne.s32.totalorder %s322, %s323
      %p332 = scmp.eq.s32.totalorder %s34, 0
      %p333 = por %p331, %p332
      %p334 = scmp.ne.s32.totalorder %s322, %s323
      %p335 = scmp.eq.s32.totalorder %s35, 1
      %p336 = por %p334, %p335
      %p338 = scmp.ne.s32.totalorder %s323, %s337
      %p339 = scmp.eq.s32.totalorder %s35, 0
      %p340 = por %p338, %p339
      %s342 = sadd.s32 %s341, 1
      %p345 = scmp.eq.s32.totalorder %s29, 1
      %p346 = scmp.ne.s32.totalorder %s341, %s343
      %p347 = scmp.eq.s32.totalorder %s29, 0
      %p348 = por %p346, %p347
      %p349 = scmp.ne.s32.totalorder %s341, %s343
      %p350 = scmp.eq.s32.totalorder %s34, 1
      %p351 = por %p349, %p350
      %p352 = scmp.ne.s32.totalorder %s343, %s344
      %p353 = scmp.eq.s32.totalorder %s34, 0
      %p354 = por %p352, %p353
      %p355 = scmp.ne.s32.totalorder %s343, %s344
      %p356 = scmp.eq.s32.totalorder %s35, 1
      %p357 = por %p355, %p356
      %p359 = scmp.ne.s32.totalorder %s344, %s358
      %p360 = scmp.eq.s32.totalorder %s35, 0
      %p361 = por %p359, %p360
      %s363 = sadd.s32 %s362, 1
      %p366 = scmp.eq.s32.totalorder %s29, 1
      %p367 = scmp.ne.s32.totalorder %s362, %s364
      %p368 = scmp.eq.s32.totalorder %s29, 0
      %p369 = por %p367, %p368
      %p370 = scmp.ne.s32.totalorder %s362, %s364
      %p371 = scmp.eq.s32.totalorder %s34, 1
      %p372 = por %p370, %p371
      %p373 = scmp.ne.s32.totalorder %s364, %s365
      %p374 = scmp.eq.s32.totalorder %s34, 0
      %p375 = por %p373, %p374
      %p376 = scmp.ne.s32.totalorder %s364, %s365
      %p377 = scmp.eq.s32.totalorder %s35, 1
      %p378 = por %p376, %p377
      %p380 = scmp.ne.s32.totalorder %s365, %s379
      %p381 = scmp.eq.s32.totalorder %s35, 0
      %p382 = por %p380, %p381
      %s384 = sadd.s32 %s383, 1
      %p387 = scmp.eq.s32.totalorder %s29, 1
      %p388 = scmp.ne.s32.totalorder %s383, %s385
      %p389 = scmp.eq.s32.totalorder %s29, 0
      %p390 = por %p388, %p389
      %p391 = scmp.ne.s32.totalorder %s383, %s385
      %p392 = scmp.eq.s32.totalorder %s34, 1
      %p393 = por %p391, %p392
      %p394 = scmp.ne.s32.totalorder %s385, %s386
      %p395 = scmp.eq.s32.totalorder %s34, 0
      %p396 = por %p394, %p395
      %p397 = scmp.ne.s32.totalorder %s385, %s386
      %p398 = scmp.eq.s32.totalorder %s35, 1
      %p399 = por %p397, %p398
      %p401 = scmp.ne.s32.totalorder %s386, %s400
      %p402 = scmp.eq.s32.totalorder %s35, 0
      %p403 = por %p401, %p402
      %s405 = sadd.s32 %s404, 1
      %p408 = scmp.eq.s32.totalorder %s29, 1
      %p409 = scmp.ne.s32.totalorder %s404, %s406
      %p410 = scmp.eq.s32.totalorder %s29, 0
      %p411 = por %p409, %p410
      %p412 = scmp.ne.s32.totalorder %s404, %s406
      %p413 = scmp.eq.s32.totalorder %s34, 1
      %p414 = por %p412, %p413
      %p415 = scmp.ne.s32.totalorder %s406, %s407
      %p416 = scmp.eq.s32.totalorder %s34, 0
      %p417 = por %p415, %p416
      %p418 = scmp.ne.s32.totalorder %s406, %s407
      %p419 = scmp.eq.s32.totalorder %s35, 1
      %p420 = por %p418, %p419
      %p422 = scmp.ne.s32.totalorder %s407, %s421
      %p423 = scmp.eq.s32.totalorder %s35, 0
      %p424 = por %p422, %p423
      %s426 = sadd.s32 %s425, 1
      %p429 = scmp.eq.s32.totalorder %s29, 1
      %p430 = scmp.ne.s32.totalorder %s425, %s427
      %p431 = scmp.eq.s32.totalorder %s29, 0
      %p432 = por %p430, %p431
      %p433 = scmp.ne.s32.totalorder %s425, %s427
      %p434 = scmp.eq.s32.totalorder %s34, 1
      %p435 = por %p433, %p434
      %p436 = scmp.ne.s32.totalorder %s427, %s428
      %p437 = scmp.eq.s32.totalorder %s34, 0
      %p438 = por %p436, %p437
      %p439 = scmp.ne.s32.totalorder %s427, %s428
      %p440 = scmp.eq.s32.totalorder %s35, 1
      %p441 = por %p439, %p440
      %p443 = scmp.ne.s32.totalorder %s428, %s442
      %p444 = scmp.eq.s32.totalorder %s35, 0
      %p445 = por %p443, %p444
      %s447 = sadd.s32 %s446, 1
      %p450 = scmp.eq.s32.totalorder %s29, 1
      %p451 = scmp.ne.s32.totalorder %s446, %s448
      %p452 = scmp.eq.s32.totalorder %s29, 0
      %p453 = por %p451, %p452
      %p454 = scmp.ne.s32.totalorder %s446, %s448
      %p455 = scmp.eq.s32.totalorder %s34, 1
      %p456 = por %p454, %p455
      %p457 = scmp.ne.s32.totalorder %s448, %s449
      %p458 = scmp.eq.s32.totalorder %s34, 0
      %p459 = por %p457, %p458
      %p460 = scmp.ne.s32.totalorder %s448, %s449
      %p461 = scmp.eq.s32.totalorder %s35, 1
      %p462 = por %p460, %p461
      %p464 = scmp.ne.s32.totalorder %s449, %s463
      %p465 = scmp.eq.s32.totalorder %s35, 0
      %p466 = por %p464, %p465
      %p467 = scmp.le.s32.totalorder 1, %s29
      %p468 = scmp.lt.s32.totalorder %s29, 3
      %p469 = pnand %p467, %p468
      %p470 = pneg %p469
      // Predicated region
      $region9: #{tpu_custom_call.1} parent=5 // pred_check
        _
      $region10: #{tpu_custom_call.1} parent=5 // pred_check_branch
        %472 = sbr.rel (%p469) target = $region12
      $region11: #{tpu_custom_call.1} parent=5 // pred_region
        %s473 = ssub.s32 %s29, 1
        // Predicated region
        $region13: #{tpu_custom_call.1} parent=11 // pred_check
          %p474 = pneg %p50
        $region14: #{tpu_custom_call.1} parent=11 // pred_check_branch
          %476 = sbr.rel (%p474) target = $region16
        $region15: #{tpu_custom_call.1} parent=11 // pred_region
          %s478 = ssub.s32 512, 512
          %479 = vsyncadd [#allocation7], %s478
          %s480 = sshll.u32 [#allocation6], 4
          %s481 = int_to_ptr.vmem [resolvable:$true] %s480
          %486 = dma.hbm_to_vmem [thread:$0]  %s0, 512, %s481, [#allocation7], 256, 256, 16
        $region16: #{tpu_custom_call.1} parent=11 // pred_fallthru
          _
        // Predicated region
        $region17: #{tpu_custom_call.1} parent=11 // pred_check
          %p487 = pneg %p71
        $region18: #{tpu_custom_call.1} parent=11 // pred_check_branch
          %489 = sbr.rel (%p487) target = $region20
        $region19: #{tpu_custom_call.1} parent=11 // pred_region
          %s491 = ssub.s32 2048, 2048
          %492 = vsyncadd [#allocation10], %s491
          %s493 = sshll.u32 [#allocation9], 4
          %s494 = int_to_ptr.vmem [resolvable:$true] %s493
          %499 = dma.hbm_to_vmem [thread:$0]  %s1, 2048, %s494, [#allocation10], 256, 256, 16
        $region20: #{tpu_custom_call.1} parent=11 // pred_fallthru
          _
        // Predicated region
        $region21: #{tpu_custom_call.1} parent=11 // pred_check
          %p500 = pneg %p92
        $region22: #{tpu_custom_call.1} parent=11 // pred_check_branch
          %502 = sbr.rel (%p500) target = $region24
        $region23: #{tpu_custom_call.1} parent=11 // pred_region
          _
        $region24: #{tpu_custom_call.1} parent=11 // pred_fallthru
          _
        // Predicated region
        $region25: #{tpu_custom_call.1} parent=11 // pred_check
          %p503 = pneg %p113
        $region26: #{tpu_custom_call.1} parent=11 // pred_check_branch
          %505 = sbr.rel (%p503) target = $region28
        $region27: #{tpu_custom_call.1} parent=11 // pred_region
          _
        $region28: #{tpu_custom_call.1} parent=11 // pred_fallthru
          _
        // Predicated region
        $region29: #{tpu_custom_call.1} parent=11 // pred_check
          %p506 = pneg %p134
        $region30: #{tpu_custom_call.1} parent=11 // pred_check_branch
          %508 = sbr.rel (%p506) target = $region32
        $region31: #{tpu_custom_call.1} parent=11 // pred_region
          _
        $region32: #{tpu_custom_call.1} parent=11 // pred_fallthru
          _
        // Predicated region
        $region33: #{tpu_custom_call.1} parent=11 // pred_check
          %p509 = pneg %p207
        $region34: #{tpu_custom_call.1} parent=11 // pred_check_branch
          %511 = sbr.rel (%p509) target = $region36
        $region35: #{tpu_custom_call.1} parent=11 // pred_region
          _
        $region36: #{tpu_custom_call.1} parent=11 // pred_fallthru
          _
        // Predicated region
        $region37: #{tpu_custom_call.1} parent=11 // pred_check
          %p512 = pneg %p228
        $region38: #{tpu_custom_call.1} parent=11 // pred_check_branch
          %514 = sbr.rel (%p512) target = $region40
        $region39: #{tpu_custom_call.1} parent=11 // pred_region
          _
        $region40: #{tpu_custom_call.1} parent=11 // pred_fallthru
          _
        // Predicated region
        $region41: #{tpu_custom_call.1} parent=11 // pred_check
          %p515 = pneg %p249
        $region42: #{tpu_custom_call.1} parent=11 // pred_check_branch
          %517 = sbr.rel (%p515) target = $region44
        $region43: #{tpu_custom_call.1} parent=11 // pred_region
          _
        $region44: #{tpu_custom_call.1} parent=11 // pred_fallthru
          _
        // Predicated region
        $region45: #{tpu_custom_call.1} parent=11 // pred_check
          %p518 = pneg %p270
        $region46: #{tpu_custom_call.1} parent=11 // pred_check_branch
          %520 = sbr.rel (%p518) target = $region48
        $region47: #{tpu_custom_call.1} parent=11 // pred_region
          _
        $region48: #{tpu_custom_call.1} parent=11 // pred_fallthru
          _
        // Predicated region
        $region49: #{tpu_custom_call.1} parent=11 // pred_check
          %p521 = pneg %p291
        $region50: #{tpu_custom_call.1} parent=11 // pred_check_branch
          %523 = sbr.rel (%p521) target = $region52
        $region51: #{tpu_custom_call.1} parent=11 // pred_region
          _
        $region52: #{tpu_custom_call.1} parent=11 // pred_fallthru
          _
        // Predicated region
        $region53: #{tpu_custom_call.1} parent=11 // pred_check
          %p524 = pneg %p312
        $region54: #{tpu_custom_call.1} parent=11 // pred_check_branch
          %526 = sbr.rel (%p524) target = $region56
        $region55: #{tpu_custom_call.1} parent=11 // pred_region
          _
        $region56: #{tpu_custom_call.1} parent=11 // pred_fallthru
          _
        // Predicated region
        $region57: #{tpu_custom_call.1} parent=11 // pred_check
          %p527 = pneg %p333
        $region58: #{tpu_custom_call.1} parent=11 // pred_check_branch
          %529 = sbr.rel (%p527) target = $region60
        $region59: #{tpu_custom_call.1} parent=11 // pred_region
          %s531 = ssub.s32 4096, 4096
          %532 = vsyncadd [#allocation10], %s531
          %s533 = sshll.u32 [#allocation11], 4
          %s534 = int_to_ptr.vmem [resolvable:$true] %s533
          %539 = dma.hbm_to_vmem [thread:$0]  %s13, 4096, %s534, [#allocation10], 128, 128, 8
        $region60: #{tpu_custom_call.1} parent=11 // pred_fallthru
          _
        // Predicated region
        $region61: #{tpu_custom_call.1} parent=11 // pred_check
          %p540 = pneg %p354
        $region62: #{tpu_custom_call.1} parent=11 // pred_check_branch
          %542 = sbr.rel (%p540) target = $region64
        $region63: #{tpu_custom_call.1} parent=11 // pred_region
          _
        $region64: #{tpu_custom_call.1} parent=11 // pred_fallthru
          _
        // Predicated region
        $region65: #{tpu_custom_call.1} parent=11 // pred_check
          %p543 = pneg %p375
        $region66: #{tpu_custom_call.1} parent=11 // pred_check_branch
          %545 = sbr.rel (%p543) target = $region68
        $region67: #{tpu_custom_call.1} parent=11 // pred_region
          %s547 = ssub.s32 16384, 16384
          %548 = vsyncadd [#allocation13], %s547
          %s549 = sshll.u32 [#allocation12], 4
          %s550 = int_to_ptr.vmem [resolvable:$true] %s549
          %555 = dma.hbm_to_vmem [thread:$0]  %s15, 16384, %s550, [#allocation13], 1024, 1024, 64
        $region68: #{tpu_custom_call.1} parent=11 // pred_fallthru
          _
        // Predicated region
        $region69: #{tpu_custom_call.1} parent=11 // pred_check
          %p556 = pneg %p396
        $region70: #{tpu_custom_call.1} parent=11 // pred_check_branch
          %558 = sbr.rel (%p556) target = $region72
        $region71: #{tpu_custom_call.1} parent=11 // pred_region
          _
        $region72: #{tpu_custom_call.1} parent=11 // pred_fallthru
          _
        // Predicated region
        $region73: #{tpu_custom_call.1} parent=11 // pred_check
          %p559 = pneg %p417
        $region74: #{tpu_custom_call.1} parent=11 // pred_check_branch
          %561 = sbr.rel (%p559) target = $region76
        $region75: #{tpu_custom_call.1} parent=11 // pred_region
          %s563 = ssub.s32 32768, 32768
          %564 = vsyncadd [#allocation13], %s563
          %s565 = sshll.u32 [#allocation14], 4
          %s566 = int_to_ptr.vmem [resolvable:$true] %s565
          %571 = dma.hbm_to_vmem [thread:$0]  %s17, 32768, %s566, [#allocation13], 256, 256, 16
        $region76: #{tpu_custom_call.1} parent=11 // pred_fallthru
          _
        // Predicated region
        $region77: #{tpu_custom_call.1} parent=11 // pred_check
          %p572 = pneg %p438
        $region78: #{tpu_custom_call.1} parent=11 // pred_check_branch
          %574 = sbr.rel (%p572) target = $region80
        $region79: #{tpu_custom_call.1} parent=11 // pred_region
          _
        $region80: #{tpu_custom_call.1} parent=11 // pred_fallthru
          _
      $region12: #{tpu_custom_call.1} parent=5 // pred_fallthru
        _
      %p575 = scmp.lt.s32.totalorder %s29, 2
      // Predicated region
      $region81: #{tpu_custom_call.1} parent=5 // pred_check
        %p576 = pneg %p575
      $region82: #{tpu_custom_call.1} parent=5 // pred_check_branch
        %578 = sbr.rel (%p576) target = $region84
      $region83: #{tpu_custom_call.1} parent=5 // pred_region
        // Predicated region
        $region85: #{tpu_custom_call.1} parent=83 // pred_check
          %p579 = pneg %p154
        $region86: #{tpu_custom_call.1} parent=83 // pred_check_branch
          %581 = sbr.rel (%p579) target = $region88
        $region87: #{tpu_custom_call.1} parent=83 // pred_region
          %s582 = smul.u32 16, %s29
          %p583 = scmp.lt.s32.totalorder %s582, 31
          %s584 = scalar_select %p583, %s582, 31
          %s585 = smul.addr %s584, 4
          %s586 = scalar_lea.vmem %s5, %s585
          %s587 = smul.u32 16, %s29
        $region88: #{tpu_custom_call.1} parent=83 // pred_fallthru
          _
        // Predicated region
        $region89: #{tpu_custom_call.1} parent=83 // pred_check
          %p588 = pneg %p180
        $region90: #{tpu_custom_call.1} parent=83 // pred_check_branch
          %590 = sbr.rel (%p588) target = $region92
        $region91: #{tpu_custom_call.1} parent=83 // pred_region
          %s591 = smul.u32 16, %s29
          %p592 = scmp.lt.s32.totalorder %s591, 31
          %s593 = scalar_select %p592, %s591, 31
          %s594 = smul.addr %s593, 4
          %s595 = scalar_lea.vmem %s6, %s594
          %s596 = smul.u32 16, %s29
        $region92: #{tpu_custom_call.1} parent=83 // pred_fallthru
          _
      $region84: #{tpu_custom_call.1} parent=5 // pred_fallthru
        _
      %p597 = scmp.le.s32.totalorder 1, %s29
      %p598 = scmp.lt.s32.totalorder %s29, 3
      %p599 = pnand %p597, %p598
      %p600 = pneg %p599
      // Predicated region
      $region93: #{tpu_custom_call.1} parent=5 // pred_check
        _
      $region94: #{tpu_custom_call.1} parent=5 // pred_check_branch
        %602 = sbr.rel (%p599) target = $region96
      $region95: #{tpu_custom_call.1} parent=5 // pred_region
        %s603 = ssub.s32 %s29, 1
        // Predicated region
        $region97: #{tpu_custom_call.1} parent=95 // pred_check
          %p604 = pneg %p50
        $region98: #{tpu_custom_call.1} parent=95 // pred_check_branch
          %606 = sbr.rel (%p604) target = $region100
        $region99: #{tpu_custom_call.1} parent=95 // pred_region
          %607 = dma.done [#allocation7], 512
        $region100: #{tpu_custom_call.1} parent=95 // pred_fallthru
          _
        // Predicated region
        $region101: #{tpu_custom_call.1} parent=95 // pred_check
          %p608 = pneg %p71
        $region102: #{tpu_custom_call.1} parent=95 // pred_check_branch
          %610 = sbr.rel (%p608) target = $region104
        $region103: #{tpu_custom_call.1} parent=95 // pred_region
          %611 = dma.done [#allocation10], 2048
        $region104: #{tpu_custom_call.1} parent=95 // pred_fallthru
          _
        // Predicated region
        $region105: #{tpu_custom_call.1} parent=95 // pred_check
          %p612 = pneg %p333
        $region106: #{tpu_custom_call.1} parent=95 // pred_check_branch
          %614 = sbr.rel (%p612) target = $region108
        $region107: #{tpu_custom_call.1} parent=95 // pred_region
          %615 = dma.done [#allocation10], 4096
        $region108: #{tpu_custom_call.1} parent=95 // pred_fallthru
          _
        // Predicated region
        $region109: #{tpu_custom_call.1} parent=95 // pred_check
          %p616 = pneg %p375
        $region110: #{tpu_custom_call.1} parent=95 // pred_check_branch
          %618 = sbr.rel (%p616) target = $region112
        $region111: #{tpu_custom_call.1} parent=95 // pred_region
          %619 = dma.done [#allocation13], 16384
        $region112: #{tpu_custom_call.1} parent=95 // pred_fallthru
          _
        // Predicated region
        $region113: #{tpu_custom_call.1} parent=95 // pred_check
          %p620 = pneg %p417
        $region114: #{tpu_custom_call.1} parent=95 // pred_check_branch
          %622 = sbr.rel (%p620) target = $region116
        $region115: #{tpu_custom_call.1} parent=95 // pred_region
          %623 = dma.done [#allocation13], 32768
        $region116: #{tpu_custom_call.1} parent=95 // pred_fallthru
          _
        %p624 = pneg %p50
        %p625 = pneg %p47
        %p626 = pneg %p71
        %p627 = pneg %p68
        %p628 = pneg %p92
        %p629 = pneg %p89
        %p630 = pneg %p113
        %p631 = pneg %p110
        %p632 = pneg %p134
        %p633 = pneg %p131
        %s634 = smul.u32 16, %s34
        %p635 = scmp.lt.s32.totalorder %s634, 31
        %s636 = scalar_select %p635, %s634, 31
        %s637 = smul.addr %s636, 4
        %s638 = scalar_lea.vmem %s5, %s637
        %p639 = pneg %p160
        %p640 = pneg %p157
        %s641 = smul.u32 16, %s34
        %p642 = scmp.lt.s32.totalorder %s641, 31
        %s643 = scalar_select %p642, %s641, 31
        %s644 = smul.addr %s643, 4
        %s645 = scalar_lea.vmem %s6, %s644
        %p646 = pneg %p186
        %p647 = pneg %p183
        %p648 = pneg %p207
        %p649 = pneg %p204
        %p650 = pneg %p228
        %p651 = pneg %p225
        %p652 = pneg %p249
        %p653 = pneg %p246
        %p654 = pneg %p270
        %p655 = pneg %p267
        %p656 = pneg %p291
        %p657 = pneg %p288
        %p658 = pneg %p312
        %p659 = pneg %p309
        %p660 = pneg %p333
        %p661 = pneg %p330
        %p662 = pneg %p354
        %p663 = pneg %p351
        %p664 = pneg %p375
        %p665 = pneg %p372
        %p666 = pneg %p396
        %p667 = pneg %p393
        %p668 = pneg %p417
        %p669 = pneg %p414
        %p670 = pneg %p438
        %p671 = pneg %p435
        %p672 = pneg %p459
        %p673 = pneg %p456
        %s674 = smul.u32 16, %s34
        %p675 = scmp.lt.s32.totalorder %s674, 31
        %s676 = scalar_select %p675, %s674, 31
        %s677 = smul.addr %s676, 4
        %s678 = scalar_lea.vmem %s5, %s677
        %s679 = smul.u32 16, %s34
        %s680 = smul.u32 16, %s34
        %p681 = scmp.lt.s32.totalorder %s680, 31
        %s682 = scalar_select %p681, %s680, 31
        %s683 = smul.addr %s682, 4
        %s684 = scalar_lea.vmem %s6, %s683
        %s685 = smul.u32 16, %s34
        %p686 = scmp.eq.s32.totalorder %s34, 0
        // Predicated region
        $region117: #{tpu_custom_call.1} parent=95 // pred_check
          %p687 = pneg %p686
        $region118: #{tpu_custom_call.1} parent=95 // pred_check_branch
          %689 = sbr.rel (%p687) target = $region120
        $region119: #{tpu_custom_call.1} parent=95 // pred_region
          %v690 = vld [vmem:[#allocation6] sm:$0xff]
          %v691 = vld [vmem:[#allocation6 + $0x8] sm:$0xff]
          %v692 = vld [vmem:[#allocation6 + $0x10] sm:$0xff]
          %v693 = vld [vmem:[#allocation6 + $0x18] sm:$0xff]
          %v694 = vld [vmem:[#allocation9] sm:$0xff]
          %v695 = vld [vmem:[#allocation9 + $0x8] sm:$0xff]
          %v696 = vld [vmem:[#allocation9 + $0x10] sm:$0xff]
          %v697 = vld [vmem:[#allocation9 + $0x18] sm:$0xff]
          %v698 = vld [vmem:[#allocation9 + $0x20] sm:$0xff]
          %v699 = vld [vmem:[#allocation9 + $0x28] sm:$0xff]
          %v700 = vld [vmem:[#allocation9 + $0x30] sm:$0xff]
          %v701 = vld [vmem:[#allocation9 + $0x38] sm:$0xff]
          %v702 = vld [vmem:[#allocation9 + $0x40] sm:$0xff]
          %v703 = vld [vmem:[#allocation9 + $0x48] sm:$0xff]
          %v704 = vld [vmem:[#allocation9 + $0x50] sm:$0xff]
          %v705 = vld [vmem:[#allocation9 + $0x58] sm:$0xff]
          %v706 = vld [vmem:[#allocation9 + $0x60] sm:$0xff]
          %v707 = vld [vmem:[#allocation9 + $0x68] sm:$0xff]
          %v708 = vld [vmem:[#allocation9 + $0x70] sm:$0xff]
          %v709 = vld [vmem:[#allocation9 + $0x78] sm:$0xff]
          %v710 = vld [vmem:[%s9] sm:$0xff]
          %v711 = vld [vmem:[%s9 + $0x8] sm:$0xff]
          %v712 = vld [vmem:[%s9 + $0x10] sm:$0xff]
          %v713 = vld [vmem:[%s9 + $0x18] sm:$0xff]
          %v714 = vld [vmem:[%s9 + $0x20] sm:$0xff]
          %v715 = vld [vmem:[%s9 + $0x28] sm:$0xff]
          %v716 = vld [vmem:[%s9 + $0x30] sm:$0xff]
          %v717 = vld [vmem:[%s9 + $0x38] sm:$0xff]
          %v718 = vld [vmem:[%s9 + $0x40] sm:$0xff]
          %v719 = vld [vmem:[%s9 + $0x48] sm:$0xff]
          %v720 = vld [vmem:[%s9 + $0x50] sm:$0xff]
          %v721 = vld [vmem:[%s9 + $0x58] sm:$0xff]
          %v722 = vld [vmem:[%s9 + $0x60] sm:$0xff]
          %v723 = vld [vmem:[%s9 + $0x68] sm:$0xff]
          %v724 = vld [vmem:[%s9 + $0x70] sm:$0xff]
          %v725 = vld [vmem:[%s9 + $0x78] sm:$0xff]
          %v726 = vld [vmem:[%s9 + $0x80] sm:$0xff]
          %v727 = vld [vmem:[%s9 + $0x88] sm:$0xff]
          %v728 = vld [vmem:[%s9 + $0x90] sm:$0xff]
          %v729 = vld [vmem:[%s9 + $0x98] sm:$0xff]
          %v730 = vld [vmem:[%s9 + $0xa0] sm:$0xff]
          %v731 = vld [vmem:[%s9 + $0xa8] sm:$0xff]
          %v732 = vld [vmem:[%s9 + $0xb0] sm:$0xff]
          %v733 = vld [vmem:[%s9 + $0xb8] sm:$0xff]
          %v734 = vld [vmem:[%s9 + $0xc0] sm:$0xff]
          %v735 = vld [vmem:[%s9 + $0xc8] sm:$0xff]
          %v736 = vld [vmem:[%s9 + $0xd0] sm:$0xff]
          %v737 = vld [vmem:[%s9 + $0xd8] sm:$0xff]
          %v738 = vld [vmem:[%s9 + $0xe0] sm:$0xff]
          %v739 = vld [vmem:[%s9 + $0xe8] sm:$0xff]
          %v740 = vld [vmem:[%s9 + $0xf0] sm:$0xff]
          %v741 = vld [vmem:[%s9 + $0xf8] sm:$0xff]
          %v742 = vld [vmem:[%s10] sm:$0x1]
          %v744 = vlaneseq
          %v745 = vshrl.u32 %v744, 7
          %v746 = vsub.s32 0, %v745
          %v747 = vrot.slane %v742, %v746
          %749 = vmatprep.subr.mxu0 0.0
          %750 = vmatpush1.msra.mxu0 %v710
          %751 = vmatprep.subr.mxu0 0.0
          %752 = vmatpush1.msra.mxu0 %v711
          %753 = vmatprep.subr.mxu0 0.0
          %754 = vmatpush1.msra.mxu0 %v712
          %755 = vmatprep.subr.mxu0 0.0
          %756 = vmatpush1.msra.mxu0 %v713
          %757 = vmatprep.subr.mxu0 0.0
          %758 = vmatpush1.msra.mxu0 %v714
          %759 = vmatprep.subr.mxu0 0.0
          %760 = vmatpush1.msra.mxu0 %v715
          %761 = vmatprep.subr.mxu0 0.0
          %762 = vmatpush1.msra.mxu0 %v716
          %763 = vmatprep.subr.mxu0 0.0
          %764 = vmatpush1.msra.mxu0 %v717
          %765 = vmatprep.subr.mxu0 0.0
          %766 = vmatpush1.msra.mxu0 %v718
          %767 = vmatprep.subr.mxu0 0.0
          %768 = vmatpush1.msra.mxu0 %v719
          %769 = vmatprep.subr.mxu0 0.0
          %770 = vmatpush1.msra.mxu0 %v720
          %771 = vmatprep.subr.mxu0 0.0
          %772 = vmatpush1.msra.mxu0 %v721
          %773 = vmatprep.subr.mxu0 0.0
          %774 = vmatpush1.msra.mxu0 %v722
          %775 = vmatprep.subr.mxu0 0.0
          %776 = vmatpush1.msra.mxu0 %v723
          %777 = vmatprep.subr.mxu0 0.0
          %778 = vmatpush1.msra.mxu0 %v724
          %779 = vmatprep.subr.mxu0 0.0
          %780 = vmatpush1.msra.mxu0 %v725
          %781 = vmatprep.subr.mxu0 0.0
          %782 = vmatpush1.msra.mxu0 %v726
          %783 = vmatprep.subr.mxu0 0.0
          %784 = vmatpush1.msra.mxu0 %v727
          %785 = vmatprep.subr.mxu0 0.0
          %786 = vmatpush1.msra.mxu0 %v728
          %787 = vmatprep.subr.mxu0 0.0
          %788 = vmatpush1.msra.mxu0 %v729
          %789 = vmatprep.subr.mxu0 0.0
          %790 = vmatpush1.msra.mxu0 %v730
          %791 = vmatprep.subr.mxu0 0.0
          %792 = vmatpush1.msra.mxu0 %v731
          %793 = vmatprep.subr.mxu0 0.0
          %794 = vmatpush1.msra.mxu0 %v732
          %795 = vmatprep.subr.mxu0 0.0
          %796 = vmatpush1.msra.mxu0 %v733
          %797 = vmatprep.subr.mxu0 0.0
          %798 = vmatpush1.msra.mxu0 %v734
          %799 = vmatprep.subr.mxu0 0.0
          %800 = vmatpush1.msra.mxu0 %v735
          %801 = vmatprep.subr.mxu0 0.0
          %802 = vmatpush1.msra.mxu0 %v736
          %803 = vmatprep.subr.mxu0 0.0
          %804 = vmatpush1.msra.mxu0 %v737
          %805 = vmatprep.subr.mxu0 0.0
          %806 = vmatpush1.msra.mxu0 %v738
          %807 = vmatprep.subr.mxu0 0.0
          %808 = vmatpush1.msra.mxu0 %v739
          %809 = vmatprep.subr.mxu0 0.0
          %810 = vmatpush1.msra.mxu0 %v740
          %811 = vmatprep.subr.mxu0 0.0
          %812 = vmatpush1.msra.mxu0 %v741
          %813 = vmatprep.mubr.f32.mxu0 %v691
          %814 = vmatmul.mubr.f32.gmra.mrb[0].mxu0 %v690
          %v815 = vpop.f32.mrb[0].mxu0
          %v816 = vadd.f32 %v747, %v815
          %v817 = vpop.f32.mrb[0].mxu0
          %818 = vmatprep.mubr.f32.mxu0 %v693
          %819 = vmatmul.mubr.f32.gmra.mrb[0].mxu0 %v692
          %v820 = vpop.f32.mrb[0].mxu0
          %v821 = vadd.f32 %v747, %v820
          %v822 = vpop.f32.mrb[0].mxu0
          %823 = vdwg.mxu0
          %v824 = vld [vmem:[%s11] sm:$0xff]
          %v825 = vld [vmem:[%s11 + $0x8] sm:$0xff]
          %v826 = vld [vmem:[%s11 + $0x10] sm:$0xff]
          %v827 = vld [vmem:[%s11 + $0x18] sm:$0xff]
          %v828 = vld [vmem:[%s11 + $0x20] sm:$0xff]
          %v829 = vld [vmem:[%s11 + $0x28] sm:$0xff]
          %v830 = vld [vmem:[%s11 + $0x30] sm:$0xff]
          %v831 = vld [vmem:[%s11 + $0x38] sm:$0xff]
          %v832 = vld [vmem:[%s11 + $0x40] sm:$0xff]
          %v833 = vld [vmem:[%s11 + $0x48] sm:$0xff]
          %v834 = vld [vmem:[%s11 + $0x50] sm:$0xff]
          %v835 = vld [vmem:[%s11 + $0x58] sm:$0xff]
          %v836 = vld [vmem:[%s11 + $0x60] sm:$0xff]
          %v837 = vld [vmem:[%s11 + $0x68] sm:$0xff]
          %v838 = vld [vmem:[%s11 + $0x70] sm:$0xff]
          %v839 = vld [vmem:[%s11 + $0x78] sm:$0xff]
          %v840 = vld [vmem:[%s11 + $0x80] sm:$0xff]
          %v841 = vld [vmem:[%s11 + $0x88] sm:$0xff]
          %v842 = vld [vmem:[%s11 + $0x90] sm:$0xff]
          %v843 = vld [vmem:[%s11 + $0x98] sm:$0xff]
          %v844 = vld [vmem:[%s11 + $0xa0] sm:$0xff]
          %v845 = vld [vmem:[%s11 + $0xa8] sm:$0xff]
          %v846 = vld [vmem:[%s11 + $0xb0] sm:$0xff]
          %v847 = vld [vmem:[%s11 + $0xb8] sm:$0xff]
          %v848 = vld [vmem:[%s11 + $0xc0] sm:$0xff]
          %v849 = vld [vmem:[%s11 + $0xc8] sm:$0xff]
          %v850 = vld [vmem:[%s11 + $0xd0] sm:$0xff]
          %v851 = vld [vmem:[%s11 + $0xd8] sm:$0xff]
          %v852 = vld [vmem:[%s11 + $0xe0] sm:$0xff]
          %v853 = vld [vmem:[%s11 + $0xe8] sm:$0xff]
          %v854 = vld [vmem:[%s11 + $0xf0] sm:$0xff]
          %v855 = vld [vmem:[%s11 + $0xf8] sm:$0xff]
          %v856 = vld [vmem:[%s12] sm:$0x1]
          %v858 = vlaneseq
          %v859 = vshrl.u32 %v858, 7
          %v860 = vsub.s32 0, %v859
          %v861 = vrot.slane %v856, %v860
          %863 = vmatprep.subr.mxu0 0.0
          %864 = vmatpush1.msra.mxu0 %v824
          %865 = vmatprep.subr.mxu0 0.0
          %866 = vmatpush1.msra.mxu0 %v825
          %867 = vmatprep.subr.mxu0 0.0
          %868 = vmatpush1.msra.mxu0 %v826
          %869 = vmatprep.subr.mxu0 0.0
          %870 = vmatpush1.msra.mxu0 %v827
          %871 = vmatprep.subr.mxu0 0.0
          %872 = vmatpush1.msra.mxu0 %v828
          %873 = vmatprep.subr.mxu0 0.0
          %874 = vmatpush1.msra.mxu0 %v829
          %875 = vmatprep.subr.mxu0 0.0
          %876 = vmatpush1.msra.mxu0 %v830
          %877 = vmatprep.subr.mxu0 0.0
          %878 = vmatpush1.msra.mxu0 %v831
          %879 = vmatprep.subr.mxu0 0.0
          %880 = vmatpush1.msra.mxu0 %v832
          %881 = vmatprep.subr.mxu0 0.0
          %882 = vmatpush1.msra.mxu0 %v833
          %883 = vmatprep.subr.mxu0 0.0
          %884 = vmatpush1.msra.mxu0 %v834
          %885 = vmatprep.subr.mxu0 0.0
          %886 = vmatpush1.msra.mxu0 %v835
          %887 = vmatprep.subr.mxu0 0.0
          %888 = vmatpush1.msra.mxu0 %v836
          %889 = vmatprep.subr.mxu0 0.0
          %890 = vmatpush1.msra.mxu0 %v837
          %891 = vmatprep.subr.mxu0 0.0
          %892 = vmatpush1.msra.mxu0 %v838
          %893 = vmatprep.subr.mxu0 0.0
          %894 = vmatpush1.msra.mxu0 %v839
          %895 = vmatprep.subr.mxu0 0.0
          %896 = vmatpush1.msra.mxu0 %v840
          %897 = vmatprep.subr.mxu0 0.0
          %898 = vmatpush1.msra.mxu0 %v841
          %899 = vmatprep.subr.mxu0 0.0
          %900 = vmatpush1.msra.mxu0 %v842
          %901 = vmatprep.subr.mxu0 0.0
          %902 = vmatpush1.msra.mxu0 %v843
          %903 = vmatprep.subr.mxu0 0.0
          %904 = vmatpush1.msra.mxu0 %v844
          %905 = vmatprep.subr.mxu0 0.0
          %906 = vmatpush1.msra.mxu0 %v845
          %907 = vmatprep.subr.mxu0 0.0
          %908 = vmatpush1.msra.mxu0 %v846
          %909 = vmatprep.subr.mxu0 0.0
          %910 = vmatpush1.msra.mxu0 %v847
          %911 = vmatprep.subr.mxu0 0.0
          %912 = vmatpush1.msra.mxu0 %v848
          %913 = vmatprep.subr.mxu0 0.0
          %914 = vmatpush1.msra.mxu0 %v849
          %915 = vmatprep.subr.mxu0 0.0
          %916 = vmatpush1.msra.mxu0 %v850
          %917 = vmatprep.subr.mxu0 0.0
          %918 = vmatpush1.msra.mxu0 %v851
          %919 = vmatprep.subr.mxu0 0.0
          %920 = vmatpush1.msra.mxu0 %v852
          %921 = vmatprep.subr.mxu0 0.0
          %922 = vmatpush1.msra.mxu0 %v853
          %923 = vmatprep.subr.mxu0 0.0
          %924 = vmatpush1.msra.mxu0 %v854
          %925 = vmatprep.subr.mxu0 0.0
          %926 = vmatpush1.msra.mxu0 %v855
          %927 = vmatprep.mubr.f32.mxu0 %v691
          %928 = vmatmul.mubr.f32.gmra.mrb[0].mxu0 %v690
          %v929 = vpop.f32.mrb[0].mxu0
          %v930 = vadd.f32 %v861, %v929
          %v931 = vpop.f32.mrb[0].mxu0
          %932 = vmatprep.mubr.f32.mxu0 %v693
          %933 = vmatmul.mubr.f32.gmra.mrb[0].mxu0 %v692
          %v934 = vpop.f32.mrb[0].mxu0
          %v935 = vadd.f32 %v861, %v934
          %v936 = vpop.f32.mrb[0].mxu0
          %937 = vdwg.mxu0
          %v938 = vld [vmem:[#allocation11] sm:$0xff]
          %v939 = vld [vmem:[#allocation11 + $0x8] sm:$0xff]
          %v940 = vld [vmem:[#allocation11 + $0x10] sm:$0xff]
          %v941 = vld [vmem:[#allocation11 + $0x18] sm:$0xff]
          %v942 = vld [vmem:[#allocation11 + $0x20] sm:$0xff]
          %v943 = vld [vmem:[#allocation11 + $0x28] sm:$0xff]
          %v944 = vld [vmem:[#allocation11 + $0x30] sm:$0xff]
          %v945 = vld [vmem:[#allocation11 + $0x38] sm:$0xff]
          %v946 = vld [vmem:[#allocation11 + $0x40] sm:$0xff]
          %v947 = vld [vmem:[#allocation11 + $0x48] sm:$0xff]
          %v948 = vld [vmem:[#allocation11 + $0x50] sm:$0xff]
          %v949 = vld [vmem:[#allocation11 + $0x58] sm:$0xff]
          %v950 = vld [vmem:[#allocation11 + $0x60] sm:$0xff]
          %v951 = vld [vmem:[#allocation11 + $0x68] sm:$0xff]
          %v952 = vld [vmem:[#allocation11 + $0x70] sm:$0xff]
          %v953 = vld [vmem:[#allocation11 + $0x78] sm:$0xff]
          %v954 = vld [vmem:[#allocation11 + $0x80] sm:$0xff]
          %v955 = vld [vmem:[#allocation11 + $0x88] sm:$0xff]
          %v956 = vld [vmem:[#allocation11 + $0x90] sm:$0xff]
          %v957 = vld [vmem:[#allocation11 + $0x98] sm:$0xff]
          %v958 = vld [vmem:[#allocation11 + $0xa0] sm:$0xff]
          %v959 = vld [vmem:[#allocation11 + $0xa8] sm:$0xff]
          %v960 = vld [vmem:[#allocation11 + $0xb0] sm:$0xff]
          %v961 = vld [vmem:[#allocation11 + $0xb8] sm:$0xff]
          %v962 = vld [vmem:[#allocation11 + $0xc0] sm:$0xff]
          %v963 = vld [vmem:[#allocation11 + $0xc8] sm:$0xff]
          %v964 = vld [vmem:[#allocation11 + $0xd0] sm:$0xff]
          %v965 = vld [vmem:[#allocation11 + $0xd8] sm:$0xff]
          %v966 = vld [vmem:[#allocation11 + $0xe0] sm:$0xff]
          %v967 = vld [vmem:[#allocation11 + $0xe8] sm:$0xff]
          %v968 = vld [vmem:[#allocation11 + $0xf0] sm:$0xff]
          %v969 = vld [vmem:[#allocation11 + $0xf8] sm:$0xff]
          %v970 = vld [vmem:[%s14] sm:$0x1]
          %v972 = vlaneseq
          %v973 = vshrl.u32 %v972, 7
          %v974 = vsub.s32 0, %v973
          %v975 = vrot.slane %v970, %v974
          %977 = vmatprep.subr.mxu0 0.0
          %978 = vmatpush1.msra.mxu0 %v938
          %979 = vmatprep.subr.mxu0 0.0
          %980 = vmatpush1.msra.mxu0 %v939
          %981 = vmatprep.subr.mxu0 0.0
          %982 = vmatpush1.msra.mxu0 %v940
          %983 = vmatprep.subr.mxu0 0.0
          %984 = vmatpush1.msra.mxu0 %v941
          %985 = vmatprep.subr.mxu0 0.0
          %986 = vmatpush1.msra.mxu0 %v942
          %987 = vmatprep.subr.mxu0 0.0
          %988 = vmatpush1.msra.mxu0 %v943
          %989 = vmatprep.subr.mxu0 0.0
          %990 = vmatpush1.msra.mxu0 %v944
          %991 = vmatprep.subr.mxu0 0.0
          %992 = vmatpush1.msra.mxu0 %v945
          %993 = vmatprep.subr.mxu0 0.0
          %994 = vmatpush1.msra.mxu0 %v946
          %995 = vmatprep.subr.mxu0 0.0
          %996 = vmatpush1.msra.mxu0 %v947
          %997 = vmatprep.subr.mxu0 0.0
          %998 = vmatpush1.msra.mxu0 %v948
          %999 = vmatprep.subr.mxu0 0.0
          %1000 = vmatpush1.msra.mxu0 %v949
          %1001 = vmatprep.subr.mxu0 0.0
          %1002 = vmatpush1.msra.mxu0 %v950
          %1003 = vmatprep.subr.mxu0 0.0
          %1004 = vmatpush1.msra.mxu0 %v951
          %1005 = vmatprep.subr.mxu0 0.0
          %1006 = vmatpush1.msra.mxu0 %v952
          %1007 = vmatprep.subr.mxu0 0.0
          %1008 = vmatpush1.msra.mxu0 %v953
          %1009 = vmatprep.subr.mxu0 0.0
          %1010 = vmatpush1.msra.mxu0 %v954
          %1011 = vmatprep.subr.mxu0 0.0
          %1012 = vmatpush1.msra.mxu0 %v955
          %1013 = vmatprep.subr.mxu0 0.0
          %1014 = vmatpush1.msra.mxu0 %v956
          %1015 = vmatprep.subr.mxu0 0.0
          %1016 = vmatpush1.msra.mxu0 %v957
          %1017 = vmatprep.subr.mxu0 0.0
          %1018 = vmatpush1.msra.mxu0 %v958
          %1019 = vmatprep.subr.mxu0 0.0
          %1020 = vmatpush1.msra.mxu0 %v959
          %1021 = vmatprep.subr.mxu0 0.0
          %1022 = vmatpush1.msra.mxu0 %v960
          %1023 = vmatprep.subr.mxu0 0.0
          %1024 = vmatpush1.msra.mxu0 %v961
          %1025 = vmatprep.subr.mxu0 0.0
          %1026 = vmatpush1.msra.mxu0 %v962
          %1027 = vmatprep.subr.mxu0 0.0
          %1028 = vmatpush1.msra.mxu0 %v963
          %1029 = vmatprep.subr.mxu0 0.0
          %1030 = vmatpush1.msra.mxu0 %v964
          %1031 = vmatprep.subr.mxu0 0.0
          %1032 = vmatpush1.msra.mxu0 %v965
          %1033 = vmatprep.subr.mxu0 0.0
          %1034 = vmatpush1.msra.mxu0 %v966
          %1035 = vmatprep.subr.mxu0 0.0
          %1036 = vmatpush1.msra.mxu0 %v967
          %1037 = vmatprep.subr.mxu0 0.0
          %1038 = vmatpush1.msra.mxu0 %v968
          %1039 = vmatprep.subr.mxu0 0.0
          %1040 = vmatpush1.msra.mxu0 %v969
          %1041 = vmatprep.mubr.f32.mxu0 %v695
          %1042 = vmatmul.mubr.f32.gmra.mrb[0].mxu0 %v694
          %v1043 = vpop.f32.mrb[0].mxu0
          %v1044 = vadd.f32 %v975, %v1043
          %v1045 = vpop.f32.mrb[0].mxu0
          %1046 = vmatprep.mubr.f32.mxu0 %v697
          %1047 = vmatmul.mubr.f32.gmra.mrb[0].mxu0 %v696
          %v1048 = vpop.f32.mrb[0].mxu0
          %v1049 = vadd.f32 %v975, %v1048
          %v1050 = vpop.f32.mrb[0].mxu0
          %1051 = vmatprep.mubr.f32.mxu0 %v699
          %1052 = vmatmul.mubr.f32.gmra.mrb[0].mxu0 %v698
          %v1053 = vpop.f32.mrb[0].mxu0
          %v1054 = vadd.f32 %v975, %v1053
          %v1055 = vpop.f32.mrb[0].mxu0
          %1056 = vmatprep.mubr.f32.mxu0 %v701
          %1057 = vmatmul.mubr.f32.gmra.mrb[0].mxu0 %v700
          %v1058 = vpop.f32.mrb[0].mxu0
          %v1059 = vadd.f32 %v975, %v1058
          %v1060 = vpop.f32.mrb[0].mxu0
          %1061 = vmatprep.mubr.f32.mxu0 %v703
          %1062 = vmatmul.mubr.f32.gmra.mrb[0].mxu0 %v702
          %v1063 = vpop.f32.mrb[0].mxu0
          %v1064 = vadd.f32 %v975, %v1063
          %v1065 = vpop.f32.mrb[0].mxu0
          %1066 = vmatprep.mubr.f32.mxu0 %v705
          %1067 = vmatmul.mubr.f32.gmra.mrb[0].mxu0 %v704
          %v1068 = vpop.f32.mrb[0].mxu0
          %v1069 = vadd.f32 %v975, %v1068
          %v1070 = vpop.f32.mrb[0].mxu0
          %1071 = vmatprep.mubr.f32.mxu0 %v707
          %1072 = vmatmul.mubr.f32.gmra.mrb[0].mxu0 %v706
          %v1073 = vpop.f32.mrb[0].mxu0
          %v1074 = vadd.f32 %v975, %v1073
          %v1075 = vpop.f32.mrb[0].mxu0
          %1076 = vmatprep.mubr.f32.mxu0 %v709
          %1077 = vmatmul.mubr.f32.gmra.mrb[0].mxu0 %v708
          %v1078 = vpop.f32.mrb[0].mxu0
          %v1079 = vadd.f32 %v975, %v1078
          %v1080 = vpop.f32.mrb[0].mxu0
          %1081 = vdwg.mxu0
          %v1082 = vld [vmem:[%s3] sm:$0xf]
          %v1083 = vld [vmem:[%s3 + $0x4] sm:$0xf]
          %v1084 = vld [vmem:[%s3 + $0x8] sm:$0xf]
          %v1085 = vld [vmem:[%s3 + $0xc] sm:$0xf]
          %v1086 = vld [vmem:[%s3 + $0x10] sm:$0xf]
          %v1087 = vld [vmem:[%s3 + $0x14] sm:$0xf]
          %v1088 = vld [vmem:[%s3 + $0x18] sm:$0xf]
          %v1089 = vld [vmem:[%s3 + $0x1c] sm:$0xf]
          %v1090 = vunpack.c.l.bf16 %v1082
          %v1091 = vunpack.c.l.bf16 %v1083
          %v1092 = vunpack.c.l.bf16 %v1084
          %v1093 = vunpack.c.l.bf16 %v1085
          %v1094 = vunpack.c.l.bf16 %v1086
          %v1095 = vunpack.c.l.bf16 %v1087
          %v1096 = vunpack.c.l.bf16 %v1088
          %v1097 = vunpack.c.l.bf16 %v1089
          %v1098 = vld [vmem:[%s4] sm:$0xf]
          %v1099 = vld [vmem:[%s4 + $0x4] sm:$0xf]
          %v1100 = vld [vmem:[%s4 + $0x8] sm:$0xf]
          %v1101 = vld [vmem:[%s4 + $0xc] sm:$0xf]
          %v1102 = vld [vmem:[%s4 + $0x10] sm:$0xf]
          %v1103 = vld [vmem:[%s4 + $0x14] sm:$0xf]
          %v1104 = vld [vmem:[%s4 + $0x18] sm:$0xf]
          %v1105 = vld [vmem:[%s4 + $0x1c] sm:$0xf]
          %v1106 = vunpack.c.l.bf16 %v1098
          %v1107 = vunpack.c.l.bf16 %v1099
          %v1108 = vunpack.c.l.bf16 %v1100
          %v1109 = vunpack.c.l.bf16 %v1101
          %v1110 = vunpack.c.l.bf16 %v1102
          %v1111 = vunpack.c.l.bf16 %v1103
          %v1112 = vunpack.c.l.bf16 %v1104
          %v1113 = vunpack.c.l.bf16 %v1105
          %vm1114 = vcmask 130048
          %v1116 = vsel %vm1114, %v1106, 0
          %v1119 = vsel %vm1114, %v1107, 0
          %v1122 = vsel %vm1114, %v1108, 0
          %v1125 = vsel %vm1114, %v1109, 0
          %v1128 = vsel %vm1114, %v1110, 0
          %v1131 = vsel %vm1114, %v1111, 0
          %v1134 = vsel %vm1114, %v1112, 0
          %v1137 = vsel %vm1114, %v1113, 0
          %1139 = vmatprep.subr.mxu0 0.0
          %1140 = vmatpush1.msra.mxu0 %v930
          %1141 = vmatprep.subr.mxu0 0.0
          %1142 = vmatpush1.msra.mxu0 %v935
          %1143 = vmatprep.subr.mxu0 0.0
          %1144 = vmatpush1.msra.mxu0 0.0
          %1145 = vmatprep.subr.mxu0 0.0
          %1146 = vmatpush1.msra.mxu0 0.0
          %1147 = vmatprep.subr.mxu0 0.0
          %1148 = vmatpush1.msra.mxu0 0.0
          %1149 = vmatprep.subr.mxu0 0.0
          %1150 = vmatpush1.msra.mxu0 0.0
          %1151 = vmatprep.subr.mxu0 0.0
          %1152 = vmatpush1.msra.mxu0 0.0
          %1153 = vmatprep.subr.mxu0 0.0
          %1154 = vmatpush1.msra.mxu0 0.0
          %1155 = vmatprep.subr.mxu0 0.0
          %1156 = vmatpush1.msra.mxu0 0.0
          %1157 = vmatprep.subr.mxu0 0.0
          %1158 = vmatpush1.msra.mxu0 0.0
          %1159 = vmatprep.subr.mxu0 0.0
          %1160 = vmatpush1.msra.mxu0 0.0
          %1161 = vmatprep.subr.mxu0 0.0
          %1162 = vmatpush1.msra.mxu0 0.0
          %1163 = vmatprep.subr.mxu0 0.0
          %1164 = vmatpush1.msra.mxu0 0.0
          %1165 = vmatprep.subr.mxu0 0.0
          %1166 = vmatpush1.msra.mxu0 0.0
          %1167 = vmatprep.subr.mxu0 0.0
          %1168 = vmatpush1.msra.mxu0 0.0
          %1169 = vmatprep.subr.mxu0 0.0
          %1170 = vmatpush1.msra.mxu0 0.0
          %1171 = vmatprep.subr.mxu0 0.0
          %1172 = vmatpush1.msra.mxu0 0.0
          %1173 = vmatprep.subr.mxu0 0.0
          %1174 = vmatpush1.msra.mxu0 0.0
          %1175 = vmatprep.subr.mxu0 0.0
          %1176 = vmatpush1.msra.mxu0 0.0
          %1177 = vmatprep.subr.mxu0 0.0
          %1178 = vmatpush1.msra.mxu0 0.0
          %1179 = vmatprep.subr.mxu0 0.0
          %1180 = vmatpush1.msra.mxu0 0.0
          %1181 = vmatprep.subr.mxu0 0.0
          %1182 = vmatpush1.msra.mxu0 0.0
          %1183 = vmatprep.subr.mxu0 0.0
          %1184 = vmatpush1.msra.mxu0 0.0
          %1185 = vmatprep.subr.mxu0 0.0
          %1186 = vmatpush1.msra.mxu0 0.0
          %1187 = vmatprep.subr.mxu0 0.0
          %1188 = vmatpush1.msra.mxu0 0.0
          %1189 = vmatprep.subr.mxu0 0.0
          %1190 = vmatpush1.msra.mxu0 0.0
          %1191 = vmatprep.subr.mxu0 0.0
          %1192 = vmatpush1.msra.mxu0 0.0
          %1193 = vmatprep.subr.mxu0 0.0
          %1194 = vmatpush1.msra.mxu0 0.0
          %1195 = vmatprep.subr.mxu0 0.0
          %1196 = vmatpush1.msra.mxu0 0.0
          %1197 = vmatprep.subr.mxu0 0.0
          %1198 = vmatpush1.msra.mxu0 0.0
          %1199 = vmatprep.subr.mxu0 0.0
          %1200 = vmatpush1.msra.mxu0 0.0
          %1201 = vmatprep.subr.mxu0 0.0
          %1202 = vmatpush1.msra.mxu0 0.0
          %1203 = vmatprep.mubr.f32.mxu0 0.0
          %1204 = vmatmul.mubr.f32.gmra.mrb[0].mxu0 %v1116
          %v1205 = vpop.f32.mrb[0].mxu0
          %v1206 = vadd.f32 0.0, %v1205
          %v1207 = vpop.f32.mrb[0].mxu0
          %1208 = vmatprep.mubr.f32.mxu0 0.0
          %1209 = vmatmul.mubr.f32.gmra.mrb[0].mxu0 %v1119
          %v1210 = vpop.f32.mrb[0].mxu0
          %v1211 = vadd.f32 0.0, %v1210
          %v1212 = vpop.f32.mrb[0].mxu0
          %1213 = vmatprep.mubr.f32.mxu0 0.0
          %1214 = vmatmul.mubr.f32.gmra.mrb[0].mxu0 %v1122
          %v1215 = vpop.f32.mrb[0].mxu0
          %v1216 = vadd.f32 0.0, %v1215
          %v1217 = vpop.f32.mrb[0].mxu0
          %1218 = vmatprep.mubr.f32.mxu0 0.0
          %1219 = vmatmul.mubr.f32.gmra.mrb[0].mxu0 %v1125
          %v1220 = vpop.f32.mrb[0].mxu0
          %v1221 = vadd.f32 0.0, %v1220
          %v1222 = vpop.f32.mrb[0].mxu0
          %1223 = vmatprep.mubr.f32.mxu0 0.0
          %1224 = vmatmul.mubr.f32.gmra.mrb[0].mxu0 %v1128
          %v1225 = vpop.f32.mrb[0].mxu0
          %v1226 = vadd.f32 0.0, %v1225
          %v1227 = vpop.f32.mrb[0].mxu0
          %1228 = vmatprep.mubr.f32.mxu0 0.0
          %1229 = vmatmul.mubr.f32.gmra.mrb[0].mxu0 %v1131
          %v1230 = vpop.f32.mrb[0].mxu0
          %v1231 = vadd.f32 0.0, %v1230
          %v1232 = vpop.f32.mrb[0].mxu0
          %1233 = vmatprep.mubr.f32.mxu0 0.0
          %1234 = vmatmul.mubr.f32.gmra.mrb[0].mxu0 %v1134
          %v1235 = vpop.f32.mrb[0].mxu0
          %v1236 = vadd.f32 0.0, %v1235
          %v1237 = vpop.f32.mrb[0].mxu0
          %1238 = vmatprep.mubr.f32.mxu0 0.0
          %1239 = vmatmul.mubr.f32.gmra.mrb[0].mxu0 %v1137
          %v1240 = vpop.f32.mrb[0].mxu0
          %v1241 = vadd.f32 0.0, %v1240
          %v1242 = vpop.f32.mrb[0].mxu0
          %1243 = vdwg.mxu0
          %v1245 = vsel %vm1114, %v1090, 0
          %v1248 = vsel %vm1114, %v1091, 0
          %v1251 = vsel %vm1114, %v1092, 0
          %v1254 = vsel %vm1114, %v1093, 0
          %v1257 = vsel %vm1114, %v1094, 0
          %v1260 = vsel %vm1114, %v1095, 0
          %v1263 = vsel %vm1114, %v1096, 0
          %v1266 = vsel %vm1114, %v1097, 0
          %1268 = vmatprep.subr.mxu0 0.0
          %1269 = vmatpush1.msra.mxu0 %v816
          %1270 = vmatprep.subr.mxu0 0.0
          %1271 = vmatpush1.msra.mxu0 %v821
          %1272 = vmatprep.subr.mxu0 0.0
          %1273 = vmatpush1.msra.mxu0 0.0
          %1274 = vmatprep.subr.mxu0 0.0
          %1275 = vmatpush1.msra.mxu0 0.0
          %1276 = vmatprep.subr.mxu0 0.0
          %1277 = vmatpush1.msra.mxu0 0.0
          %1278 = vmatprep.subr.mxu0 0.0
          %1279 = vmatpush1.msra.mxu0 0.0
          %1280 = vmatprep.subr.mxu0 0.0
          %1281 = vmatpush1.msra.mxu0 0.0
          %1282 = vmatprep.subr.mxu0 0.0
          %1283 = vmatpush1.msra.mxu0 0.0
          %1284 = vmatprep.subr.mxu0 0.0
          %1285 = vmatpush1.msra.mxu0 0.0
          %1286 = vmatprep.subr.mxu0 0.0
          %1287 = vmatpush1.msra.mxu0 0.0
          %1288 = vmatprep.subr.mxu0 0.0
          %1289 = vmatpush1.msra.mxu0 0.0
          %1290 = vmatprep.subr.mxu0 0.0
          %1291 = vmatpush1.msra.mxu0 0.0
          %1292 = vmatprep.subr.mxu0 0.0
          %1293 = vmatpush1.msra.mxu0 0.0
          %1294 = vmatprep.subr.mxu0 0.0
          %1295 = vmatpush1.msra.mxu0 0.0
          %1296 = vmatprep.subr.mxu0 0.0
          %1297 = vmatpush1.msra.mxu0 0.0
          %1298 = vmatprep.subr.mxu0 0.0
          %1299 = vmatpush1.msra.mxu0 0.0
          %1300 = vmatprep.subr.mxu0 0.0
          %1301 = vmatpush1.msra.mxu0 0.0
          %1302 = vmatprep.subr.mxu0 0.0
          %1303 = vmatpush1.msra.mxu0 0.0
          %1304 = vmatprep.subr.mxu0 0.0
          %1305 = vmatpush1.msra.mxu0 0.0
          %1306 = vmatprep.subr.mxu0 0.0
          %1307 = vmatpush1.msra.mxu0 0.0
          %1308 = vmatprep.subr.mxu0 0.0
          %1309 = vmatpush1.msra.mxu0 0.0
          %1310 = vmatprep.subr.mxu0 0.0
          %1311 = vmatpush1.msra.mxu0 0.0
          %1312 = vmatprep.subr.mxu0 0.0
          %1313 = vmatpush1.msra.mxu0 0.0
          %1314 = vmatprep.subr.mxu0 0.0
          %1315 = vmatpush1.msra.mxu0 0.0
          %1316 = vmatprep.subr.mxu0 0.0
          %1317 = vmatpush1.msra.mxu0 0.0
          %1318 = vmatprep.subr.mxu0 0.0
          %1319 = vmatpush1.msra.mxu0 0.0
          %1320 = vmatprep.subr.mxu0 0.0
          %1321 = vmatpush1.msra.mxu0 0.0
          %1322 = vmatprep.subr.mxu0 0.0
          %1323 = vmatpush1.msra.mxu0 0.0
          %1324 = vmatprep.subr.mxu0 0.0
          %1325 = vmatpush1.msra.mxu0 0.0
          %1326 = vmatprep.subr.mxu0 0.0
          %1327 = vmatpush1.msra.mxu0 0.0
          %1328 = vmatprep.subr.mxu0 0.0
          %1329 = vmatpush1.msra.mxu0 0.0
          %1330 = vmatprep.subr.mxu0 0.0
          %1331 = vmatpush1.msra.mxu0 0.0
          %1332 = vmatprep.mubr.f32.mxu0 0.0
          %1333 = vmatmul.mubr.f32.gmra.mrb[0].mxu0 %v1245
          %v1334 = vpop.f32.mrb[0].mxu0
          %v1335 = vadd.f32 %v1206, %v1334
          %v1336 = vpop.f32.mrb[0].mxu0
          %1337 = vmatprep.mubr.f32.mxu0 0.0
          %1338 = vmatmul.mubr.f32.gmra.mrb[0].mxu0 %v1248
          %v1339 = vpop.f32.mrb[0].mxu0
          %v1340 = vadd.f32 %v1211, %v1339
          %v1341 = vpop.f32.mrb[0].mxu0
          %1342 = vmatprep.mubr.f32.mxu0 0.0
          %1343 = vmatmul.mubr.f32.gmra.mrb[0].mxu0 %v1251
          %v1344 = vpop.f32.mrb[0].mxu0
          %v1345 = vadd.f32 %v1216, %v1344
          %v1346 = vpop.f32.mrb[0].mxu0
          %1347 = vmatprep.mubr.f32.mxu0 0.0
          %1348 = vmatmul.mubr.f32.gmra.mrb[0].mxu0 %v1254
          %v1349 = vpop.f32.mrb[0].mxu0
          %v1350 = vadd.f32 %v1221, %v1349
          %v1351 = vpop.f32.mrb[0].mxu0
          %1352 = vmatprep.mubr.f32.mxu0 0.0
          %1353 = vmatmul.mubr.f32.gmra.mrb[0].mxu0 %v1257
          %v1354 = vpop.f32.mrb[0].mxu0
          %v1355 = vadd.f32 %v1226, %v1354
          %v1356 = vpop.f32.mrb[0].mxu0
          %1357 = vmatprep.mubr.f32.mxu0 0.0
          %1358 = vmatmul.mubr.f32.gmra.mrb[0].mxu0 %v1260
          %v1359 = vpop.f32.mrb[0].mxu0
          %v1360 = vadd.f32 %v1231, %v1359
          %v1361 = vpop.f32.mrb[0].mxu0
          %1362 = vmatprep.mubr.f32.mxu0 0.0
          %1363 = vmatmul.mubr.f32.gmra.mrb[0].mxu0 %v1263
          %v1364 = vpop.f32.mrb[0].mxu0
          %v1365 = vadd.f32 %v1236, %v1364
          %v1366 = vpop.f32.mrb[0].mxu0
          %1367 = vmatprep.mubr.f32.mxu0 0.0
          %1368 = vmatmul.mubr.f32.gmra.mrb[0].mxu0 %v1266
          %v1369 = vpop.f32.mrb[0].mxu0
          %v1370 = vadd.f32 %v1241, %v1369
          %v1371 = vpop.f32.mrb[0].mxu0
          %1372 = vdwg.mxu0
          %v1373 = vadd.f32 %v1335, %v1044
          %v1374 = vadd.f32 %v1340, %v1049
          %v1375 = vadd.f32 %v1345, %v1054
          %v1376 = vadd.f32 %v1350, %v1059
          %v1377 = vadd.f32 %v1355, %v1064
          %v1378 = vadd.f32 %v1360, %v1069
          %v1379 = vadd.f32 %v1365, %v1074
          %v1380 = vadd.f32 %v1370, %v1079
          %v1381 = vld [vmem:[%s2] sm:$0xff]
          %v1382 = vld [vmem:[%s2 + $0x8] sm:$0xff]
          %v1383 = vld [vmem:[%s2 + $0x10] sm:$0xff]
          %v1384 = vld [vmem:[%s2 + $0x18] sm:$0xff]
          %v1385 = vld [vmem:[%s2 + $0x20] sm:$0xff]
          %v1386 = vld [vmem:[%s2 + $0x28] sm:$0xff]
          %v1387 = vld [vmem:[%s2 + $0x30] sm:$0xff]
          %v1388 = vld [vmem:[%s2 + $0x38] sm:$0xff]
          %v1389 = vsub.f32 0.0, %v1381
          %v1390 = vsub.f32 0.0, %v1382
          %v1391 = vsub.f32 0.0, %v1383
          %v1392 = vsub.f32 0.0, %v1384
          %v1393 = vsub.f32 0.0, %v1385
          %v1394 = vsub.f32 0.0, %v1386
          %v1395 = vsub.f32 0.0, %v1387
          %v1396 = vsub.f32 0.0, %v1388
          %v1397 = vmul.f32 %v1381, %v1381
          %v1398 = vmul.f32 %v1382, %v1382
          %v1399 = vmul.f32 %v1383, %v1383
          %v1400 = vmul.f32 %v1384, %v1384
          %v1401 = vmul.f32 %v1385, %v1385
          %v1402 = vmul.f32 %v1386, %v1386
          %v1403 = vmul.f32 %v1387, %v1387
          %v1404 = vmul.f32 %v1388, %v1388
          %vm1405 = vcmask 64512
          %v1406 = vsel %vm1405, %v1397, 0.0
          %1407 = vadd.xlane.f32.xlu0 %v1406
          %v1408 = vpop.xlane.xlu0 %1407
          %v1409 = vsel %vm1405, %v1398, 0.0
          %1410 = vadd.xlane.f32.xlu0 %v1409
          %v1411 = vpop.xlane.xlu0 %1410
          %v1412 = vsel %vm1405, %v1399, 0.0
          %1413 = vadd.xlane.f32.xlu0 %v1412
          %v1414 = vpop.xlane.xlu0 %1413
          %v1415 = vsel %vm1405, %v1400, 0.0
          %1416 = vadd.xlane.f32.xlu0 %v1415
          %v1417 = vpop.xlane.xlu0 %1416
          %v1418 = vsel %vm1405, %v1401, 0.0
          %1419 = vadd.xlane.f32.xlu0 %v1418
          %v1420 = vpop.xlane.xlu0 %1419
          %v1421 = vsel %vm1405, %v1402, 0.0
          %1422 = vadd.xlane.f32.xlu0 %v1421
          %v1423 = vpop.xlane.xlu0 %1422
          %v1424 = vsel %vm1405, %v1403, 0.0
          %1425 = vadd.xlane.f32.xlu0 %v1424
          %v1426 = vpop.xlane.xlu0 %1425
          %v1427 = vsel %vm1405, %v1404, 0.0
          %1428 = vadd.xlane.f32.xlu0 %v1427
          %v1429 = vpop.xlane.xlu0 %1428
          %v1430 = vrsqrt.pop %v1408
          %v1431 = vrsqrt.pop %v1411
          %v1432 = vrsqrt.pop %v1414
          %v1433 = vrsqrt.pop %v1417
          %v1434 = vrsqrt.pop %v1420
          %v1435 = vrsqrt.pop %v1423
          %v1436 = vrsqrt.pop %v1426
          %v1437 = vrsqrt.pop %v1429
          %v1438 = vmul.f32 %v1389, %v1430
          %v1439 = vmul.f32 %v1390, %v1431
          %v1440 = vmul.f32 %v1391, %v1432
          %v1441 = vmul.f32 %v1392, %v1433
          %v1442 = vmul.f32 %v1393, %v1434
          %v1443 = vmul.f32 %v1394, %v1435
          %v1444 = vmul.f32 %v1395, %v1436
          %v1445 = vmul.f32 %v1396, %v1437
          %v1446 = vld [vmem:[%s7] sm:$0xff]
          %v1448 = vsel %vm1405, %v1438, 0
          %v1451 = vsel %vm1405, %v1439, 0
          %v1454 = vsel %vm1405, %v1440, 0
          %v1457 = vsel %vm1405, %v1441, 0
          %v1460 = vsel %vm1405, %v1442, 0
          %v1463 = vsel %vm1405, %v1443, 0
          %v1466 = vsel %vm1405, %v1444, 0
          %v1469 = vsel %vm1405, %v1445, 0
          %1471 = vmatprep.subr.mxu0 0.0
          %1472 = vmatpush1.msra.mxu0 %v1446
          %1473 = vmatprep.subr.mxu0 0.0
          %1474 = vmatpush1.msra.mxu0 0.0
          %1475 = vmatprep.subr.mxu0 0.0
          %1476 = vmatpush1.msra.mxu0 0.0
          %1477 = vmatprep.subr.mxu0 0.0
          %1478 = vmatpush1.msra.mxu0 0.0
          %1479 = vmatprep.subr.mxu0 0.0
          %1480 = vmatpush1.msra.mxu0 0.0
          %1481 = vmatprep.subr.mxu0 0.0
          %1482 = vmatpush1.msra.mxu0 0.0
          %1483 = vmatprep.subr.mxu0 0.0
          %1484 = vmatpush1.msra.mxu0 0.0
          %1485 = vmatprep.subr.mxu0 0.0
          %1486 = vmatpush1.msra.mxu0 0.0
          %1487 = vmatprep.subr.mxu0 0.0
          %1488 = vmatpush1.msra.mxu0 0.0
          %1489 = vmatprep.subr.mxu0 0.0
          %1490 = vmatpush1.msra.mxu0 0.0
          %1491 = vmatprep.subr.mxu0 0.0
          %1492 = vmatpush1.msra.mxu0 0.0
          %1493 = vmatprep.subr.mxu0 0.0
          %1494 = vmatpush1.msra.mxu0 0.0
          %1495 = vmatprep.subr.mxu0 0.0
          %1496 = vmatpush1.msra.mxu0 0.0
          %1497 = vmatprep.subr.mxu0 0.0
          %1498 = vmatpush1.msra.mxu0 0.0
          %1499 = vmatprep.subr.mxu0 0.0
          %1500 = vmatpush1.msra.mxu0 0.0
          %1501 = vmatprep.subr.mxu0 0.0
          %1502 = vmatpush1.msra.mxu0 0.0
          %1503 = vmatprep.subr.mxu0 0.0
          %1504 = vmatpush1.msra.mxu0 0.0
          %1505 = vmatprep.subr.mxu0 0.0
          %1506 = vmatpush1.msra.mxu0 0.0
          %1507 = vmatprep.subr.mxu0 0.0
          %1508 = vmatpush1.msra.mxu0 0.0
          %1509 = vmatprep.subr.mxu0 0.0
          %1510 = vmatpush1.msra.mxu0 0.0
          %1511 = vmatprep.subr.mxu0 0.0
          %1512 = vmatpush1.msra.mxu0 0.0
          %1513 = vmatprep.subr.mxu0 0.0
          %1514 = vmatpush1.msra.mxu0 0.0
          %1515 = vmatprep.subr.mxu0 0.0
          %1516 = vmatpush1.msra.mxu0 0.0
          %1517 = vmatprep.subr.mxu0 0.0
          %1518 = vmatpush1.msra.mxu0 0.0
          %1519 = vmatprep.subr.mxu0 0.0
          %1520 = vmatpush1.msra.mxu0 0.0
          %1521 = vmatprep.subr.mxu0 0.0
          %1522 = vmatpush1.msra.mxu0 0.0
          %1523 = vmatprep.subr.mxu0 0.0
          %1524 = vmatpush1.msra.mxu0 0.0
          %1525 = vmatprep.subr.mxu0 0.0
          %1526 = vmatpush1.msra.mxu0 0.0
          %1527 = vmatprep.subr.mxu0 0.0
          %1528 = vmatpush1.msra.mxu0 0.0
          %1529 = vmatprep.subr.mxu0 0.0
          %1530 = vmatpush1.msra.mxu0 0.0
          %1531 = vmatprep.subr.mxu0 0.0
          %1532 = vmatpush1.msra.mxu0 0.0
          %1533 = vmatprep.subr.mxu0 0.0
          %1534 = vmatpush1.msra.mxu0 0.0
          %1535 = vmatprep.mubr.f32.mxu0 0.0
          %1536 = vmatmul.mubr.f32.gmra.mrb[0].mxu0 %v1448
          %v1537 = vpop.f32.mrb[0].mxu0
          %v1538 = vadd.f32 0.0, %v1537
          %v1539 = vpop.f32.mrb[0].mxu0
          %1540 = vmatprep.mubr.f32.mxu0 0.0
          %1541 = vmatmul.mubr.f32.gmra.mrb[0].mxu0 %v1451
          %v1542 = vpop.f32.mrb[0].mxu0
          %v1543 = vadd.f32 0.0, %v1542
          %v1544 = vpop.f32.mrb[0].mxu0
          %1545 = vmatprep.mubr.f32.mxu0 0.0
          %1546 = vmatmul.mubr.f32.gmra.mrb[0].mxu0 %v1454
          %v1547 = vpop.f32.mrb[0].mxu0
          %v1548 = vadd.f32 0.0, %v1547
          %v1549 = vpop.f32.mrb[0].mxu0
          %1550 = vmatprep.mubr.f32.mxu0 0.0
          %1551 = vmatmul.mubr.f32.gmra.mrb[0].mxu0 %v1457
          %v1552 = vpop.f32.mrb[0].mxu0
          %v1553 = vadd.f32 0.0, %v1552
          %v1554 = vpop.f32.mrb[0].mxu0
          %1555 = vmatprep.mubr.f32.mxu0 0.0
          %1556 = vmatmul.mubr.f32.gmra.mrb[0].mxu0 %v1460
          %v1557 = vpop.f32.mrb[0].mxu0
          %v1558 = vadd.f32 0.0, %v1557
          %v1559 = vpop.f32.mrb[0].mxu0
          %1560 = vmatprep.mubr.f32.mxu0 0.0
          %1561 = vmatmul.mubr.f32.gmra.mrb[0].mxu0 %v1463
          %v1562 = vpop.f32.mrb[0].mxu0
          %v1563 = vadd.f32 0.0, %v1562
          %v1564 = vpop.f32.mrb[0].mxu0
          %1565 = vmatprep.mubr.f32.mxu0 0.0
          %1566 = vmatmul.mubr.f32.gmra.mrb[0].mxu0 %v1466
          %v1567 = vpop.f32.mrb[0].mxu0
          %v1568 = vadd.f32 0.0, %v1567
          %v1569 = vpop.f32.mrb[0].mxu0
          %1570 = vmatprep.mubr.f32.mxu0 0.0
          %1571 = vmatmul.mubr.f32.gmra.mrb[0].mxu0 %v1469
          %v1572 = vpop.f32.mrb[0].mxu0
          %v1573 = vadd.f32 0.0, %v1572
          %v1574 = vpop.f32.mrb[0].mxu0
          %1575 = vdwg.mxu0
          %v1576 = vadd.f32 %v1373, %v1538
          %v1577 = vadd.f32 %v1374, %v1543
          %v1578 = vadd.f32 %v1375, %v1548
          %v1579 = vadd.f32 %v1376, %v1553
          %v1580 = vadd.f32 %v1377, %v1558
          %v1581 = vadd.f32 %v1378, %v1563
          %v1582 = vadd.f32 %v1379, %v1568
          %v1583 = vadd.f32 %v1380, %v1573
          %1584 = vst [vmem:[#allocation2] sm:$0xff] %v1576
          %1585 = vst [vmem:[#allocation2 + $0x8] sm:$0xff] %v1577
          %1586 = vst [vmem:[#allocation2 + $0x10] sm:$0xff] %v1578
          %1587 = vst [vmem:[#allocation2 + $0x18] sm:$0xff] %v1579
          %1588 = vst [vmem:[#allocation2 + $0x20] sm:$0xff] %v1580
          %1589 = vst [vmem:[#allocation2 + $0x28] sm:$0xff] %v1581
          %1590 = vst [vmem:[#allocation2 + $0x30] sm:$0xff] %v1582
          %1591 = vst [vmem:[#allocation2 + $0x38] sm:$0xff] %v1583
          %vm1592 = vcmask 0
          %1593 = vst.msk [vmem:[#allocation3] sm:$0x1] %vm1592, -1e+30
          %vm1594 = vcmask 7168
          %1595 = vst.msk [vmem:[#allocation4] sm:$0xff] %vm1594, 0.0
          %1596 = vst.msk [vmem:[#allocation4 + $0x8] sm:$0xff] %vm1594, 0.0
          %1597 = vst.msk [vmem:[#allocation4 + $0x10] sm:$0xff] %vm1594, 0.0
          %1598 = vst.msk [vmem:[#allocation4 + $0x18] sm:$0xff] %vm1594, 0.0
          %1599 = vst.msk [vmem:[#allocation4 + $0x20] sm:$0xff] %vm1594, 0.0
          %1600 = vst.msk [vmem:[#allocation4 + $0x28] sm:$0xff] %vm1594, 0.0
          %1601 = vst.msk [vmem:[#allocation4 + $0x30] sm:$0xff] %vm1594, 0.0
          %1602 = vst.msk [vmem:[#allocation4 + $0x38] sm:$0xff] %vm1594, 0.0
          %1603 = vst [vmem:[#allocation5] sm:$0xff] 0.0
          %1604 = vst [vmem:[#allocation5 + $0x8] sm:$0xff] 0.0
          %1605 = vst [vmem:[#allocation5 + $0x10] sm:$0xff] 0.0
          %1606 = vst [vmem:[#allocation5 + $0x18] sm:$0xff] 0.0
          %1607 = vst [vmem:[#allocation5 + $0x20] sm:$0xff] 0.0
          %1608 = vst [vmem:[#allocation5 + $0x28] sm:$0xff] 0.0
          %1609 = vst [vmem:[#allocation5 + $0x30] sm:$0xff] 0.0
          %1610 = vst [vmem:[#allocation5 + $0x38] sm:$0xff] 0.0
        $region120: #{tpu_custom_call.1} parent=95 // pred_fallthru
          _
        %v1611 = vld [vmem:[%s678] sm:$0xf]
        %v1612 = vld [vmem:[%s678 + $0x4] sm:$0xf]
        %v1613 = vld [vmem:[%s678 + $0x8] sm:$0xf]
        %v1614 = vld [vmem:[%s678 + $0xc] sm:$0xf]
        %v1615 = vld [vmem:[%s678 + $0x10] sm:$0xf]
        %v1616 = vld [vmem:[%s678 + $0x14] sm:$0xf]
        %v1617 = vld [vmem:[%s678 + $0x18] sm:$0xf]
        %v1618 = vld [vmem:[%s678 + $0x1c] sm:$0xf]
        %v1619 = vld [vmem:[%s678 + $0x20] sm:$0xf]
        %v1620 = vld [vmem:[%s678 + $0x24] sm:$0xf]
        %v1621 = vld [vmem:[%s678 + $0x28] sm:$0xf]
        %v1622 = vld [vmem:[%s678 + $0x2c] sm:$0xf]
        %v1623 = vld [vmem:[%s678 + $0x30] sm:$0xf]
        %v1624 = vld [vmem:[%s678 + $0x34] sm:$0xf]
        %v1625 = vld [vmem:[%s678 + $0x38] sm:$0xf]
        %v1626 = vld [vmem:[%s678 + $0x3c] sm:$0xf]
        %v1627 = vunpack.c.l.bf16 %v1611
        %v1628 = vunpack.c.l.bf16 %v1612
        %v1629 = vunpack.c.l.bf16 %v1613
        %v1630 = vunpack.c.l.bf16 %v1614
        %v1631 = vunpack.c.l.bf16 %v1615
        %v1632 = vunpack.c.l.bf16 %v1616
        %v1633 = vunpack.c.l.bf16 %v1617
        %v1634 = vunpack.c.l.bf16 %v1618
        %v1635 = vunpack.c.l.bf16 %v1619
        %v1636 = vunpack.c.l.bf16 %v1620
        %v1637 = vunpack.c.l.bf16 %v1621
        %v1638 = vunpack.c.l.bf16 %v1622
        %v1639 = vunpack.c.l.bf16 %v1623
        %v1640 = vunpack.c.l.bf16 %v1624
        %v1641 = vunpack.c.l.bf16 %v1625
        %v1642 = vunpack.c.l.bf16 %v1626
        %v1643 = vld [vmem:[%s684] sm:$0xf]
        %v1644 = vld [vmem:[%s684 + $0x4] sm:$0xf]
        %v1645 = vld [vmem:[%s684 + $0x8] sm:$0xf]
        %v1646 = vld [vmem:[%s684 + $0xc] sm:$0xf]
        %v1647 = vld [vmem:[%s684 + $0x10] sm:$0xf]
        %v1648 = vld [vmem:[%s684 + $0x14] sm:$0xf]
        %v1649 = vld [vmem:[%s684 + $0x18] sm:$0xf]
        %v1650 = vld [vmem:[%s684 + $0x1c] sm:$0xf]
        %v1651 = vld [vmem:[%s684 + $0x20] sm:$0xf]
        %v1652 = vld [vmem:[%s684 + $0x24] sm:$0xf]
        %v1653 = vld [vmem:[%s684 + $0x28] sm:$0xf]
        %v1654 = vld [vmem:[%s684 + $0x2c] sm:$0xf]
        %v1655 = vld [vmem:[%s684 + $0x30] sm:$0xf]
        %v1656 = vld [vmem:[%s684 + $0x34] sm:$0xf]
        %v1657 = vld [vmem:[%s684 + $0x38] sm:$0xf]
        %v1658 = vld [vmem:[%s684 + $0x3c] sm:$0xf]
        %v1659 = vunpack.c.l.bf16 %v1643
        %v1660 = vunpack.c.l.bf16 %v1644
        %v1661 = vunpack.c.l.bf16 %v1645
        %v1662 = vunpack.c.l.bf16 %v1646
        %v1663 = vunpack.c.l.bf16 %v1647
        %v1664 = vunpack.c.l.bf16 %v1648
        %v1665 = vunpack.c.l.bf16 %v1649
        %v1666 = vunpack.c.l.bf16 %v1650
        %v1667 = vunpack.c.l.bf16 %v1651
        %v1668 = vunpack.c.l.bf16 %v1652
        %v1669 = vunpack.c.l.bf16 %v1653
        %v1670 = vunpack.c.l.bf16 %v1654
        %v1671 = vunpack.c.l.bf16 %v1655
        %v1672 = vunpack.c.l.bf16 %v1656
        %v1673 = vunpack.c.l.bf16 %v1657
        %v1674 = vunpack.c.l.bf16 %v1658
        %v1675 = vld [vmem:[#allocation2] sm:$0xff]
        %v1676 = vld [vmem:[#allocation2 + $0x8] sm:$0xff]
        %v1677 = vld [vmem:[#allocation2 + $0x10] sm:$0xff]
        %v1678 = vld [vmem:[#allocation2 + $0x18] sm:$0xff]
        %v1679 = vld [vmem:[#allocation2 + $0x20] sm:$0xff]
        %v1680 = vld [vmem:[#allocation2 + $0x28] sm:$0xff]
        %v1681 = vld [vmem:[#allocation2 + $0x30] sm:$0xff]
        %v1682 = vld [vmem:[#allocation2 + $0x38] sm:$0xff]
        %vm1683 = vcmask 523264
        %v1685 = vsel %vm1683, %v1627, 0
        %v1688 = vsel %vm1683, %v1628, 0
        %v1691 = vsel %vm1683, %v1629, 0
        %v1694 = vsel %vm1683, %v1630, 0
        %v1697 = vsel %vm1683, %v1631, 0
        %v1700 = vsel %vm1683, %v1632, 0
        %v1703 = vsel %vm1683, %v1633, 0
        %v1706 = vsel %vm1683, %v1634, 0
        %v1709 = vsel %vm1683, %v1635, 0
        %v1712 = vsel %vm1683, %v1636, 0
        %v1715 = vsel %vm1683, %v1637, 0
        %v1718 = vsel %vm1683, %v1638, 0
        %v1721 = vsel %vm1683, %v1639, 0
        %v1724 = vsel %vm1683, %v1640, 0
        %v1727 = vsel %vm1683, %v1641, 0
        %v1730 = vsel %vm1683, %v1642, 0
        %1732 = vmatprep.subr.mxu0 0.0
        %1733 = vmatpush1.msra.mxu0 %v1675
        %1734 = vmatprep.subr.mxu0 0.0
        %1735 = vmatpush1.msra.mxu0 %v1676
        %1736 = vmatprep.subr.mxu0 0.0
        %1737 = vmatpush1.msra.mxu0 %v1677
        %1738 = vmatprep.subr.mxu0 0.0
        %1739 = vmatpush1.msra.mxu0 %v1678
        %1740 = vmatprep.subr.mxu0 0.0
        %1741 = vmatpush1.msra.mxu0 %v1679
        %1742 = vmatprep.subr.mxu0 0.0
        %1743 = vmatpush1.msra.mxu0 %v1680
        %1744 = vmatprep.subr.mxu0 0.0
        %1745 = vmatpush1.msra.mxu0 %v1681
        %1746 = vmatprep.subr.mxu0 0.0
        %1747 = vmatpush1.msra.mxu0 %v1682
        %1748 = vmatprep.subr.mxu0 0.0
        %1749 = vmatpush1.msra.mxu0 0.0
        %1750 = vmatprep.subr.mxu0 0.0
        %1751 = vmatpush1.msra.mxu0 0.0
        %1752 = vmatprep.subr.mxu0 0.0
        %1753 = vmatpush1.msra.mxu0 0.0
        %1754 = vmatprep.subr.mxu0 0.0
        %1755 = vmatpush1.msra.mxu0 0.0
        %1756 = vmatprep.subr.mxu0 0.0
        %1757 = vmatpush1.msra.mxu0 0.0
        %1758 = vmatprep.subr.mxu0 0.0
        %1759 = vmatpush1.msra.mxu0 0.0
        %1760 = vmatprep.subr.mxu0 0.0
        %1761 = vmatpush1.msra.mxu0 0.0
        %1762 = vmatprep.subr.mxu0 0.0
        %1763 = vmatpush1.msra.mxu0 0.0
        %1764 = vmatprep.subr.mxu0 0.0
        %1765 = vmatpush1.msra.mxu0 0.0
        %1766 = vmatprep.subr.mxu0 0.0
        %1767 = vmatpush1.msra.mxu0 0.0
        %1768 = vmatprep.subr.mxu0 0.0
        %1769 = vmatpush1.msra.mxu0 0.0
        %1770 = vmatprep.subr.mxu0 0.0
        %1771 = vmatpush1.msra.mxu0 0.0
        %1772 = vmatprep.subr.mxu0 0.0
        %1773 = vmatpush1.msra.mxu0 0.0
        %1774 = vmatprep.subr.mxu0 0.0
        %1775 = vmatpush1.msra.mxu0 0.0
        %1776 = vmatprep.subr.mxu0 0.0
        %1777 = vmatpush1.msra.mxu0 0.0
        %1778 = vmatprep.subr.mxu0 0.0
        %1779 = vmatpush1.msra.mxu0 0.0
        %1780 = vmatprep.subr.mxu0 0.0
        %1781 = vmatpush1.msra.mxu0 0.0
        %1782 = vmatprep.subr.mxu0 0.0
        %1783 = vmatpush1.msra.mxu0 0.0
        %1784 = vmatprep.subr.mxu0 0.0
        %1785 = vmatpush1.msra.mxu0 0.0
        %1786 = vmatprep.subr.mxu0 0.0
        %1787 = vmatpush1.msra.mxu0 0.0
        %1788 = vmatprep.subr.mxu0 0.0
        %1789 = vmatpush1.msra.mxu0 0.0
        %1790 = vmatprep.subr.mxu0 0.0
        %1791 = vmatpush1.msra.mxu0 0.0
        %1792 = vmatprep.subr.mxu0 0.0
        %1793 = vmatpush1.msra.mxu0 0.0
        %1794 = vmatprep.subr.mxu0 0.0
        %1795 = vmatpush1.msra.mxu0 0.0
        %1796 = vmatprep.mubr.f32.mxu0 0.0
        %1797 = vmatmul.mubr.f32.gmra.mrb[0].mxu0 %v1685
        %v1798 = vpop.f32.mrb[0].mxu0
        %v1799 = vadd.f32 0.0, %v1798
        %v1800 = vpop.f32.mrb[0].mxu0
        %1801 = vmatprep.mubr.f32.mxu0 0.0
        %1802 = vmatmul.mubr.f32.gmra.mrb[0].mxu0 %v1688
        %v1803 = vpop.f32.mrb[0].mxu0
        %v1804 = vadd.f32 0.0, %v1803
        %v1805 = vpop.f32.mrb[0].mxu0
        %1806 = vmatprep.mubr.f32.mxu0 0.0
        %1807 = vmatmul.mubr.f32.gmra.mrb[0].mxu0 %v1691
        %v1808 = vpop.f32.mrb[0].mxu0
        %v1809 = vadd.f32 0.0, %v1808
        %v1810 = vpop.f32.mrb[0].mxu0
        %1811 = vmatprep.mubr.f32.mxu0 0.0
        %1812 = vmatmul.mubr.f32.gmra.mrb[0].mxu0 %v1694
        %v1813 = vpop.f32.mrb[0].mxu0
        %v1814 = vadd.f32 0.0, %v1813
        %v1815 = vpop.f32.mrb[0].mxu0
        %1816 = vmatprep.mubr.f32.mxu0 0.0
        %1817 = vmatmul.mubr.f32.gmra.mrb[0].mxu0 %v1697
        %v1818 = vpop.f32.mrb[0].mxu0
        %v1819 = vadd.f32 0.0, %v1818
        %v1820 = vpop.f32.mrb[0].mxu0
        %1821 = vmatprep.mubr.f32.mxu0 0.0
        %1822 = vmatmul.mubr.f32.gmra.mrb[0].mxu0 %v1700
        %v1823 = vpop.f32.mrb[0].mxu0
        %v1824 = vadd.f32 0.0, %v1823
        %v1825 = vpop.f32.mrb[0].mxu0
        %1826 = vmatprep.mubr.f32.mxu0 0.0
        %1827 = vmatmul.mubr.f32.gmra.mrb[0].mxu0 %v1703
        %v1828 = vpop.f32.mrb[0].mxu0
        %v1829 = vadd.f32 0.0, %v1828
        %v1830 = vpop.f32.mrb[0].mxu0
        %1831 = vmatprep.mubr.f32.mxu0 0.0
        %1832 = vmatmul.mubr.f32.gmra.mrb[0].mxu0 %v1706
        %v1833 = vpop.f32.mrb[0].mxu0
        %v1834 = vadd.f32 0.0, %v1833
        %v1835 = vpop.f32.mrb[0].mxu0
        %1836 = vmatprep.mubr.f32.mxu0 0.0
        %1837 = vmatmul.mubr.f32.gmra.mrb[0].mxu0 %v1709
        %v1838 = vpop.f32.mrb[0].mxu0
        %v1839 = vadd.f32 0.0, %v1838
        %v1840 = vpop.f32.mrb[0].mxu0
        %1841 = vmatprep.mubr.f32.mxu0 0.0
        %1842 = vmatmul.mubr.f32.gmra.mrb[0].mxu0 %v1712
        %v1843 = vpop.f32.mrb[0].mxu0
        %v1844 = vadd.f32 0.0, %v1843
        %v1845 = vpop.f32.mrb[0].mxu0
        %1846 = vmatprep.mubr.f32.mxu0 0.0
        %1847 = vmatmul.mubr.f32.gmra.mrb[0].mxu0 %v1715
        %v1848 = vpop.f32.mrb[0].mxu0
        %v1849 = vadd.f32 0.0, %v1848
        %v1850 = vpop.f32.mrb[0].mxu0
        %1851 = vmatprep.mubr.f32.mxu0 0.0
        %1852 = vmatmul.mubr.f32.gmra.mrb[0].mxu0 %v1718
        %v1853 = vpop.f32.mrb[0].mxu0
        %v1854 = vadd.f32 0.0, %v1853
        %v1855 = vpop.f32.mrb[0].mxu0
        %1856 = vmatprep.mubr.f32.mxu0 0.0
        %1857 = vmatmul.mubr.f32.gmra.mrb[0].mxu0 %v1721
        %v1858 = vpop.f32.mrb[0].mxu0
        %v1859 = vadd.f32 0.0, %v1858
        %v1860 = vpop.f32.mrb[0].mxu0
        %1861 = vmatprep.mubr.f32.mxu0 0.0
        %1862 = vmatmul.mubr.f32.gmra.mrb[0].mxu0 %v1724
        %v1863 = vpop.f32.mrb[0].mxu0
        %v1864 = vadd.f32 0.0, %v1863
        %v1865 = vpop.f32.mrb[0].mxu0
        %1866 = vmatprep.mubr.f32.mxu0 0.0
        %1867 = vmatmul.mubr.f32.gmra.mrb[0].mxu0 %v1727
        %v1868 = vpop.f32.mrb[0].mxu0
        %v1869 = vadd.f32 0.0, %v1868
        %v1870 = vpop.f32.mrb[0].mxu0
        %1871 = vmatprep.mubr.f32.mxu0 0.0
        %1872 = vmatmul.mubr.f32.gmra.mrb[0].mxu0 %v1730
        %v1873 = vpop.f32.mrb[0].mxu0
        %v1874 = vadd.f32 0.0, %v1873
        %v1875 = vpop.f32.mrb[0].mxu0
        %1876 = vdwg.mxu0
        %v1878 = vsel %vm1683, %v1659, 0
        %v1881 = vsel %vm1683, %v1660, 0
        %v1884 = vsel %vm1683, %v1661, 0
        %v1887 = vsel %vm1683, %v1662, 0
        %v1890 = vsel %vm1683, %v1663, 0
        %v1893 = vsel %vm1683, %v1664, 0
        %v1896 = vsel %vm1683, %v1665, 0
        %v1899 = vsel %vm1683, %v1666, 0
        %v1902 = vsel %vm1683, %v1667, 0
        %v1905 = vsel %vm1683, %v1668, 0
        %v1908 = vsel %vm1683, %v1669, 0
        %v1911 = vsel %vm1683, %v1670, 0
        %v1914 = vsel %vm1683, %v1671, 0
        %v1917 = vsel %vm1683, %v1672, 0
        %v1920 = vsel %vm1683, %v1673, 0
        %v1923 = vsel %vm1683, %v1674, 0
        %1925 = vmatprep.subr.mxu0 0.0
        %1926 = vmatpush1.msra.mxu0 %v1675
        %1927 = vmatprep.subr.mxu0 0.0
        %1928 = vmatpush1.msra.mxu0 %v1676
        %1929 = vmatprep.subr.mxu0 0.0
        %1930 = vmatpush1.msra.mxu0 %v1677
        %1931 = vmatprep.subr.mxu0 0.0
        %1932 = vmatpush1.msra.mxu0 %v1678
        %1933 = vmatprep.subr.mxu0 0.0
        %1934 = vmatpush1.msra.mxu0 %v1679
        %1935 = vmatprep.subr.mxu0 0.0
        %1936 = vmatpush1.msra.mxu0 %v1680
        %1937 = vmatprep.subr.mxu0 0.0
        %1938 = vmatpush1.msra.mxu0 %v1681
        %1939 = vmatprep.subr.mxu0 0.0
        %1940 = vmatpush1.msra.mxu0 %v1682
        %1941 = vmatprep.subr.mxu0 0.0
        %1942 = vmatpush1.msra.mxu0 0.0
        %1943 = vmatprep.subr.mxu0 0.0
        %1944 = vmatpush1.msra.mxu0 0.0
        %1945 = vmatprep.subr.mxu0 0.0
        %1946 = vmatpush1.msra.mxu0 0.0
        %1947 = vmatprep.subr.mxu0 0.0
        %1948 = vmatpush1.msra.mxu0 0.0
        %1949 = vmatprep.subr.mxu0 0.0
        %1950 = vmatpush1.msra.mxu0 0.0
        %1951 = vmatprep.subr.mxu0 0.0
        %1952 = vmatpush1.msra.mxu0 0.0
        %1953 = vmatprep.subr.mxu0 0.0
        %1954 = vmatpush1.msra.mxu0 0.0
        %1955 = vmatprep.subr.mxu0 0.0
        %1956 = vmatpush1.msra.mxu0 0.0
        %1957 = vmatprep.subr.mxu0 0.0
        %1958 = vmatpush1.msra.mxu0 0.0
        %1959 = vmatprep.subr.mxu0 0.0
        %1960 = vmatpush1.msra.mxu0 0.0
        %1961 = vmatprep.subr.mxu0 0.0
        %1962 = vmatpush1.msra.mxu0 0.0
        %1963 = vmatprep.subr.mxu0 0.0
        %1964 = vmatpush1.msra.mxu0 0.0
        %1965 = vmatprep.subr.mxu0 0.0
        %1966 = vmatpush1.msra.mxu0 0.0
        %1967 = vmatprep.subr.mxu0 0.0
        %1968 = vmatpush1.msra.mxu0 0.0
        %1969 = vmatprep.subr.mxu0 0.0
        %1970 = vmatpush1.msra.mxu0 0.0
        %1971 = vmatprep.subr.mxu0 0.0
        %1972 = vmatpush1.msra.mxu0 0.0
        %1973 = vmatprep.subr.mxu0 0.0
        %1974 = vmatpush1.msra.mxu0 0.0
        %1975 = vmatprep.subr.mxu0 0.0
        %1976 = vmatpush1.msra.mxu0 0.0
        %1977 = vmatprep.subr.mxu0 0.0
        %1978 = vmatpush1.msra.mxu0 0.0
        %1979 = vmatprep.subr.mxu0 0.0
        %1980 = vmatpush1.msra.mxu0 0.0
        %1981 = vmatprep.subr.mxu0 0.0
        %1982 = vmatpush1.msra.mxu0 0.0
        %1983 = vmatprep.subr.mxu0 0.0
        %1984 = vmatpush1.msra.mxu0 0.0
        %1985 = vmatprep.subr.mxu0 0.0
        %1986 = vmatpush1.msra.mxu0 0.0
        %1987 = vmatprep.subr.mxu0 0.0
        %1988 = vmatpush1.msra.mxu0 0.0
        %1989 = vmatprep.mubr.f32.mxu0 0.0
        %1990 = vmatmul.mubr.f32.gmra.mrb[0].mxu0 %v1878
        %v1991 = vpop.f32.mrb[0].mxu0
        %v1992 = vadd.f32 0.0, %v1991
        %v1993 = vpop.f32.mrb[0].mxu0
        %1994 = vmatprep.mubr.f32.mxu0 0.0
        %1995 = vmatmul.mubr.f32.gmra.mrb[0].mxu0 %v1881
        %v1996 = vpop.f32.mrb[0].mxu0
        %v1997 = vadd.f32 0.0, %v1996
        %v1998 = vpop.f32.mrb[0].mxu0
        %1999 = vmatprep.mubr.f32.mxu0 0.0
        %2000 = vmatmul.mubr.f32.gmra.mrb[0].mxu0 %v1884
        %v2001 = vpop.f32.mrb[0].mxu0
        %v2002 = vadd.f32 0.0, %v2001
        %v2003 = vpop.f32.mrb[0].mxu0
        %2004 = vmatprep.mubr.f32.mxu0 0.0
        %2005 = vmatmul.mubr.f32.gmra.mrb[0].mxu0 %v1887
        %v2006 = vpop.f32.mrb[0].mxu0
        %v2007 = vadd.f32 0.0, %v2006
        %v2008 = vpop.f32.mrb[0].mxu0
        %2009 = vmatprep.mubr.f32.mxu0 0.0
        %2010 = vmatmul.mubr.f32.gmra.mrb[0].mxu0 %v1890
        %v2011 = vpop.f32.mrb[0].mxu0
        %v2012 = vadd.f32 0.0, %v2011
        %v2013 = vpop.f32.mrb[0].mxu0
        %2014 = vmatprep.mubr.f32.mxu0 0.0
        %2015 = vmatmul.mubr.f32.gmra.mrb[0].mxu0 %v1893
        %v2016 = vpop.f32.mrb[0].mxu0
        %v2017 = vadd.f32 0.0, %v2016
        %v2018 = vpop.f32.mrb[0].mxu0
        %2019 = vmatprep.mubr.f32.mxu0 0.0
        %2020 = vmatmul.mubr.f32.gmra.mrb[0].mxu0 %v1896
        %v2021 = vpop.f32.mrb[0].mxu0
        %v2022 = vadd.f32 0.0, %v2021
        %v2023 = vpop.f32.mrb[0].mxu0
        %2024 = vmatprep.mubr.f32.mxu0 0.0
        %2025 = vmatmul.mubr.f32.gmra.mrb[0].mxu0 %v1899
        %v2026 = vpop.f32.mrb[0].mxu0
        %v2027 = vadd.f32 0.0, %v2026
        %v2028 = vpop.f32.mrb[0].mxu0
        %2029 = vmatprep.mubr.f32.mxu0 0.0
        %2030 = vmatmul.mubr.f32.gmra.mrb[0].mxu0 %v1902
        %v2031 = vpop.f32.mrb[0].mxu0
        %v2032 = vadd.f32 0.0, %v2031
        %v2033 = vpop.f32.mrb[0].mxu0
        %2034 = vmatprep.mubr.f32.mxu0 0.0
        %2035 = vmatmul.mubr.f32.gmra.mrb[0].mxu0 %v1905
        %v2036 = vpop.f32.mrb[0].mxu0
        %v2037 = vadd.f32 0.0, %v2036
        %v2038 = vpop.f32.mrb[0].mxu0
        %2039 = vmatprep.mubr.f32.mxu0 0.0
        %2040 = vmatmul.mubr.f32.gmra.mrb[0].mxu0 %v1908
        %v2041 = vpop.f32.mrb[0].mxu0
        %v2042 = vadd.f32 0.0, %v2041
        %v2043 = vpop.f32.mrb[0].mxu0
        %2044 = vmatprep.mubr.f32.mxu0 0.0
        %2045 = vmatmul.mubr.f32.gmra.mrb[0].mxu0 %v1911
        %v2046 = vpop.f32.mrb[0].mxu0
        %v2047 = vadd.f32 0.0, %v2046
        %v2048 = vpop.f32.mrb[0].mxu0
        %2049 = vmatprep.mubr.f32.mxu0 0.0
        %2050 = vmatmul.mubr.f32.gmra.mrb[0].mxu0 %v1914
        %v2051 = vpop.f32.mrb[0].mxu0
        %v2052 = vadd.f32 0.0, %v2051
        %v2053 = vpop.f32.mrb[0].mxu0
        %2054 = vmatprep.mubr.f32.mxu0 0.0
        %2055 = vmatmul.mubr.f32.gmra.mrb[0].mxu0 %v1917
        %v2056 = vpop.f32.mrb[0].mxu0
        %v2057 = vadd.f32 0.0, %v2056
        %v2058 = vpop.f32.mrb[0].mxu0
        %2059 = vmatprep.mubr.f32.mxu0 0.0
        %2060 = vmatmul.mubr.f32.gmra.mrb[0].mxu0 %v1920
        %v2061 = vpop.f32.mrb[0].mxu0
        %v2062 = vadd.f32 0.0, %v2061
        %v2063 = vpop.f32.mrb[0].mxu0
        %2064 = vmatprep.mubr.f32.mxu0 0.0
        %2065 = vmatmul.mubr.f32.gmra.mrb[0].mxu0 %v1923
        %v2066 = vpop.f32.mrb[0].mxu0
        %v2067 = vadd.f32 0.0, %v2066
        %v2068 = vpop.f32.mrb[0].mxu0
        %2069 = vdwg.mxu0
        %v2070 = vlaneseq
        %v2071 = vand.u32 %v2070, 127
        %vm2072 = vcmp.ge.s32.totalorder %v2071, 64
        %v2073 = vmul.f32 %v1799, %v1992
        %v2074 = vmul.f32 %v1804, %v1997
        %v2075 = vmul.f32 %v1809, %v2002
        %v2076 = vmul.f32 %v1814, %v2007
        %v2077 = vmul.f32 %v1819, %v2012
        %v2078 = vmul.f32 %v1824, %v2017
        %v2079 = vmul.f32 %v1829, %v2022
        %v2080 = vmul.f32 %v1834, %v2027
        %v2081 = vmul.f32 %v1839, %v2032
        %v2082 = vmul.f32 %v1844, %v2037
        %v2083 = vmul.f32 %v1849, %v2042
        %v2084 = vmul.f32 %v1854, %v2047
        %v2085 = vmul.f32 %v1859, %v2052
        %v2086 = vmul.f32 %v1864, %v2057
        %v2087 = vmul.f32 %v1869, %v2062
        %v2088 = vmul.f32 %v1874, %v2067
        %v2089 = vsel %vm2072, 1, 0
        %vm2090 = vcmp.eq.s32.totalorder %v2089, 1
        %v2091 = vsel %vm2090, %v2073, 0.0
        %v2092 = vsel %vm2090, %v2074, 0.0
        %v2093 = vsel %vm2090, %v2075, 0.0
        %v2094 = vsel %vm2090, %v2076, 0.0
        %v2095 = vsel %vm2090, %v2077, 0.0
        %v2096 = vsel %vm2090, %v2078, 0.0
        %v2097 = vsel %vm2090, %v2079, 0.0
        %v2098 = vsel %vm2090, %v2080, 0.0
        %v2099 = vsel %vm2090, %v2081, 0.0
        %v2100 = vsel %vm2090, %v2082, 0.0
        %v2101 = vsel %vm2090, %v2083, 0.0
        %v2102 = vsel %vm2090, %v2084, 0.0
        %v2103 = vsel %vm2090, %v2085, 0.0
        %v2104 = vsel %vm2090, %v2086, 0.0
        %v2105 = vsel %vm2090, %v2087, 0.0
        %v2106 = vsel %vm2090, %v2088, 0.0
        %2107 = vadd.xlane.f32.xlu0 %v2091
        %v2108 = vpop.xlane.xlu0 %2107
        %2109 = vadd.xlane.f32.xlu0 %v2092
        %v2110 = vpop.xlane.xlu0 %2109
        %2111 = vadd.xlane.f32.xlu0 %v2093
        %v2112 = vpop.xlane.xlu0 %2111
        %2113 = vadd.xlane.f32.xlu0 %v2094
        %v2114 = vpop.xlane.xlu0 %2113
        %2115 = vadd.xlane.f32.xlu0 %v2095
        %v2116 = vpop.xlane.xlu0 %2115
        %2117 = vadd.xlane.f32.xlu0 %v2096
        %v2118 = vpop.xlane.xlu0 %2117
        %2119 = vadd.xlane.f32.xlu0 %v2097
        %v2120 = vpop.xlane.xlu0 %2119
        %2121 = vadd.xlane.f32.xlu0 %v2098
        %v2122 = vpop.xlane.xlu0 %2121
        %2123 = vadd.xlane.f32.xlu0 %v2099
        %v2124 = vpop.xlane.xlu0 %2123
        %2125 = vadd.xlane.f32.xlu0 %v2100
        %v2126 = vpop.xlane.xlu0 %2125
        %2127 = vadd.xlane.f32.xlu0 %v2101
        %v2128 = vpop.xlane.xlu0 %2127
        %2129 = vadd.xlane.f32.xlu0 %v2102
        %v2130 = vpop.xlane.xlu0 %2129
        %2131 = vadd.xlane.f32.xlu0 %v2103
        %v2132 = vpop.xlane.xlu0 %2131
        %2133 = vadd.xlane.f32.xlu0 %v2104
        %v2134 = vpop.xlane.xlu0 %2133
        %2135 = vadd.xlane.f32.xlu0 %v2105
        %v2136 = vpop.xlane.xlu0 %2135
        %2137 = vadd.xlane.f32.xlu0 %v2106
        %v2138 = vpop.xlane.xlu0 %2137
        %v2139 = vmax.f32 %v2108, -1.0
        %v2140 = vmax.f32 %v2110, -1.0
        %v2141 = vmax.f32 %v2112, -1.0
        %v2142 = vmax.f32 %v2114, -1.0
        %v2143 = vmax.f32 %v2116, -1.0
        %v2144 = vmax.f32 %v2118, -1.0
        %v2145 = vmax.f32 %v2120, -1.0
        %v2146 = vmax.f32 %v2122, -1.0
        %v2147 = vmax.f32 %v2124, -1.0
        %v2148 = vmax.f32 %v2126, -1.0
        %v2149 = vmax.f32 %v2128, -1.0
        %v2150 = vmax.f32 %v2130, -1.0
        %v2151 = vmax.f32 %v2132, -1.0
        %v2152 = vmax.f32 %v2134, -1.0
        %v2153 = vmax.f32 %v2136, -1.0
        %v2154 = vmax.f32 %v2138, -1.0
        %v2155 = vmin.f32 %v2139, 1.0
        %v2156 = vmin.f32 %v2140, 1.0
        %v2157 = vmin.f32 %v2141, 1.0
        %v2158 = vmin.f32 %v2142, 1.0
        %v2159 = vmin.f32 %v2143, 1.0
        %v2160 = vmin.f32 %v2144, 1.0
        %v2161 = vmin.f32 %v2145, 1.0
        %v2162 = vmin.f32 %v2146, 1.0
        %v2163 = vmin.f32 %v2147, 1.0
        %v2164 = vmin.f32 %v2148, 1.0
        %v2165 = vmin.f32 %v2149, 1.0
        %v2166 = vmin.f32 %v2150, 1.0
        %v2167 = vmin.f32 %v2151, 1.0
        %v2168 = vmin.f32 %v2152, 1.0
        %v2169 = vmin.f32 %v2153, 1.0
        %v2170 = vmin.f32 %v2154, 1.0
        %v2171 = vmul.f32 %v2155, %v2155
        %v2172 = vmul.f32 %v2156, %v2156
        %v2173 = vmul.f32 %v2157, %v2157
        %v2174 = vmul.f32 %v2158, %v2158
        %v2175 = vmul.f32 %v2159, %v2159
        %v2176 = vmul.f32 %v2160, %v2160
        %v2177 = vmul.f32 %v2161, %v2161
        %v2178 = vmul.f32 %v2162, %v2162
        %v2179 = vmul.f32 %v2163, %v2163
        %v2180 = vmul.f32 %v2164, %v2164
        %v2181 = vmul.f32 %v2165, %v2165
        %v2182 = vmul.f32 %v2166, %v2166
        %v2183 = vmul.f32 %v2167, %v2167
        %v2184 = vmul.f32 %v2168, %v2168
        %v2185 = vmul.f32 %v2169, %v2169
        %v2186 = vmul.f32 %v2170, %v2170
        %v2187 = vsub.f32 1.0, %v2171
        %v2188 = vsub.f32 1.0, %v2172
        %v2189 = vsub.f32 1.0, %v2173
        %v2190 = vsub.f32 1.0, %v2174
        %v2191 = vsub.f32 1.0, %v2175
        %v2192 = vsub.f32 1.0, %v2176
        %v2193 = vsub.f32 1.0, %v2177
        %v2194 = vsub.f32 1.0, %v2178
        %v2195 = vsub.f32 1.0, %v2179
        %v2196 = vsub.f32 1.0, %v2180
        %v2197 = vsub.f32 1.0, %v2181
        %v2198 = vsub.f32 1.0, %v2182
        %v2199 = vsub.f32 1.0, %v2183
        %v2200 = vsub.f32 1.0, %v2184
        %v2201 = vsub.f32 1.0, %v2185
        %v2202 = vsub.f32 1.0, %v2186
        %v2203 = vmax.f32 %v2187, 0.0
        %v2204 = vmax.f32 %v2188, 0.0
        %v2205 = vmax.f32 %v2189, 0.0
        %v2206 = vmax.f32 %v2190, 0.0
        %v2207 = vmax.f32 %v2191, 0.0
        %v2208 = vmax.f32 %v2192, 0.0
        %v2209 = vmax.f32 %v2193, 0.0
        %v2210 = vmax.f32 %v2194, 0.0
        %v2211 = vmax.f32 %v2195, 0.0
        %v2212 = vmax.f32 %v2196, 0.0
        %v2213 = vmax.f32 %v2197, 0.0
        %v2214 = vmax.f32 %v2198, 0.0
        %v2215 = vmax.f32 %v2199, 0.0
        %v2216 = vmax.f32 %v2200, 0.0
        %v2217 = vmax.f32 %v2201, 0.0
        %v2218 = vmax.f32 %v2202, 0.0
        %v2219 = vrsqrt.pop %v2203
        %v2220 = vmul.f32 %v2203, %v2219
        %vm2221 = vcmp.eq.f32.partialorder %v2203, inf
        %v2222 = vsel %vm2221, %v2203, %v2220
        %vm2223 = vcmp.eq.f32.partialorder %v2203, 0.0
        %v2224 = vand.u32 %v2203, 2147483648
        %v2225 = vsel %vm2223, %v2224, %v2222
        %v2226 = vrsqrt.pop %v2204
        %v2227 = vmul.f32 %v2204, %v2226
        %vm2228 = vcmp.eq.f32.partialorder %v2204, inf
        %v2229 = vsel %vm2228, %v2204, %v2227
        %vm2230 = vcmp.eq.f32.partialorder %v2204, 0.0
        %v2231 = vand.u32 %v2204, 2147483648
        %v2232 = vsel %vm2230, %v2231, %v2229
        %v2233 = vrsqrt.pop %v2205
        %v2234 = vmul.f32 %v2205, %v2233
        %vm2235 = vcmp.eq.f32.partialorder %v2205, inf
        %v2236 = vsel %vm2235, %v2205, %v2234
        %vm2237 = vcmp.eq.f32.partialorder %v2205, 0.0
        %v2238 = vand.u32 %v2205, 2147483648
        %v2239 = vsel %vm2237, %v2238, %v2236
        %v2240 = vrsqrt.pop %v2206
        %v2241 = vmul.f32 %v2206, %v2240
        %vm2242 = vcmp.eq.f32.partialorder %v2206, inf
        %v2243 = vsel %vm2242, %v2206, %v2241
        %vm2244 = vcmp.eq.f32.partialorder %v2206, 0.0
        %v2245 = vand.u32 %v2206, 2147483648
        %v2246 = vsel %vm2244, %v2245, %v2243
        %v2247 = vrsqrt.pop %v2207
        %v2248 = vmul.f32 %v2207, %v2247
        %vm2249 = vcmp.eq.f32.partialorder %v2207, inf
        %v2250 = vsel %vm2249, %v2207, %v2248
        %vm2251 = vcmp.eq.f32.partialorder %v2207, 0.0
        %v2252 = vand.u32 %v2207, 2147483648
        %v2253 = vsel %vm2251, %v2252, %v2250
        %v2254 = vrsqrt.pop %v2208
        %v2255 = vmul.f32 %v2208, %v2254
        %vm2256 = vcmp.eq.f32.partialorder %v2208, inf
        %v2257 = vsel %vm2256, %v2208, %v2255
        %vm2258 = vcmp.eq.f32.partialorder %v2208, 0.0
        %v2259 = vand.u32 %v2208, 2147483648
        %v2260 = vsel %vm2258, %v2259, %v2257
        %v2261 = vrsqrt.pop %v2209
        %v2262 = vmul.f32 %v2209, %v2261
        %vm2263 = vcmp.eq.f32.partialorder %v2209, inf
        %v2264 = vsel %vm2263, %v2209, %v2262
        %vm2265 = vcmp.eq.f32.partialorder %v2209, 0.0
        %v2266 = vand.u32 %v2209, 2147483648
        %v2267 = vsel %vm2265, %v2266, %v2264
        %v2268 = vrsqrt.pop %v2210
        %v2269 = vmul.f32 %v2210, %v2268
        %vm2270 = vcmp.eq.f32.partialorder %v2210, inf
        %v2271 = vsel %vm2270, %v2210, %v2269
        %vm2272 = vcmp.eq.f32.partialorder %v2210, 0.0
        %v2273 = vand.u32 %v2210, 2147483648
        %v2274 = vsel %vm2272, %v2273, %v2271
        %v2275 = vrsqrt.pop %v2211
        %v2276 = vmul.f32 %v2211, %v2275
        %vm2277 = vcmp.eq.f32.partialorder %v2211, inf
        %v2278 = vsel %vm2277, %v2211, %v2276
        %vm2279 = vcmp.eq.f32.partialorder %v2211, 0.0
        %v2280 = vand.u32 %v2211, 2147483648
        %v2281 = vsel %vm2279, %v2280, %v2278
        %v2282 = vrsqrt.pop %v2212
        %v2283 = vmul.f32 %v2212, %v2282
        %vm2284 = vcmp.eq.f32.partialorder %v2212, inf
        %v2285 = vsel %vm2284, %v2212, %v2283
        %vm2286 = vcmp.eq.f32.partialorder %v2212, 0.0
        %v2287 = vand.u32 %v2212, 2147483648
        %v2288 = vsel %vm2286, %v2287, %v2285
        %v2289 = vrsqrt.pop %v2213
        %v2290 = vmul.f32 %v2213, %v2289
        %vm2291 = vcmp.eq.f32.partialorder %v2213, inf
        %v2292 = vsel %vm2291, %v2213, %v2290
        %vm2293 = vcmp.eq.f32.partialorder %v2213, 0.0
        %v2294 = vand.u32 %v2213, 2147483648
        %v2295 = vsel %vm2293, %v2294, %v2292
        %v2296 = vrsqrt.pop %v2214
        %v2297 = vmul.f32 %v2214, %v2296
        %vm2298 = vcmp.eq.f32.partialorder %v2214, inf
        %v2299 = vsel %vm2298, %v2214, %v2297
        %vm2300 = vcmp.eq.f32.partialorder %v2214, 0.0
        %v2301 = vand.u32 %v2214, 2147483648
        %v2302 = vsel %vm2300, %v2301, %v2299
        %v2303 = vrsqrt.pop %v2215
        %v2304 = vmul.f32 %v2215, %v2303
        %vm2305 = vcmp.eq.f32.partialorder %v2215, inf
        %v2306 = vsel %vm2305, %v2215, %v2304
        %vm2307 = vcmp.eq.f32.partialorder %v2215, 0.0
        %v2308 = vand.u32 %v2215, 2147483648
        %v2309 = vsel %vm2307, %v2308, %v2306
        %v2310 = vrsqrt.pop %v2216
        %v2311 = vmul.f32 %v2216, %v2310
        %vm2312 = vcmp.eq.f32.partialorder %v2216, inf
        %v2313 = vsel %vm2312, %v2216, %v2311
        %vm2314 = vcmp.eq.f32.partialorder %v2216, 0.0
        %v2315 = vand.u32 %v2216, 2147483648
        %v2316 = vsel %vm2314, %v2315, %v2313
        %v2317 = vrsqrt.pop %v2217
        %v2318 = vmul.f32 %v2217, %v2317
        %vm2319 = vcmp.eq.f32.partialorder %v2217, inf
        %v2320 = vsel %vm2319, %v2217, %v2318
        %vm2321 = vcmp.eq.f32.partialorder %v2217, 0.0
        %v2322 = vand.u32 %v2217, 2147483648
        %v2323 = vsel %vm2321, %v2322, %v2320
        %v2324 = vrsqrt.pop %v2218
        %v2325 = vmul.f32 %v2218, %v2324
        %vm2326 = vcmp.eq.f32.partialorder %v2218, inf
        %v2327 = vsel %vm2326, %v2218, %v2325
        %vm2328 = vcmp.eq.f32.partialorder %v2218, 0.0
        %v2329 = vand.u32 %v2218, 2147483648
        %v2330 = vsel %vm2328, %v2329, %v2327
        %vm2331 = vcmask 7168
        %v2332 = vsel %vm2331, 1.0, %v2155
        %v2333 = vsel %vm2331, 1.0, %v2156
        %v2334 = vsel %vm2331, 1.0, %v2157
        %v2335 = vsel %vm2331, 1.0, %v2158
        %v2336 = vsel %vm2331, 1.0, %v2159
        %v2337 = vsel %vm2331, 1.0, %v2160
        %v2338 = vsel %vm2331, 1.0, %v2161
        %v2339 = vsel %vm2331, 1.0, %v2162
        %v2340 = vsel %vm2331, 1.0, %v2163
        %v2341 = vsel %vm2331, 1.0, %v2164
        %v2342 = vsel %vm2331, 1.0, %v2165
        %v2343 = vsel %vm2331, 1.0, %v2166
        %v2344 = vsel %vm2331, 1.0, %v2167
        %v2345 = vsel %vm2331, 1.0, %v2168
        %v2346 = vsel %vm2331, 1.0, %v2169
        %v2347 = vsel %vm2331, 1.0, %v2170
        %v2348 = vsel %vm2331, 0.0, %v2225
        %v2349 = vsel %vm2331, 0.0, %v2232
        %v2350 = vsel %vm2331, 0.0, %v2239
        %v2351 = vsel %vm2331, 0.0, %v2246
        %v2352 = vsel %vm2331, 0.0, %v2253
        %v2353 = vsel %vm2331, 0.0, %v2260
        %v2354 = vsel %vm2331, 0.0, %v2267
        %v2355 = vsel %vm2331, 0.0, %v2274
        %v2356 = vsel %vm2331, 0.0, %v2281
        %v2357 = vsel %vm2331, 0.0, %v2288
        %v2358 = vsel %vm2331, 0.0, %v2295
        %v2359 = vsel %vm2331, 0.0, %v2302
        %v2360 = vsel %vm2331, 0.0, %v2309
        %v2361 = vsel %vm2331, 0.0, %v2316
        %v2362 = vsel %vm2331, 0.0, %v2323
        %v2363 = vsel %vm2331, 0.0, %v2330
        %v2364 = vmul.f32 %v2225, %v2225
        %v2365 = vmul.f32 %v2232, %v2232
        %v2366 = vmul.f32 %v2239, %v2239
        %v2367 = vmul.f32 %v2246, %v2246
        %v2368 = vmul.f32 %v2253, %v2253
        %v2369 = vmul.f32 %v2260, %v2260
        %v2370 = vmul.f32 %v2267, %v2267
        %v2371 = vmul.f32 %v2274, %v2274
        %v2372 = vmul.f32 %v2281, %v2281
        %v2373 = vmul.f32 %v2288, %v2288
        %v2374 = vmul.f32 %v2295, %v2295
        %v2375 = vmul.f32 %v2302, %v2302
        %v2376 = vmul.f32 %v2309, %v2309
        %v2377 = vmul.f32 %v2316, %v2316
        %v2378 = vmul.f32 %v2323, %v2323
        %v2379 = vmul.f32 %v2330, %v2330
        %v2380 = vsub.f32 %v2171, %v2364
        %v2381 = vsub.f32 %v2172, %v2365
        %v2382 = vsub.f32 %v2173, %v2366
        %v2383 = vsub.f32 %v2174, %v2367
        %v2384 = vsub.f32 %v2175, %v2368
        %v2385 = vsub.f32 %v2176, %v2369
        %v2386 = vsub.f32 %v2177, %v2370
        %v2387 = vsub.f32 %v2178, %v2371
        %v2388 = vsub.f32 %v2179, %v2372
        %v2389 = vsub.f32 %v2180, %v2373
        %v2390 = vsub.f32 %v2181, %v2374
        %v2391 = vsub.f32 %v2182, %v2375
        %v2392 = vsub.f32 %v2183, %v2376
        %v2393 = vsub.f32 %v2184, %v2377
        %v2394 = vsub.f32 %v2185, %v2378
        %v2395 = vsub.f32 %v2186, %v2379
        %v2396 = vmul.f32 %v2155, 2.0
        %v2397 = vmul.f32 %v2156, 2.0
        %v2398 = vmul.f32 %v2157, 2.0
        %v2399 = vmul.f32 %v2158, 2.0
        %v2400 = vmul.f32 %v2159, 2.0
        %v2401 = vmul.f32 %v2160, 2.0
        %v2402 = vmul.f32 %v2161, 2.0
        %v2403 = vmul.f32 %v2162, 2.0
        %v2404 = vmul.f32 %v2163, 2.0
        %v2405 = vmul.f32 %v2164, 2.0
        %v2406 = vmul.f32 %v2165, 2.0
        %v2407 = vmul.f32 %v2166, 2.0
        %v2408 = vmul.f32 %v2167, 2.0
        %v2409 = vmul.f32 %v2168, 2.0
        %v2410 = vmul.f32 %v2169, 2.0
        %v2411 = vmul.f32 %v2170, 2.0
        %v2412 = vmul.f32 %v2396, %v2225
        %v2413 = vmul.f32 %v2397, %v2232
        %v2414 = vmul.f32 %v2398, %v2239
        %v2415 = vmul.f32 %v2399, %v2246
        %v2416 = vmul.f32 %v2400, %v2253
        %v2417 = vmul.f32 %v2401, %v2260
        %v2418 = vmul.f32 %v2402, %v2267
        %v2419 = vmul.f32 %v2403, %v2274
        %v2420 = vmul.f32 %v2404, %v2281
        %v2421 = vmul.f32 %v2405, %v2288
        %v2422 = vmul.f32 %v2406, %v2295
        %v2423 = vmul.f32 %v2407, %v2302
        %v2424 = vmul.f32 %v2408, %v2309
        %v2425 = vmul.f32 %v2409, %v2316
        %v2426 = vmul.f32 %v2410, %v2323
        %v2427 = vmul.f32 %v2411, %v2330
        %v2428 = vmul.f32 %v2380, %v2332
        %v2429 = vmul.f32 %v2381, %v2333
        %v2430 = vmul.f32 %v2382, %v2334
        %v2431 = vmul.f32 %v2383, %v2335
        %v2432 = vmul.f32 %v2384, %v2336
        %v2433 = vmul.f32 %v2385, %v2337
        %v2434 = vmul.f32 %v2386, %v2338
        %v2435 = vmul.f32 %v2387, %v2339
        %v2436 = vmul.f32 %v2388, %v2340
        %v2437 = vmul.f32 %v2389, %v2341
        %v2438 = vmul.f32 %v2390, %v2342
        %v2439 = vmul.f32 %v2391, %v2343
        %v2440 = vmul.f32 %v2392, %v2344
        %v2441 = vmul.f32 %v2393, %v2345
        %v2442 = vmul.f32 %v2394, %v2346
        %v2443 = vmul.f32 %v2395, %v2347
        %v2444 = vmul.f32 %v2412, %v2348
        %v2445 = vmul.f32 %v2413, %v2349
        %v2446 = vmul.f32 %v2414, %v2350
        %v2447 = vmul.f32 %v2415, %v2351
        %v2448 = vmul.f32 %v2416, %v2352
        %v2449 = vmul.f32 %v2417, %v2353
        %v2450 = vmul.f32 %v2418, %v2354
        %v2451 = vmul.f32 %v2419, %v2355
        %v2452 = vmul.f32 %v2420, %v2356
        %v2453 = vmul.f32 %v2421, %v2357
        %v2454 = vmul.f32 %v2422, %v2358
        %v2455 = vmul.f32 %v2423, %v2359
        %v2456 = vmul.f32 %v2424, %v2360
        %v2457 = vmul.f32 %v2425, %v2361
        %v2458 = vmul.f32 %v2426, %v2362
        %v2459 = vmul.f32 %v2427, %v2363
        %v2460 = vsub.f32 %v2428, %v2444
        %v2461 = vsub.f32 %v2429, %v2445
        %v2462 = vsub.f32 %v2430, %v2446
        %v2463 = vsub.f32 %v2431, %v2447
        %v2464 = vsub.f32 %v2432, %v2448
        %v2465 = vsub.f32 %v2433, %v2449
        %v2466 = vsub.f32 %v2434, %v2450
        %v2467 = vsub.f32 %v2435, %v2451
        %v2468 = vsub.f32 %v2436, %v2452
        %v2469 = vsub.f32 %v2437, %v2453
        %v2470 = vsub.f32 %v2438, %v2454
        %v2471 = vsub.f32 %v2439, %v2455
        %v2472 = vsub.f32 %v2440, %v2456
        %v2473 = vsub.f32 %v2441, %v2457
        %v2474 = vsub.f32 %v2442, %v2458
        %v2475 = vsub.f32 %v2443, %v2459
        %v2476 = vmul.f32 %v2412, %v2332
        %v2477 = vmul.f32 %v2413, %v2333
        %v2478 = vmul.f32 %v2414, %v2334
        %v2479 = vmul.f32 %v2415, %v2335
        %v2480 = vmul.f32 %v2416, %v2336
        %v2481 = vmul.f32 %v2417, %v2337
        %v2482 = vmul.f32 %v2418, %v2338
        %v2483 = vmul.f32 %v2419, %v2339
        %v2484 = vmul.f32 %v2420, %v2340
        %v2485 = vmul.f32 %v2421, %v2341
        %v2486 = vmul.f32 %v2422, %v2342
        %v2487 = vmul.f32 %v2423, %v2343
        %v2488 = vmul.f32 %v2424, %v2344
        %v2489 = vmul.f32 %v2425, %v2345
        %v2490 = vmul.f32 %v2426, %v2346
        %v2491 = vmul.f32 %v2427, %v2347
        %v2492 = vmul.f32 %v2380, %v2348
        %v2493 = vmul.f32 %v2381, %v2349
        %v2494 = vmul.f32 %v2382, %v2350
        %v2495 = vmul.f32 %v2383, %v2351
        %v2496 = vmul.f32 %v2384, %v2352
        %v2497 = vmul.f32 %v2385, %v2353
        %v2498 = vmul.f32 %v2386, %v2354
        %v2499 = vmul.f32 %v2387, %v2355
        %v2500 = vmul.f32 %v2388, %v2356
        %v2501 = vmul.f32 %v2389, %v2357
        %v2502 = vmul.f32 %v2390, %v2358
        %v2503 = vmul.f32 %v2391, %v2359
        %v2504 = vmul.f32 %v2392, %v2360
        %v2505 = vmul.f32 %v2393, %v2361
        %v2506 = vmul.f32 %v2394, %v2362
        %v2507 = vmul.f32 %v2395, %v2363
        %v2508 = vadd.f32 %v2476, %v2492
        %v2509 = vadd.f32 %v2477, %v2493
        %v2510 = vadd.f32 %v2478, %v2494
        %v2511 = vadd.f32 %v2479, %v2495
        %v2512 = vadd.f32 %v2480, %v2496
        %v2513 = vadd.f32 %v2481, %v2497
        %v2514 = vadd.f32 %v2482, %v2498
        %v2515 = vadd.f32 %v2483, %v2499
        %v2516 = vadd.f32 %v2484, %v2500
        %v2517 = vadd.f32 %v2485, %v2501
        %v2518 = vadd.f32 %v2486, %v2502
        %v2519 = vadd.f32 %v2487, %v2503
        %v2520 = vadd.f32 %v2488, %v2504
        %v2521 = vadd.f32 %v2489, %v2505
        %v2522 = vadd.f32 %v2490, %v2506
        %v2523 = vadd.f32 %v2491, %v2507
        %2540 = vrot.lane.b32.xlu0 %v2460, 2
        %v2541 = vpop.permute.xlu0 %2540
        %2542 = vrot.lane.b32.xlu0 %v2461, 2
        %v2543 = vpop.permute.xlu0 %2542
        %2544 = vrot.lane.b32.xlu0 %v2462, 2
        %v2545 = vpop.permute.xlu0 %2544
        %2546 = vrot.lane.b32.xlu0 %v2463, 2
        %v2547 = vpop.permute.xlu0 %2546
        %2548 = vrot.lane.b32.xlu0 %v2464, 2
        %v2549 = vpop.permute.xlu0 %2548
        %2550 = vrot.lane.b32.xlu0 %v2465, 2
        %v2551 = vpop.permute.xlu0 %2550
        %2552 = vrot.lane.b32.xlu0 %v2466, 2
        %v2553 = vpop.permute.xlu0 %2552
        %2554 = vrot.lane.b32.xlu0 %v2467, 2
        %v2555 = vpop.permute.xlu0 %2554
        %2556 = vrot.lane.b32.xlu0 %v2468, 2
        %v2557 = vpop.permute.xlu0 %2556
        %2558 = vrot.lane.b32.xlu0 %v2469, 2
        %v2559 = vpop.permute.xlu0 %2558
        %2560 = vrot.lane.b32.xlu0 %v2470, 2
        %v2561 = vpop.permute.xlu0 %2560
        %2562 = vrot.lane.b32.xlu0 %v2471, 2
        %v2563 = vpop.permute.xlu0 %2562
        %2564 = vrot.lane.b32.xlu0 %v2472, 2
        %v2565 = vpop.permute.xlu0 %2564
        %2566 = vrot.lane.b32.xlu0 %v2473, 2
        %v2567 = vpop.permute.xlu0 %2566
        %2568 = vrot.lane.b32.xlu0 %v2474, 2
        %v2569 = vpop.permute.xlu0 %2568
        %2570 = vrot.lane.b32.xlu0 %v2475, 2
        %v2571 = vpop.permute.xlu0 %2570
        %vm2588 = vcmask 15360
        %v2589 = vsel %vm2588, %v2332, %v2541
        %v2590 = vsel %vm2588, %v2333, %v2543
        %v2591 = vsel %vm2588, %v2334, %v2545
        %v2592 = vsel %vm2588, %v2335, %v2547
        %v2593 = vsel %vm2588, %v2336, %v2549
        %v2594 = vsel %vm2588, %v2337, %v2551
        %v2595 = vsel %vm2588, %v2338, %v2553
        %v2596 = vsel %vm2588, %v2339, %v2555
        %v2597 = vsel %vm2588, %v2340, %v2557
        %v2598 = vsel %vm2588, %v2341, %v2559
        %v2599 = vsel %vm2588, %v2342, %v2561
        %v2600 = vsel %vm2588, %v2343, %v2563
        %v2601 = vsel %vm2588, %v2344, %v2565
        %v2602 = vsel %vm2588, %v2345, %v2567
        %v2603 = vsel %vm2588, %v2346, %v2569
        %v2604 = vsel %vm2588, %v2347, %v2571
        %2621 = vrot.lane.b32.xlu0 %v2508, 2
        %v2622 = vpop.permute.xlu0 %2621
        %2623 = vrot.lane.b32.xlu0 %v2509, 2
        %v2624 = vpop.permute.xlu0 %2623
        %2625 = vrot.lane.b32.xlu0 %v2510, 2
        %v2626 = vpop.permute.xlu0 %2625
        %2627 = vrot.lane.b32.xlu0 %v2511, 2
        %v2628 = vpop.permute.xlu0 %2627
        %2629 = vrot.lane.b32.xlu0 %v2512, 2
        %v2630 = vpop.permute.xlu0 %2629
        %2631 = vrot.lane.b32.xlu0 %v2513, 2
        %v2632 = vpop.permute.xlu0 %2631
        %2633 = vrot.lane.b32.xlu0 %v2514, 2
        %v2634 = vpop.permute.xlu0 %2633
        %2635 = vrot.lane.b32.xlu0 %v2515, 2
        %v2636 = vpop.permute.xlu0 %2635
        %2637 = vrot.lane.b32.xlu0 %v2516, 2
        %v2638 = vpop.permute.xlu0 %2637
        %2639 = vrot.lane.b32.xlu0 %v2517, 2
        %v2640 = vpop.permute.xlu0 %2639
        %2641 = vrot.lane.b32.xlu0 %v2518, 2
        %v2642 = vpop.permute.xlu0 %2641
        %2643 = vrot.lane.b32.xlu0 %v2519, 2
        %v2644 = vpop.permute.xlu0 %2643
        %2645 = vrot.lane.b32.xlu0 %v2520, 2
        %v2646 = vpop.permute.xlu0 %2645
        %2647 = vrot.lane.b32.xlu0 %v2521, 2
        %v2648 = vpop.permute.xlu0 %2647
        %2649 = vrot.lane.b32.xlu0 %v2522, 2
        %v2650 = vpop.permute.xlu0 %2649
        %2651 = vrot.lane.b32.xlu0 %v2523, 2
        %v2652 = vpop.permute.xlu0 %2651
        %v2669 = vsel %vm2588, %v2348, %v2622
        %v2670 = vsel %vm2588, %v2349, %v2624
        %v2671 = vsel %vm2588, %v2350, %v2626
        %v2672 = vsel %vm2588, %v2351, %v2628
        %v2673 = vsel %vm2588, %v2352, %v2630
        %v2674 = vsel %vm2588, %v2353, %v2632
        %v2675 = vsel %vm2588, %v2354, %v2634
        %v2676 = vsel %vm2588, %v2355, %v2636
        %v2677 = vsel %vm2588, %v2356, %v2638
        %v2678 = vsel %vm2588, %v2357, %v2640
        %v2679 = vsel %vm2588, %v2358, %v2642
        %v2680 = vsel %vm2588, %v2359, %v2644
        %v2681 = vsel %vm2588, %v2360, %v2646
        %v2682 = vsel %vm2588, %v2361, %v2648
        %v2683 = vsel %vm2588, %v2362, %v2650
        %v2684 = vsel %vm2588, %v2363, %v2652
        %v2685 = vmul.f32 %v2380, %v2380
        %v2686 = vmul.f32 %v2381, %v2381
        %v2687 = vmul.f32 %v2382, %v2382
        %v2688 = vmul.f32 %v2383, %v2383
        %v2689 = vmul.f32 %v2384, %v2384
        %v2690 = vmul.f32 %v2385, %v2385
        %v2691 = vmul.f32 %v2386, %v2386
        %v2692 = vmul.f32 %v2387, %v2387
        %v2693 = vmul.f32 %v2388, %v2388
        %v2694 = vmul.f32 %v2389, %v2389
        %v2695 = vmul.f32 %v2390, %v2390
        %v2696 = vmul.f32 %v2391, %v2391
        %v2697 = vmul.f32 %v2392, %v2392
        %v2698 = vmul.f32 %v2393, %v2393
        %v2699 = vmul.f32 %v2394, %v2394
        %v2700 = vmul.f32 %v2395, %v2395
        %v2701 = vmul.f32 %v2412, %v2412
        %v2702 = vmul.f32 %v2413, %v2413
        %v2703 = vmul.f32 %v2414, %v2414
        %v2704 = vmul.f32 %v2415, %v2415
        %v2705 = vmul.f32 %v2416, %v2416
        %v2706 = vmul.f32 %v2417, %v2417
        %v2707 = vmul.f32 %v2418, %v2418
        %v2708 = vmul.f32 %v2419, %v2419
        %v2709 = vmul.f32 %v2420, %v2420
        %v2710 = vmul.f32 %v2421, %v2421
        %v2711 = vmul.f32 %v2422, %v2422
        %v2712 = vmul.f32 %v2423, %v2423
        %v2713 = vmul.f32 %v2424, %v2424
        %v2714 = vmul.f32 %v2425, %v2425
        %v2715 = vmul.f32 %v2426, %v2426
        %v2716 = vmul.f32 %v2427, %v2427
        %v2717 = vsub.f32 %v2685, %v2701
        %v2718 = vsub.f32 %v2686, %v2702
        %v2719 = vsub.f32 %v2687, %v2703
        %v2720 = vsub.f32 %v2688, %v2704
        %v2721 = vsub.f32 %v2689, %v2705
        %v2722 = vsub.f32 %v2690, %v2706
        %v2723 = vsub.f32 %v2691, %v2707
        %v2724 = vsub.f32 %v2692, %v2708
        %v2725 = vsub.f32 %v2693, %v2709
        %v2726 = vsub.f32 %v2694, %v2710
        %v2727 = vsub.f32 %v2695, %v2711
        %v2728 = vsub.f32 %v2696, %v2712
        %v2729 = vsub.f32 %v2697, %v2713
        %v2730 = vsub.f32 %v2698, %v2714
        %v2731 = vsub.f32 %v2699, %v2715
        %v2732 = vsub.f32 %v2700, %v2716
        %v2733 = vmul.f32 %v2380, 2.0
        %v2734 = vmul.f32 %v2381, 2.0
        %v2735 = vmul.f32 %v2382, 2.0
        %v2736 = vmul.f32 %v2383, 2.0
        %v2737 = vmul.f32 %v2384, 2.0
        %v2738 = vmul.f32 %v2385, 2.0
        %v2739 = vmul.f32 %v2386, 2.0
        %v2740 = vmul.f32 %v2387, 2.0
        %v2741 = vmul.f32 %v2388, 2.0
        %v2742 = vmul.f32 %v2389, 2.0
        %v2743 = vmul.f32 %v2390, 2.0
        %v2744 = vmul.f32 %v2391, 2.0
        %v2745 = vmul.f32 %v2392, 2.0
        %v2746 = vmul.f32 %v2393, 2.0
        %v2747 = vmul.f32 %v2394, 2.0
        %v2748 = vmul.f32 %v2395, 2.0
        %v2749 = vmul.f32 %v2733, %v2412
        %v2750 = vmul.f32 %v2734, %v2413
        %v2751 = vmul.f32 %v2735, %v2414
        %v2752 = vmul.f32 %v2736, %v2415
        %v2753 = vmul.f32 %v2737, %v2416
        %v2754 = vmul.f32 %v2738, %v2417
        %v2755 = vmul.f32 %v2739, %v2418
        %v2756 = vmul.f32 %v2740, %v2419
        %v2757 = vmul.f32 %v2741, %v2420
        %v2758 = vmul.f32 %v2742, %v2421
        %v2759 = vmul.f32 %v2743, %v2422
        %v2760 = vmul.f32 %v2744, %v2423
        %v2761 = vmul.f32 %v2745, %v2424
        %v2762 = vmul.f32 %v2746, %v2425
        %v2763 = vmul.f32 %v2747, %v2426
        %v2764 = vmul.f32 %v2748, %v2427
        %v2765 = vmul.f32 %v2717, %v2589
        %v2766 = vmul.f32 %v2718, %v2590
        %v2767 = vmul.f32 %v2719, %v2591
        %v2768 = vmul.f32 %v2720, %v2592
        %v2769 = vmul.f32 %v2721, %v2593
        %v2770 = vmul.f32 %v2722, %v2594
        %v2771 = vmul.f32 %v2723, %v2595
        %v2772 = vmul.f32 %v2724, %v2596
        %v2773 = vmul.f32 %v2725, %v2597
        %v2774 = vmul.f32 %v2726, %v2598
        %v2775 = vmul.f32 %v2727, %v2599
        %v2776 = vmul.f32 %v2728, %v2600
        %v2777 = vmul.f32 %v2729, %v2601
        %v2778 = vmul.f32 %v2730, %v2602
        %v2779 = vmul.f32 %v2731, %v2603
        %v2780 = vmul.f32 %v2732, %v2604
        %v2781 = vmul.f32 %v2749, %v2669
        %v2782 = vmul.f32 %v2750, %v2670
        %v2783 = vmul.f32 %v2751, %v2671
        %v2784 = vmul.f32 %v2752, %v2672
        %v2785 = vmul.f32 %v2753, %v2673
        %v2786 = vmul.f32 %v2754, %v2674
        %v2787 = vmul.f32 %v2755, %v2675
        %v2788 = vmul.f32 %v2756, %v2676
        %v2789 = vmul.f32 %v2757, %v2677
        %v2790 = vmul.f32 %v2758, %v2678
        %v2791 = vmul.f32 %v2759, %v2679
        %v2792 = vmul.f32 %v2760, %v2680
        %v2793 = vmul.f32 %v2761, %v2681
        %v2794 = vmul.f32 %v2762, %v2682
        %v2795 = vmul.f32 %v2763, %v2683
        %v2796 = vmul.f32 %v2764, %v2684
        %v2797 = vsub.f32 %v2765, %v2781
        %v2798 = vsub.f32 %v2766, %v2782
        %v2799 = vsub.f32 %v2767, %v2783
        %v2800 = vsub.f32 %v2768, %v2784
        %v2801 = vsub.f32 %v2769, %v2785
        %v2802 = vsub.f32 %v2770, %v2786
        %v2803 = vsub.f32 %v2771, %v2787
        %v2804 = vsub.f32 %v2772, %v2788
        %v2805 = vsub.f32 %v2773, %v2789
        %v2806 = vsub.f32 %v2774, %v2790
        %v2807 = vsub.f32 %v2775, %v2791
        %v2808 = vsub.f32 %v2776, %v2792
        %v2809 = vsub.f32 %v2777, %v2793
        %v2810 = vsub.f32 %v2778, %v2794
        %v2811 = vsub.f32 %v2779, %v2795
        %v2812 = vsub.f32 %v2780, %v2796
        %v2813 = vmul.f32 %v2749, %v2589
        %v2814 = vmul.f32 %v2750, %v2590
        %v2815 = vmul.f32 %v2751, %v2591
        %v2816 = vmul.f32 %v2752, %v2592
        %v2817 = vmul.f32 %v2753, %v2593
        %v2818 = vmul.f32 %v2754, %v2594
        %v2819 = vmul.f32 %v2755, %v2595
        %v2820 = vmul.f32 %v2756, %v2596
        %v2821 = vmul.f32 %v2757, %v2597
        %v2822 = vmul.f32 %v2758, %v2598
        %v2823 = vmul.f32 %v2759, %v2599
        %v2824 = vmul.f32 %v2760, %v2600
        %v2825 = vmul.f32 %v2761, %v2601
        %v2826 = vmul.f32 %v2762, %v2602
        %v2827 = vmul.f32 %v2763, %v2603
        %v2828 = vmul.f32 %v2764, %v2604
        %v2829 = vmul.f32 %v2717, %v2669
        %v2830 = vmul.f32 %v2718, %v2670
        %v2831 = vmul.f32 %v2719, %v2671
        %v2832 = vmul.f32 %v2720, %v2672
        %v2833 = vmul.f32 %v2721, %v2673
        %v2834 = vmul.f32 %v2722, %v2674
        %v2835 = vmul.f32 %v2723, %v2675
        %v2836 = vmul.f32 %v2724, %v2676
        %v2837 = vmul.f32 %v2725, %v2677
        %v2838 = vmul.f32 %v2726, %v2678
        %v2839 = vmul.f32 %v2727, %v2679
        %v2840 = vmul.f32 %v2728, %v2680
        %v2841 = vmul.f32 %v2729, %v2681
        %v2842 = vmul.f32 %v2730, %v2682
        %v2843 = vmul.f32 %v2731, %v2683
        %v2844 = vmul.f32 %v2732, %v2684
        %v2845 = vadd.f32 %v2813, %v2829
        %v2846 = vadd.f32 %v2814, %v2830
        %v2847 = vadd.f32 %v2815, %v2831
        %v2848 = vadd.f32 %v2816, %v2832
        %v2849 = vadd.f32 %v2817, %v2833
        %v2850 = vadd.f32 %v2818, %v2834
        %v2851 = vadd.f32 %v2819, %v2835
        %v2852 = vadd.f32 %v2820, %v2836
        %v2853 = vadd.f32 %v2821, %v2837
        %v2854 = vadd.f32 %v2822, %v2838
        %v2855 = vadd.f32 %v2823, %v2839
        %v2856 = vadd.f32 %v2824, %v2840
        %v2857 = vadd.f32 %v2825, %v2841
        %v2858 = vadd.f32 %v2826, %v2842
        %v2859 = vadd.f32 %v2827, %v2843
        %v2860 = vadd.f32 %v2828, %v2844
        %2877 = vrot.lane.b32.xlu0 %v2797, 4
        %v2878 = vpop.permute.xlu0 %2877
        %2879 = vrot.lane.b32.xlu0 %v2798, 4
        %v2880 = vpop.permute.xlu0 %2879
        %2881 = vrot.lane.b32.xlu0 %v2799, 4
        %v2882 = vpop.permute.xlu0 %2881
        %2883 = vrot.lane.b32.xlu0 %v2800, 4
        %v2884 = vpop.permute.xlu0 %2883
        %2885 = vrot.lane.b32.xlu0 %v2801, 4
        %v2886 = vpop.permute.xlu0 %2885
        %2887 = vrot.lane.b32.xlu0 %v2802, 4
        %v2888 = vpop.permute.xlu0 %2887
        %2889 = vrot.lane.b32.xlu0 %v2803, 4
        %v2890 = vpop.permute.xlu0 %2889
        %2891 = vrot.lane.b32.xlu0 %v2804, 4
        %v2892 = vpop.permute.xlu0 %2891
        %2893 = vrot.lane.b32.xlu0 %v2805, 4
        %v2894 = vpop.permute.xlu0 %2893
        %2895 = vrot.lane.b32.xlu0 %v2806, 4
        %v2896 = vpop.permute.xlu0 %2895
        %2897 = vrot.lane.b32.xlu0 %v2807, 4
        %v2898 = vpop.permute.xlu0 %2897
        %2899 = vrot.lane.b32.xlu0 %v2808, 4
        %v2900 = vpop.permute.xlu0 %2899
        %2901 = vrot.lane.b32.xlu0 %v2809, 4
        %v2902 = vpop.permute.xlu0 %2901
        %2903 = vrot.lane.b32.xlu0 %v2810, 4
        %v2904 = vpop.permute.xlu0 %2903
        %2905 = vrot.lane.b32.xlu0 %v2811, 4
        %v2906 = vpop.permute.xlu0 %2905
        %2907 = vrot.lane.b32.xlu0 %v2812, 4
        %v2908 = vpop.permute.xlu0 %2907
        %vm2925 = vcmask 31744
        %v2926 = vsel %vm2925, %v2589, %v2878
        %v2927 = vsel %vm2925, %v2590, %v2880
        %v2928 = vsel %vm2925, %v2591, %v2882
        %v2929 = vsel %vm2925, %v2592, %v2884
        %v2930 = vsel %vm2925, %v2593, %v2886
        %v2931 = vsel %vm2925, %v2594, %v2888
        %v2932 = vsel %vm2925, %v2595, %v2890
        %v2933 = vsel %vm2925, %v2596, %v2892
        %v2934 = vsel %vm2925, %v2597, %v2894
        %v2935 = vsel %vm2925, %v2598, %v2896
        %v2936 = vsel %vm2925, %v2599, %v2898
        %v2937 = vsel %vm2925, %v2600, %v2900
        %v2938 = vsel %vm2925, %v2601, %v2902
        %v2939 = vsel %vm2925, %v2602, %v2904
        %v2940 = vsel %vm2925, %v2603, %v2906
        %v2941 = vsel %vm2925, %v2604, %v2908
        %2958 = vrot.lane.b32.xlu0 %v2845, 4
        %v2959 = vpop.permute.xlu0 %2958
        %2960 = vrot.lane.b32.xlu0 %v2846, 4
        %v2961 = vpop.permute.xlu0 %2960
        %2962 = vrot.lane.b32.xlu0 %v2847, 4
        %v2963 = vpop.permute.xlu0 %2962
        %2964 = vrot.lane.b32.xlu0 %v2848, 4
        %v2965 = vpop.permute.xlu0 %2964
        %2966 = vrot.lane.b32.xlu0 %v2849, 4
        %v2967 = vpop.permute.xlu0 %2966
        %2968 = vrot.lane.b32.xlu0 %v2850, 4
        %v2969 = vpop.permute.xlu0 %2968
        %2970 = vrot.lane.b32.xlu0 %v2851, 4
        %v2971 = vpop.permute.xlu0 %2970
        %2972 = vrot.lane.b32.xlu0 %v2852, 4
        %v2973 = vpop.permute.xlu0 %2972
        %2974 = vrot.lane.b32.xlu0 %v2853, 4
        %v2975 = vpop.permute.xlu0 %2974
        %2976 = vrot.lane.b32.xlu0 %v2854, 4
        %v2977 = vpop.permute.xlu0 %2976
        %2978 = vrot.lane.b32.xlu0 %v2855, 4
        %v2979 = vpop.permute.xlu0 %2978
        %2980 = vrot.lane.b32.xlu0 %v2856, 4
        %v2981 = vpop.permute.xlu0 %2980
        %2982 = vrot.lane.b32.xlu0 %v2857, 4
        %v2983 = vpop.permute.xlu0 %2982
        %2984 = vrot.lane.b32.xlu0 %v2858, 4
        %v2985 = vpop.permute.xlu0 %2984
        %2986 = vrot.lane.b32.xlu0 %v2859, 4
        %v2987 = vpop.permute.xlu0 %2986
        %2988 = vrot.lane.b32.xlu0 %v2860, 4
        %v2989 = vpop.permute.xlu0 %2988
        %v3006 = vsel %vm2925, %v2669, %v2959
        %v3007 = vsel %vm2925, %v2670, %v2961
        %v3008 = vsel %vm2925, %v2671, %v2963
        %v3009 = vsel %vm2925, %v2672, %v2965
        %v3010 = vsel %vm2925, %v2673, %v2967
        %v3011 = vsel %vm2925, %v2674, %v2969
        %v3012 = vsel %vm2925, %v2675, %v2971
        %v3013 = vsel %vm2925, %v2676, %v2973
        %v3014 = vsel %vm2925, %v2677, %v2975
        %v3015 = vsel %vm2925, %v2678, %v2977
        %v3016 = vsel %vm2925, %v2679, %v2979
        %v3017 = vsel %vm2925, %v2680, %v2981
        %v3018 = vsel %vm2925, %v2681, %v2983
        %v3019 = vsel %vm2925, %v2682, %v2985
        %v3020 = vsel %vm2925, %v2683, %v2987
        %v3021 = vsel %vm2925, %v2684, %v2989
        %v3022 = vmul.f32 %v2717, %v2717
        %v3023 = vmul.f32 %v2718, %v2718
        %v3024 = vmul.f32 %v2719, %v2719
        %v3025 = vmul.f32 %v2720, %v2720
        %v3026 = vmul.f32 %v2721, %v2721
        %v3027 = vmul.f32 %v2722, %v2722
        %v3028 = vmul.f32 %v2723, %v2723
        %v3029 = vmul.f32 %v2724, %v2724
        %v3030 = vmul.f32 %v2725, %v2725
        %v3031 = vmul.f32 %v2726, %v2726
        %v3032 = vmul.f32 %v2727, %v2727
        %v3033 = vmul.f32 %v2728, %v2728
        %v3034 = vmul.f32 %v2729, %v2729
        %v3035 = vmul.f32 %v2730, %v2730
        %v3036 = vmul.f32 %v2731, %v2731
        %v3037 = vmul.f32 %v2732, %v2732
        %v3038 = vmul.f32 %v2749, %v2749
        %v3039 = vmul.f32 %v2750, %v2750
        %v3040 = vmul.f32 %v2751, %v2751
        %v3041 = vmul.f32 %v2752, %v2752
        %v3042 = vmul.f32 %v2753, %v2753
        %v3043 = vmul.f32 %v2754, %v2754
        %v3044 = vmul.f32 %v2755, %v2755
        %v3045 = vmul.f32 %v2756, %v2756
        %v3046 = vmul.f32 %v2757, %v2757
        %v3047 = vmul.f32 %v2758, %v2758
        %v3048 = vmul.f32 %v2759, %v2759
        %v3049 = vmul.f32 %v2760, %v2760
        %v3050 = vmul.f32 %v2761, %v2761
        %v3051 = vmul.f32 %v2762, %v2762
        %v3052 = vmul.f32 %v2763, %v2763
        %v3053 = vmul.f32 %v2764, %v2764
        %v3054 = vsub.f32 %v3022, %v3038
        %v3055 = vsub.f32 %v3023, %v3039
        %v3056 = vsub.f32 %v3024, %v3040
        %v3057 = vsub.f32 %v3025, %v3041
        %v3058 = vsub.f32 %v3026, %v3042
        %v3059 = vsub.f32 %v3027, %v3043
        %v3060 = vsub.f32 %v3028, %v3044
        %v3061 = vsub.f32 %v3029, %v3045
        %v3062 = vsub.f32 %v3030, %v3046
        %v3063 = vsub.f32 %v3031, %v3047
        %v3064 = vsub.f32 %v3032, %v3048
        %v3065 = vsub.f32 %v3033, %v3049
        %v3066 = vsub.f32 %v3034, %v3050
        %v3067 = vsub.f32 %v3035, %v3051
        %v3068 = vsub.f32 %v3036, %v3052
        %v3069 = vsub.f32 %v3037, %v3053
        %v3070 = vmul.f32 %v2717, 2.0
        %v3071 = vmul.f32 %v2718, 2.0
        %v3072 = vmul.f32 %v2719, 2.0
        %v3073 = vmul.f32 %v2720, 2.0
        %v3074 = vmul.f32 %v2721, 2.0
        %v3075 = vmul.f32 %v2722, 2.0
        %v3076 = vmul.f32 %v2723, 2.0
        %v3077 = vmul.f32 %v2724, 2.0
        %v3078 = vmul.f32 %v2725, 2.0
        %v3079 = vmul.f32 %v2726, 2.0
        %v3080 = vmul.f32 %v2727, 2.0
        %v3081 = vmul.f32 %v2728, 2.0
        %v3082 = vmul.f32 %v2729, 2.0
        %v3083 = vmul.f32 %v2730, 2.0
        %v3084 = vmul.f32 %v2731, 2.0
        %v3085 = vmul.f32 %v2732, 2.0
        %v3086 = vmul.f32 %v3070, %v2749
        %v3087 = vmul.f32 %v3071, %v2750
        %v3088 = vmul.f32 %v3072, %v2751
        %v3089 = vmul.f32 %v3073, %v2752
        %v3090 = vmul.f32 %v3074, %v2753
        %v3091 = vmul.f32 %v3075, %v2754
        %v3092 = vmul.f32 %v3076, %v2755
        %v3093 = vmul.f32 %v3077, %v2756
        %v3094 = vmul.f32 %v3078, %v2757
        %v3095 = vmul.f32 %v3079, %v2758
        %v3096 = vmul.f32 %v3080, %v2759
        %v3097 = vmul.f32 %v3081, %v2760
        %v3098 = vmul.f32 %v3082, %v2761
        %v3099 = vmul.f32 %v3083, %v2762
        %v3100 = vmul.f32 %v3084, %v2763
        %v3101 = vmul.f32 %v3085, %v2764
        %v3102 = vmul.f32 %v3054, %v2926
        %v3103 = vmul.f32 %v3055, %v2927
        %v3104 = vmul.f32 %v3056, %v2928
        %v3105 = vmul.f32 %v3057, %v2929
        %v3106 = vmul.f32 %v3058, %v2930
        %v3107 = vmul.f32 %v3059, %v2931
        %v3108 = vmul.f32 %v3060, %v2932
        %v3109 = vmul.f32 %v3061, %v2933
        %v3110 = vmul.f32 %v3062, %v2934
        %v3111 = vmul.f32 %v3063, %v2935
        %v3112 = vmul.f32 %v3064, %v2936
        %v3113 = vmul.f32 %v3065, %v2937
        %v3114 = vmul.f32 %v3066, %v2938
        %v3115 = vmul.f32 %v3067, %v2939
        %v3116 = vmul.f32 %v3068, %v2940
        %v3117 = vmul.f32 %v3069, %v2941
        %v3118 = vmul.f32 %v3086, %v3006
        %v3119 = vmul.f32 %v3087, %v3007
        %v3120 = vmul.f32 %v3088, %v3008
        %v3121 = vmul.f32 %v3089, %v3009
        %v3122 = vmul.f32 %v3090, %v3010
        %v3123 = vmul.f32 %v3091, %v3011
        %v3124 = vmul.f32 %v3092, %v3012
        %v3125 = vmul.f32 %v3093, %v3013
        %v3126 = vmul.f32 %v3094, %v3014
        %v3127 = vmul.f32 %v3095, %v3015
        %v3128 = vmul.f32 %v3096, %v3016
        %v3129 = vmul.f32 %v3097, %v3017
        %v3130 = vmul.f32 %v3098, %v3018
        %v3131 = vmul.f32 %v3099, %v3019
        %v3132 = vmul.f32 %v3100, %v3020
        %v3133 = vmul.f32 %v3101, %v3021
        %v3134 = vsub.f32 %v3102, %v3118
        %v3135 = vsub.f32 %v3103, %v3119
        %v3136 = vsub.f32 %v3104, %v3120
        %v3137 = vsub.f32 %v3105, %v3121
        %v3138 = vsub.f32 %v3106, %v3122
        %v3139 = vsub.f32 %v3107, %v3123
        %v3140 = vsub.f32 %v3108, %v3124
        %v3141 = vsub.f32 %v3109, %v3125
        %v3142 = vsub.f32 %v3110, %v3126
        %v3143 = vsub.f32 %v3111, %v3127
        %v3144 = vsub.f32 %v3112, %v3128
        %v3145 = vsub.f32 %v3113, %v3129
        %v3146 = vsub.f32 %v3114, %v3130
        %v3147 = vsub.f32 %v3115, %v3131
        %v3148 = vsub.f32 %v3116, %v3132
        %v3149 = vsub.f32 %v3117, %v3133
        %v3150 = vmul.f32 %v3086, %v2926
        %v3151 = vmul.f32 %v3087, %v2927
        %v3152 = vmul.f32 %v3088, %v2928
        %v3153 = vmul.f32 %v3089, %v2929
        %v3154 = vmul.f32 %v3090, %v2930
        %v3155 = vmul.f32 %v3091, %v2931
        %v3156 = vmul.f32 %v3092, %v2932
        %v3157 = vmul.f32 %v3093, %v2933
        %v3158 = vmul.f32 %v3094, %v2934
        %v3159 = vmul.f32 %v3095, %v2935
        %v3160 = vmul.f32 %v3096, %v2936
        %v3161 = vmul.f32 %v3097, %v2937
        %v3162 = vmul.f32 %v3098, %v2938
        %v3163 = vmul.f32 %v3099, %v2939
        %v3164 = vmul.f32 %v3100, %v2940
        %v3165 = vmul.f32 %v3101, %v2941
        %v3166 = vmul.f32 %v3054, %v3006
        %v3167 = vmul.f32 %v3055, %v3007
        %v3168 = vmul.f32 %v3056, %v3008
        %v3169 = vmul.f32 %v3057, %v3009
        %v3170 = vmul.f32 %v3058, %v3010
        %v3171 = vmul.f32 %v3059, %v3011
        %v3172 = vmul.f32 %v3060, %v3012
        %v3173 = vmul.f32 %v3061, %v3013
        %v3174 = vmul.f32 %v3062, %v3014
        %v3175 = vmul.f32 %v3063, %v3015
        %v3176 = vmul.f32 %v3064, %v3016
        %v3177 = vmul.f32 %v3065, %v3017
        %v3178 = vmul.f32 %v3066, %v3018
        %v3179 = vmul.f32 %v3067, %v3019
        %v3180 = vmul.f32 %v3068, %v3020
        %v3181 = vmul.f32 %v3069, %v3021
        %v3182 = vadd.f32 %v3150, %v3166
        %v3183 = vadd.f32 %v3151, %v3167
        %v3184 = vadd.f32 %v3152, %v3168
        %v3185 = vadd.f32 %v3153, %v3169
        %v3186 = vadd.f32 %v3154, %v3170
        %v3187 = vadd.f32 %v3155, %v3171
        %v3188 = vadd.f32 %v3156, %v3172
        %v3189 = vadd.f32 %v3157, %v3173
        %v3190 = vadd.f32 %v3158, %v3174
        %v3191 = vadd.f32 %v3159, %v3175
        %v3192 = vadd.f32 %v3160, %v3176
        %v3193 = vadd.f32 %v3161, %v3177
        %v3194 = vadd.f32 %v3162, %v3178
        %v3195 = vadd.f32 %v3163, %v3179
        %v3196 = vadd.f32 %v3164, %v3180
        %v3197 = vadd.f32 %v3165, %v3181
        %3214 = vrot.lane.b32.xlu0 %v3134, 8
        %v3215 = vpop.permute.xlu0 %3214
        %3216 = vrot.lane.b32.xlu0 %v3135, 8
        %v3217 = vpop.permute.xlu0 %3216
        %3218 = vrot.lane.b32.xlu0 %v3136, 8
        %v3219 = vpop.permute.xlu0 %3218
        %3220 = vrot.lane.b32.xlu0 %v3137, 8
        %v3221 = vpop.permute.xlu0 %3220
        %3222 = vrot.lane.b32.xlu0 %v3138, 8
        %v3223 = vpop.permute.xlu0 %3222
        %3224 = vrot.lane.b32.xlu0 %v3139, 8
        %v3225 = vpop.permute.xlu0 %3224
        %3226 = vrot.lane.b32.xlu0 %v3140, 8
        %v3227 = vpop.permute.xlu0 %3226
        %3228 = vrot.lane.b32.xlu0 %v3141, 8
        %v3229 = vpop.permute.xlu0 %3228
        %3230 = vrot.lane.b32.xlu0 %v3142, 8
        %v3231 = vpop.permute.xlu0 %3230
        %3232 = vrot.lane.b32.xlu0 %v3143, 8
        %v3233 = vpop.permute.xlu0 %3232
        %3234 = vrot.lane.b32.xlu0 %v3144, 8
        %v3235 = vpop.permute.xlu0 %3234
        %3236 = vrot.lane.b32.xlu0 %v3145, 8
        %v3237 = vpop.permute.xlu0 %3236
        %3238 = vrot.lane.b32.xlu0 %v3146, 8
        %v3239 = vpop.permute.xlu0 %3238
        %3240 = vrot.lane.b32.xlu0 %v3147, 8
        %v3241 = vpop.permute.xlu0 %3240
        %3242 = vrot.lane.b32.xlu0 %v3148, 8
        %v3243 = vpop.permute.xlu0 %3242
        %3244 = vrot.lane.b32.xlu0 %v3149, 8
        %v3245 = vpop.permute.xlu0 %3244
        %vm3262 = vcmask 64512
        %v3263 = vsel %vm3262, %v2926, %v3215
        %v3264 = vsel %vm3262, %v2927, %v3217
        %v3265 = vsel %vm3262, %v2928, %v3219
        %v3266 = vsel %vm3262, %v2929, %v3221
        %v3267 = vsel %vm3262, %v2930, %v3223
        %v3268 = vsel %vm3262, %v2931, %v3225
        %v3269 = vsel %vm3262, %v2932, %v3227
        %v3270 = vsel %vm3262, %v2933, %v3229
        %v3271 = vsel %vm3262, %v2934, %v3231
        %v3272 = vsel %vm3262, %v2935, %v3233
        %v3273 = vsel %vm3262, %v2936, %v3235
        %v3274 = vsel %vm3262, %v2937, %v3237
        %v3275 = vsel %vm3262, %v2938, %v3239
        %v3276 = vsel %vm3262, %v2939, %v3241
        %v3277 = vsel %vm3262, %v2940, %v3243
        %v3278 = vsel %vm3262, %v2941, %v3245
        %3295 = vrot.lane.b32.xlu0 %v3182, 8
        %v3296 = vpop.permute.xlu0 %3295
        %3297 = vrot.lane.b32.xlu0 %v3183, 8
        %v3298 = vpop.permute.xlu0 %3297
        %3299 = vrot.lane.b32.xlu0 %v3184, 8
        %v3300 = vpop.permute.xlu0 %3299
        %3301 = vrot.lane.b32.xlu0 %v3185, 8
        %v3302 = vpop.permute.xlu0 %3301
        %3303 = vrot.lane.b32.xlu0 %v3186, 8
        %v3304 = vpop.permute.xlu0 %3303
        %3305 = vrot.lane.b32.xlu0 %v3187, 8
        %v3306 = vpop.permute.xlu0 %3305
        %3307 = vrot.lane.b32.xlu0 %v3188, 8
        %v3308 = vpop.permute.xlu0 %3307
        %3309 = vrot.lane.b32.xlu0 %v3189, 8
        %v3310 = vpop.permute.xlu0 %3309
        %3311 = vrot.lane.b32.xlu0 %v3190, 8
        %v3312 = vpop.permute.xlu0 %3311
        %3313 = vrot.lane.b32.xlu0 %v3191, 8
        %v3314 = vpop.permute.xlu0 %3313
        %3315 = vrot.lane.b32.xlu0 %v3192, 8
        %v3316 = vpop.permute.xlu0 %3315
        %3317 = vrot.lane.b32.xlu0 %v3193, 8
        %v3318 = vpop.permute.xlu0 %3317
        %3319 = vrot.lane.b32.xlu0 %v3194, 8
        %v3320 = vpop.permute.xlu0 %3319
        %3321 = vrot.lane.b32.xlu0 %v3195, 8
        %v3322 = vpop.permute.xlu0 %3321
        %3323 = vrot.lane.b32.xlu0 %v3196, 8
        %v3324 = vpop.permute.xlu0 %3323
        %3325 = vrot.lane.b32.xlu0 %v3197, 8
        %v3326 = vpop.permute.xlu0 %3325
        %v3343 = vsel %vm3262, %v3006, %v3296
        %v3344 = vsel %vm3262, %v3007, %v3298
        %v3345 = vsel %vm3262, %v3008, %v3300
        %v3346 = vsel %vm3262, %v3009, %v3302
        %v3347 = vsel %vm3262, %v3010, %v3304
        %v3348 = vsel %vm3262, %v3011, %v3306
        %v3349 = vsel %vm3262, %v3012, %v3308
        %v3350 = vsel %vm3262, %v3013, %v3310
        %v3351 = vsel %vm3262, %v3014, %v3312
        %v3352 = vsel %vm3262, %v3015, %v3314
        %v3353 = vsel %vm3262, %v3016, %v3316
        %v3354 = vsel %vm3262, %v3017, %v3318
        %v3355 = vsel %vm3262, %v3018, %v3320
        %v3356 = vsel %vm3262, %v3019, %v3322
        %v3357 = vsel %vm3262, %v3020, %v3324
        %v3358 = vsel %vm3262, %v3021, %v3326
        %v3359 = vmul.f32 %v3054, %v3054
        %v3360 = vmul.f32 %v3055, %v3055
        %v3361 = vmul.f32 %v3056, %v3056
        %v3362 = vmul.f32 %v3057, %v3057
        %v3363 = vmul.f32 %v3058, %v3058
        %v3364 = vmul.f32 %v3059, %v3059
        %v3365 = vmul.f32 %v3060, %v3060
        %v3366 = vmul.f32 %v3061, %v3061
        %v3367 = vmul.f32 %v3062, %v3062
        %v3368 = vmul.f32 %v3063, %v3063
        %v3369 = vmul.f32 %v3064, %v3064
        %v3370 = vmul.f32 %v3065, %v3065
        %v3371 = vmul.f32 %v3066, %v3066
        %v3372 = vmul.f32 %v3067, %v3067
        %v3373 = vmul.f32 %v3068, %v3068
        %v3374 = vmul.f32 %v3069, %v3069
        %v3375 = vmul.f32 %v3086, %v3086
        %v3376 = vmul.f32 %v3087, %v3087
        %v3377 = vmul.f32 %v3088, %v3088
        %v3378 = vmul.f32 %v3089, %v3089
        %v3379 = vmul.f32 %v3090, %v3090
        %v3380 = vmul.f32 %v3091, %v3091
        %v3381 = vmul.f32 %v3092, %v3092
        %v3382 = vmul.f32 %v3093, %v3093
        %v3383 = vmul.f32 %v3094, %v3094
        %v3384 = vmul.f32 %v3095, %v3095
        %v3385 = vmul.f32 %v3096, %v3096
        %v3386 = vmul.f32 %v3097, %v3097
        %v3387 = vmul.f32 %v3098, %v3098
        %v3388 = vmul.f32 %v3099, %v3099
        %v3389 = vmul.f32 %v3100, %v3100
        %v3390 = vmul.f32 %v3101, %v3101
        %v3391 = vsub.f32 %v3359, %v3375
        %v3392 = vsub.f32 %v3360, %v3376
        %v3393 = vsub.f32 %v3361, %v3377
        %v3394 = vsub.f32 %v3362, %v3378
        %v3395 = vsub.f32 %v3363, %v3379
        %v3396 = vsub.f32 %v3364, %v3380
        %v3397 = vsub.f32 %v3365, %v3381
        %v3398 = vsub.f32 %v3366, %v3382
        %v3399 = vsub.f32 %v3367, %v3383
        %v3400 = vsub.f32 %v3368, %v3384
        %v3401 = vsub.f32 %v3369, %v3385
        %v3402 = vsub.f32 %v3370, %v3386
        %v3403 = vsub.f32 %v3371, %v3387
        %v3404 = vsub.f32 %v3372, %v3388
        %v3405 = vsub.f32 %v3373, %v3389
        %v3406 = vsub.f32 %v3374, %v3390
        %v3407 = vmul.f32 %v3054, 2.0
        %v3408 = vmul.f32 %v3055, 2.0
        %v3409 = vmul.f32 %v3056, 2.0
        %v3410 = vmul.f32 %v3057, 2.0
        %v3411 = vmul.f32 %v3058, 2.0
        %v3412 = vmul.f32 %v3059, 2.0
        %v3413 = vmul.f32 %v3060, 2.0
        %v3414 = vmul.f32 %v3061, 2.0
        %v3415 = vmul.f32 %v3062, 2.0
        %v3416 = vmul.f32 %v3063, 2.0
        %v3417 = vmul.f32 %v3064, 2.0
        %v3418 = vmul.f32 %v3065, 2.0
        %v3419 = vmul.f32 %v3066, 2.0
        %v3420 = vmul.f32 %v3067, 2.0
        %v3421 = vmul.f32 %v3068, 2.0
        %v3422 = vmul.f32 %v3069, 2.0
        %v3423 = vmul.f32 %v3407, %v3086
        %v3424 = vmul.f32 %v3408, %v3087
        %v3425 = vmul.f32 %v3409, %v3088
        %v3426 = vmul.f32 %v3410, %v3089
        %v3427 = vmul.f32 %v3411, %v3090
        %v3428 = vmul.f32 %v3412, %v3091
        %v3429 = vmul.f32 %v3413, %v3092
        %v3430 = vmul.f32 %v3414, %v3093
        %v3431 = vmul.f32 %v3415, %v3094
        %v3432 = vmul.f32 %v3416, %v3095
        %v3433 = vmul.f32 %v3417, %v3096
        %v3434 = vmul.f32 %v3418, %v3097
        %v3435 = vmul.f32 %v3419, %v3098
        %v3436 = vmul.f32 %v3420, %v3099
        %v3437 = vmul.f32 %v3421, %v3100
        %v3438 = vmul.f32 %v3422, %v3101
        %v3439 = vmul.f32 %v3391, %v3263
        %v3440 = vmul.f32 %v3392, %v3264
        %v3441 = vmul.f32 %v3393, %v3265
        %v3442 = vmul.f32 %v3394, %v3266
        %v3443 = vmul.f32 %v3395, %v3267
        %v3444 = vmul.f32 %v3396, %v3268
        %v3445 = vmul.f32 %v3397, %v3269
        %v3446 = vmul.f32 %v3398, %v3270
        %v3447 = vmul.f32 %v3399, %v3271
        %v3448 = vmul.f32 %v3400, %v3272
        %v3449 = vmul.f32 %v3401, %v3273
        %v3450 = vmul.f32 %v3402, %v3274
        %v3451 = vmul.f32 %v3403, %v3275
        %v3452 = vmul.f32 %v3404, %v3276
        %v3453 = vmul.f32 %v3405, %v3277
        %v3454 = vmul.f32 %v3406, %v3278
        %v3455 = vmul.f32 %v3423, %v3343
        %v3456 = vmul.f32 %v3424, %v3344
        %v3457 = vmul.f32 %v3425, %v3345
        %v3458 = vmul.f32 %v3426, %v3346
        %v3459 = vmul.f32 %v3427, %v3347
        %v3460 = vmul.f32 %v3428, %v3348
        %v3461 = vmul.f32 %v3429, %v3349
        %v3462 = vmul.f32 %v3430, %v3350
        %v3463 = vmul.f32 %v3431, %v3351
        %v3464 = vmul.f32 %v3432, %v3352
        %v3465 = vmul.f32 %v3433, %v3353
        %v3466 = vmul.f32 %v3434, %v3354
        %v3467 = vmul.f32 %v3435, %v3355
        %v3468 = vmul.f32 %v3436, %v3356
        %v3469 = vmul.f32 %v3437, %v3357
        %v3470 = vmul.f32 %v3438, %v3358
        %v3471 = vsub.f32 %v3439, %v3455
        %v3472 = vsub.f32 %v3440, %v3456
        %v3473 = vsub.f32 %v3441, %v3457
        %v3474 = vsub.f32 %v3442, %v3458
        %v3475 = vsub.f32 %v3443, %v3459
        %v3476 = vsub.f32 %v3444, %v3460
        %v3477 = vsub.f32 %v3445, %v3461
        %v3478 = vsub.f32 %v3446, %v3462
        %v3479 = vsub.f32 %v3447, %v3463
        %v3480 = vsub.f32 %v3448, %v3464
        %v3481 = vsub.f32 %v3449, %v3465
        %v3482 = vsub.f32 %v3450, %v3466
        %v3483 = vsub.f32 %v3451, %v3467
        %v3484 = vsub.f32 %v3452, %v3468
        %v3485 = vsub.f32 %v3453, %v3469
        %v3486 = vsub.f32 %v3454, %v3470
        %v3487 = vmul.f32 %v3423, %v3263
        %v3488 = vmul.f32 %v3424, %v3264
        %v3489 = vmul.f32 %v3425, %v3265
        %v3490 = vmul.f32 %v3426, %v3266
        %v3491 = vmul.f32 %v3427, %v3267
        %v3492 = vmul.f32 %v3428, %v3268
        %v3493 = vmul.f32 %v3429, %v3269
        %v3494 = vmul.f32 %v3430, %v3270
        %v3495 = vmul.f32 %v3431, %v3271
        %v3496 = vmul.f32 %v3432, %v3272
        %v3497 = vmul.f32 %v3433, %v3273
        %v3498 = vmul.f32 %v3434, %v3274
        %v3499 = vmul.f32 %v3435, %v3275
        %v3500 = vmul.f32 %v3436, %v3276
        %v3501 = vmul.f32 %v3437, %v3277
        %v3502 = vmul.f32 %v3438, %v3278
        %v3503 = vmul.f32 %v3391, %v3343
        %v3504 = vmul.f32 %v3392, %v3344
        %v3505 = vmul.f32 %v3393, %v3345
        %v3506 = vmul.f32 %v3394, %v3346
        %v3507 = vmul.f32 %v3395, %v3347
        %v3508 = vmul.f32 %v3396, %v3348
        %v3509 = vmul.f32 %v3397, %v3349
        %v3510 = vmul.f32 %v3398, %v3350
        %v3511 = vmul.f32 %v3399, %v3351
        %v3512 = vmul.f32 %v3400, %v3352
        %v3513 = vmul.f32 %v3401, %v3353
        %v3514 = vmul.f32 %v3402, %v3354
        %v3515 = vmul.f32 %v3403, %v3355
        %v3516 = vmul.f32 %v3404, %v3356
        %v3517 = vmul.f32 %v3405, %v3357
        %v3518 = vmul.f32 %v3406, %v3358
        %v3519 = vadd.f32 %v3487, %v3503
        %v3520 = vadd.f32 %v3488, %v3504
        %v3521 = vadd.f32 %v3489, %v3505
        %v3522 = vadd.f32 %v3490, %v3506
        %v3523 = vadd.f32 %v3491, %v3507
        %v3524 = vadd.f32 %v3492, %v3508
        %v3525 = vadd.f32 %v3493, %v3509
        %v3526 = vadd.f32 %v3494, %v3510
        %v3527 = vadd.f32 %v3495, %v3511
        %v3528 = vadd.f32 %v3496, %v3512
        %v3529 = vadd.f32 %v3497, %v3513
        %v3530 = vadd.f32 %v3498, %v3514
        %v3531 = vadd.f32 %v3499, %v3515
        %v3532 = vadd.f32 %v3500, %v3516
        %v3533 = vadd.f32 %v3501, %v3517
        %v3534 = vadd.f32 %v3502, %v3518
        %3551 = vrot.lane.b32.xlu0 %v3471, 16
        %v3552 = vpop.permute.xlu0 %3551
        %3553 = vrot.lane.b32.xlu0 %v3472, 16
        %v3554 = vpop.permute.xlu0 %3553
        %3555 = vrot.lane.b32.xlu0 %v3473, 16
        %v3556 = vpop.permute.xlu0 %3555
        %3557 = vrot.lane.b32.xlu0 %v3474, 16
        %v3558 = vpop.permute.xlu0 %3557
        %3559 = vrot.lane.b32.xlu0 %v3475, 16
        %v3560 = vpop.permute.xlu0 %3559
        %3561 = vrot.lane.b32.xlu0 %v3476, 16
        %v3562 = vpop.permute.xlu0 %3561
        %3563 = vrot.lane.b32.xlu0 %v3477, 16
        %v3564 = vpop.permute.xlu0 %3563
        %3565 = vrot.lane.b32.xlu0 %v3478, 16
        %v3566 = vpop.permute.xlu0 %3565
        %3567 = vrot.lane.b32.xlu0 %v3479, 16
        %v3568 = vpop.permute.xlu0 %3567
        %3569 = vrot.lane.b32.xlu0 %v3480, 16
        %v3570 = vpop.permute.xlu0 %3569
        %3571 = vrot.lane.b32.xlu0 %v3481, 16
        %v3572 = vpop.permute.xlu0 %3571
        %3573 = vrot.lane.b32.xlu0 %v3482, 16
        %v3574 = vpop.permute.xlu0 %3573
        %3575 = vrot.lane.b32.xlu0 %v3483, 16
        %v3576 = vpop.permute.xlu0 %3575
        %3577 = vrot.lane.b32.xlu0 %v3484, 16
        %v3578 = vpop.permute.xlu0 %3577
        %3579 = vrot.lane.b32.xlu0 %v3485, 16
        %v3580 = vpop.permute.xlu0 %3579
        %3581 = vrot.lane.b32.xlu0 %v3486, 16
        %v3582 = vpop.permute.xlu0 %3581
        %vm3599 = vcmask 130048
        %v3600 = vsel %vm3599, %v3263, %v3552
        %v3601 = vsel %vm3599, %v3264, %v3554
        %v3602 = vsel %vm3599, %v3265, %v3556
        %v3603 = vsel %vm3599, %v3266, %v3558
        %v3604 = vsel %vm3599, %v3267, %v3560
        %v3605 = vsel %vm3599, %v3268, %v3562
        %v3606 = vsel %vm3599, %v3269, %v3564
        %v3607 = vsel %vm3599, %v3270, %v3566
        %v3608 = vsel %vm3599, %v3271, %v3568
        %v3609 = vsel %vm3599, %v3272, %v3570
        %v3610 = vsel %vm3599, %v3273, %v3572
        %v3611 = vsel %vm3599, %v3274, %v3574
        %v3612 = vsel %vm3599, %v3275, %v3576
        %v3613 = vsel %vm3599, %v3276, %v3578
        %v3614 = vsel %vm3599, %v3277, %v3580
        %v3615 = vsel %vm3599, %v3278, %v3582
        %3632 = vrot.lane.b32.xlu0 %v3519, 16
        %v3633 = vpop.permute.xlu0 %3632
        %3634 = vrot.lane.b32.xlu0 %v3520, 16
        %v3635 = vpop.permute.xlu0 %3634
        %3636 = vrot.lane.b32.xlu0 %v3521, 16
        %v3637 = vpop.permute.xlu0 %3636
        %3638 = vrot.lane.b32.xlu0 %v3522, 16
        %v3639 = vpop.permute.xlu0 %3638
        %3640 = vrot.lane.b32.xlu0 %v3523, 16
        %v3641 = vpop.permute.xlu0 %3640
        %3642 = vrot.lane.b32.xlu0 %v3524, 16
        %v3643 = vpop.permute.xlu0 %3642
        %3644 = vrot.lane.b32.xlu0 %v3525, 16
        %v3645 = vpop.permute.xlu0 %3644
        %3646 = vrot.lane.b32.xlu0 %v3526, 16
        %v3647 = vpop.permute.xlu0 %3646
        %3648 = vrot.lane.b32.xlu0 %v3527, 16
        %v3649 = vpop.permute.xlu0 %3648
        %3650 = vrot.lane.b32.xlu0 %v3528, 16
        %v3651 = vpop.permute.xlu0 %3650
        %3652 = vrot.lane.b32.xlu0 %v3529, 16
        %v3653 = vpop.permute.xlu0 %3652
        %3654 = vrot.lane.b32.xlu0 %v3530, 16
        %v3655 = vpop.permute.xlu0 %3654
        %3656 = vrot.lane.b32.xlu0 %v3531, 16
        %v3657 = vpop.permute.xlu0 %3656
        %3658 = vrot.lane.b32.xlu0 %v3532, 16
        %v3659 = vpop.permute.xlu0 %3658
        %3660 = vrot.lane.b32.xlu0 %v3533, 16
        %v3661 = vpop.permute.xlu0 %3660
        %3662 = vrot.lane.b32.xlu0 %v3534, 16
        %v3663 = vpop.permute.xlu0 %3662
        %v3680 = vsel %vm3599, %v3343, %v3633
        %v3681 = vsel %vm3599, %v3344, %v3635
        %v3682 = vsel %vm3599, %v3345, %v3637
        %v3683 = vsel %vm3599, %v3346, %v3639
        %v3684 = vsel %vm3599, %v3347, %v3641
        %v3685 = vsel %vm3599, %v3348, %v3643
        %v3686 = vsel %vm3599, %v3349, %v3645
        %v3687 = vsel %vm3599, %v3350, %v3647
        %v3688 = vsel %vm3599, %v3351, %v3649
        %v3689 = vsel %vm3599, %v3352, %v3651
        %v3690 = vsel %vm3599, %v3353, %v3653
        %v3691 = vsel %vm3599, %v3354, %v3655
        %v3692 = vsel %vm3599, %v3355, %v3657
        %v3693 = vsel %vm3599, %v3356, %v3659
        %v3694 = vsel %vm3599, %v3357, %v3661
        %v3695 = vsel %vm3599, %v3358, %v3663
        %v3696 = vmul.f32 %v3391, %v3391
        %v3697 = vmul.f32 %v3392, %v3392
        %v3698 = vmul.f32 %v3393, %v3393
        %v3699 = vmul.f32 %v3394, %v3394
        %v3700 = vmul.f32 %v3395, %v3395
        %v3701 = vmul.f32 %v3396, %v3396
        %v3702 = vmul.f32 %v3397, %v3397
        %v3703 = vmul.f32 %v3398, %v3398
        %v3704 = vmul.f32 %v3399, %v3399
        %v3705 = vmul.f32 %v3400, %v3400
        %v3706 = vmul.f32 %v3401, %v3401
        %v3707 = vmul.f32 %v3402, %v3402
        %v3708 = vmul.f32 %v3403, %v3403
        %v3709 = vmul.f32 %v3404, %v3404
        %v3710 = vmul.f32 %v3405, %v3405
        %v3711 = vmul.f32 %v3406, %v3406
        %v3712 = vmul.f32 %v3423, %v3423
        %v3713 = vmul.f32 %v3424, %v3424
        %v3714 = vmul.f32 %v3425, %v3425
        %v3715 = vmul.f32 %v3426, %v3426
        %v3716 = vmul.f32 %v3427, %v3427
        %v3717 = vmul.f32 %v3428, %v3428
        %v3718 = vmul.f32 %v3429, %v3429
        %v3719 = vmul.f32 %v3430, %v3430
        %v3720 = vmul.f32 %v3431, %v3431
        %v3721 = vmul.f32 %v3432, %v3432
        %v3722 = vmul.f32 %v3433, %v3433
        %v3723 = vmul.f32 %v3434, %v3434
        %v3724 = vmul.f32 %v3435, %v3435
        %v3725 = vmul.f32 %v3436, %v3436
        %v3726 = vmul.f32 %v3437, %v3437
        %v3727 = vmul.f32 %v3438, %v3438
        %v3728 = vsub.f32 %v3696, %v3712
        %v3729 = vsub.f32 %v3697, %v3713
        %v3730 = vsub.f32 %v3698, %v3714
        %v3731 = vsub.f32 %v3699, %v3715
        %v3732 = vsub.f32 %v3700, %v3716
        %v3733 = vsub.f32 %v3701, %v3717
        %v3734 = vsub.f32 %v3702, %v3718
        %v3735 = vsub.f32 %v3703, %v3719
        %v3736 = vsub.f32 %v3704, %v3720
        %v3737 = vsub.f32 %v3705, %v3721
        %v3738 = vsub.f32 %v3706, %v3722
        %v3739 = vsub.f32 %v3707, %v3723
        %v3740 = vsub.f32 %v3708, %v3724
        %v3741 = vsub.f32 %v3709, %v3725
        %v3742 = vsub.f32 %v3710, %v3726
        %v3743 = vsub.f32 %v3711, %v3727
        %v3744 = vmul.f32 %v3391, 2.0
        %v3745 = vmul.f32 %v3392, 2.0
        %v3746 = vmul.f32 %v3393, 2.0
        %v3747 = vmul.f32 %v3394, 2.0
        %v3748 = vmul.f32 %v3395, 2.0
        %v3749 = vmul.f32 %v3396, 2.0
        %v3750 = vmul.f32 %v3397, 2.0
        %v3751 = vmul.f32 %v3398, 2.0
        %v3752 = vmul.f32 %v3399, 2.0
        %v3753 = vmul.f32 %v3400, 2.0
        %v3754 = vmul.f32 %v3401, 2.0
        %v3755 = vmul.f32 %v3402, 2.0
        %v3756 = vmul.f32 %v3403, 2.0
        %v3757 = vmul.f32 %v3404, 2.0
        %v3758 = vmul.f32 %v3405, 2.0
        %v3759 = vmul.f32 %v3406, 2.0
        %v3760 = vmul.f32 %v3744, %v3423
        %v3761 = vmul.f32 %v3745, %v3424
        %v3762 = vmul.f32 %v3746, %v3425
        %v3763 = vmul.f32 %v3747, %v3426
        %v3764 = vmul.f32 %v3748, %v3427
        %v3765 = vmul.f32 %v3749, %v3428
        %v3766 = vmul.f32 %v3750, %v3429
        %v3767 = vmul.f32 %v3751, %v3430
        %v3768 = vmul.f32 %v3752, %v3431
        %v3769 = vmul.f32 %v3753, %v3432
        %v3770 = vmul.f32 %v3754, %v3433
        %v3771 = vmul.f32 %v3755, %v3434
        %v3772 = vmul.f32 %v3756, %v3435
        %v3773 = vmul.f32 %v3757, %v3436
        %v3774 = vmul.f32 %v3758, %v3437
        %v3775 = vmul.f32 %v3759, %v3438
        %v3776 = vmul.f32 %v3728, %v3600
        %v3777 = vmul.f32 %v3729, %v3601
        %v3778 = vmul.f32 %v3730, %v3602
        %v3779 = vmul.f32 %v3731, %v3603
        %v3780 = vmul.f32 %v3732, %v3604
        %v3781 = vmul.f32 %v3733, %v3605
        %v3782 = vmul.f32 %v3734, %v3606
        %v3783 = vmul.f32 %v3735, %v3607
        %v3784 = vmul.f32 %v3736, %v3608
        %v3785 = vmul.f32 %v3737, %v3609
        %v3786 = vmul.f32 %v3738, %v3610
        %v3787 = vmul.f32 %v3739, %v3611
        %v3788 = vmul.f32 %v3740, %v3612
        %v3789 = vmul.f32 %v3741, %v3613
        %v3790 = vmul.f32 %v3742, %v3614
        %v3791 = vmul.f32 %v3743, %v3615
        %v3792 = vmul.f32 %v3760, %v3680
        %v3793 = vmul.f32 %v3761, %v3681
        %v3794 = vmul.f32 %v3762, %v3682
        %v3795 = vmul.f32 %v3763, %v3683
        %v3796 = vmul.f32 %v3764, %v3684
        %v3797 = vmul.f32 %v3765, %v3685
        %v3798 = vmul.f32 %v3766, %v3686
        %v3799 = vmul.f32 %v3767, %v3687
        %v3800 = vmul.f32 %v3768, %v3688
        %v3801 = vmul.f32 %v3769, %v3689
        %v3802 = vmul.f32 %v3770, %v3690
        %v3803 = vmul.f32 %v3771, %v3691
        %v3804 = vmul.f32 %v3772, %v3692
        %v3805 = vmul.f32 %v3773, %v3693
        %v3806 = vmul.f32 %v3774, %v3694
        %v3807 = vmul.f32 %v3775, %v3695
        %v3808 = vsub.f32 %v3776, %v3792
        %v3809 = vsub.f32 %v3777, %v3793
        %v3810 = vsub.f32 %v3778, %v3794
        %v3811 = vsub.f32 %v3779, %v3795
        %v3812 = vsub.f32 %v3780, %v3796
        %v3813 = vsub.f32 %v3781, %v3797
        %v3814 = vsub.f32 %v3782, %v3798
        %v3815 = vsub.f32 %v3783, %v3799
        %v3816 = vsub.f32 %v3784, %v3800
        %v3817 = vsub.f32 %v3785, %v3801
        %v3818 = vsub.f32 %v3786, %v3802
        %v3819 = vsub.f32 %v3787, %v3803
        %v3820 = vsub.f32 %v3788, %v3804
        %v3821 = vsub.f32 %v3789, %v3805
        %v3822 = vsub.f32 %v3790, %v3806
        %v3823 = vsub.f32 %v3791, %v3807
        %v3824 = vmul.f32 %v3760, %v3600
        %v3825 = vmul.f32 %v3761, %v3601
        %v3826 = vmul.f32 %v3762, %v3602
        %v3827 = vmul.f32 %v3763, %v3603
        %v3828 = vmul.f32 %v3764, %v3604
        %v3829 = vmul.f32 %v3765, %v3605
        %v3830 = vmul.f32 %v3766, %v3606
        %v3831 = vmul.f32 %v3767, %v3607
        %v3832 = vmul.f32 %v3768, %v3608
        %v3833 = vmul.f32 %v3769, %v3609
        %v3834 = vmul.f32 %v3770, %v3610
        %v3835 = vmul.f32 %v3771, %v3611
        %v3836 = vmul.f32 %v3772, %v3612
        %v3837 = vmul.f32 %v3773, %v3613
        %v3838 = vmul.f32 %v3774, %v3614
        %v3839 = vmul.f32 %v3775, %v3615
        %v3840 = vmul.f32 %v3728, %v3680
        %v3841 = vmul.f32 %v3729, %v3681
        %v3842 = vmul.f32 %v3730, %v3682
        %v3843 = vmul.f32 %v3731, %v3683
        %v3844 = vmul.f32 %v3732, %v3684
        %v3845 = vmul.f32 %v3733, %v3685
        %v3846 = vmul.f32 %v3734, %v3686
        %v3847 = vmul.f32 %v3735, %v3687
        %v3848 = vmul.f32 %v3736, %v3688
        %v3849 = vmul.f32 %v3737, %v3689
        %v3850 = vmul.f32 %v3738, %v3690
        %v3851 = vmul.f32 %v3739, %v3691
        %v3852 = vmul.f32 %v3740, %v3692
        %v3853 = vmul.f32 %v3741, %v3693
        %v3854 = vmul.f32 %v3742, %v3694
        %v3855 = vmul.f32 %v3743, %v3695
        %v3856 = vadd.f32 %v3824, %v3840
        %v3857 = vadd.f32 %v3825, %v3841
        %v3858 = vadd.f32 %v3826, %v3842
        %v3859 = vadd.f32 %v3827, %v3843
        %v3860 = vadd.f32 %v3828, %v3844
        %v3861 = vadd.f32 %v3829, %v3845
        %v3862 = vadd.f32 %v3830, %v3846
        %v3863 = vadd.f32 %v3831, %v3847
        %v3864 = vadd.f32 %v3832, %v3848
        %v3865 = vadd.f32 %v3833, %v3849
        %v3866 = vadd.f32 %v3834, %v3850
        %v3867 = vadd.f32 %v3835, %v3851
        %v3868 = vadd.f32 %v3836, %v3852
        %v3869 = vadd.f32 %v3837, %v3853
        %v3870 = vadd.f32 %v3838, %v3854
        %v3871 = vadd.f32 %v3839, %v3855
        %3888 = vrot.lane.b32.xlu0 %v3808, 32
        %v3889 = vpop.permute.xlu0 %3888
        %3890 = vrot.lane.b32.xlu0 %v3809, 32
        %v3891 = vpop.permute.xlu0 %3890
        %3892 = vrot.lane.b32.xlu0 %v3810, 32
        %v3893 = vpop.permute.xlu0 %3892
        %3894 = vrot.lane.b32.xlu0 %v3811, 32
        %v3895 = vpop.permute.xlu0 %3894
        %3896 = vrot.lane.b32.xlu0 %v3812, 32
        %v3897 = vpop.permute.xlu0 %3896
        %3898 = vrot.lane.b32.xlu0 %v3813, 32
        %v3899 = vpop.permute.xlu0 %3898
        %3900 = vrot.lane.b32.xlu0 %v3814, 32
        %v3901 = vpop.permute.xlu0 %3900
        %3902 = vrot.lane.b32.xlu0 %v3815, 32
        %v3903 = vpop.permute.xlu0 %3902
        %3904 = vrot.lane.b32.xlu0 %v3816, 32
        %v3905 = vpop.permute.xlu0 %3904
        %3906 = vrot.lane.b32.xlu0 %v3817, 32
        %v3907 = vpop.permute.xlu0 %3906
        %3908 = vrot.lane.b32.xlu0 %v3818, 32
        %v3909 = vpop.permute.xlu0 %3908
        %3910 = vrot.lane.b32.xlu0 %v3819, 32
        %v3911 = vpop.permute.xlu0 %3910
        %3912 = vrot.lane.b32.xlu0 %v3820, 32
        %v3913 = vpop.permute.xlu0 %3912
        %3914 = vrot.lane.b32.xlu0 %v3821, 32
        %v3915 = vpop.permute.xlu0 %3914
        %3916 = vrot.lane.b32.xlu0 %v3822, 32
        %v3917 = vpop.permute.xlu0 %3916
        %3918 = vrot.lane.b32.xlu0 %v3823, 32
        %v3919 = vpop.permute.xlu0 %3918
        %vm3936 = vcmask 261120
        %v3937 = vsel %vm3936, %v3600, %v3889
        %v3938 = vsel %vm3936, %v3601, %v3891
        %v3939 = vsel %vm3936, %v3602, %v3893
        %v3940 = vsel %vm3936, %v3603, %v3895
        %v3941 = vsel %vm3936, %v3604, %v3897
        %v3942 = vsel %vm3936, %v3605, %v3899
        %v3943 = vsel %vm3936, %v3606, %v3901
        %v3944 = vsel %vm3936, %v3607, %v3903
        %v3945 = vsel %vm3936, %v3608, %v3905
        %v3946 = vsel %vm3936, %v3609, %v3907
        %v3947 = vsel %vm3936, %v3610, %v3909
        %v3948 = vsel %vm3936, %v3611, %v3911
        %v3949 = vsel %vm3936, %v3612, %v3913
        %v3950 = vsel %vm3936, %v3613, %v3915
        %v3951 = vsel %vm3936, %v3614, %v3917
        %v3952 = vsel %vm3936, %v3615, %v3919
        %3969 = vrot.lane.b32.xlu0 %v3856, 32
        %v3970 = vpop.permute.xlu0 %3969
        %3971 = vrot.lane.b32.xlu0 %v3857, 32
        %v3972 = vpop.permute.xlu0 %3971
        %3973 = vrot.lane.b32.xlu0 %v3858, 32
        %v3974 = vpop.permute.xlu0 %3973
        %3975 = vrot.lane.b32.xlu0 %v3859, 32
        %v3976 = vpop.permute.xlu0 %3975
        %3977 = vrot.lane.b32.xlu0 %v3860, 32
        %v3978 = vpop.permute.xlu0 %3977
        %3979 = vrot.lane.b32.xlu0 %v3861, 32
        %v3980 = vpop.permute.xlu0 %3979
        %3981 = vrot.lane.b32.xlu0 %v3862, 32
        %v3982 = vpop.permute.xlu0 %3981
        %3983 = vrot.lane.b32.xlu0 %v3863, 32
        %v3984 = vpop.permute.xlu0 %3983
        %3985 = vrot.lane.b32.xlu0 %v3864, 32
        %v3986 = vpop.permute.xlu0 %3985
        %3987 = vrot.lane.b32.xlu0 %v3865, 32
        %v3988 = vpop.permute.xlu0 %3987
        %3989 = vrot.lane.b32.xlu0 %v3866, 32
        %v3990 = vpop.permute.xlu0 %3989
        %3991 = vrot.lane.b32.xlu0 %v3867, 32
        %v3992 = vpop.permute.xlu0 %3991
        %3993 = vrot.lane.b32.xlu0 %v3868, 32
        %v3994 = vpop.permute.xlu0 %3993
        %3995 = vrot.lane.b32.xlu0 %v3869, 32
        %v3996 = vpop.permute.xlu0 %3995
        %3997 = vrot.lane.b32.xlu0 %v3870, 32
        %v3998 = vpop.permute.xlu0 %3997
        %3999 = vrot.lane.b32.xlu0 %v3871, 32
        %v4000 = vpop.permute.xlu0 %3999
        %v4017 = vsel %vm3936, %v3680, %v3970
        %v4018 = vsel %vm3936, %v3681, %v3972
        %v4019 = vsel %vm3936, %v3682, %v3974
        %v4020 = vsel %vm3936, %v3683, %v3976
        %v4021 = vsel %vm3936, %v3684, %v3978
        %v4022 = vsel %vm3936, %v3685, %v3980
        %v4023 = vsel %vm3936, %v3686, %v3982
        %v4024 = vsel %vm3936, %v3687, %v3984
        %v4025 = vsel %vm3936, %v3688, %v3986
        %v4026 = vsel %vm3936, %v3689, %v3988
        %v4027 = vsel %vm3936, %v3690, %v3990
        %v4028 = vsel %vm3936, %v3691, %v3992
        %v4029 = vsel %vm3936, %v3692, %v3994
        %v4030 = vsel %vm3936, %v3693, %v3996
        %v4031 = vsel %vm3936, %v3694, %v3998
        %v4032 = vsel %vm3936, %v3695, %v4000
        %v4033 = vmul.f32 %v3728, %v3728
        %v4034 = vmul.f32 %v3729, %v3729
        %v4035 = vmul.f32 %v3730, %v3730
        %v4036 = vmul.f32 %v3731, %v3731
        %v4037 = vmul.f32 %v3732, %v3732
        %v4038 = vmul.f32 %v3733, %v3733
        %v4039 = vmul.f32 %v3734, %v3734
        %v4040 = vmul.f32 %v3735, %v3735
        %v4041 = vmul.f32 %v3736, %v3736
        %v4042 = vmul.f32 %v3737, %v3737
        %v4043 = vmul.f32 %v3738, %v3738
        %v4044 = vmul.f32 %v3739, %v3739
        %v4045 = vmul.f32 %v3740, %v3740
        %v4046 = vmul.f32 %v3741, %v3741
        %v4047 = vmul.f32 %v3742, %v3742
        %v4048 = vmul.f32 %v3743, %v3743
        %v4049 = vmul.f32 %v3760, %v3760
        %v4050 = vmul.f32 %v3761, %v3761
        %v4051 = vmul.f32 %v3762, %v3762
        %v4052 = vmul.f32 %v3763, %v3763
        %v4053 = vmul.f32 %v3764, %v3764
        %v4054 = vmul.f32 %v3765, %v3765
        %v4055 = vmul.f32 %v3766, %v3766
        %v4056 = vmul.f32 %v3767, %v3767
        %v4057 = vmul.f32 %v3768, %v3768
        %v4058 = vmul.f32 %v3769, %v3769
        %v4059 = vmul.f32 %v3770, %v3770
        %v4060 = vmul.f32 %v3771, %v3771
        %v4061 = vmul.f32 %v3772, %v3772
        %v4062 = vmul.f32 %v3773, %v3773
        %v4063 = vmul.f32 %v3774, %v3774
        %v4064 = vmul.f32 %v3775, %v3775
        %v4065 = vsub.f32 %v4033, %v4049
        %v4066 = vsub.f32 %v4034, %v4050
        %v4067 = vsub.f32 %v4035, %v4051
        %v4068 = vsub.f32 %v4036, %v4052
        %v4069 = vsub.f32 %v4037, %v4053
        %v4070 = vsub.f32 %v4038, %v4054
        %v4071 = vsub.f32 %v4039, %v4055
        %v4072 = vsub.f32 %v4040, %v4056
        %v4073 = vsub.f32 %v4041, %v4057
        %v4074 = vsub.f32 %v4042, %v4058
        %v4075 = vsub.f32 %v4043, %v4059
        %v4076 = vsub.f32 %v4044, %v4060
        %v4077 = vsub.f32 %v4045, %v4061
        %v4078 = vsub.f32 %v4046, %v4062
        %v4079 = vsub.f32 %v4047, %v4063
        %v4080 = vsub.f32 %v4048, %v4064
        %v4081 = vmul.f32 %v3728, 2.0
        %v4082 = vmul.f32 %v3729, 2.0
        %v4083 = vmul.f32 %v3730, 2.0
        %v4084 = vmul.f32 %v3731, 2.0
        %v4085 = vmul.f32 %v3732, 2.0
        %v4086 = vmul.f32 %v3733, 2.0
        %v4087 = vmul.f32 %v3734, 2.0
        %v4088 = vmul.f32 %v3735, 2.0
        %v4089 = vmul.f32 %v3736, 2.0
        %v4090 = vmul.f32 %v3737, 2.0
        %v4091 = vmul.f32 %v3738, 2.0
        %v4092 = vmul.f32 %v3739, 2.0
        %v4093 = vmul.f32 %v3740, 2.0
        %v4094 = vmul.f32 %v3741, 2.0
        %v4095 = vmul.f32 %v3742, 2.0
        %v4096 = vmul.f32 %v3743, 2.0
        %v4097 = vmul.f32 %v4081, %v3760
        %v4098 = vmul.f32 %v4082, %v3761
        %v4099 = vmul.f32 %v4083, %v3762
        %v4100 = vmul.f32 %v4084, %v3763
        %v4101 = vmul.f32 %v4085, %v3764
        %v4102 = vmul.f32 %v4086, %v3765
        %v4103 = vmul.f32 %v4087, %v3766
        %v4104 = vmul.f32 %v4088, %v3767
        %v4105 = vmul.f32 %v4089, %v3768
        %v4106 = vmul.f32 %v4090, %v3769
        %v4107 = vmul.f32 %v4091, %v3770
        %v4108 = vmul.f32 %v4092, %v3771
        %v4109 = vmul.f32 %v4093, %v3772
        %v4110 = vmul.f32 %v4094, %v3773
        %v4111 = vmul.f32 %v4095, %v3774
        %v4112 = vmul.f32 %v4096, %v3775
        %v4113 = vmul.f32 %v4065, %v3937
        %v4114 = vmul.f32 %v4066, %v3938
        %v4115 = vmul.f32 %v4067, %v3939
        %v4116 = vmul.f32 %v4068, %v3940
        %v4117 = vmul.f32 %v4069, %v3941
        %v4118 = vmul.f32 %v4070, %v3942
        %v4119 = vmul.f32 %v4071, %v3943
        %v4120 = vmul.f32 %v4072, %v3944
        %v4121 = vmul.f32 %v4073, %v3945
        %v4122 = vmul.f32 %v4074, %v3946
        %v4123 = vmul.f32 %v4075, %v3947
        %v4124 = vmul.f32 %v4076, %v3948
        %v4125 = vmul.f32 %v4077, %v3949
        %v4126 = vmul.f32 %v4078, %v3950
        %v4127 = vmul.f32 %v4079, %v3951
        %v4128 = vmul.f32 %v4080, %v3952
        %v4129 = vmul.f32 %v4097, %v4017
        %v4130 = vmul.f32 %v4098, %v4018
        %v4131 = vmul.f32 %v4099, %v4019
        %v4132 = vmul.f32 %v4100, %v4020
        %v4133 = vmul.f32 %v4101, %v4021
        %v4134 = vmul.f32 %v4102, %v4022
        %v4135 = vmul.f32 %v4103, %v4023
        %v4136 = vmul.f32 %v4104, %v4024
        %v4137 = vmul.f32 %v4105, %v4025
        %v4138 = vmul.f32 %v4106, %v4026
        %v4139 = vmul.f32 %v4107, %v4027
        %v4140 = vmul.f32 %v4108, %v4028
        %v4141 = vmul.f32 %v4109, %v4029
        %v4142 = vmul.f32 %v4110, %v4030
        %v4143 = vmul.f32 %v4111, %v4031
        %v4144 = vmul.f32 %v4112, %v4032
        %v4145 = vsub.f32 %v4113, %v4129
        %v4146 = vsub.f32 %v4114, %v4130
        %v4147 = vsub.f32 %v4115, %v4131
        %v4148 = vsub.f32 %v4116, %v4132
        %v4149 = vsub.f32 %v4117, %v4133
        %v4150 = vsub.f32 %v4118, %v4134
        %v4151 = vsub.f32 %v4119, %v4135
        %v4152 = vsub.f32 %v4120, %v4136
        %v4153 = vsub.f32 %v4121, %v4137
        %v4154 = vsub.f32 %v4122, %v4138
        %v4155 = vsub.f32 %v4123, %v4139
        %v4156 = vsub.f32 %v4124, %v4140
        %v4157 = vsub.f32 %v4125, %v4141
        %v4158 = vsub.f32 %v4126, %v4142
        %v4159 = vsub.f32 %v4127, %v4143
        %v4160 = vsub.f32 %v4128, %v4144
        %4177 = vrot.lane.b32.xlu0 %v4145, 64
        %v4178 = vpop.permute.xlu0 %4177
        %4179 = vrot.lane.b32.xlu0 %v4146, 64
        %v4180 = vpop.permute.xlu0 %4179
        %4181 = vrot.lane.b32.xlu0 %v4147, 64
        %v4182 = vpop.permute.xlu0 %4181
        %4183 = vrot.lane.b32.xlu0 %v4148, 64
        %v4184 = vpop.permute.xlu0 %4183
        %4185 = vrot.lane.b32.xlu0 %v4149, 64
        %v4186 = vpop.permute.xlu0 %4185
        %4187 = vrot.lane.b32.xlu0 %v4150, 64
        %v4188 = vpop.permute.xlu0 %4187
        %4189 = vrot.lane.b32.xlu0 %v4151, 64
        %v4190 = vpop.permute.xlu0 %4189
        %4191 = vrot.lane.b32.xlu0 %v4152, 64
        %v4192 = vpop.permute.xlu0 %4191
        %4193 = vrot.lane.b32.xlu0 %v4153, 64
        %v4194 = vpop.permute.xlu0 %4193
        %4195 = vrot.lane.b32.xlu0 %v4154, 64
        %v4196 = vpop.permute.xlu0 %4195
        %4197 = vrot.lane.b32.xlu0 %v4155, 64
        %v4198 = vpop.permute.xlu0 %4197
        %4199 = vrot.lane.b32.xlu0 %v4156, 64
        %v4200 = vpop.permute.xlu0 %4199
        %4201 = vrot.lane.b32.xlu0 %v4157, 64
        %v4202 = vpop.permute.xlu0 %4201
        %4203 = vrot.lane.b32.xlu0 %v4158, 64
        %v4204 = vpop.permute.xlu0 %4203
        %4205 = vrot.lane.b32.xlu0 %v4159, 64
        %v4206 = vpop.permute.xlu0 %4205
        %4207 = vrot.lane.b32.xlu0 %v4160, 64
        %v4208 = vpop.permute.xlu0 %4207
        %v4225 = vsel %vm1683, %v3937, %v4178
        %v4226 = vsel %vm1683, %v3938, %v4180
        %v4227 = vsel %vm1683, %v3939, %v4182
        %v4228 = vsel %vm1683, %v3940, %v4184
        %v4229 = vsel %vm1683, %v3941, %v4186
        %v4230 = vsel %vm1683, %v3942, %v4188
        %v4231 = vsel %vm1683, %v3943, %v4190
        %v4232 = vsel %vm1683, %v3944, %v4192
        %v4233 = vsel %vm1683, %v3945, %v4194
        %v4234 = vsel %vm1683, %v3946, %v4196
        %v4235 = vsel %vm1683, %v3947, %v4198
        %v4236 = vsel %vm1683, %v3948, %v4200
        %v4237 = vsel %vm1683, %v3949, %v4202
        %v4238 = vsel %vm1683, %v3950, %v4204
        %v4239 = vsel %vm1683, %v3951, %v4206
        %v4240 = vsel %vm1683, %v3952, %v4208
        %v4241 = vadd.f32 %v4225, %v1799
        %v4242 = vadd.f32 %v4226, %v1804
        %v4243 = vadd.f32 %v4227, %v1809
        %v4244 = vadd.f32 %v4228, %v1814
        %v4245 = vadd.f32 %v4229, %v1819
        %v4246 = vadd.f32 %v4230, %v1824
        %v4247 = vadd.f32 %v4231, %v1829
        %v4248 = vadd.f32 %v4232, %v1834
        %v4249 = vadd.f32 %v4233, %v1839
        %v4250 = vadd.f32 %v4234, %v1844
        %v4251 = vadd.f32 %v4235, %v1849
        %v4252 = vadd.f32 %v4236, %v1854
        %v4253 = vadd.f32 %v4237, %v1859
        %v4254 = vadd.f32 %v4238, %v1864
        %v4255 = vadd.f32 %v4239, %v1869
        %v4256 = vadd.f32 %v4240, %v1874
        %v4257 = vadd.f32 %v4241, %v1992
        %v4258 = vadd.f32 %v4242, %v1997
        %v4259 = vadd.f32 %v4243, %v2002
        %v4260 = vadd.f32 %v4244, %v2007
        %v4261 = vadd.f32 %v4245, %v2012
        %v4262 = vadd.f32 %v4246, %v2017
        %v4263 = vadd.f32 %v4247, %v2022
        %v4264 = vadd.f32 %v4248, %v2027
        %v4265 = vadd.f32 %v4249, %v2032
        %v4266 = vadd.f32 %v4250, %v2037
        %v4267 = vadd.f32 %v4251, %v2042
        %v4268 = vadd.f32 %v4252, %v2047
        %v4269 = vadd.f32 %v4253, %v2052
        %v4270 = vadd.f32 %v4254, %v2057
        %v4271 = vadd.f32 %v4255, %v2062
        %v4272 = vadd.f32 %v4256, %v2067
        %v4273 = vxor.u32 %v4257, 2147483648
        %v4274 = vxor.u32 %v4258, 2147483648
        %v4275 = vxor.u32 %v4259, 2147483648
        %v4276 = vxor.u32 %v4260, 2147483648
        %v4277 = vxor.u32 %v4261, 2147483648
        %v4278 = vxor.u32 %v4262, 2147483648
        %v4279 = vxor.u32 %v4263, 2147483648
        %v4280 = vxor.u32 %v4264, 2147483648
        %v4281 = vxor.u32 %v4265, 2147483648
        %v4282 = vxor.u32 %v4266, 2147483648
        %v4283 = vxor.u32 %v4267, 2147483648
        %v4284 = vxor.u32 %v4268, 2147483648
        %v4285 = vxor.u32 %v4269, 2147483648
        %v4286 = vxor.u32 %v4270, 2147483648
        %v4287 = vxor.u32 %v4271, 2147483648
        %v4288 = vxor.u32 %v4272, 2147483648
        %v4289 = vmul.f32 %v4273, 1.442695
        %v4290 = vpow.pop %v4289
        %v4291 = vmul.f32 %v4274, 1.442695
        %v4292 = vpow.pop %v4291
        %v4293 = vmul.f32 %v4275, 1.442695
        %v4294 = vpow.pop %v4293
        %v4295 = vmul.f32 %v4276, 1.442695
        %v4296 = vpow.pop %v4295
        %v4297 = vmul.f32 %v4277, 1.442695
        %v4298 = vpow.pop %v4297
        %v4299 = vmul.f32 %v4278, 1.442695
        %v4300 = vpow.pop %v4299
        %v4301 = vmul.f32 %v4279, 1.442695
        %v4302 = vpow.pop %v4301
        %v4303 = vmul.f32 %v4280, 1.442695
        %v4304 = vpow.pop %v4303
        %v4305 = vmul.f32 %v4281, 1.442695
        %v4306 = vpow.pop %v4305
        %v4307 = vmul.f32 %v4282, 1.442695
        %v4308 = vpow.pop %v4307
        %v4309 = vmul.f32 %v4283, 1.442695
        %v4310 = vpow.pop %v4309
        %v4311 = vmul.f32 %v4284, 1.442695
        %v4312 = vpow.pop %v4311
        %v4313 = vmul.f32 %v4285, 1.442695
        %v4314 = vpow.pop %v4313
        %v4315 = vmul.f32 %v4286, 1.442695
        %v4316 = vpow.pop %v4315
        %v4317 = vmul.f32 %v4287, 1.442695
        %v4318 = vpow.pop %v4317
        %v4319 = vmul.f32 %v4288, 1.442695
        %v4320 = vpow.pop %v4319
        %v4321 = vadd.f32 %v4290, 1.0
        %v4322 = vadd.f32 %v4292, 1.0
        %v4323 = vadd.f32 %v4294, 1.0
        %v4324 = vadd.f32 %v4296, 1.0
        %v4325 = vadd.f32 %v4298, 1.0
        %v4326 = vadd.f32 %v4300, 1.0
        %v4327 = vadd.f32 %v4302, 1.0
        %v4328 = vadd.f32 %v4304, 1.0
        %v4329 = vadd.f32 %v4306, 1.0
        %v4330 = vadd.f32 %v4308, 1.0
        %v4331 = vadd.f32 %v4310, 1.0
        %v4332 = vadd.f32 %v4312, 1.0
        %v4333 = vadd.f32 %v4314, 1.0
        %v4334 = vadd.f32 %v4316, 1.0
        %v4335 = vadd.f32 %v4318, 1.0
        %v4336 = vadd.f32 %v4320, 1.0
        %v4337 = vrcp.pop %v4321
        %v4338 = vmul.f32 1.0, %v4337
        %v4339 = vrcp.pop %v4322
        %v4340 = vmul.f32 1.0, %v4339
        %v4341 = vrcp.pop %v4323
        %v4342 = vmul.f32 1.0, %v4341
        %v4343 = vrcp.pop %v4324
        %v4344 = vmul.f32 1.0, %v4343
        %v4345 = vrcp.pop %v4325
        %v4346 = vmul.f32 1.0, %v4345
        %v4347 = vrcp.pop %v4326
        %v4348 = vmul.f32 1.0, %v4347
        %v4349 = vrcp.pop %v4327
        %v4350 = vmul.f32 1.0, %v4349
        %v4351 = vrcp.pop %v4328
        %v4352 = vmul.f32 1.0, %v4351
        %v4353 = vrcp.pop %v4329
        %v4354 = vmul.f32 1.0, %v4353
        %v4355 = vrcp.pop %v4330
        %v4356 = vmul.f32 1.0, %v4355
        %v4357 = vrcp.pop %v4331
        %v4358 = vmul.f32 1.0, %v4357
        %v4359 = vrcp.pop %v4332
        %v4360 = vmul.f32 1.0, %v4359
        %v4361 = vrcp.pop %v4333
        %v4362 = vmul.f32 1.0, %v4361
        %v4363 = vrcp.pop %v4334
        %v4364 = vmul.f32 1.0, %v4363
        %v4365 = vrcp.pop %v4335
        %v4366 = vmul.f32 1.0, %v4365
        %v4367 = vrcp.pop %v4336
        %v4368 = vmul.f32 1.0, %v4367
        %v4369 = vmul.f32 %v4257, %v4338
        %v4370 = vmul.f32 %v4258, %v4340
        %v4371 = vmul.f32 %v4259, %v4342
        %v4372 = vmul.f32 %v4260, %v4344
        %v4373 = vmul.f32 %v4261, %v4346
        %v4374 = vmul.f32 %v4262, %v4348
        %v4375 = vmul.f32 %v4263, %v4350
        %v4376 = vmul.f32 %v4264, %v4352
        %v4377 = vmul.f32 %v4265, %v4354
        %v4378 = vmul.f32 %v4266, %v4356
        %v4379 = vmul.f32 %v4267, %v4358
        %v4380 = vmul.f32 %v4268, %v4360
        %v4381 = vmul.f32 %v4269, %v4362
        %v4382 = vmul.f32 %v4270, %v4364
        %v4383 = vmul.f32 %v4271, %v4366
        %v4384 = vmul.f32 %v4272, %v4368
        %v4385 = vld [vmem:[%s8] sm:$0x1]
        %v4387 = vlaneseq
        %v4388 = vshrl.u32 %v4387, 7
        %v4389 = vsub.s32 0, %v4388
        %v4390 = vrot.slane %v4385, %v4389
        %v4392 = vmul.f32 %v4369, %v4390
        %v4393 = vmul.f32 %v4370, %v4390
        %v4394 = vmul.f32 %v4371, %v4390
        %v4395 = vmul.f32 %v4372, %v4390
        %v4396 = vmul.f32 %v4373, %v4390
        %v4397 = vmul.f32 %v4374, %v4390
        %v4398 = vmul.f32 %v4375, %v4390
        %v4399 = vmul.f32 %v4376, %v4390
        %v4400 = vmul.f32 %v4377, %v4390
        %v4401 = vmul.f32 %v4378, %v4390
        %v4402 = vmul.f32 %v4379, %v4390
        %v4403 = vmul.f32 %v4380, %v4390
        %v4404 = vmul.f32 %v4381, %v4390
        %v4405 = vmul.f32 %v4382, %v4390
        %v4406 = vmul.f32 %v4383, %v4390
        %v4407 = vmul.f32 %v4384, %v4390
        %4408 = vadd.xlane.f32.xlu0 %v4392
        %v4409 = vpop.xlane.xlu0 %4408
        %4410 = vadd.xlane.f32.xlu0 %v4393
        %v4411 = vpop.xlane.xlu0 %4410
        %4412 = vadd.xlane.f32.xlu0 %v4394
        %v4413 = vpop.xlane.xlu0 %4412
        %4414 = vadd.xlane.f32.xlu0 %v4395
        %v4415 = vpop.xlane.xlu0 %4414
        %4416 = vadd.xlane.f32.xlu0 %v4396
        %v4417 = vpop.xlane.xlu0 %4416
        %4418 = vadd.xlane.f32.xlu0 %v4397
        %v4419 = vpop.xlane.xlu0 %4418
        %4420 = vadd.xlane.f32.xlu0 %v4398
        %v4421 = vpop.xlane.xlu0 %4420
        %4422 = vadd.xlane.f32.xlu0 %v4399
        %v4423 = vpop.xlane.xlu0 %4422
        %4424 = vadd.xlane.f32.xlu0 %v4400
        %v4425 = vpop.xlane.xlu0 %4424
        %4426 = vadd.xlane.f32.xlu0 %v4401
        %v4427 = vpop.xlane.xlu0 %4426
        %4428 = vadd.xlane.f32.xlu0 %v4402
        %v4429 = vpop.xlane.xlu0 %4428
        %4430 = vadd.xlane.f32.xlu0 %v4403
        %v4431 = vpop.xlane.xlu0 %4430
        %4432 = vadd.xlane.f32.xlu0 %v4404
        %v4433 = vpop.xlane.xlu0 %4432
        %4434 = vadd.xlane.f32.xlu0 %v4405
        %v4435 = vpop.xlane.xlu0 %4434
        %4436 = vadd.xlane.f32.xlu0 %v4406
        %v4437 = vpop.xlane.xlu0 %4436
        %4438 = vadd.xlane.f32.xlu0 %v4407
        %v4439 = vpop.xlane.xlu0 %4438
        %v4440 = vmax.f32 %v4409, %v4417
        %v4441 = vmax.f32 %v4411, %v4419
        %v4442 = vmax.f32 %v4413, %v4421
        %v4443 = vmax.f32 %v4415, %v4423
        %v4444 = vmax.f32 %v4440, %v4425
        %v4445 = vmax.f32 %v4441, %v4427
        %v4446 = vmax.f32 %v4442, %v4429
        %v4447 = vmax.f32 %v4443, %v4431
        %v4448 = vmax.f32 %v4444, %v4433
        %v4449 = vmax.f32 %v4445, %v4435
        %v4450 = vmax.f32 %v4446, %v4437
        %v4451 = vmax.f32 %v4447, %v4439
        %v4452 = vmax.f32 %v4448, %v4449
        %v4453 = vmax.f32 %v4450, %v4451
        %v4454 = vmax.f32 %v4452, %v4453
        %v4455 = vrot.slane %v4454, 4
        %v4456 = vmax.f32 %v4454, %v4455
        %v4457 = vrot.slane %v4456, 2
        %v4458 = vmax.f32 %v4456, %v4457
        %v4459 = vrot.slane %v4458, 1
        %v4460 = vmax.f32 %v4458, %v4459
        %v4461 = vsub.f32 %v4409, %v4460
        %v4462 = vsub.f32 %v4411, %v4460
        %v4463 = vsub.f32 %v4413, %v4460
        %v4464 = vsub.f32 %v4415, %v4460
        %v4465 = vsub.f32 %v4417, %v4460
        %v4466 = vsub.f32 %v4419, %v4460
        %v4467 = vsub.f32 %v4421, %v4460
        %v4468 = vsub.f32 %v4423, %v4460
        %v4469 = vsub.f32 %v4425, %v4460
        %v4470 = vsub.f32 %v4427, %v4460
        %v4471 = vsub.f32 %v4429, %v4460
        %v4472 = vsub.f32 %v4431, %v4460
        %v4473 = vsub.f32 %v4433, %v4460
        %v4474 = vsub.f32 %v4435, %v4460
        %v4475 = vsub.f32 %v4437, %v4460
        %v4476 = vsub.f32 %v4439, %v4460
        %v4477 = vmin.f32 %v4461, 60.0
        %v4478 = vmin.f32 %v4462, 60.0
        %v4479 = vmin.f32 %v4463, 60.0
        %v4480 = vmin.f32 %v4464, 60.0
        %v4481 = vmin.f32 %v4465, 60.0
        %v4482 = vmin.f32 %v4466, 60.0
        %v4483 = vmin.f32 %v4467, 60.0
        %v4484 = vmin.f32 %v4468, 60.0
        %v4485 = vmin.f32 %v4469, 60.0
        %v4486 = vmin.f32 %v4470, 60.0
        %v4487 = vmin.f32 %v4471, 60.0
        %v4488 = vmin.f32 %v4472, 60.0
        %v4489 = vmin.f32 %v4473, 60.0
        %v4490 = vmin.f32 %v4474, 60.0
        %v4491 = vmin.f32 %v4475, 60.0
        %v4492 = vmin.f32 %v4476, 60.0
        %v4493 = vmul.f32 %v4477, 1.442695
        %v4494 = vpow.pop %v4493
        %v4495 = vmul.f32 %v4478, 1.442695
        %v4496 = vpow.pop %v4495
        %v4497 = vmul.f32 %v4479, 1.442695
        %v4498 = vpow.pop %v4497
        %v4499 = vmul.f32 %v4480, 1.442695
        %v4500 = vpow.pop %v4499
        %v4501 = vmul.f32 %v4481, 1.442695
        %v4502 = vpow.pop %v4501
        %v4503 = vmul.f32 %v4482, 1.442695
        %v4504 = vpow.pop %v4503
        %v4505 = vmul.f32 %v4483, 1.442695
        %v4506 = vpow.pop %v4505
        %v4507 = vmul.f32 %v4484, 1.442695
        %v4508 = vpow.pop %v4507
        %v4509 = vmul.f32 %v4485, 1.442695
        %v4510 = vpow.pop %v4509
        %v4511 = vmul.f32 %v4486, 1.442695
        %v4512 = vpow.pop %v4511
        %v4513 = vmul.f32 %v4487, 1.442695
        %v4514 = vpow.pop %v4513
        %v4515 = vmul.f32 %v4488, 1.442695
        %v4516 = vpow.pop %v4515
        %v4517 = vmul.f32 %v4489, 1.442695
        %v4518 = vpow.pop %v4517
        %v4519 = vmul.f32 %v4490, 1.442695
        %v4520 = vpow.pop %v4519
        %v4521 = vmul.f32 %v4491, 1.442695
        %v4522 = vpow.pop %v4521
        %v4523 = vmul.f32 %v4492, 1.442695
        %v4524 = vpow.pop %v4523
        %4525 = vxpose.xlu0.b32.start [1/16] %v1659, 128
        %4526 = vxpose.xlu0.b32.cont [2/16] %v1660, 128
        %4527 = vxpose.xlu0.b32.cont [3/16] %v1661, 128
        %4528 = vxpose.xlu0.b32.cont [4/16] %v1662, 128
        %4529 = vxpose.xlu0.b32.cont [5/16] %v1663, 128
        %4530 = vxpose.xlu0.b32.cont [6/16] %v1664, 128
        %4531 = vxpose.xlu0.b32.cont [7/16] %v1665, 128
        %4532 = vxpose.xlu0.b32.cont [8/16] %v1666, 128
        %4533 = vxpose.xlu0.b32.cont [9/16] %v1667, 128
        %4534 = vxpose.xlu0.b32.cont [10/16] %v1668, 128
        %4535 = vxpose.xlu0.b32.cont [11/16] %v1669, 128
        %4536 = vxpose.xlu0.b32.cont [12/16] %v1670, 128
        %4537 = vxpose.xlu0.b32.cont [13/16] %v1671, 128
        %4538 = vxpose.xlu0.b32.cont [14/16] %v1672, 128
        %4539 = vxpose.xlu0.b32.cont [15/16] %v1673, 128
        %4540 = vxpose.xlu0.b32.end [16/16] %v1674, 128
        %v4541 = vpop.trf.xlu0
        %v4542 = vpop.trf.xlu0
        %v4543 = vpop.trf.xlu0
        %v4544 = vpop.trf.xlu0
        %v4545 = vpop.trf.xlu0
        %v4546 = vpop.trf.xlu0
        %v4547 = vpop.trf.xlu0
        %v4548 = vpop.trf.xlu0
        %v4549 = vpop.trf.xlu0
        %v4550 = vpop.trf.xlu0
        %v4551 = vpop.trf.xlu0
        %v4552 = vpop.trf.xlu0
        %v4553 = vpop.trf.xlu0
        %v4554 = vpop.trf.xlu0
        %v4555 = vpop.trf.xlu0
        %v4556 = vpop.trf.xlu0
        %4557 = vmatprep.subr.mxu0 0.0
        %4558 = vmatpush1.msra.mxu0 %v4494
        %4559 = vmatprep.subr.mxu0 0.0
        %4560 = vmatpush1.msra.mxu0 %v4496
        %4561 = vmatprep.subr.mxu0 0.0
        %4562 = vmatpush1.msra.mxu0 %v4498
        %4563 = vmatprep.subr.mxu0 0.0
        %4564 = vmatpush1.msra.mxu0 %v4500
        %4565 = vmatprep.subr.mxu0 0.0
        %4566 = vmatpush1.msra.mxu0 %v4502
        %4567 = vmatprep.subr.mxu0 0.0
        %4568 = vmatpush1.msra.mxu0 %v4504
        %4569 = vmatprep.subr.mxu0 0.0
        %4570 = vmatpush1.msra.mxu0 %v4506
        %4571 = vmatprep.subr.mxu0 0.0
        %4572 = vmatpush1.msra.mxu0 %v4508
        %4573 = vmatprep.subr.mxu0 0.0
        %4574 = vmatpush1.msra.mxu0 %v4510
        %4575 = vmatprep.subr.mxu0 0.0
        %4576 = vmatpush1.msra.mxu0 %v4512
        %4577 = vmatprep.subr.mxu0 0.0
        %4578 = vmatpush1.msra.mxu0 %v4514
        %4579 = vmatprep.subr.mxu0 0.0
        %4580 = vmatpush1.msra.mxu0 %v4516
        %4581 = vmatprep.subr.mxu0 0.0
        %4582 = vmatpush1.msra.mxu0 %v4518
        %4583 = vmatprep.subr.mxu0 0.0
        %4584 = vmatpush1.msra.mxu0 %v4520
        %4585 = vmatprep.subr.mxu0 0.0
        %4586 = vmatpush1.msra.mxu0 %v4522
        %4587 = vmatprep.subr.mxu0 0.0
        %4588 = vmatpush1.msra.mxu0 %v4524
        %4589 = vmatprep.subr.mxu0 0.0
        %4590 = vmatpush1.msra.mxu0 0.0
        %4591 = vmatprep.subr.mxu0 0.0
        %4592 = vmatpush1.msra.mxu0 0.0
        %4593 = vmatprep.subr.mxu0 0.0
        %4594 = vmatpush1.msra.mxu0 0.0
        %4595 = vmatprep.subr.mxu0 0.0
        %4596 = vmatpush1.msra.mxu0 0.0
        %4597 = vmatprep.subr.mxu0 0.0
        %4598 = vmatpush1.msra.mxu0 0.0
        %4599 = vmatprep.subr.mxu0 0.0
        %4600 = vmatpush1.msra.mxu0 0.0
        %4601 = vmatprep.subr.mxu0 0.0
        %4602 = vmatpush1.msra.mxu0 0.0
        %4603 = vmatprep.subr.mxu0 0.0
        %4604 = vmatpush1.msra.mxu0 0.0
        %4605 = vmatprep.subr.mxu0 0.0
        %4606 = vmatpush1.msra.mxu0 0.0
        %4607 = vmatprep.subr.mxu0 0.0
        %4608 = vmatpush1.msra.mxu0 0.0
        %4609 = vmatprep.subr.mxu0 0.0
        %4610 = vmatpush1.msra.mxu0 0.0
        %4611 = vmatprep.subr.mxu0 0.0
        %4612 = vmatpush1.msra.mxu0 0.0
        %4613 = vmatprep.subr.mxu0 0.0
        %4614 = vmatpush1.msra.mxu0 0.0
        %4615 = vmatprep.subr.mxu0 0.0
        %4616 = vmatpush1.msra.mxu0 0.0
        %4617 = vmatprep.subr.mxu0 0.0
        %4618 = vmatpush1.msra.mxu0 0.0
        %4619 = vmatprep.subr.mxu0 0.0
        %4620 = vmatpush1.msra.mxu0 0.0
        %4621 = vmatprep.mubr.f32.mxu0 0.0
        %4622 = vmatmul.mubr.f32.gmra.mrb[0].mxu0 %v4541
        %v4623 = vpop.f32.mrb[0].mxu0
        %v4624 = vadd.f32 0.0, %v4623
        %v4625 = vpop.f32.mrb[0].mxu0
        %4626 = vmatprep.mubr.f32.mxu0 0.0
        %4627 = vmatmul.mubr.f32.gmra.mrb[0].mxu0 %v4542
        %v4628 = vpop.f32.mrb[0].mxu0
        %v4629 = vadd.f32 0.0, %v4628
        %v4630 = vpop.f32.mrb[0].mxu0
        %4631 = vmatprep.mubr.f32.mxu0 0.0
        %4632 = vmatmul.mubr.f32.gmra.mrb[0].mxu0 %v4543
        %v4633 = vpop.f32.mrb[0].mxu0
        %v4634 = vadd.f32 0.0, %v4633
        %v4635 = vpop.f32.mrb[0].mxu0
        %4636 = vmatprep.mubr.f32.mxu0 0.0
        %4637 = vmatmul.mubr.f32.gmra.mrb[0].mxu0 %v4544
        %v4638 = vpop.f32.mrb[0].mxu0
        %v4639 = vadd.f32 0.0, %v4638
        %v4640 = vpop.f32.mrb[0].mxu0
        %4641 = vmatprep.mubr.f32.mxu0 0.0
        %4642 = vmatmul.mubr.f32.gmra.mrb[0].mxu0 %v4545
        %v4643 = vpop.f32.mrb[0].mxu0
        %v4644 = vadd.f32 0.0, %v4643
        %v4645 = vpop.f32.mrb[0].mxu0
        %4646 = vmatprep.mubr.f32.mxu0 0.0
        %4647 = vmatmul.mubr.f32.gmra.mrb[0].mxu0 %v4546
        %v4648 = vpop.f32.mrb[0].mxu0
        %v4649 = vadd.f32 0.0, %v4648
        %v4650 = vpop.f32.mrb[0].mxu0
        %4651 = vmatprep.mubr.f32.mxu0 0.0
        %4652 = vmatmul.mubr.f32.gmra.mrb[0].mxu0 %v4547
        %v4653 = vpop.f32.mrb[0].mxu0
        %v4654 = vadd.f32 0.0, %v4653
        %v4655 = vpop.f32.mrb[0].mxu0
        %4656 = vmatprep.mubr.f32.mxu0 0.0
        %4657 = vmatmul.mubr.f32.gmra.mrb[0].mxu0 %v4548
        %v4658 = vpop.f32.mrb[0].mxu0
        %v4659 = vadd.f32 0.0, %v4658
        %v4660 = vpop.f32.mrb[0].mxu0
        %4661 = vdwg.mxu0
        %v4662 = vmul.f32 %v4494, %v1799
        %v4663 = vmul.f32 %v4496, %v1804
        %v4664 = vmul.f32 %v4498, %v1809
        %v4665 = vmul.f32 %v4500, %v1814
        %v4666 = vmul.f32 %v4502, %v1819
        %v4667 = vmul.f32 %v4504, %v1824
        %v4668 = vmul.f32 %v4506, %v1829
        %v4669 = vmul.f32 %v4508, %v1834
        %v4670 = vmul.f32 %v4510, %v1839
        %v4671 = vmul.f32 %v4512, %v1844
        %v4672 = vmul.f32 %v4514, %v1849
        %v4673 = vmul.f32 %v4516, %v1854
        %v4674 = vmul.f32 %v4518, %v1859
        %v4675 = vmul.f32 %v4520, %v1864
        %v4676 = vmul.f32 %v4522, %v1869
        %v4677 = vmul.f32 %v4524, %v1874
        %4678 = vmatprep.subr.mxu0 0.0
        %4679 = vmatpush1.msra.mxu0 %v4662
        %4680 = vmatprep.subr.mxu0 0.0
        %4681 = vmatpush1.msra.mxu0 %v4663
        %4682 = vmatprep.subr.mxu0 0.0
        %4683 = vmatpush1.msra.mxu0 %v4664
        %4684 = vmatprep.subr.mxu0 0.0
        %4685 = vmatpush1.msra.mxu0 %v4665
        %4686 = vmatprep.subr.mxu0 0.0
        %4687 = vmatpush1.msra.mxu0 %v4666
        %4688 = vmatprep.subr.mxu0 0.0
        %4689 = vmatpush1.msra.mxu0 %v4667
        %4690 = vmatprep.subr.mxu0 0.0
        %4691 = vmatpush1.msra.mxu0 %v4668
        %4692 = vmatprep.subr.mxu0 0.0
        %4693 = vmatpush1.msra.mxu0 %v4669
        %4694 = vmatprep.subr.mxu0 0.0
        %4695 = vmatpush1.msra.mxu0 %v4670
        %4696 = vmatprep.subr.mxu0 0.0
        %4697 = vmatpush1.msra.mxu0 %v4671
        %4698 = vmatprep.subr.mxu0 0.0
        %4699 = vmatpush1.msra.mxu0 %v4672
        %4700 = vmatprep.subr.mxu0 0.0
        %4701 = vmatpush1.msra.mxu0 %v4673
        %4702 = vmatprep.subr.mxu0 0.0
        %4703 = vmatpush1.msra.mxu0 %v4674
        %4704 = vmatprep.subr.mxu0 0.0
        %4705 = vmatpush1.msra.mxu0 %v4675
        %4706 = vmatprep.subr.mxu0 0.0
        %4707 = vmatpush1.msra.mxu0 %v4676
        %4708 = vmatprep.subr.mxu0 0.0
        %4709 = vmatpush1.msra.mxu0 %v4677
        %4710 = vmatprep.subr.mxu0 0.0
        %4711 = vmatpush1.msra.mxu0 0.0
        %4712 = vmatprep.subr.mxu0 0.0
        %4713 = vmatpush1.msra.mxu0 0.0
        %4714 = vmatprep.subr.mxu0 0.0
        %4715 = vmatpush1.msra.mxu0 0.0
        %4716 = vmatprep.subr.mxu0 0.0
        %4717 = vmatpush1.msra.mxu0 0.0
        %4718 = vmatprep.subr.mxu0 0.0
        %4719 = vmatpush1.msra.mxu0 0.0
        %4720 = vmatprep.subr.mxu0 0.0
        %4721 = vmatpush1.msra.mxu0 0.0
        %4722 = vmatprep.subr.mxu0 0.0
        %4723 = vmatpush1.msra.mxu0 0.0
        %4724 = vmatprep.subr.mxu0 0.0
        %4725 = vmatpush1.msra.mxu0 0.0
        %4726 = vmatprep.subr.mxu0 0.0
        %4727 = vmatpush1.msra.mxu0 0.0
        %4728 = vmatprep.subr.mxu0 0.0
        %4729 = vmatpush1.msra.mxu0 0.0
        %4730 = vmatprep.subr.mxu0 0.0
        %4731 = vmatpush1.msra.mxu0 0.0
        %4732 = vmatprep.subr.mxu0 0.0
        %4733 = vmatpush1.msra.mxu0 0.0
        %4734 = vmatprep.subr.mxu0 0.0
        %4735 = vmatpush1.msra.mxu0 0.0
        %4736 = vmatprep.subr.mxu0 0.0
        %4737 = vmatpush1.msra.mxu0 0.0
        %4738 = vmatprep.subr.mxu0 0.0
        %4739 = vmatpush1.msra.mxu0 0.0
        %4740 = vmatprep.subr.mxu0 0.0
        %4741 = vmatpush1.msra.mxu0 0.0
        %4742 = vmatprep.mubr.f32.mxu0 0.0
        %4743 = vmatmul.mubr.f32.gmra.mrb[0].mxu0 %v4541
        %v4744 = vpop.f32.mrb[0].mxu0
        %v4745 = vadd.f32 0.0, %v4744
        %v4746 = vpop.f32.mrb[0].mxu0
        %4747 = vmatprep.mubr.f32.mxu0 0.0
        %4748 = vmatmul.mubr.f32.gmra.mrb[0].mxu0 %v4542
        %v4749 = vpop.f32.mrb[0].mxu0
        %v4750 = vadd.f32 0.0, %v4749
        %v4751 = vpop.f32.mrb[0].mxu0
        %4752 = vmatprep.mubr.f32.mxu0 0.0
        %4753 = vmatmul.mubr.f32.gmra.mrb[0].mxu0 %v4543
        %v4754 = vpop.f32.mrb[0].mxu0
        %v4755 = vadd.f32 0.0, %v4754
        %v4756 = vpop.f32.mrb[0].mxu0
        %4757 = vmatprep.mubr.f32.mxu0 0.0
        %4758 = vmatmul.mubr.f32.gmra.mrb[0].mxu0 %v4544
        %v4759 = vpop.f32.mrb[0].mxu0
        %v4760 = vadd.f32 0.0, %v4759
        %v4761 = vpop.f32.mrb[0].mxu0
        %4762 = vmatprep.mubr.f32.mxu0 0.0
        %4763 = vmatmul.mubr.f32.gmra.mrb[0].mxu0 %v4545
        %v4764 = vpop.f32.mrb[0].mxu0
        %v4765 = vadd.f32 0.0, %v4764
        %v4766 = vpop.f32.mrb[0].mxu0
        %4767 = vmatprep.mubr.f32.mxu0 0.0
        %4768 = vmatmul.mubr.f32.gmra.mrb[0].mxu0 %v4546
        %v4769 = vpop.f32.mrb[0].mxu0
        %v4770 = vadd.f32 0.0, %v4769
        %v4771 = vpop.f32.mrb[0].mxu0
        %4772 = vmatprep.mubr.f32.mxu0 0.0
        %4773 = vmatmul.mubr.f32.gmra.mrb[0].mxu0 %v4547
        %v4774 = vpop.f32.mrb[0].mxu0
        %v4775 = vadd.f32 0.0, %v4774
        %v4776 = vpop.f32.mrb[0].mxu0
        %4777 = vmatprep.mubr.f32.mxu0 0.0
        %4778 = vmatmul.mubr.f32.gmra.mrb[0].mxu0 %v4548
        %v4779 = vpop.f32.mrb[0].mxu0
        %v4780 = vadd.f32 0.0, %v4779
        %v4781 = vpop.f32.mrb[0].mxu0
        %4782 = vdwg.mxu0
        %v4783 = vld [vmem:[#allocation3] sm:$0x1]
        %v4784 = vmax.f32 %v4783, %v4460
        %v4785 = vsub.f32 %v4783, %v4784
        %v4786 = vmul.f32 %v4785, 1.442695
        %v4787 = vpow.pop %v4786
        %v4788 = vsub.f32 %v4460, %v4784
        %v4789 = vmul.f32 %v4788, 1.442695
        %v4790 = vpow.pop %v4789
        %vm4791 = vcmask 0
        %4792 = vst.msk [vmem:[#allocation3] sm:$0x1] %vm4791, %v4784
        %v4793 = vld [vmem:[#allocation4] sm:$0xff]
        %v4794 = vld [vmem:[#allocation4 + $0x8] sm:$0xff]
        %v4795 = vld [vmem:[#allocation4 + $0x10] sm:$0xff]
        %v4796 = vld [vmem:[#allocation4 + $0x18] sm:$0xff]
        %v4797 = vld [vmem:[#allocation4 + $0x20] sm:$0xff]
        %v4798 = vld [vmem:[#allocation4 + $0x28] sm:$0xff]
        %v4799 = vld [vmem:[#allocation4 + $0x30] sm:$0xff]
        %v4800 = vld [vmem:[#allocation4 + $0x38] sm:$0xff]
        %v4802 = vlaneseq
        %v4803 = vshrl.u32 %v4802, 7
        %v4804 = vsub.s32 0, %v4803
        %v4805 = vrot.slane %v4787, %v4804
        %v4807 = vmul.f32 %v4805, %v4793
        %v4808 = vmul.f32 %v4805, %v4794
        %v4809 = vmul.f32 %v4805, %v4795
        %v4810 = vmul.f32 %v4805, %v4796
        %v4811 = vmul.f32 %v4805, %v4797
        %v4812 = vmul.f32 %v4805, %v4798
        %v4813 = vmul.f32 %v4805, %v4799
        %v4814 = vmul.f32 %v4805, %v4800
        %v4816 = vlaneseq
        %v4817 = vshrl.u32 %v4816, 7
        %v4818 = vsub.s32 0, %v4817
        %v4819 = vrot.slane %v4790, %v4818
        %v4821 = vmul.f32 %v4819, %v4624
        %v4822 = vmul.f32 %v4819, %v4629
        %v4823 = vmul.f32 %v4819, %v4634
        %v4824 = vmul.f32 %v4819, %v4639
        %v4825 = vmul.f32 %v4819, %v4644
        %v4826 = vmul.f32 %v4819, %v4649
        %v4827 = vmul.f32 %v4819, %v4654
        %v4828 = vmul.f32 %v4819, %v4659
        %v4829 = vadd.f32 %v4807, %v4821
        %v4830 = vadd.f32 %v4808, %v4822
        %v4831 = vadd.f32 %v4809, %v4823
        %v4832 = vadd.f32 %v4810, %v4824
        %v4833 = vadd.f32 %v4811, %v4825
        %v4834 = vadd.f32 %v4812, %v4826
        %v4835 = vadd.f32 %v4813, %v4827
        %v4836 = vadd.f32 %v4814, %v4828
        %4837 = vst.msk [vmem:[#allocation4] sm:$0xff] %vm2331, %v4829
        %4838 = vst.msk [vmem:[#allocation4 + $0x8] sm:$0xff] %vm2331, %v4830
        %4839 = vst.msk [vmem:[#allocation4 + $0x10] sm:$0xff] %vm2331, %v4831
        %4840 = vst.msk [vmem:[#allocation4 + $0x18] sm:$0xff] %vm2331, %v4832
        %4841 = vst.msk [vmem:[#allocation4 + $0x20] sm:$0xff] %vm2331, %v4833
        %4842 = vst.msk [vmem:[#allocation4 + $0x28] sm:$0xff] %vm2331, %v4834
        %4843 = vst.msk [vmem:[#allocation4 + $0x30] sm:$0xff] %vm2331, %v4835
        %4844 = vst.msk [vmem:[#allocation4 + $0x38] sm:$0xff] %vm2331, %v4836
        %v4845 = vld [vmem:[#allocation5] sm:$0xff]
        %v4846 = vld [vmem:[#allocation5 + $0x8] sm:$0xff]
        %v4847 = vld [vmem:[#allocation5 + $0x10] sm:$0xff]
        %v4848 = vld [vmem:[#allocation5 + $0x18] sm:$0xff]
        %v4849 = vld [vmem:[#allocation5 + $0x20] sm:$0xff]
        %v4850 = vld [vmem:[#allocation5 + $0x28] sm:$0xff]
        %v4851 = vld [vmem:[#allocation5 + $0x30] sm:$0xff]
        %v4852 = vld [vmem:[#allocation5 + $0x38] sm:$0xff]
        %4853 = vset.pattern.permute.xlu0 0
        %4854 = vperm.xlu0 %4853, %v4805
        %v4855 = vpop.permute.xlu0 %4854
        %v4857 = vmul.f32 %v4855, %v4845
        %v4858 = vmul.f32 %v4855, %v4846
        %v4859 = vmul.f32 %v4855, %v4847
        %v4860 = vmul.f32 %v4855, %v4848
        %v4861 = vmul.f32 %v4855, %v4849
        %v4862 = vmul.f32 %v4855, %v4850
        %v4863 = vmul.f32 %v4855, %v4851
        %v4864 = vmul.f32 %v4855, %v4852
        %4865 = vset.pattern.permute.xlu0 0
        %4866 = vperm.xlu0 %4865, %v4819
        %v4867 = vpop.permute.xlu0 %4866
        %v4869 = vmul.f32 %v4867, %v4745
        %v4870 = vmul.f32 %v4867, %v4750
        %v4871 = vmul.f32 %v4867, %v4755
        %v4872 = vmul.f32 %v4867, %v4760
        %v4873 = vmul.f32 %v4867, %v4765
        %v4874 = vmul.f32 %v4867, %v4770
        %v4875 = vmul.f32 %v4867, %v4775
        %v4876 = vmul.f32 %v4867, %v4780
        %v4877 = vadd.f32 %v4857, %v4869
        %v4878 = vadd.f32 %v4858, %v4870
        %v4879 = vadd.f32 %v4859, %v4871
        %v4880 = vadd.f32 %v4860, %v4872
        %v4881 = vadd.f32 %v4861, %v4873
        %v4882 = vadd.f32 %v4862, %v4874
        %v4883 = vadd.f32 %v4863, %v4875
        %v4884 = vadd.f32 %v4864, %v4876
        %4885 = vst [vmem:[#allocation5] sm:$0xff] %v4877
        %4886 = vst [vmem:[#allocation5 + $0x8] sm:$0xff] %v4878
        %4887 = vst [vmem:[#allocation5 + $0x10] sm:$0xff] %v4879
        %4888 = vst [vmem:[#allocation5 + $0x18] sm:$0xff] %v4880
        %4889 = vst [vmem:[#allocation5 + $0x20] sm:$0xff] %v4881
        %4890 = vst [vmem:[#allocation5 + $0x28] sm:$0xff] %v4882
        %4891 = vst [vmem:[#allocation5 + $0x30] sm:$0xff] %v4883
        %4892 = vst [vmem:[#allocation5 + $0x38] sm:$0xff] %v4884
        %p4893 = scmp.eq.s32.totalorder %s34, 1
        // Predicated region
        $region121: #{tpu_custom_call.1} parent=95 // pred_check
          %p4894 = pneg %p4893
        $region122: #{tpu_custom_call.1} parent=95 // pred_check_branch
          %4896 = sbr.rel (%p4894) target = $region124
        $region123: #{tpu_custom_call.1} parent=95 // pred_region
          %v4897 = vld [vmem:[#allocation4] sm:$0xff]
          %v4898 = vld [vmem:[#allocation4 + $0x8] sm:$0xff]
          %v4899 = vld [vmem:[#allocation4 + $0x10] sm:$0xff]
          %v4900 = vld [vmem:[#allocation4 + $0x18] sm:$0xff]
          %v4901 = vld [vmem:[#allocation4 + $0x20] sm:$0xff]
          %v4902 = vld [vmem:[#allocation4 + $0x28] sm:$0xff]
          %v4903 = vld [vmem:[#allocation4 + $0x30] sm:$0xff]
          %v4904 = vld [vmem:[#allocation4 + $0x38] sm:$0xff]
          %vm4905 = vcmp.gt.f32.partialorder %v4897, 0.0
          %vm4906 = vcmp.gt.f32.partialorder %v4898, 0.0
          %vm4907 = vcmp.gt.f32.partialorder %v4899, 0.0
          %vm4908 = vcmp.gt.f32.partialorder %v4900, 0.0
          %vm4909 = vcmp.gt.f32.partialorder %v4901, 0.0
          %vm4910 = vcmp.gt.f32.partialorder %v4902, 0.0
          %vm4911 = vcmp.gt.f32.partialorder %v4903, 0.0
          %vm4912 = vcmp.gt.f32.partialorder %v4904, 0.0
          %v4913 = vrcp.pop %v4897
          %v4914 = vmul.f32 1.0, %v4913
          %v4915 = vrcp.pop %v4898
          %v4916 = vmul.f32 1.0, %v4915
          %v4917 = vrcp.pop %v4899
          %v4918 = vmul.f32 1.0, %v4917
          %v4919 = vrcp.pop %v4900
          %v4920 = vmul.f32 1.0, %v4919
          %v4921 = vrcp.pop %v4901
          %v4922 = vmul.f32 1.0, %v4921
          %v4923 = vrcp.pop %v4902
          %v4924 = vmul.f32 1.0, %v4923
          %v4925 = vrcp.pop %v4903
          %v4926 = vmul.f32 1.0, %v4925
          %v4927 = vrcp.pop %v4904
          %v4928 = vmul.f32 1.0, %v4927
          %v4929 = vsel %vm4905, %v4914, 0.0
          %v4930 = vsel %vm4906, %v4916, 0.0
          %v4931 = vsel %vm4907, %v4918, 0.0
          %v4932 = vsel %vm4908, %v4920, 0.0
          %v4933 = vsel %vm4909, %v4922, 0.0
          %v4934 = vsel %vm4910, %v4924, 0.0
          %v4935 = vsel %vm4911, %v4926, 0.0
          %v4936 = vsel %vm4912, %v4928, 0.0
          %v4937 = vld [vmem:[#allocation5] sm:$0xff]
          %v4938 = vld [vmem:[#allocation5 + $0x8] sm:$0xff]
          %v4939 = vld [vmem:[#allocation5 + $0x10] sm:$0xff]
          %v4940 = vld [vmem:[#allocation5 + $0x18] sm:$0xff]
          %v4941 = vld [vmem:[#allocation5 + $0x20] sm:$0xff]
          %v4942 = vld [vmem:[#allocation5 + $0x28] sm:$0xff]
          %v4943 = vld [vmem:[#allocation5 + $0x30] sm:$0xff]
          %v4944 = vld [vmem:[#allocation5 + $0x38] sm:$0xff]
          %4946 = vset.pattern.permute.xlu0 0
          %4947 = vperm.xlu0 %4946, %v4929
          %v4948 = vpop.permute.xlu0 %4947
          %4951 = vset.pattern.permute.xlu0 0
          %4952 = vperm.xlu0 %4951, %v4930
          %v4953 = vpop.permute.xlu0 %4952
          %4956 = vset.pattern.permute.xlu0 0
          %4957 = vperm.xlu0 %4956, %v4931
          %v4958 = vpop.permute.xlu0 %4957
          %4961 = vset.pattern.permute.xlu0 0
          %4962 = vperm.xlu0 %4961, %v4932
          %v4963 = vpop.permute.xlu0 %4962
          %4966 = vset.pattern.permute.xlu0 0
          %4967 = vperm.xlu0 %4966, %v4933
          %v4968 = vpop.permute.xlu0 %4967
          %4971 = vset.pattern.permute.xlu0 0
          %4972 = vperm.xlu0 %4971, %v4934
          %v4973 = vpop.permute.xlu0 %4972
          %4976 = vset.pattern.permute.xlu0 0
          %4977 = vperm.xlu0 %4976, %v4935
          %v4978 = vpop.permute.xlu0 %4977
          %4981 = vset.pattern.permute.xlu0 0
          %4982 = vperm.xlu0 %4981, %v4936
          %v4983 = vpop.permute.xlu0 %4982
          %v4985 = vmul.f32 %v4937, %v4948
          %v4986 = vmul.f32 %v4938, %v4953
          %v4987 = vmul.f32 %v4939, %v4958
          %v4988 = vmul.f32 %v4940, %v4963
          %v4989 = vmul.f32 %v4941, %v4968
          %v4990 = vmul.f32 %v4942, %v4973
          %v4991 = vmul.f32 %v4943, %v4978
          %v4992 = vmul.f32 %v4944, %v4983
          %v4993 = vld [vmem:[%s4] sm:$0xf]
          %v4994 = vld [vmem:[%s4 + $0x4] sm:$0xf]
          %v4995 = vld [vmem:[%s4 + $0x8] sm:$0xf]
          %v4996 = vld [vmem:[%s4 + $0xc] sm:$0xf]
          %v4997 = vld [vmem:[%s4 + $0x10] sm:$0xf]
          %v4998 = vld [vmem:[%s4 + $0x14] sm:$0xf]
          %v4999 = vld [vmem:[%s4 + $0x18] sm:$0xf]
          %v5000 = vld [vmem:[%s4 + $0x1c] sm:$0xf]
          %v5001 = vunpack.c.l.bf16 %v4993
          %v5002 = vunpack.c.l.bf16 %v4994
          %v5003 = vunpack.c.l.bf16 %v4995
          %v5004 = vunpack.c.l.bf16 %v4996
          %v5005 = vunpack.c.l.bf16 %v4997
          %v5006 = vunpack.c.l.bf16 %v4998
          %v5007 = vunpack.c.l.bf16 %v4999
          %v5008 = vunpack.c.l.bf16 %v5000
          %5009 = vxpose.xlu0.b32.start [1/16] %v5001, 128
          %5010 = vxpose.xlu0.b32.cont [2/16] %v5002, 128
          %5011 = vxpose.xlu0.b32.cont [3/16] %v5003, 128
          %5012 = vxpose.xlu0.b32.cont [4/16] %v5004, 128
          %5013 = vxpose.xlu0.b32.cont [5/16] %v5005, 128
          %5014 = vxpose.xlu0.b32.cont [6/16] %v5006, 128
          %5015 = vxpose.xlu0.b32.cont [7/16] %v5007, 128
          %5016 = vxpose.xlu0.b32.cont [8/16] %v5008, 128
          %5017 = vxpose.xlu0.b32.cont [9/16] 0.0, 128
          %5018 = vxpose.xlu0.b32.cont [10/16] 0.0, 128
          %5019 = vxpose.xlu0.b32.cont [11/16] 0.0, 128
          %5020 = vxpose.xlu0.b32.cont [12/16] 0.0, 128
          %5021 = vxpose.xlu0.b32.cont [13/16] 0.0, 128
          %5022 = vxpose.xlu0.b32.cont [14/16] 0.0, 128
          %5023 = vxpose.xlu0.b32.cont [15/16] 0.0, 128
          %5024 = vxpose.xlu0.b32.end [16/16] 0.0, 128
          %v5025 = vpop.trf.xlu0
          %v5026 = vpop.trf.xlu0
          %v5027 = vpop.trf.xlu0
          %v5028 = vpop.trf.xlu0
          %v5029 = vpop.trf.xlu0
          %v5030 = vpop.trf.xlu0
          %v5031 = vpop.trf.xlu0
          %v5032 = vpop.trf.xlu0
          %v5033 = vpop.trf.xlu0
          %v5034 = vpop.trf.xlu0
          %v5035 = vpop.trf.xlu0
          %v5036 = vpop.trf.xlu0
          %v5037 = vpop.trf.xlu0
          %v5038 = vpop.trf.xlu0
          %v5039 = vpop.trf.xlu0
          %v5040 = vpop.trf.xlu0
          %v5042 = vsel %vm1683, %v5025, 0
          %v5045 = vsel %vm1683, %v5026, 0
          %5047 = vmatprep.subr.mxu0 0.0
          %5048 = vmatpush1.msra.mxu0 %v4985
          %5049 = vmatprep.subr.mxu0 0.0
          %5050 = vmatpush1.msra.mxu0 %v4986
          %5051 = vmatprep.subr.mxu0 0.0
          %5052 = vmatpush1.msra.mxu0 %v4987
          %5053 = vmatprep.subr.mxu0 0.0
          %5054 = vmatpush1.msra.mxu0 %v4988
          %5055 = vmatprep.subr.mxu0 0.0
          %5056 = vmatpush1.msra.mxu0 %v4989
          %5057 = vmatprep.subr.mxu0 0.0
          %5058 = vmatpush1.msra.mxu0 %v4990
          %5059 = vmatprep.subr.mxu0 0.0
          %5060 = vmatpush1.msra.mxu0 %v4991
          %5061 = vmatprep.subr.mxu0 0.0
          %5062 = vmatpush1.msra.mxu0 %v4992
          %5063 = vmatprep.subr.mxu0 0.0
          %5064 = vmatpush1.msra.mxu0 0.0
          %5065 = vmatprep.subr.mxu0 0.0
          %5066 = vmatpush1.msra.mxu0 0.0
          %5067 = vmatprep.subr.mxu0 0.0
          %5068 = vmatpush1.msra.mxu0 0.0
          %5069 = vmatprep.subr.mxu0 0.0
          %5070 = vmatpush1.msra.mxu0 0.0
          %5071 = vmatprep.subr.mxu0 0.0
          %5072 = vmatpush1.msra.mxu0 0.0
          %5073 = vmatprep.subr.mxu0 0.0
          %5074 = vmatpush1.msra.mxu0 0.0
          %5075 = vmatprep.subr.mxu0 0.0
          %5076 = vmatpush1.msra.mxu0 0.0
          %5077 = vmatprep.subr.mxu0 0.0
          %5078 = vmatpush1.msra.mxu0 0.0
          %5079 = vmatprep.subr.mxu0 0.0
          %5080 = vmatpush1.msra.mxu0 0.0
          %5081 = vmatprep.subr.mxu0 0.0
          %5082 = vmatpush1.msra.mxu0 0.0
          %5083 = vmatprep.subr.mxu0 0.0
          %5084 = vmatpush1.msra.mxu0 0.0
          %5085 = vmatprep.subr.mxu0 0.0
          %5086 = vmatpush1.msra.mxu0 0.0
          %5087 = vmatprep.subr.mxu0 0.0
          %5088 = vmatpush1.msra.mxu0 0.0
          %5089 = vmatprep.subr.mxu0 0.0
          %5090 = vmatpush1.msra.mxu0 0.0
          %5091 = vmatprep.subr.mxu0 0.0
          %5092 = vmatpush1.msra.mxu0 0.0
          %5093 = vmatprep.subr.mxu0 0.0
          %5094 = vmatpush1.msra.mxu0 0.0
          %5095 = vmatprep.subr.mxu0 0.0
          %5096 = vmatpush1.msra.mxu0 0.0
          %5097 = vmatprep.subr.mxu0 0.0
          %5098 = vmatpush1.msra.mxu0 0.0
          %5099 = vmatprep.subr.mxu0 0.0
          %5100 = vmatpush1.msra.mxu0 0.0
          %5101 = vmatprep.subr.mxu0 0.0
          %5102 = vmatpush1.msra.mxu0 0.0
          %5103 = vmatprep.subr.mxu0 0.0
          %5104 = vmatpush1.msra.mxu0 0.0
          %5105 = vmatprep.subr.mxu0 0.0
          %5106 = vmatpush1.msra.mxu0 0.0
          %5107 = vmatprep.subr.mxu0 0.0
          %5108 = vmatpush1.msra.mxu0 0.0
          %5109 = vmatprep.subr.mxu0 0.0
          %5110 = vmatpush1.msra.mxu0 0.0
          %5111 = vmatprep.mubr.f32.mxu0 0.0
          %5112 = vmatmul.mubr.f32.gmra.mrb[0].mxu0 %v5042
          %v5113 = vpop.f32.mrb[0].mxu0
          %v5114 = vadd.f32 0.0, %v5113
          %v5115 = vpop.f32.mrb[0].mxu0
          %5116 = vmatprep.mubr.f32.mxu0 0.0
          %5117 = vmatmul.mubr.f32.gmra.mrb[0].mxu0 %v5045
          %v5118 = vpop.f32.mrb[0].mxu0
          %v5119 = vadd.f32 0.0, %v5118
          %v5120 = vpop.f32.mrb[0].mxu0
          %5121 = vdwg.mxu0
          %v5122 = vld [vmem:[#allocation12] sm:$0xff]
          %v5123 = vld [vmem:[#allocation12 + $0x8] sm:$0xff]
          %v5124 = vld [vmem:[#allocation12 + $0x10] sm:$0xff]
          %v5125 = vld [vmem:[#allocation12 + $0x18] sm:$0xff]
          %v5126 = vld [vmem:[#allocation12 + $0x20] sm:$0xff]
          %v5127 = vld [vmem:[#allocation12 + $0x28] sm:$0xff]
          %v5128 = vld [vmem:[#allocation12 + $0x30] sm:$0xff]
          %v5129 = vld [vmem:[#allocation12 + $0x38] sm:$0xff]
          %v5130 = vld [vmem:[#allocation12 + $0x40] sm:$0xff]
          %v5131 = vld [vmem:[#allocation12 + $0x48] sm:$0xff]
          %v5132 = vld [vmem:[#allocation12 + $0x50] sm:$0xff]
          %v5133 = vld [vmem:[#allocation12 + $0x58] sm:$0xff]
          %v5134 = vld [vmem:[#allocation12 + $0x60] sm:$0xff]
          %v5135 = vld [vmem:[#allocation12 + $0x68] sm:$0xff]
          %v5136 = vld [vmem:[#allocation12 + $0x70] sm:$0xff]
          %v5137 = vld [vmem:[#allocation12 + $0x78] sm:$0xff]
          %v5138 = vld [vmem:[#allocation12 + $0x80] sm:$0xff]
          %v5139 = vld [vmem:[#allocation12 + $0x88] sm:$0xff]
          %v5140 = vld [vmem:[#allocation12 + $0x90] sm:$0xff]
          %v5141 = vld [vmem:[#allocation12 + $0x98] sm:$0xff]
          %v5142 = vld [vmem:[#allocation12 + $0xa0] sm:$0xff]
          %v5143 = vld [vmem:[#allocation12 + $0xa8] sm:$0xff]
          %v5144 = vld [vmem:[#allocation12 + $0xb0] sm:$0xff]
          %v5145 = vld [vmem:[#allocation12 + $0xb8] sm:$0xff]
          %v5146 = vld [vmem:[#allocation12 + $0xc0] sm:$0xff]
          %v5147 = vld [vmem:[#allocation12 + $0xc8] sm:$0xff]
          %v5148 = vld [vmem:[#allocation12 + $0xd0] sm:$0xff]
          %v5149 = vld [vmem:[#allocation12 + $0xd8] sm:$0xff]
          %v5150 = vld [vmem:[#allocation12 + $0xe0] sm:$0xff]
          %v5151 = vld [vmem:[#allocation12 + $0xe8] sm:$0xff]
          %v5152 = vld [vmem:[#allocation12 + $0xf0] sm:$0xff]
          %v5153 = vld [vmem:[#allocation12 + $0xf8] sm:$0xff]
          %v5154 = vld [vmem:[#allocation12 + $0x100] sm:$0xff]
          %v5155 = vld [vmem:[#allocation12 + $0x108] sm:$0xff]
          %v5156 = vld [vmem:[#allocation12 + $0x110] sm:$0xff]
          %v5157 = vld [vmem:[#allocation12 + $0x118] sm:$0xff]
          %v5158 = vld [vmem:[#allocation12 + $0x120] sm:$0xff]
          %v5159 = vld [vmem:[#allocation12 + $0x128] sm:$0xff]
          %v5160 = vld [vmem:[#allocation12 + $0x130] sm:$0xff]
          %v5161 = vld [vmem:[#allocation12 + $0x138] sm:$0xff]
          %v5162 = vld [vmem:[#allocation12 + $0x140] sm:$0xff]
          %v5163 = vld [vmem:[#allocation12 + $0x148] sm:$0xff]
          %v5164 = vld [vmem:[#allocation12 + $0x150] sm:$0xff]
          %v5165 = vld [vmem:[#allocation12 + $0x158] sm:$0xff]
          %v5166 = vld [vmem:[#allocation12 + $0x160] sm:$0xff]
          %v5167 = vld [vmem:[#allocation12 + $0x168] sm:$0xff]
          %v5168 = vld [vmem:[#allocation12 + $0x170] sm:$0xff]
          %v5169 = vld [vmem:[#allocation12 + $0x178] sm:$0xff]
          %v5170 = vld [vmem:[#allocation12 + $0x180] sm:$0xff]
          %v5171 = vld [vmem:[#allocation12 + $0x188] sm:$0xff]
          %v5172 = vld [vmem:[#allocation12 + $0x190] sm:$0xff]
          %v5173 = vld [vmem:[#allocation12 + $0x198] sm:$0xff]
          %v5174 = vld [vmem:[#allocation12 + $0x1a0] sm:$0xff]
          %v5175 = vld [vmem:[#allocation12 + $0x1a8] sm:$0xff]
          %v5176 = vld [vmem:[#allocation12 + $0x1b0] sm:$0xff]
          %v5177 = vld [vmem:[#allocation12 + $0x1b8] sm:$0xff]
          %v5178 = vld [vmem:[#allocation12 + $0x1c0] sm:$0xff]
          %v5179 = vld [vmem:[#allocation12 + $0x1c8] sm:$0xff]
          %v5180 = vld [vmem:[#allocation12 + $0x1d0] sm:$0xff]
          %v5181 = vld [vmem:[#allocation12 + $0x1d8] sm:$0xff]
          %v5182 = vld [vmem:[#allocation12 + $0x1e0] sm:$0xff]
          %v5183 = vld [vmem:[#allocation12 + $0x1e8] sm:$0xff]
          %v5184 = vld [vmem:[#allocation12 + $0x1f0] sm:$0xff]
          %v5185 = vld [vmem:[#allocation12 + $0x1f8] sm:$0xff]
          %v5186 = vld [vmem:[#allocation12 + $0x200] sm:$0xff]
          %v5187 = vld [vmem:[#allocation12 + $0x208] sm:$0xff]
          %v5188 = vld [vmem:[#allocation12 + $0x210] sm:$0xff]
          %v5189 = vld [vmem:[#allocation12 + $0x218] sm:$0xff]
          %v5190 = vld [vmem:[#allocation12 + $0x220] sm:$0xff]
          %v5191 = vld [vmem:[#allocation12 + $0x228] sm:$0xff]
          %v5192 = vld [vmem:[#allocation12 + $0x230] sm:$0xff]
          %v5193 = vld [vmem:[#allocation12 + $0x238] sm:$0xff]
          %v5194 = vld [vmem:[#allocation12 + $0x240] sm:$0xff]
          %v5195 = vld [vmem:[#allocation12 + $0x248] sm:$0xff]
          %v5196 = vld [vmem:[#allocation12 + $0x250] sm:$0xff]
          %v5197 = vld [vmem:[#allocation12 + $0x258] sm:$0xff]
          %v5198 = vld [vmem:[#allocation12 + $0x260] sm:$0xff]
          %v5199 = vld [vmem:[#allocation12 + $0x268] sm:$0xff]
          %v5200 = vld [vmem:[#allocation12 + $0x270] sm:$0xff]
          %v5201 = vld [vmem:[#allocation12 + $0x278] sm:$0xff]
          %v5202 = vld [vmem:[#allocation12 + $0x280] sm:$0xff]
          %v5203 = vld [vmem:[#allocation12 + $0x288] sm:$0xff]
          %v5204 = vld [vmem:[#allocation12 + $0x290] sm:$0xff]
          %v5205 = vld [vmem:[#allocation12 + $0x298] sm:$0xff]
          %v5206 = vld [vmem:[#allocation12 + $0x2a0] sm:$0xff]
          %v5207 = vld [vmem:[#allocation12 + $0x2a8] sm:$0xff]
          %v5208 = vld [vmem:[#allocation12 + $0x2b0] sm:$0xff]
          %v5209 = vld [vmem:[#allocation12 + $0x2b8] sm:$0xff]
          %v5210 = vld [vmem:[#allocation12 + $0x2c0] sm:$0xff]
          %v5211 = vld [vmem:[#allocation12 + $0x2c8] sm:$0xff]
          %v5212 = vld [vmem:[#allocation12 + $0x2d0] sm:$0xff]
          %v5213 = vld [vmem:[#allocation12 + $0x2d8] sm:$0xff]
          %v5214 = vld [vmem:[#allocation12 + $0x2e0] sm:$0xff]
          %v5215 = vld [vmem:[#allocation12 + $0x2e8] sm:$0xff]
          %v5216 = vld [vmem:[#allocation12 + $0x2f0] sm:$0xff]
          %v5217 = vld [vmem:[#allocation12 + $0x2f8] sm:$0xff]
          %v5218 = vld [vmem:[#allocation12 + $0x300] sm:$0xff]
          %v5219 = vld [vmem:[#allocation12 + $0x308] sm:$0xff]
          %v5220 = vld [vmem:[#allocation12 + $0x310] sm:$0xff]
          %v5221 = vld [vmem:[#allocation12 + $0x318] sm:$0xff]
          %v5222 = vld [vmem:[#allocation12 + $0x320] sm:$0xff]
          %v5223 = vld [vmem:[#allocation12 + $0x328] sm:$0xff]
          %v5224 = vld [vmem:[#allocation12 + $0x330] sm:$0xff]
          %v5225 = vld [vmem:[#allocation12 + $0x338] sm:$0xff]
          %v5226 = vld [vmem:[#allocation12 + $0x340] sm:$0xff]
          %v5227 = vld [vmem:[#allocation12 + $0x348] sm:$0xff]
          %v5228 = vld [vmem:[#allocation12 + $0x350] sm:$0xff]
          %v5229 = vld [vmem:[#allocation12 + $0x358] sm:$0xff]
          %v5230 = vld [vmem:[#allocation12 + $0x360] sm:$0xff]
          %v5231 = vld [vmem:[#allocation12 + $0x368] sm:$0xff]
          %v5232 = vld [vmem:[#allocation12 + $0x370] sm:$0xff]
          %v5233 = vld [vmem:[#allocation12 + $0x378] sm:$0xff]
          %v5234 = vld [vmem:[#allocation12 + $0x380] sm:$0xff]
          %v5235 = vld [vmem:[#allocation12 + $0x388] sm:$0xff]
          %v5236 = vld [vmem:[#allocation12 + $0x390] sm:$0xff]
          %v5237 = vld [vmem:[#allocation12 + $0x398] sm:$0xff]
          %v5238 = vld [vmem:[#allocation12 + $0x3a0] sm:$0xff]
          %v5239 = vld [vmem:[#allocation12 + $0x3a8] sm:$0xff]
          %v5240 = vld [vmem:[#allocation12 + $0x3b0] sm:$0xff]
          %v5241 = vld [vmem:[#allocation12 + $0x3b8] sm:$0xff]
          %v5242 = vld [vmem:[#allocation12 + $0x3c0] sm:$0xff]
          %v5243 = vld [vmem:[#allocation12 + $0x3c8] sm:$0xff]
          %v5244 = vld [vmem:[#allocation12 + $0x3d0] sm:$0xff]
          %v5245 = vld [vmem:[#allocation12 + $0x3d8] sm:$0xff]
          %v5246 = vld [vmem:[#allocation12 + $0x3e0] sm:$0xff]
          %v5247 = vld [vmem:[#allocation12 + $0x3e8] sm:$0xff]
          %v5248 = vld [vmem:[#allocation12 + $0x3f0] sm:$0xff]
          %v5249 = vld [vmem:[#allocation12 + $0x3f8] sm:$0xff]
          %v5250 = vld [vmem:[%s16] sm:$0xff]
          %v5252 = vlaneseq
          %v5253 = vshrl.u32 %v5252, 7
          %v5254 = vsub.s32 0, %v5253
          %v5255 = vrot.slane %v5250, %v5254
          %v5256 = vlaneseq
          %v5257 = vshrl.u32 %v5256, 7
          %v5258 = vsub.s32 1, %v5257
          %v5259 = vrot.slane %v5250, %v5258
          %v5260 = vlaneseq
          %v5261 = vshrl.u32 %v5260, 7
          %v5262 = vsub.s32 2, %v5261
          %v5263 = vrot.slane %v5250, %v5262
          %v5264 = vlaneseq
          %v5265 = vshrl.u32 %v5264, 7
          %v5266 = vsub.s32 3, %v5265
          %v5267 = vrot.slane %v5250, %v5266
          %v5268 = vlaneseq
          %v5269 = vshrl.u32 %v5268, 7
          %v5270 = vsub.s32 4, %v5269
          %v5271 = vrot.slane %v5250, %v5270
          %v5272 = vlaneseq
          %v5273 = vshrl.u32 %v5272, 7
          %v5274 = vsub.s32 5, %v5273
          %v5275 = vrot.slane %v5250, %v5274
          %v5276 = vlaneseq
          %v5277 = vshrl.u32 %v5276, 7
          %v5278 = vsub.s32 6, %v5277
          %v5279 = vrot.slane %v5250, %v5278
          %v5280 = vlaneseq
          %v5281 = vshrl.u32 %v5280, 7
          %v5282 = vsub.s32 7, %v5281
          %v5283 = vrot.slane %v5250, %v5282
          %5292 = vmatprep.subr.mxu0 %v5123
          %5293 = vmatpush1.msra.mxu0 %v5122
          %5294 = vmatprep.subr.mxu0 %v5131
          %5295 = vmatpush1.msra.mxu0 %v5130
          %5296 = vmatprep.subr.mxu0 %v5139
          %5297 = vmatpush1.msra.mxu0 %v5138
          %5298 = vmatprep.subr.mxu0 %v5147
          %5299 = vmatpush1.msra.mxu0 %v5146
          %5300 = vmatprep.subr.mxu0 %v5155
          %5301 = vmatpush1.msra.mxu0 %v5154
          %5302 = vmatprep.subr.mxu0 %v5163
          %5303 = vmatpush1.msra.mxu0 %v5162
          %5304 = vmatprep.subr.mxu0 %v5171
          %5305 = vmatpush1.msra.mxu0 %v5170
          %5306 = vmatprep.subr.mxu0 %v5179
          %5307 = vmatpush1.msra.mxu0 %v5178
          %5308 = vmatprep.subr.mxu0 %v5187
          %5309 = vmatpush1.msra.mxu0 %v5186
          %5310 = vmatprep.subr.mxu0 %v5195
          %5311 = vmatpush1.msra.mxu0 %v5194
          %5312 = vmatprep.subr.mxu0 %v5203
          %5313 = vmatpush1.msra.mxu0 %v5202
          %5314 = vmatprep.subr.mxu0 %v5211
          %5315 = vmatpush1.msra.mxu0 %v5210
          %5316 = vmatprep.subr.mxu0 %v5219
          %5317 = vmatpush1.msra.mxu0 %v5218
          %5318 = vmatprep.subr.mxu0 %v5227
          %5319 = vmatpush1.msra.mxu0 %v5226
          %5320 = vmatprep.subr.mxu0 %v5235
          %5321 = vmatpush1.msra.mxu0 %v5234
          %5322 = vmatprep.subr.mxu0 %v5243
          %5323 = vmatpush1.msra.mxu0 %v5242
          %5324 = vmatprep.subr.mxu0 0.0
          %5325 = vmatpush1.msra.mxu0 0.0
          %5326 = vmatprep.subr.mxu0 0.0
          %5327 = vmatpush1.msra.mxu0 0.0
          %5328 = vmatprep.subr.mxu0 0.0
          %5329 = vmatpush1.msra.mxu0 0.0
          %5330 = vmatprep.subr.mxu0 0.0
          %5331 = vmatpush1.msra.mxu0 0.0
          %5332 = vmatprep.subr.mxu0 0.0
          %5333 = vmatpush1.msra.mxu0 0.0
          %5334 = vmatprep.subr.mxu0 0.0
          %5335 = vmatpush1.msra.mxu0 0.0
          %5336 = vmatprep.subr.mxu0 0.0
          %5337 = vmatpush1.msra.mxu0 0.0
          %5338 = vmatprep.subr.mxu0 0.0
          %5339 = vmatpush1.msra.mxu0 0.0
          %5340 = vmatprep.subr.mxu0 0.0
          %5341 = vmatpush1.msra.mxu0 0.0
          %5342 = vmatprep.subr.mxu0 0.0
          %5343 = vmatpush1.msra.mxu0 0.0
          %5344 = vmatprep.subr.mxu0 0.0
          %5345 = vmatpush1.msra.mxu0 0.0
          %5346 = vmatprep.subr.mxu0 0.0
          %5347 = vmatpush1.msra.mxu0 0.0
          %5348 = vmatprep.subr.mxu0 0.0
          %5349 = vmatpush1.msra.mxu0 0.0
          %5350 = vmatprep.subr.mxu0 0.0
          %5351 = vmatpush1.msra.mxu0 0.0
          %5352 = vmatprep.subr.mxu0 0.0
          %5353 = vmatpush1.msra.mxu0 0.0
          %5354 = vmatprep.subr.mxu0 0.0
          %5355 = vmatpush1.msra.mxu0 0.0
          %5356 = vmatprep.mubr.f32.mxu0 0.0
          %5357 = vmatmul.mubr.f32.gmra.mrb[0].mxu0 %v5114
          %v5358 = vpop.f32.mrb[0].mxu0
          %v5359 = vadd.f32 %v5255, %v5358
          %v5360 = vpop.f32.mrb[0].mxu0
          %v5361 = vadd.f32 %v5259, %v5360
          %5362 = vmatprep.mubr.f32.mxu0 0.0
          %5363 = vmatmul.mubr.f32.gmra.mrb[0].mxu0 %v5119
          %v5364 = vpop.f32.mrb[0].mxu0
          %v5365 = vadd.f32 %v5255, %v5364
          %v5366 = vpop.f32.mrb[0].mxu0
          %v5367 = vadd.f32 %v5259, %v5366
          %5368 = vdwg.mxu0
          %5369 = vmatprep.subr.mxu0 %v5125
          %5370 = vmatpush1.msra.mxu0 %v5124
          %5371 = vmatprep.subr.mxu0 %v5133
          %5372 = vmatpush1.msra.mxu0 %v5132
          %5373 = vmatprep.subr.mxu0 %v5141
          %5374 = vmatpush1.msra.mxu0 %v5140
          %5375 = vmatprep.subr.mxu0 %v5149
          %5376 = vmatpush1.msra.mxu0 %v5148
          %5377 = vmatprep.subr.mxu0 %v5157
          %5378 = vmatpush1.msra.mxu0 %v5156
          %5379 = vmatprep.subr.mxu0 %v5165
          %5380 = vmatpush1.msra.mxu0 %v5164
          %5381 = vmatprep.subr.mxu0 %v5173
          %5382 = vmatpush1.msra.mxu0 %v5172
          %5383 = vmatprep.subr.mxu0 %v5181
          %5384 = vmatpush1.msra.mxu0 %v5180
          %5385 = vmatprep.subr.mxu0 %v5189
          %5386 = vmatpush1.msra.mxu0 %v5188
          %5387 = vmatprep.subr.mxu0 %v5197
          %5388 = vmatpush1.msra.mxu0 %v5196
          %5389 = vmatprep.subr.mxu0 %v5205
          %5390 = vmatpush1.msra.mxu0 %v5204
          %5391 = vmatprep.subr.mxu0 %v5213
          %5392 = vmatpush1.msra.mxu0 %v5212
          %5393 = vmatprep.subr.mxu0 %v5221
          %5394 = vmatpush1.msra.mxu0 %v5220
          %5395 = vmatprep.subr.mxu0 %v5229
          %5396 = vmatpush1.msra.mxu0 %v5228
          %5397 = vmatprep.subr.mxu0 %v5237
          %5398 = vmatpush1.msra.mxu0 %v5236
          %5399 = vmatprep.subr.mxu0 %v5245
          %5400 = vmatpush1.msra.mxu0 %v5244
          %5401 = vmatprep.subr.mxu0 0.0
          %5402 = vmatpush1.msra.mxu0 0.0
          %5403 = vmatprep.subr.mxu0 0.0
          %5404 = vmatpush1.msra.mxu0 0.0
          %5405 = vmatprep.subr.mxu0 0.0
          %5406 = vmatpush1.msra.mxu0 0.0
          %5407 = vmatprep.subr.mxu0 0.0
          %5408 = vmatpush1.msra.mxu0 0.0
          %5409 = vmatprep.subr.mxu0 0.0
          %5410 = vmatpush1.msra.mxu0 0.0
          %5411 = vmatprep.subr.mxu0 0.0
          %5412 = vmatpush1.msra.mxu0 0.0
          %5413 = vmatprep.subr.mxu0 0.0
          %5414 = vmatpush1.msra.mxu0 0.0
          %5415 = vmatprep.subr.mxu0 0.0
          %5416 = vmatpush1.msra.mxu0 0.0
          %5417 = vmatprep.subr.mxu0 0.0
          %5418 = vmatpush1.msra.mxu0 0.0
          %5419 = vmatprep.subr.mxu0 0.0
          %5420 = vmatpush1.msra.mxu0 0.0
          %5421 = vmatprep.subr.mxu0 0.0
          %5422 = vmatpush1.msra.mxu0 0.0
          %5423 = vmatprep.subr.mxu0 0.0
          %5424 = vmatpush1.msra.mxu0 0.0
          %5425 = vmatprep.subr.mxu0 0.0
          %5426 = vmatpush1.msra.mxu0 0.0
          %5427 = vmatprep.subr.mxu0 0.0
          %5428 = vmatpush1.msra.mxu0 0.0
          %5429 = vmatprep.subr.mxu0 0.0
          %5430 = vmatpush1.msra.mxu0 0.0
          %5431 = vmatprep.subr.mxu0 0.0
          %5432 = vmatpush1.msra.mxu0 0.0
          %5433 = vmatprep.mubr.f32.mxu0 0.0
          %5434 = vmatmul.mubr.f32.gmra.mrb[0].mxu0 %v5114
          %v5435 = vpop.f32.mrb[0].mxu0
          %v5436 = vadd.f32 %v5263, %v5435
          %v5437 = vpop.f32.mrb[0].mxu0
          %v5438 = vadd.f32 %v5267, %v5437
          %5439 = vmatprep.mubr.f32.mxu0 0.0
          %5440 = vmatmul.mubr.f32.gmra.mrb[0].mxu0 %v5119
          %v5441 = vpop.f32.mrb[0].mxu0
          %v5442 = vadd.f32 %v5263, %v5441
          %v5443 = vpop.f32.mrb[0].mxu0
          %v5444 = vadd.f32 %v5267, %v5443
          %5445 = vdwg.mxu0
          %5446 = vmatprep.subr.mxu0 %v5127
          %5447 = vmatpush1.msra.mxu0 %v5126
          %5448 = vmatprep.subr.mxu0 %v5135
          %5449 = vmatpush1.msra.mxu0 %v5134
          %5450 = vmatprep.subr.mxu0 %v5143
          %5451 = vmatpush1.msra.mxu0 %v5142
          %5452 = vmatprep.subr.mxu0 %v5151
          %5453 = vmatpush1.msra.mxu0 %v5150
          %5454 = vmatprep.subr.mxu0 %v5159
          %5455 = vmatpush1.msra.mxu0 %v5158
          %5456 = vmatprep.subr.mxu0 %v5167
          %5457 = vmatpush1.msra.mxu0 %v5166
          %5458 = vmatprep.subr.mxu0 %v5175
          %5459 = vmatpush1.msra.mxu0 %v5174
          %5460 = vmatprep.subr.mxu0 %v5183
          %5461 = vmatpush1.msra.mxu0 %v5182
          %5462 = vmatprep.subr.mxu0 %v5191
          %5463 = vmatpush1.msra.mxu0 %v5190
          %5464 = vmatprep.subr.mxu0 %v5199
          %5465 = vmatpush1.msra.mxu0 %v5198
          %5466 = vmatprep.subr.mxu0 %v5207
          %5467 = vmatpush1.msra.mxu0 %v5206
          %5468 = vmatprep.subr.mxu0 %v5215
          %5469 = vmatpush1.msra.mxu0 %v5214
          %5470 = vmatprep.subr.mxu0 %v5223
          %5471 = vmatpush1.msra.mxu0 %v5222
          %5472 = vmatprep.subr.mxu0 %v5231
          %5473 = vmatpush1.msra.mxu0 %v5230
          %5474 = vmatprep.subr.mxu0 %v5239
          %5475 = vmatpush1.msra.mxu0 %v5238
          %5476 = vmatprep.subr.mxu0 %v5247
          %5477 = vmatpush1.msra.mxu0 %v5246
          %5478 = vmatprep.subr.mxu0 0.0
          %5479 = vmatpush1.msra.mxu0 0.0
          %5480 = vmatprep.subr.mxu0 0.0
          %5481 = vmatpush1.msra.mxu0 0.0
          %5482 = vmatprep.subr.mxu0 0.0
          %5483 = vmatpush1.msra.mxu0 0.0
          %5484 = vmatprep.subr.mxu0 0.0
          %5485 = vmatpush1.msra.mxu0 0.0
          %5486 = vmatprep.subr.mxu0 0.0
          %5487 = vmatpush1.msra.mxu0 0.0
          %5488 = vmatprep.subr.mxu0 0.0
          %5489 = vmatpush1.msra.mxu0 0.0
          %5490 = vmatprep.subr.mxu0 0.0
          %5491 = vmatpush1.msra.mxu0 0.0
          %5492 = vmatprep.subr.mxu0 0.0
          %5493 = vmatpush1.msra.mxu0 0.0
          %5494 = vmatprep.subr.mxu0 0.0
          %5495 = vmatpush1.msra.mxu0 0.0
          %5496 = vmatprep.subr.mxu0 0.0
          %5497 = vmatpush1.msra.mxu0 0.0
          %5498 = vmatprep.subr.mxu0 0.0
          %5499 = vmatpush1.msra.mxu0 0.0
          %5500 = vmatprep.subr.mxu0 0.0
          %5501 = vmatpush1.msra.mxu0 0.0
          %5502 = vmatprep.subr.mxu0 0.0
          %5503 = vmatpush1.msra.mxu0 0.0
          %5504 = vmatprep.subr.mxu0 0.0
          %5505 = vmatpush1.msra.mxu0 0.0
          %5506 = vmatprep.subr.mxu0 0.0
          %5507 = vmatpush1.msra.mxu0 0.0
          %5508 = vmatprep.subr.mxu0 0.0
          %5509 = vmatpush1.msra.mxu0 0.0
          %5510 = vmatprep.mubr.f32.mxu0 0.0
          %5511 = vmatmul.mubr.f32.gmra.mrb[0].mxu0 %v5114
          %v5512 = vpop.f32.mrb[0].mxu0
          %v5513 = vadd.f32 %v5271, %v5512
          %v5514 = vpop.f32.mrb[0].mxu0
          %v5515 = vadd.f32 %v5275, %v5514
          %5516 = vmatprep.mubr.f32.mxu0 0.0
          %5517 = vmatmul.mubr.f32.gmra.mrb[0].mxu0 %v5119
          %v5518 = vpop.f32.mrb[0].mxu0
          %v5519 = vadd.f32 %v5271, %v5518
          %v5520 = vpop.f32.mrb[0].mxu0
          %v5521 = vadd.f32 %v5275, %v5520
          %5522 = vdwg.mxu0
          %5523 = vmatprep.subr.mxu0 %v5129
          %5524 = vmatpush1.msra.mxu0 %v5128
          %5525 = vmatprep.subr.mxu0 %v5137
          %5526 = vmatpush1.msra.mxu0 %v5136
          %5527 = vmatprep.subr.mxu0 %v5145
          %5528 = vmatpush1.msra.mxu0 %v5144
          %5529 = vmatprep.subr.mxu0 %v5153
          %5530 = vmatpush1.msra.mxu0 %v5152
          %5531 = vmatprep.subr.mxu0 %v5161
          %5532 = vmatpush1.msra.mxu0 %v5160
          %5533 = vmatprep.subr.mxu0 %v5169
          %5534 = vmatpush1.msra.mxu0 %v5168
          %5535 = vmatprep.subr.mxu0 %v5177
          %5536 = vmatpush1.msra.mxu0 %v5176
          %5537 = vmatprep.subr.mxu0 %v5185
          %5538 = vmatpush1.msra.mxu0 %v5184
          %5539 = vmatprep.subr.mxu0 %v5193
          %5540 = vmatpush1.msra.mxu0 %v5192
          %5541 = vmatprep.subr.mxu0 %v5201
          %5542 = vmatpush1.msra.mxu0 %v5200
          %5543 = vmatprep.subr.mxu0 %v5209
          %5544 = vmatpush1.msra.mxu0 %v5208
          %5545 = vmatprep.subr.mxu0 %v5217
          %5546 = vmatpush1.msra.mxu0 %v5216
          %5547 = vmatprep.subr.mxu0 %v5225
          %5548 = vmatpush1.msra.mxu0 %v5224
          %5549 = vmatprep.subr.mxu0 %v5233
          %5550 = vmatpush1.msra.mxu0 %v5232
          %5551 = vmatprep.subr.mxu0 %v5241
          %5552 = vmatpush1.msra.mxu0 %v5240
          %5553 = vmatprep.subr.mxu0 %v5249
          %5554 = vmatpush1.msra.mxu0 %v5248
          %5555 = vmatprep.subr.mxu0 0.0
          %5556 = vmatpush1.msra.mxu0 0.0
          %5557 = vmatprep.subr.mxu0 0.0
          %5558 = vmatpush1.msra.mxu0 0.0
          %5559 = vmatprep.subr.mxu0 0.0
          %5560 = vmatpush1.msra.mxu0 0.0
          %5561 = vmatprep.subr.mxu0 0.0
          %5562 = vmatpush1.msra.mxu0 0.0
          %5563 = vmatprep.subr.mxu0 0.0
          %5564 = vmatpush1.msra.mxu0 0.0
          %5565 = vmatprep.subr.mxu0 0.0
          %5566 = vmatpush1.msra.mxu0 0.0
          %5567 = vmatprep.subr.mxu0 0.0
          %5568 = vmatpush1.msra.mxu0 0.0
          %5569 = vmatprep.subr.mxu0 0.0
          %5570 = vmatpush1.msra.mxu0 0.0
          %5571 = vmatprep.subr.mxu0 0.0
          %5572 = vmatpush1.msra.mxu0 0.0
          %5573 = vmatprep.subr.mxu0 0.0
          %5574 = vmatpush1.msra.mxu0 0.0
          %5575 = vmatprep.subr.mxu0 0.0
          %5576 = vmatpush1.msra.mxu0 0.0
          %5577 = vmatprep.subr.mxu0 0.0
          %5578 = vmatpush1.msra.mxu0 0.0
          %5579 = vmatprep.subr.mxu0 0.0
          %5580 = vmatpush1.msra.mxu0 0.0
          %5581 = vmatprep.subr.mxu0 0.0
          %5582 = vmatpush1.msra.mxu0 0.0
          %5583 = vmatprep.subr.mxu0 0.0
          %5584 = vmatpush1.msra.mxu0 0.0
          %5585 = vmatprep.subr.mxu0 0.0
          %5586 = vmatpush1.msra.mxu0 0.0
          %5587 = vmatprep.mubr.f32.mxu0 0.0
          %5588 = vmatmul.mubr.f32.gmra.mrb[0].mxu0 %v5114
          %v5589 = vpop.f32.mrb[0].mxu0
          %v5590 = vadd.f32 %v5279, %v5589
          %v5591 = vpop.f32.mrb[0].mxu0
          %v5592 = vadd.f32 %v5283, %v5591
          %5593 = vmatprep.mubr.f32.mxu0 0.0
          %5594 = vmatmul.mubr.f32.gmra.mrb[0].mxu0 %v5119
          %v5595 = vpop.f32.mrb[0].mxu0
          %v5596 = vadd.f32 %v5279, %v5595
          %v5597 = vpop.f32.mrb[0].mxu0
          %v5598 = vadd.f32 %v5283, %v5597
          %5599 = vdwg.mxu0
          %v5600 = vxor.u32 %v5359, 2147483648
          %v5601 = vxor.u32 %v5361, 2147483648
          %v5602 = vxor.u32 %v5436, 2147483648
          %v5603 = vxor.u32 %v5438, 2147483648
          %v5604 = vxor.u32 %v5513, 2147483648
          %v5605 = vxor.u32 %v5515, 2147483648
          %v5606 = vxor.u32 %v5590, 2147483648
          %v5607 = vxor.u32 %v5592, 2147483648
          %v5608 = vxor.u32 %v5365, 2147483648
          %v5609 = vxor.u32 %v5367, 2147483648
          %v5610 = vxor.u32 %v5442, 2147483648
          %v5611 = vxor.u32 %v5444, 2147483648
          %v5612 = vxor.u32 %v5519, 2147483648
          %v5613 = vxor.u32 %v5521, 2147483648
          %v5614 = vxor.u32 %v5596, 2147483648
          %v5615 = vxor.u32 %v5598, 2147483648
          %v5616 = vmul.f32 %v5600, 1.442695
          %v5617 = vpow.pop %v5616
          %v5618 = vmul.f32 %v5601, 1.442695
          %v5619 = vpow.pop %v5618
          %v5620 = vmul.f32 %v5602, 1.442695
          %v5621 = vpow.pop %v5620
          %v5622 = vmul.f32 %v5603, 1.442695
          %v5623 = vpow.pop %v5622
          %v5624 = vmul.f32 %v5604, 1.442695
          %v5625 = vpow.pop %v5624
          %v5626 = vmul.f32 %v5605, 1.442695
          %v5627 = vpow.pop %v5626
          %v5628 = vmul.f32 %v5606, 1.442695
          %v5629 = vpow.pop %v5628
          %v5630 = vmul.f32 %v5607, 1.442695
          %v5631 = vpow.pop %v5630
          %v5632 = vmul.f32 %v5608, 1.442695
          %v5633 = vpow.pop %v5632
          %v5634 = vmul.f32 %v5609, 1.442695
          %v5635 = vpow.pop %v5634
          %v5636 = vmul.f32 %v5610, 1.442695
          %v5637 = vpow.pop %v5636
          %v5638 = vmul.f32 %v5611, 1.442695
          %v5639 = vpow.pop %v5638
          %v5640 = vmul.f32 %v5612, 1.442695
          %v5641 = vpow.pop %v5640
          %v5642 = vmul.f32 %v5613, 1.442695
          %v5643 = vpow.pop %v5642
          %v5644 = vmul.f32 %v5614, 1.442695
          %v5645 = vpow.pop %v5644
          %v5646 = vmul.f32 %v5615, 1.442695
          %v5647 = vpow.pop %v5646
          %v5648 = vadd.f32 %v5617, 1.0
          %v5649 = vadd.f32 %v5619, 1.0
          %v5650 = vadd.f32 %v5621, 1.0
          %v5651 = vadd.f32 %v5623, 1.0
          %v5652 = vadd.f32 %v5625, 1.0
          %v5653 = vadd.f32 %v5627, 1.0
          %v5654 = vadd.f32 %v5629, 1.0
          %v5655 = vadd.f32 %v5631, 1.0
          %v5656 = vadd.f32 %v5633, 1.0
          %v5657 = vadd.f32 %v5635, 1.0
          %v5658 = vadd.f32 %v5637, 1.0
          %v5659 = vadd.f32 %v5639, 1.0
          %v5660 = vadd.f32 %v5641, 1.0
          %v5661 = vadd.f32 %v5643, 1.0
          %v5662 = vadd.f32 %v5645, 1.0
          %v5663 = vadd.f32 %v5647, 1.0
          %v5664 = vrcp.pop %v5648
          %v5665 = vmul.f32 1.0, %v5664
          %v5666 = vrcp.pop %v5649
          %v5667 = vmul.f32 1.0, %v5666
          %v5668 = vrcp.pop %v5650
          %v5669 = vmul.f32 1.0, %v5668
          %v5670 = vrcp.pop %v5651
          %v5671 = vmul.f32 1.0, %v5670
          %v5672 = vrcp.pop %v5652
          %v5673 = vmul.f32 1.0, %v5672
          %v5674 = vrcp.pop %v5653
          %v5675 = vmul.f32 1.0, %v5674
          %v5676 = vrcp.pop %v5654
          %v5677 = vmul.f32 1.0, %v5676
          %v5678 = vrcp.pop %v5655
          %v5679 = vmul.f32 1.0, %v5678
          %v5680 = vrcp.pop %v5656
          %v5681 = vmul.f32 1.0, %v5680
          %v5682 = vrcp.pop %v5657
          %v5683 = vmul.f32 1.0, %v5682
          %v5684 = vrcp.pop %v5658
          %v5685 = vmul.f32 1.0, %v5684
          %v5686 = vrcp.pop %v5659
          %v5687 = vmul.f32 1.0, %v5686
          %v5688 = vrcp.pop %v5660
          %v5689 = vmul.f32 1.0, %v5688
          %v5690 = vrcp.pop %v5661
          %v5691 = vmul.f32 1.0, %v5690
          %v5692 = vrcp.pop %v5662
          %v5693 = vmul.f32 1.0, %v5692
          %v5694 = vrcp.pop %v5663
          %v5695 = vmul.f32 1.0, %v5694
          %v5696 = vmul.f32 %v5359, %v5665
          %v5697 = vmul.f32 %v5361, %v5667
          %v5698 = vmul.f32 %v5436, %v5669
          %v5699 = vmul.f32 %v5438, %v5671
          %v5700 = vmul.f32 %v5513, %v5673
          %v5701 = vmul.f32 %v5515, %v5675
          %v5702 = vmul.f32 %v5590, %v5677
          %v5703 = vmul.f32 %v5592, %v5679
          %v5704 = vmul.f32 %v5365, %v5681
          %v5705 = vmul.f32 %v5367, %v5683
          %v5706 = vmul.f32 %v5442, %v5685
          %v5707 = vmul.f32 %v5444, %v5687
          %v5708 = vmul.f32 %v5519, %v5689
          %v5709 = vmul.f32 %v5521, %v5691
          %v5710 = vmul.f32 %v5596, %v5693
          %v5711 = vmul.f32 %v5598, %v5695
          %v5712 = vld [vmem:[#allocation14] sm:$0xff]
          %v5713 = vld [vmem:[#allocation14 + $0x8] sm:$0xff]
          %v5714 = vld [vmem:[#allocation14 + $0x10] sm:$0xff]
          %v5715 = vld [vmem:[#allocation14 + $0x18] sm:$0xff]
          %v5716 = vld [vmem:[#allocation14 + $0x20] sm:$0xff]
          %v5717 = vld [vmem:[#allocation14 + $0x28] sm:$0xff]
          %v5718 = vld [vmem:[#allocation14 + $0x30] sm:$0xff]
          %v5719 = vld [vmem:[#allocation14 + $0x38] sm:$0xff]
          %v5720 = vld [vmem:[#allocation14 + $0x40] sm:$0xff]
          %v5721 = vld [vmem:[#allocation14 + $0x48] sm:$0xff]
          %v5722 = vld [vmem:[#allocation14 + $0x50] sm:$0xff]
          %v5723 = vld [vmem:[#allocation14 + $0x58] sm:$0xff]
          %v5724 = vld [vmem:[#allocation14 + $0x60] sm:$0xff]
          %v5725 = vld [vmem:[#allocation14 + $0x68] sm:$0xff]
          %v5726 = vld [vmem:[#allocation14 + $0x70] sm:$0xff]
          %v5727 = vld [vmem:[#allocation14 + $0x78] sm:$0xff]
          %v5728 = vld [vmem:[#allocation14 + $0x80] sm:$0xff]
          %v5729 = vld [vmem:[#allocation14 + $0x88] sm:$0xff]
          %v5730 = vld [vmem:[#allocation14 + $0x90] sm:$0xff]
          %v5731 = vld [vmem:[#allocation14 + $0x98] sm:$0xff]
          %v5732 = vld [vmem:[#allocation14 + $0xa0] sm:$0xff]
          %v5733 = vld [vmem:[#allocation14 + $0xa8] sm:$0xff]
          %v5734 = vld [vmem:[#allocation14 + $0xb0] sm:$0xff]
          %v5735 = vld [vmem:[#allocation14 + $0xb8] sm:$0xff]
          %v5736 = vld [vmem:[#allocation14 + $0xc0] sm:$0xff]
          %v5737 = vld [vmem:[#allocation14 + $0xc8] sm:$0xff]
          %v5738 = vld [vmem:[#allocation14 + $0xd0] sm:$0xff]
          %v5739 = vld [vmem:[#allocation14 + $0xd8] sm:$0xff]
          %v5740 = vld [vmem:[#allocation14 + $0xe0] sm:$0xff]
          %v5741 = vld [vmem:[#allocation14 + $0xe8] sm:$0xff]
          %v5742 = vld [vmem:[#allocation14 + $0xf0] sm:$0xff]
          %v5743 = vld [vmem:[#allocation14 + $0xf8] sm:$0xff]
          %v5744 = vld [vmem:[#allocation14 + $0x100] sm:$0xff]
          %v5745 = vld [vmem:[#allocation14 + $0x108] sm:$0xff]
          %v5746 = vld [vmem:[#allocation14 + $0x110] sm:$0xff]
          %v5747 = vld [vmem:[#allocation14 + $0x118] sm:$0xff]
          %v5748 = vld [vmem:[#allocation14 + $0x120] sm:$0xff]
          %v5749 = vld [vmem:[#allocation14 + $0x128] sm:$0xff]
          %v5750 = vld [vmem:[#allocation14 + $0x130] sm:$0xff]
          %v5751 = vld [vmem:[#allocation14 + $0x138] sm:$0xff]
          %v5752 = vld [vmem:[#allocation14 + $0x140] sm:$0xff]
          %v5753 = vld [vmem:[#allocation14 + $0x148] sm:$0xff]
          %v5754 = vld [vmem:[#allocation14 + $0x150] sm:$0xff]
          %v5755 = vld [vmem:[#allocation14 + $0x158] sm:$0xff]
          %v5756 = vld [vmem:[#allocation14 + $0x160] sm:$0xff]
          %v5757 = vld [vmem:[#allocation14 + $0x168] sm:$0xff]
          %v5758 = vld [vmem:[#allocation14 + $0x170] sm:$0xff]
          %v5759 = vld [vmem:[#allocation14 + $0x178] sm:$0xff]
          %v5760 = vld [vmem:[#allocation14 + $0x180] sm:$0xff]
          %v5761 = vld [vmem:[#allocation14 + $0x188] sm:$0xff]
          %v5762 = vld [vmem:[#allocation14 + $0x190] sm:$0xff]
          %v5763 = vld [vmem:[#allocation14 + $0x198] sm:$0xff]
          %v5764 = vld [vmem:[#allocation14 + $0x1a0] sm:$0xff]
          %v5765 = vld [vmem:[#allocation14 + $0x1a8] sm:$0xff]
          %v5766 = vld [vmem:[#allocation14 + $0x1b0] sm:$0xff]
          %v5767 = vld [vmem:[#allocation14 + $0x1b8] sm:$0xff]
          %v5768 = vld [vmem:[#allocation14 + $0x1c0] sm:$0xff]
          %v5769 = vld [vmem:[#allocation14 + $0x1c8] sm:$0xff]
          %v5770 = vld [vmem:[#allocation14 + $0x1d0] sm:$0xff]
          %v5771 = vld [vmem:[#allocation14 + $0x1d8] sm:$0xff]
          %v5772 = vld [vmem:[#allocation14 + $0x1e0] sm:$0xff]
          %v5773 = vld [vmem:[#allocation14 + $0x1e8] sm:$0xff]
          %v5774 = vld [vmem:[#allocation14 + $0x1f0] sm:$0xff]
          %v5775 = vld [vmem:[#allocation14 + $0x1f8] sm:$0xff]
          %v5776 = vld [vmem:[#allocation14 + $0x200] sm:$0xff]
          %v5777 = vld [vmem:[#allocation14 + $0x208] sm:$0xff]
          %v5778 = vld [vmem:[#allocation14 + $0x210] sm:$0xff]
          %v5779 = vld [vmem:[#allocation14 + $0x218] sm:$0xff]
          %v5780 = vld [vmem:[#allocation14 + $0x220] sm:$0xff]
          %v5781 = vld [vmem:[#allocation14 + $0x228] sm:$0xff]
          %v5782 = vld [vmem:[#allocation14 + $0x230] sm:$0xff]
          %v5783 = vld [vmem:[#allocation14 + $0x238] sm:$0xff]
          %v5784 = vld [vmem:[#allocation14 + $0x240] sm:$0xff]
          %v5785 = vld [vmem:[#allocation14 + $0x248] sm:$0xff]
          %v5786 = vld [vmem:[#allocation14 + $0x250] sm:$0xff]
          %v5787 = vld [vmem:[#allocation14 + $0x258] sm:$0xff]
          %v5788 = vld [vmem:[#allocation14 + $0x260] sm:$0xff]
          %v5789 = vld [vmem:[#allocation14 + $0x268] sm:$0xff]
          %v5790 = vld [vmem:[#allocation14 + $0x270] sm:$0xff]
          %v5791 = vld [vmem:[#allocation14 + $0x278] sm:$0xff]
          %v5792 = vld [vmem:[#allocation14 + $0x280] sm:$0xff]
          %v5793 = vld [vmem:[#allocation14 + $0x288] sm:$0xff]
          %v5794 = vld [vmem:[#allocation14 + $0x290] sm:$0xff]
          %v5795 = vld [vmem:[#allocation14 + $0x298] sm:$0xff]
          %v5796 = vld [vmem:[#allocation14 + $0x2a0] sm:$0xff]
          %v5797 = vld [vmem:[#allocation14 + $0x2a8] sm:$0xff]
          %v5798 = vld [vmem:[#allocation14 + $0x2b0] sm:$0xff]
          %v5799 = vld [vmem:[#allocation14 + $0x2b8] sm:$0xff]
          %v5800 = vld [vmem:[#allocation14 + $0x2c0] sm:$0xff]
          %v5801 = vld [vmem:[#allocation14 + $0x2c8] sm:$0xff]
          %v5802 = vld [vmem:[#allocation14 + $0x2d0] sm:$0xff]
          %v5803 = vld [vmem:[#allocation14 + $0x2d8] sm:$0xff]
          %v5804 = vld [vmem:[#allocation14 + $0x2e0] sm:$0xff]
          %v5805 = vld [vmem:[#allocation14 + $0x2e8] sm:$0xff]
          %v5806 = vld [vmem:[#allocation14 + $0x2f0] sm:$0xff]
          %v5807 = vld [vmem:[#allocation14 + $0x2f8] sm:$0xff]
          %v5808 = vld [vmem:[#allocation14 + $0x300] sm:$0xff]
          %v5809 = vld [vmem:[#allocation14 + $0x308] sm:$0xff]
          %v5810 = vld [vmem:[#allocation14 + $0x310] sm:$0xff]
          %v5811 = vld [vmem:[#allocation14 + $0x318] sm:$0xff]
          %v5812 = vld [vmem:[#allocation14 + $0x320] sm:$0xff]
          %v5813 = vld [vmem:[#allocation14 + $0x328] sm:$0xff]
          %v5814 = vld [vmem:[#allocation14 + $0x330] sm:$0xff]
          %v5815 = vld [vmem:[#allocation14 + $0x338] sm:$0xff]
          %v5816 = vld [vmem:[#allocation14 + $0x340] sm:$0xff]
          %v5817 = vld [vmem:[#allocation14 + $0x348] sm:$0xff]
          %v5818 = vld [vmem:[#allocation14 + $0x350] sm:$0xff]
          %v5819 = vld [vmem:[#allocation14 + $0x358] sm:$0xff]
          %v5820 = vld [vmem:[#allocation14 + $0x360] sm:$0xff]
          %v5821 = vld [vmem:[#allocation14 + $0x368] sm:$0xff]
          %v5822 = vld [vmem:[#allocation14 + $0x370] sm:$0xff]
          %v5823 = vld [vmem:[#allocation14 + $0x378] sm:$0xff]
          %v5824 = vld [vmem:[#allocation14 + $0x380] sm:$0xff]
          %v5825 = vld [vmem:[#allocation14 + $0x388] sm:$0xff]
          %v5826 = vld [vmem:[#allocation14 + $0x390] sm:$0xff]
          %v5827 = vld [vmem:[#allocation14 + $0x398] sm:$0xff]
          %v5828 = vld [vmem:[#allocation14 + $0x3a0] sm:$0xff]
          %v5829 = vld [vmem:[#allocation14 + $0x3a8] sm:$0xff]
          %v5830 = vld [vmem:[#allocation14 + $0x3b0] sm:$0xff]
          %v5831 = vld [vmem:[#allocation14 + $0x3b8] sm:$0xff]
          %v5832 = vld [vmem:[#allocation14 + $0x3c0] sm:$0xff]
          %v5833 = vld [vmem:[#allocation14 + $0x3c8] sm:$0xff]
          %v5834 = vld [vmem:[#allocation14 + $0x3d0] sm:$0xff]
          %v5835 = vld [vmem:[#allocation14 + $0x3d8] sm:$0xff]
          %v5836 = vld [vmem:[#allocation14 + $0x3e0] sm:$0xff]
          %v5837 = vld [vmem:[#allocation14 + $0x3e8] sm:$0xff]
          %v5838 = vld [vmem:[#allocation14 + $0x3f0] sm:$0xff]
          %v5839 = vld [vmem:[#allocation14 + $0x3f8] sm:$0xff]
          %v5840 = vld [vmem:[#allocation14 + $0x400] sm:$0xff]
          %v5841 = vld [vmem:[#allocation14 + $0x408] sm:$0xff]
          %v5842 = vld [vmem:[#allocation14 + $0x410] sm:$0xff]
          %v5843 = vld [vmem:[#allocation14 + $0x418] sm:$0xff]
          %v5844 = vld [vmem:[#allocation14 + $0x420] sm:$0xff]
          %v5845 = vld [vmem:[#allocation14 + $0x428] sm:$0xff]
          %v5846 = vld [vmem:[#allocation14 + $0x430] sm:$0xff]
          %v5847 = vld [vmem:[#allocation14 + $0x438] sm:$0xff]
          %v5848 = vld [vmem:[#allocation14 + $0x440] sm:$0xff]
          %v5849 = vld [vmem:[#allocation14 + $0x448] sm:$0xff]
          %v5850 = vld [vmem:[#allocation14 + $0x450] sm:$0xff]
          %v5851 = vld [vmem:[#allocation14 + $0x458] sm:$0xff]
          %v5852 = vld [vmem:[#allocation14 + $0x460] sm:$0xff]
          %v5853 = vld [vmem:[#allocation14 + $0x468] sm:$0xff]
          %v5854 = vld [vmem:[#allocation14 + $0x470] sm:$0xff]
          %v5855 = vld [vmem:[#allocation14 + $0x478] sm:$0xff]
          %v5856 = vld [vmem:[#allocation14 + $0x480] sm:$0xff]
          %v5857 = vld [vmem:[#allocation14 + $0x488] sm:$0xff]
          %v5858 = vld [vmem:[#allocation14 + $0x490] sm:$0xff]
          %v5859 = vld [vmem:[#allocation14 + $0x498] sm:$0xff]
          %v5860 = vld [vmem:[#allocation14 + $0x4a0] sm:$0xff]
          %v5861 = vld [vmem:[#allocation14 + $0x4a8] sm:$0xff]
          %v5862 = vld [vmem:[#allocation14 + $0x4b0] sm:$0xff]
          %v5863 = vld [vmem:[#allocation14 + $0x4b8] sm:$0xff]
          %v5864 = vld [vmem:[#allocation14 + $0x4c0] sm:$0xff]
          %v5865 = vld [vmem:[#allocation14 + $0x4c8] sm:$0xff]
          %v5866 = vld [vmem:[#allocation14 + $0x4d0] sm:$0xff]
          %v5867 = vld [vmem:[#allocation14 + $0x4d8] sm:$0xff]
          %v5868 = vld [vmem:[#allocation14 + $0x4e0] sm:$0xff]
          %v5869 = vld [vmem:[#allocation14 + $0x4e8] sm:$0xff]
          %v5870 = vld [vmem:[#allocation14 + $0x4f0] sm:$0xff]
          %v5871 = vld [vmem:[#allocation14 + $0x4f8] sm:$0xff]
          %v5872 = vld [vmem:[#allocation14 + $0x500] sm:$0xff]
          %v5873 = vld [vmem:[#allocation14 + $0x508] sm:$0xff]
          %v5874 = vld [vmem:[#allocation14 + $0x510] sm:$0xff]
          %v5875 = vld [vmem:[#allocation14 + $0x518] sm:$0xff]
          %v5876 = vld [vmem:[#allocation14 + $0x520] sm:$0xff]
          %v5877 = vld [vmem:[#allocation14 + $0x528] sm:$0xff]
          %v5878 = vld [vmem:[#allocation14 + $0x530] sm:$0xff]
          %v5879 = vld [vmem:[#allocation14 + $0x538] sm:$0xff]
          %v5880 = vld [vmem:[#allocation14 + $0x540] sm:$0xff]
          %v5881 = vld [vmem:[#allocation14 + $0x548] sm:$0xff]
          %v5882 = vld [vmem:[#allocation14 + $0x550] sm:$0xff]
          %v5883 = vld [vmem:[#allocation14 + $0x558] sm:$0xff]
          %v5884 = vld [vmem:[#allocation14 + $0x560] sm:$0xff]
          %v5885 = vld [vmem:[#allocation14 + $0x568] sm:$0xff]
          %v5886 = vld [vmem:[#allocation14 + $0x570] sm:$0xff]
          %v5887 = vld [vmem:[#allocation14 + $0x578] sm:$0xff]
          %v5888 = vld [vmem:[#allocation14 + $0x580] sm:$0xff]
          %v5889 = vld [vmem:[#allocation14 + $0x588] sm:$0xff]
          %v5890 = vld [vmem:[#allocation14 + $0x590] sm:$0xff]
          %v5891 = vld [vmem:[#allocation14 + $0x598] sm:$0xff]
          %v5892 = vld [vmem:[#allocation14 + $0x5a0] sm:$0xff]
          %v5893 = vld [vmem:[#allocation14 + $0x5a8] sm:$0xff]
          %v5894 = vld [vmem:[#allocation14 + $0x5b0] sm:$0xff]
          %v5895 = vld [vmem:[#allocation14 + $0x5b8] sm:$0xff]
          %v5896 = vld [vmem:[#allocation14 + $0x5c0] sm:$0xff]
          %v5897 = vld [vmem:[#allocation14 + $0x5c8] sm:$0xff]
          %v5898 = vld [vmem:[#allocation14 + $0x5d0] sm:$0xff]
          %v5899 = vld [vmem:[#allocation14 + $0x5d8] sm:$0xff]
          %v5900 = vld [vmem:[#allocation14 + $0x5e0] sm:$0xff]
          %v5901 = vld [vmem:[#allocation14 + $0x5e8] sm:$0xff]
          %v5902 = vld [vmem:[#allocation14 + $0x5f0] sm:$0xff]
          %v5903 = vld [vmem:[#allocation14 + $0x5f8] sm:$0xff]
          %v5904 = vld [vmem:[#allocation14 + $0x600] sm:$0xff]
          %v5905 = vld [vmem:[#allocation14 + $0x608] sm:$0xff]
          %v5906 = vld [vmem:[#allocation14 + $0x610] sm:$0xff]
          %v5907 = vld [vmem:[#allocation14 + $0x618] sm:$0xff]
          %v5908 = vld [vmem:[#allocation14 + $0x620] sm:$0xff]
          %v5909 = vld [vmem:[#allocation14 + $0x628] sm:$0xff]
          %v5910 = vld [vmem:[#allocation14 + $0x630] sm:$0xff]
          %v5911 = vld [vmem:[#allocation14 + $0x638] sm:$0xff]
          %v5912 = vld [vmem:[#allocation14 + $0x640] sm:$0xff]
          %v5913 = vld [vmem:[#allocation14 + $0x648] sm:$0xff]
          %v5914 = vld [vmem:[#allocation14 + $0x650] sm:$0xff]
          %v5915 = vld [vmem:[#allocation14 + $0x658] sm:$0xff]
          %v5916 = vld [vmem:[#allocation14 + $0x660] sm:$0xff]
          %v5917 = vld [vmem:[#allocation14 + $0x668] sm:$0xff]
          %v5918 = vld [vmem:[#allocation14 + $0x670] sm:$0xff]
          %v5919 = vld [vmem:[#allocation14 + $0x678] sm:$0xff]
          %v5920 = vld [vmem:[#allocation14 + $0x680] sm:$0xff]
          %v5921 = vld [vmem:[#allocation14 + $0x688] sm:$0xff]
          %v5922 = vld [vmem:[#allocation14 + $0x690] sm:$0xff]
          %v5923 = vld [vmem:[#allocation14 + $0x698] sm:$0xff]
          %v5924 = vld [vmem:[#allocation14 + $0x6a0] sm:$0xff]
          %v5925 = vld [vmem:[#allocation14 + $0x6a8] sm:$0xff]
          %v5926 = vld [vmem:[#allocation14 + $0x6b0] sm:$0xff]
          %v5927 = vld [vmem:[#allocation14 + $0x6b8] sm:$0xff]
          %v5928 = vld [vmem:[#allocation14 + $0x6c0] sm:$0xff]
          %v5929 = vld [vmem:[#allocation14 + $0x6c8] sm:$0xff]
          %v5930 = vld [vmem:[#allocation14 + $0x6d0] sm:$0xff]
          %v5931 = vld [vmem:[#allocation14 + $0x6d8] sm:$0xff]
          %v5932 = vld [vmem:[#allocation14 + $0x6e0] sm:$0xff]
          %v5933 = vld [vmem:[#allocation14 + $0x6e8] sm:$0xff]
          %v5934 = vld [vmem:[#allocation14 + $0x6f0] sm:$0xff]
          %v5935 = vld [vmem:[#allocation14 + $0x6f8] sm:$0xff]
          %v5936 = vld [vmem:[#allocation14 + $0x700] sm:$0xff]
          %v5937 = vld [vmem:[#allocation14 + $0x708] sm:$0xff]
          %v5938 = vld [vmem:[#allocation14 + $0x710] sm:$0xff]
          %v5939 = vld [vmem:[#allocation14 + $0x718] sm:$0xff]
          %v5940 = vld [vmem:[#allocation14 + $0x720] sm:$0xff]
          %v5941 = vld [vmem:[#allocation14 + $0x728] sm:$0xff]
          %v5942 = vld [vmem:[#allocation14 + $0x730] sm:$0xff]
          %v5943 = vld [vmem:[#allocation14 + $0x738] sm:$0xff]
          %v5944 = vld [vmem:[#allocation14 + $0x740] sm:$0xff]
          %v5945 = vld [vmem:[#allocation14 + $0x748] sm:$0xff]
          %v5946 = vld [vmem:[#allocation14 + $0x750] sm:$0xff]
          %v5947 = vld [vmem:[#allocation14 + $0x758] sm:$0xff]
          %v5948 = vld [vmem:[#allocation14 + $0x760] sm:$0xff]
          %v5949 = vld [vmem:[#allocation14 + $0x768] sm:$0xff]
          %v5950 = vld [vmem:[#allocation14 + $0x770] sm:$0xff]
          %v5951 = vld [vmem:[#allocation14 + $0x778] sm:$0xff]
          %v5952 = vld [vmem:[#allocation14 + $0x780] sm:$0xff]
          %v5953 = vld [vmem:[#allocation14 + $0x788] sm:$0xff]
          %v5954 = vld [vmem:[#allocation14 + $0x790] sm:$0xff]
          %v5955 = vld [vmem:[#allocation14 + $0x798] sm:$0xff]
          %v5956 = vld [vmem:[#allocation14 + $0x7a0] sm:$0xff]
          %v5957 = vld [vmem:[#allocation14 + $0x7a8] sm:$0xff]
          %v5958 = vld [vmem:[#allocation14 + $0x7b0] sm:$0xff]
          %v5959 = vld [vmem:[#allocation14 + $0x7b8] sm:$0xff]
          %v5960 = vld [vmem:[#allocation14 + $0x7c0] sm:$0xff]
          %v5961 = vld [vmem:[#allocation14 + $0x7c8] sm:$0xff]
          %v5962 = vld [vmem:[#allocation14 + $0x7d0] sm:$0xff]
          %v5963 = vld [vmem:[#allocation14 + $0x7d8] sm:$0xff]
          %v5964 = vld [vmem:[#allocation14 + $0x7e0] sm:$0xff]
          %v5965 = vld [vmem:[#allocation14 + $0x7e8] sm:$0xff]
          %v5966 = vld [vmem:[#allocation14 + $0x7f0] sm:$0xff]
          %v5967 = vld [vmem:[#allocation14 + $0x7f8] sm:$0xff]
          %v5968 = vld [vmem:[%s18] sm:$0x3]
          %v5970 = vlaneseq
          %v5971 = vshrl.u32 %v5970, 7
          %v5972 = vsub.s32 0, %v5971
          %v5973 = vrot.slane %v5968, %v5972
          %v5974 = vlaneseq
          %v5975 = vshrl.u32 %v5974, 7
          %v5976 = vsub.s32 1, %v5975
          %v5977 = vrot.slane %v5968, %v5976
          %5980 = vmatprep.subr.mxu0 %v5713
          %5981 = vmatpush1.msra.mxu0 %v5712
          %5982 = vmatprep.subr.mxu0 %v5715
          %5983 = vmatpush1.msra.mxu0 %v5714
          %5984 = vmatprep.subr.mxu0 %v5717
          %5985 = vmatpush1.msra.mxu0 %v5716
          %5986 = vmatprep.subr.mxu0 %v5719
          %5987 = vmatpush1.msra.mxu0 %v5718
          %5988 = vmatprep.subr.mxu0 %v5721
          %5989 = vmatpush1.msra.mxu0 %v5720
          %5990 = vmatprep.subr.mxu0 %v5723
          %5991 = vmatpush1.msra.mxu0 %v5722
          %5992 = vmatprep.subr.mxu0 %v5725
          %5993 = vmatpush1.msra.mxu0 %v5724
          %5994 = vmatprep.subr.mxu0 %v5727
          %5995 = vmatpush1.msra.mxu0 %v5726
          %5996 = vmatprep.subr.mxu0 %v5729
          %5997 = vmatpush1.msra.mxu0 %v5728
          %5998 = vmatprep.subr.mxu0 %v5731
          %5999 = vmatpush1.msra.mxu0 %v5730
          %6000 = vmatprep.subr.mxu0 %v5733
          %6001 = vmatpush1.msra.mxu0 %v5732
          %6002 = vmatprep.subr.mxu0 %v5735
          %6003 = vmatpush1.msra.mxu0 %v5734
          %6004 = vmatprep.subr.mxu0 %v5737
          %6005 = vmatpush1.msra.mxu0 %v5736
          %6006 = vmatprep.subr.mxu0 %v5739
          %6007 = vmatpush1.msra.mxu0 %v5738
          %6008 = vmatprep.subr.mxu0 %v5741
          %6009 = vmatpush1.msra.mxu0 %v5740
          %6010 = vmatprep.subr.mxu0 %v5743
          %6011 = vmatpush1.msra.mxu0 %v5742
          %6012 = vmatprep.subr.mxu0 %v5745
          %6013 = vmatpush1.msra.mxu0 %v5744
          %6014 = vmatprep.subr.mxu0 %v5747
          %6015 = vmatpush1.msra.mxu0 %v5746
          %6016 = vmatprep.subr.mxu0 %v5749
          %6017 = vmatpush1.msra.mxu0 %v5748
          %6018 = vmatprep.subr.mxu0 %v5751
          %6019 = vmatpush1.msra.mxu0 %v5750
          %6020 = vmatprep.subr.mxu0 %v5753
          %6021 = vmatpush1.msra.mxu0 %v5752
          %6022 = vmatprep.subr.mxu0 %v5755
          %6023 = vmatpush1.msra.mxu0 %v5754
          %6024 = vmatprep.subr.mxu0 %v5757
          %6025 = vmatpush1.msra.mxu0 %v5756
          %6026 = vmatprep.subr.mxu0 %v5759
          %6027 = vmatpush1.msra.mxu0 %v5758
          %6028 = vmatprep.subr.mxu0 %v5761
          %6029 = vmatpush1.msra.mxu0 %v5760
          %6030 = vmatprep.subr.mxu0 %v5763
          %6031 = vmatpush1.msra.mxu0 %v5762
          %6032 = vmatprep.subr.mxu0 %v5765
          %6033 = vmatpush1.msra.mxu0 %v5764
          %6034 = vmatprep.subr.mxu0 %v5767
          %6035 = vmatpush1.msra.mxu0 %v5766
          %6036 = vmatprep.subr.mxu0 %v5769
          %6037 = vmatpush1.msra.mxu0 %v5768
          %6038 = vmatprep.subr.mxu0 %v5771
          %6039 = vmatpush1.msra.mxu0 %v5770
          %6040 = vmatprep.subr.mxu0 %v5773
          %6041 = vmatpush1.msra.mxu0 %v5772
          %6042 = vmatprep.subr.mxu0 %v5775
          %6043 = vmatpush1.msra.mxu0 %v5774
          %6044 = vmatprep.mubr.f32.mxu0 %v5697
          %6045 = vmatmul.mubr.f32.gmra.mrb[0].mxu0 %v5696
          %v6046 = vpop.f32.mrb[0].mxu0
          %v6047 = vadd.f32 %v5973, %v6046
          %v6048 = vpop.f32.mrb[0].mxu0
          %v6049 = vadd.f32 %v5977, %v6048
          %6050 = vmatprep.mubr.f32.mxu0 %v5705
          %6051 = vmatmul.mubr.f32.gmra.mrb[0].mxu0 %v5704
          %v6052 = vpop.f32.mrb[0].mxu0
          %v6053 = vadd.f32 %v5973, %v6052
          %v6054 = vpop.f32.mrb[0].mxu0
          %v6055 = vadd.f32 %v5977, %v6054
          %6056 = vdwg.mxu0
          %6057 = vmatprep.subr.mxu0 %v5777
          %6058 = vmatpush1.msra.mxu0 %v5776
          %6059 = vmatprep.subr.mxu0 %v5779
          %6060 = vmatpush1.msra.mxu0 %v5778
          %6061 = vmatprep.subr.mxu0 %v5781
          %6062 = vmatpush1.msra.mxu0 %v5780
          %6063 = vmatprep.subr.mxu0 %v5783
          %6064 = vmatpush1.msra.mxu0 %v5782
          %6065 = vmatprep.subr.mxu0 %v5785
          %6066 = vmatpush1.msra.mxu0 %v5784
          %6067 = vmatprep.subr.mxu0 %v5787
          %6068 = vmatpush1.msra.mxu0 %v5786
          %6069 = vmatprep.subr.mxu0 %v5789
          %6070 = vmatpush1.msra.mxu0 %v5788
          %6071 = vmatprep.subr.mxu0 %v5791
          %6072 = vmatpush1.msra.mxu0 %v5790
          %6073 = vmatprep.subr.mxu0 %v5793
          %6074 = vmatpush1.msra.mxu0 %v5792
          %6075 = vmatprep.subr.mxu0 %v5795
          %6076 = vmatpush1.msra.mxu0 %v5794
          %6077 = vmatprep.subr.mxu0 %v5797
          %6078 = vmatpush1.msra.mxu0 %v5796
          %6079 = vmatprep.subr.mxu0 %v5799
          %6080 = vmatpush1.msra.mxu0 %v5798
          %6081 = vmatprep.subr.mxu0 %v5801
          %6082 = vmatpush1.msra.mxu0 %v5800
          %6083 = vmatprep.subr.mxu0 %v5803
          %6084 = vmatpush1.msra.mxu0 %v5802
          %6085 = vmatprep.subr.mxu0 %v5805
          %6086 = vmatpush1.msra.mxu0 %v5804
          %6087 = vmatprep.subr.mxu0 %v5807
          %6088 = vmatpush1.msra.mxu0 %v5806
          %6089 = vmatprep.subr.mxu0 %v5809
          %6090 = vmatpush1.msra.mxu0 %v5808
          %6091 = vmatprep.subr.mxu0 %v5811
          %6092 = vmatpush1.msra.mxu0 %v5810
          %6093 = vmatprep.subr.mxu0 %v5813
          %6094 = vmatpush1.msra.mxu0 %v5812
          %6095 = vmatprep.subr.mxu0 %v5815
          %6096 = vmatpush1.msra.mxu0 %v5814
          %6097 = vmatprep.subr.mxu0 %v5817
          %6098 = vmatpush1.msra.mxu0 %v5816
          %6099 = vmatprep.subr.mxu0 %v5819
          %6100 = vmatpush1.msra.mxu0 %v5818
          %6101 = vmatprep.subr.mxu0 %v5821
          %6102 = vmatpush1.msra.mxu0 %v5820
          %6103 = vmatprep.subr.mxu0 %v5823
          %6104 = vmatpush1.msra.mxu0 %v5822
          %6105 = vmatprep.subr.mxu0 %v5825
          %6106 = vmatpush1.msra.mxu0 %v5824
          %6107 = vmatprep.subr.mxu0 %v5827
          %6108 = vmatpush1.msra.mxu0 %v5826
          %6109 = vmatprep.subr.mxu0 %v5829
          %6110 = vmatpush1.msra.mxu0 %v5828
          %6111 = vmatprep.subr.mxu0 %v5831
          %6112 = vmatpush1.msra.mxu0 %v5830
          %6113 = vmatprep.subr.mxu0 %v5833
          %6114 = vmatpush1.msra.mxu0 %v5832
          %6115 = vmatprep.subr.mxu0 %v5835
          %6116 = vmatpush1.msra.mxu0 %v5834
          %6117 = vmatprep.subr.mxu0 %v5837
          %6118 = vmatpush1.msra.mxu0 %v5836
          %6119 = vmatprep.subr.mxu0 %v5839
          %6120 = vmatpush1.msra.mxu0 %v5838
          %6121 = vmatprep.mubr.f32.mxu0 %v5699
          %6122 = vmatmul.mubr.f32.gmra.mrb[0].mxu0 %v5698
          %v6123 = vpop.f32.mrb[0].mxu0
          %v6124 = vadd.f32 %v6047, %v6123
          %v6125 = vpop.f32.mrb[0].mxu0
          %v6126 = vadd.f32 %v6049, %v6125
          %6127 = vmatprep.mubr.f32.mxu0 %v5707
          %6128 = vmatmul.mubr.f32.gmra.mrb[0].mxu0 %v5706
          %v6129 = vpop.f32.mrb[0].mxu0
          %v6130 = vadd.f32 %v6053, %v6129
          %v6131 = vpop.f32.mrb[0].mxu0
          %v6132 = vadd.f32 %v6055, %v6131
          %6133 = vdwg.mxu0
          %6134 = vmatprep.subr.mxu0 %v5841
          %6135 = vmatpush1.msra.mxu0 %v5840
          %6136 = vmatprep.subr.mxu0 %v5843
          %6137 = vmatpush1.msra.mxu0 %v5842
          %6138 = vmatprep.subr.mxu0 %v5845
          %6139 = vmatpush1.msra.mxu0 %v5844
          %6140 = vmatprep.subr.mxu0 %v5847
          %6141 = vmatpush1.msra.mxu0 %v5846
          %6142 = vmatprep.subr.mxu0 %v5849
          %6143 = vmatpush1.msra.mxu0 %v5848
          %6144 = vmatprep.subr.mxu0 %v5851
          %6145 = vmatpush1.msra.mxu0 %v5850
          %6146 = vmatprep.subr.mxu0 %v5853
          %6147 = vmatpush1.msra.mxu0 %v5852
          %6148 = vmatprep.subr.mxu0 %v5855
          %6149 = vmatpush1.msra.mxu0 %v5854
          %6150 = vmatprep.subr.mxu0 %v5857
          %6151 = vmatpush1.msra.mxu0 %v5856
          %6152 = vmatprep.subr.mxu0 %v5859
          %6153 = vmatpush1.msra.mxu0 %v5858
          %6154 = vmatprep.subr.mxu0 %v5861
          %6155 = vmatpush1.msra.mxu0 %v5860
          %6156 = vmatprep.subr.mxu0 %v5863
          %6157 = vmatpush1.msra.mxu0 %v5862
          %6158 = vmatprep.subr.mxu0 %v5865
          %6159 = vmatpush1.msra.mxu0 %v5864
          %6160 = vmatprep.subr.mxu0 %v5867
          %6161 = vmatpush1.msra.mxu0 %v5866
          %6162 = vmatprep.subr.mxu0 %v5869
          %6163 = vmatpush1.msra.mxu0 %v5868
          %6164 = vmatprep.subr.mxu0 %v5871
          %6165 = vmatpush1.msra.mxu0 %v5870
          %6166 = vmatprep.subr.mxu0 %v5873
          %6167 = vmatpush1.msra.mxu0 %v5872
          %6168 = vmatprep.subr.mxu0 %v5875
          %6169 = vmatpush1.msra.mxu0 %v5874
          %6170 = vmatprep.subr.mxu0 %v5877
          %6171 = vmatpush1.msra.mxu0 %v5876
          %6172 = vmatprep.subr.mxu0 %v5879
          %6173 = vmatpush1.msra.mxu0 %v5878
          %6174 = vmatprep.subr.mxu0 %v5881
          %6175 = vmatpush1.msra.mxu0 %v5880
          %6176 = vmatprep.subr.mxu0 %v5883
          %6177 = vmatpush1.msra.mxu0 %v5882
          %6178 = vmatprep.subr.mxu0 %v5885
          %6179 = vmatpush1.msra.mxu0 %v5884
          %6180 = vmatprep.subr.mxu0 %v5887
          %6181 = vmatpush1.msra.mxu0 %v5886
          %6182 = vmatprep.subr.mxu0 %v5889
          %6183 = vmatpush1.msra.mxu0 %v5888
          %6184 = vmatprep.subr.mxu0 %v5891
          %6185 = vmatpush1.msra.mxu0 %v5890
          %6186 = vmatprep.subr.mxu0 %v5893
          %6187 = vmatpush1.msra.mxu0 %v5892
          %6188 = vmatprep.subr.mxu0 %v5895
          %6189 = vmatpush1.msra.mxu0 %v5894
          %6190 = vmatprep.subr.mxu0 %v5897
          %6191 = vmatpush1.msra.mxu0 %v5896
          %6192 = vmatprep.subr.mxu0 %v5899
          %6193 = vmatpush1.msra.mxu0 %v5898
          %6194 = vmatprep.subr.mxu0 %v5901
          %6195 = vmatpush1.msra.mxu0 %v5900
          %6196 = vmatprep.subr.mxu0 %v5903
          %6197 = vmatpush1.msra.mxu0 %v5902
          %6198 = vmatprep.mubr.f32.mxu0 %v5701
          %6199 = vmatmul.mubr.f32.gmra.mrb[0].mxu0 %v5700
          %v6200 = vpop.f32.mrb[0].mxu0
          %v6201 = vadd.f32 %v6124, %v6200
          %v6202 = vpop.f32.mrb[0].mxu0
          %v6203 = vadd.f32 %v6126, %v6202
          %6204 = vmatprep.mubr.f32.mxu0 %v5709
          %6205 = vmatmul.mubr.f32.gmra.mrb[0].mxu0 %v5708
          %v6206 = vpop.f32.mrb[0].mxu0
          %v6207 = vadd.f32 %v6130, %v6206
          %v6208 = vpop.f32.mrb[0].mxu0
          %v6209 = vadd.f32 %v6132, %v6208
          %6210 = vdwg.mxu0
          %6211 = vmatprep.subr.mxu0 %v5905
          %6212 = vmatpush1.msra.mxu0 %v5904
          %6213 = vmatprep.subr.mxu0 %v5907
          %6214 = vmatpush1.msra.mxu0 %v5906
          %6215 = vmatprep.subr.mxu0 %v5909
          %6216 = vmatpush1.msra.mxu0 %v5908
          %6217 = vmatprep.subr.mxu0 %v5911
          %6218 = vmatpush1.msra.mxu0 %v5910
          %6219 = vmatprep.subr.mxu0 %v5913
          %6220 = vmatpush1.msra.mxu0 %v5912
          %6221 = vmatprep.subr.mxu0 %v5915
          %6222 = vmatpush1.msra.mxu0 %v5914
          %6223 = vmatprep.subr.mxu0 %v5917
          %6224 = vmatpush1.msra.mxu0 %v5916
          %6225 = vmatprep.subr.mxu0 %v5919
          %6226 = vmatpush1.msra.mxu0 %v5918
          %6227 = vmatprep.subr.mxu0 %v5921
          %6228 = vmatpush1.msra.mxu0 %v5920
          %6229 = vmatprep.subr.mxu0 %v5923
          %6230 = vmatpush1.msra.mxu0 %v5922
          %6231 = vmatprep.subr.mxu0 %v5925
          %6232 = vmatpush1.msra.mxu0 %v5924
          %6233 = vmatprep.subr.mxu0 %v5927
          %6234 = vmatpush1.msra.mxu0 %v5926
          %6235 = vmatprep.subr.mxu0 %v5929
          %6236 = vmatpush1.msra.mxu0 %v5928
          %6237 = vmatprep.subr.mxu0 %v5931
          %6238 = vmatpush1.msra.mxu0 %v5930
          %6239 = vmatprep.subr.mxu0 %v5933
          %6240 = vmatpush1.msra.mxu0 %v5932
          %6241 = vmatprep.subr.mxu0 %v5935
          %6242 = vmatpush1.msra.mxu0 %v5934
          %6243 = vmatprep.subr.mxu0 %v5937
          %6244 = vmatpush1.msra.mxu0 %v5936
          %6245 = vmatprep.subr.mxu0 %v5939
          %6246 = vmatpush1.msra.mxu0 %v5938
          %6247 = vmatprep.subr.mxu0 %v5941
          %6248 = vmatpush1.msra.mxu0 %v5940
          %6249 = vmatprep.subr.mxu0 %v5943
          %6250 = vmatpush1.msra.mxu0 %v5942
          %6251 = vmatprep.subr.mxu0 %v5945
          %6252 = vmatpush1.msra.mxu0 %v5944
          %6253 = vmatprep.subr.mxu0 %v5947
          %6254 = vmatpush1.msra.mxu0 %v5946
          %6255 = vmatprep.subr.mxu0 %v5949
          %6256 = vmatpush1.msra.mxu0 %v5948
          %6257 = vmatprep.subr.mxu0 %v5951
          %6258 = vmatpush1.msra.mxu0 %v5950
          %6259 = vmatprep.subr.mxu0 %v5953
          %6260 = vmatpush1.msra.mxu0 %v5952
          %6261 = vmatprep.subr.mxu0 %v5955
          %6262 = vmatpush1.msra.mxu0 %v5954
          %6263 = vmatprep.subr.mxu0 %v5957
          %6264 = vmatpush1.msra.mxu0 %v5956
          %6265 = vmatprep.subr.mxu0 %v5959
          %6266 = vmatpush1.msra.mxu0 %v5958
          %6267 = vmatprep.subr.mxu0 %v5961
          %6268 = vmatpush1.msra.mxu0 %v5960
          %6269 = vmatprep.subr.mxu0 %v5963
          %6270 = vmatpush1.msra.mxu0 %v5962
          %6271 = vmatprep.subr.mxu0 %v5965
          %6272 = vmatpush1.msra.mxu0 %v5964
          %6273 = vmatprep.subr.mxu0 %v5967
          %6274 = vmatpush1.msra.mxu0 %v5966
          %6275 = vmatprep.mubr.f32.mxu0 %v5703
          %6276 = vmatmul.mubr.f32.gmra.mrb[0].mxu0 %v5702
          %v6277 = vpop.f32.mrb[0].mxu0
          %v6278 = vadd.f32 %v6201, %v6277
          %v6279 = vpop.f32.mrb[0].mxu0
          %v6280 = vadd.f32 %v6203, %v6279
          %6281 = vmatprep.mubr.f32.mxu0 %v5711
          %6282 = vmatmul.mubr.f32.gmra.mrb[0].mxu0 %v5710
          %v6283 = vpop.f32.mrb[0].mxu0
          %v6284 = vadd.f32 %v6207, %v6283
          %v6285 = vpop.f32.mrb[0].mxu0
          %v6286 = vadd.f32 %v6209, %v6285
          %6287 = vdwg.mxu0
          %6288 = vst [vmem:[#allocation15] sm:$0xff] %v6278
          %6289 = vst [vmem:[#allocation15 + $0x8] sm:$0xff] %v6280
          %6290 = vst [vmem:[#allocation15 + $0x10] sm:$0xff] %v6284
          %6291 = vst [vmem:[#allocation15 + $0x18] sm:$0xff] %v6286
        $region124: #{tpu_custom_call.1} parent=95 // pred_fallthru
          _
        // Predicated region
        $region125: #{tpu_custom_call.1} parent=95 // pred_check
          %p6292 = pneg %p456
        $region126: #{tpu_custom_call.1} parent=95 // pred_check_branch
          %6294 = sbr.rel (%p6292) target = $region128
        $region127: #{tpu_custom_call.1} parent=95 // pred_region
          %s6296 = ssub.s32 512, 512
          %6297 = vsyncadd [#allocation8], %s6296
          %s6298 = sshll.u32 [#allocation15], 4
          %s6299 = int_to_ptr.vmem [resolvable:$true] %s6298
          %6304 = dma.vmem_to_hbm [thread:$0]  %s6299, 512, %s19, [#allocation8], 256, 256, 16
        $region128: #{tpu_custom_call.1} parent=95 // pred_fallthru
          _
        // Predicated region
        $region129: #{tpu_custom_call.1} parent=95 // pred_check
          %p6305 = pneg %p456
        $region130: #{tpu_custom_call.1} parent=95 // pred_check_branch
          %6307 = sbr.rel (%p6305) target = $region132
        $region131: #{tpu_custom_call.1} parent=95 // pred_region
          %6308 = dma.done [#allocation8], 512
        $region132: #{tpu_custom_call.1} parent=95 // pred_fallthru
          _
      $region96: #{tpu_custom_call.1} parent=5 // pred_fallthru
        _
      %p6309 = scmp.le.s32.totalorder 2, %s29
      // Predicated region
      $region133: #{tpu_custom_call.1} parent=5 // pred_check
        %p6310 = pneg %p6309
      $region134: #{tpu_custom_call.1} parent=5 // pred_check_branch
        %6312 = sbr.rel (%p6310) target = $region136
      $region135: #{tpu_custom_call.1} parent=5 // pred_region
        %s6313 = ssub.s32 %s29, 2
      $region136: #{tpu_custom_call.1} parent=5 // pred_fallthru
        _
    $region6: #{tpu_custom_call.1} parent=1 // loop_footer
      %s33 = sadd.s32 1, %s29
    $region7: #{tpu_custom_call.1} parent=1 // loop_footer_branch
      %28 = sbr.rel target = $region3
    $region8: #{tpu_custom_call.1} parent=1 // loop_exit
      _
    %6314 = vsyncpa [#allocation7], 1
    %s6315 = scalar_lea.sflag [#allocation7], 1
    %6316 = vsyncpa %s6315, 1
    %6317 = vsyncpa [#allocation10], 1
    %6318 = vsyncpa [#allocation13], 1
    %6319 = vsyncpa [#allocation8], 1
    %s6320 = scalar_lea.sflag [#allocation8], 1
    %6321 = vsyncpa %s6320, 1

</llo_original>
